<compile_context>
chip_gen: v5e
topology: v5e:2x2
jax: 0.10.0
libtpu: 0.0.40
codegen_flags: <defaults>
</compile_context>

<pallas_src>
import jax
import jax.numpy as jnp
from jax.experimental import pallas as pl
from jax.experimental.pallas import tpu as pltpu


B_TILE = 32       # images per grid step (multiple of 8)
_NEG = -1e30      # mask value for padded logit lanes


# ----------------------------------------------------------------------------
# Fused kernel
# ----------------------------------------------------------------------------
def mnist_fused_kernel(x_ref, w1_ref, b1_ref, w2_ref, b2_ref,
                       wfc_ref, bfc_ref, o_ref):
    # x_ref: (24*B_TILE, 160) bf16.  Row m = ((qy*2 + ry)*6 + g)*B_TILE + b
    # holds conv1 output row oy = 4g + 2ry + qy; lane kk = ki*32 + ix holds
    # input x[b, oy + ki, ix] (row taps pre-fused into K).
    half1 = 12 * B_TILE

    # ---- conv1: ONE matmul, K=160, N=384 (lane = px*192 + kx*16 + ci) ------
    c1 = jnp.dot(x_ref[...], w1_ref[...],
                 preferred_element_type=jnp.float32)          # (24*B_TILE, 384)

    # pool1 (2x2) + bias + relu -> a1: (12*B_TILE, 192), row = (ry*6+g)*B_TILE+b
    b1 = b1_ref[...]                                           # hoisted
    m1 = jnp.maximum(c1[:half1], c1[half1:])                   # row parity qy
    m1 = jnp.maximum(m1[:, :192], m1[:, 192:])                 # col parity px
    a1 = jnp.maximum(m1 + b1, 0.0)
    a1b = a1.astype(jnp.bfloat16)

    # ---- conv2 (8x8x20): output rows oy2 = 2*q + qy2, 5 row taps -----------
    # weight lanes: px*128 + n*32 + co;  K = kx*16 + ci (192)
    c2 = []
    for qy2 in range(2):
        acc = None
        for ki in range(5):
            s = qy2 + ki                       # pooled1 row offset = 2*g0 + ry
            start = ((s % 2) * 6 + s // 2) * B_TILE
            lhs = a1b[start: start + 4 * B_TILE]               # (4*B_TILE, 192)
            t = jnp.dot(lhs, w2_ref[ki],
                        preferred_element_type=jnp.float32)    # (4*B_TILE, 256)
            acc = t if acc is None else acc + t
        c2.append(acc)

    # pool2 + bias + relu -> a2: (4*B_TILE, 128), row = q*B_TILE + b,
    # lane = n*32 + co
    b2 = b2_ref[...]
    m2 = jnp.maximum(c2[0], c2[1])                             # row parity qy2
    m2 = jnp.maximum(m2[:, :128], m2[:, 128:])                 # col parity px
    a2 = jnp.maximum(m2 + b2, 0.0)
    a2b = a2.astype(jnp.bfloat16)

    # ---- fc1 (320 -> 10, padded to 128 lanes) + log_softmax ----------------
    acc = None
    for q in range(4):
        t = jnp.dot(a2b[q * B_TILE:(q + 1) * B_TILE], wfc_ref[q],
                    preferred_element_type=jnp.float32)        # (B_TILE, 128)
        acc = t if acc is None else acc + t
    logits = acc + bfc_ref[...]

    lane = jax.lax.broadcasted_iota(jnp.int32, logits.shape, 1)
    logits = jnp.where(lane < 10, logits, _NEG)
    mx = jnp.max(logits, axis=-1, keepdims=True)
    sh = logits - mx
    lse = jnp.log(jnp.sum(jnp.exp(sh), axis=-1, keepdims=True))
    o_ref[...] = sh - lse


# ----------------------------------------------------------------------------
# Wrapper-side packing (cheap, O(weights) / O(5x input)), and the pallas_call.
# ----------------------------------------------------------------------------
def pack_params(params):
    """Repack torch-layout parameters into lane-dense banded bf16 matrices."""
    w1, b1, w2, b2, wfc, bfc = params
    f32 = jnp.float32

    # conv1 (taps fused into K):
    #   w1k[ki*32 + ix, px*192 + kx*16 + co] = w1[co, 0, ki, ix - ox],
    #   ox = 2*kx + px, valid for 0 <= ix - ox < 5
    ki, ox, kj, co = jnp.meshgrid(jnp.arange(5), jnp.arange(24), jnp.arange(5),
                                  jnp.arange(10), indexing="ij")
    w1k = jnp.zeros((160, 384), f32).at[
        ki * 32 + ox + kj, (ox % 2) * 192 + (ox // 2) * 16 + co
    ].set(w1[:, 0].astype(f32)[co, ki, kj]).astype(jnp.bfloat16)
    b1t = jnp.tile(jnp.pad(b1.astype(f32), (0, 6)), 12).reshape(1, 192)

    # conv2: w2b[ki, kx*16 + ci, px*128 + n*32 + co] = w2[co, ci, ki, kx - ox2]
    ki, ox, kj, ci, co = jnp.meshgrid(jnp.arange(5), jnp.arange(8),
                                      jnp.arange(5), jnp.arange(10),
                                      jnp.arange(20), indexing="ij")
    w2b = jnp.zeros((5, 192, 256), f32).at[
        ki, (ox + kj) * 16 + ci, (ox % 2) * 128 + (ox // 2) * 32 + co
    ].set(w2.astype(f32)[co, ci, ki, kj]).astype(jnp.bfloat16)
    b2t = jnp.tile(jnp.pad(b2.astype(f32), (0, 12)), 4).reshape(1, 128)

    # fc1 consumed per pooled row q: wfcp[q, n*32 + co, no] = wfc[no, co*16+q*4+n]
    q, nx, co, no = jnp.meshgrid(jnp.arange(4), jnp.arange(4), jnp.arange(20),
                                 jnp.arange(10), indexing="ij")
    wfcp = jnp.zeros((4, 128, 128), f32).at[
        q, nx * 32 + co, no
    ].set(wfc.astype(f32)[no, co * 16 + q * 4 + nx]).astype(jnp.bfloat16)
    bfcp = jnp.pad(bfc.astype(f32), (0, 118)).reshape(1, 128)

    return w1k, b1t, w2b, b2t, wfcp, bfcp


def prep_input(x):
    """(N,1,28,28) -> contiguous bf16 slab (n_tiles*24*B_TILE, 160).

    Row ((i_tile*24 + rg)*B_TILE + b), rg = (qy*2 + ry)*6 + g, lane ki*32 + ix
    holds x[b, 4g + 2ry + qy + ki, ix]  (conv1 row taps pre-fused into K).
    """
    n = x.shape[0]
    npad = ((n + B_TILE - 1) // B_TILE) * B_TILE
    xi = jnp.pad(x[:, 0].astype(jnp.float32),
                 ((0, npad - n), (0, 0), (0, 4)))              # (npad, 28, 32)
    qy, ry, g, ki = jnp.meshgrid(jnp.arange(2), jnp.arange(2), jnp.arange(6),
                                 jnp.arange(5), indexing="ij")
    rows = (4 * g + 2 * ry + qy + ki).reshape(24, 5)           # input row index
    xg = xi[:, rows, :]                                        # (npad, 24, 5, 32)
    xg = xg.reshape(npad // B_TILE, B_TILE, 24, 160)
    xg = xg.transpose(0, 2, 1, 3).reshape(npad // B_TILE * 24 * B_TILE, 160)
    return xg.astype(jnp.bfloat16), npad, n


def mnist_cnn_forward(x, params):
    w1k, b1t, w2b, b2t, wfcp, bfcp = pack_params(params)
    xg, npad, n = prep_input(x)
    n_tiles = npad // B_TILE

    out = pl.pallas_call(
        mnist_fused_kernel,
        grid=(n_tiles,),
        in_specs=[
            pl.BlockSpec((24 * B_TILE, 160), lambda i: (i, 0)),   # input slab
            pl.BlockSpec((160, 384), lambda i: (0, 0)),           # w1k
            pl.BlockSpec((1, 192), lambda i: (0, 0)),             # b1
            pl.BlockSpec((5, 192, 256), lambda i: (0, 0, 0)),     # w2b
            pl.BlockSpec((1, 128), lambda i: (0, 0)),             # b2
            pl.BlockSpec((4, 128, 128), lambda i: (0, 0, 0)),     # wfc
            pl.BlockSpec((1, 128), lambda i: (0, 0)),             # bfc
        ],
        out_specs=pl.BlockSpec((B_TILE, 128), lambda i: (i, 0)),
        out_shape=jax.ShapeDtypeStruct((npad, 128), jnp.float32),
        compiler_params=pltpu.CompilerParams(
            dimension_semantics=("parallel",),
        ),
    )(xg, w1k, b1t, w2b, b2t, wfcp, bfcp)
    return out[:n, :10]


# ----------------------------------------------------------------------------
# Deterministic parameter init (torch shapes) and an XLA reference.
# ----------------------------------------------------------------------------
def init_params(key):
    ks = jax.random.split(key, 6)

    def u(k_, shape, fan_in):
        bound = 1.0 / (fan_in ** 0.5)
        return jax.random.uniform(k_, shape, jnp.float32, -bound, bound)

    w1 = u(ks[0], (10, 1, 5, 5), 1 * 5 * 5)
    b1 = u(ks[1], (10,), 1 * 5 * 5)
    w2 = u(ks[2], (20, 10, 5, 5), 10 * 5 * 5)
    b2 = u(ks[3], (20,), 10 * 5 * 5)
    wfc = u(ks[4], (10, 320), 320)
    bfc = u(ks[5], (10,), 320)
    return w1, b1, w2, b2, wfc, bfc


def reference_forward(x, params):
    w1, b1, w2, b2, wfc, bfc = params
    dn = ("NCHW", "OIHW", "NCHW")
    y = jax.lax.conv_general_dilated(x, w1, (1, 1), "VALID", dimension_numbers=dn)
    y = y + b1[None, :, None, None]
    y = jax.lax.reduce_window(y, -jnp.inf, jax.lax.max, (1, 1, 2, 2), (1, 1, 2, 2), "VALID")
    y = jnp.maximum(y, 0.0)
    y = jax.lax.conv_general_dilated(y, w2, (1, 1), "VALID", dimension_numbers=dn)
    y = y + b2[None, :, None, None]
    y = jax.lax.reduce_window(y, -jnp.inf, jax.lax.max, (1, 1, 2, 2), (1, 1, 2, 2), "VALID")
    y = jnp.maximum(y, 0.0)
    y = y.reshape(x.shape[0], -1)
    logits = y @ wfc.T + bfc
    return jax.nn.log_softmax(logits, axis=1)


if __name__ == "__main__":
    key = jax.random.PRNGKey(0)
    kx, kp = jax.random.split(key)
    # MNIST-shaped input: fc1 (320 = 20*4*4) forces 28x28 spatial, 1 channel.
    # Batch 64 -> 2 grid steps at B_TILE=32 (keeps both v7x TensorCores busy).
    x = jax.random.normal(kx, (64, 1, 28, 28), jnp.float32)
    params = init_params(kp)

    out = jax.jit(mnist_cnn_forward)(x, params)
    out = jax.block_until_ready(out)

    ref = reference_forward(x, params)
    assert out.shape == (64, 10)
    assert jnp.allclose(out, ref, atol=3e-2, rtol=3e-2), "Pallas result mismatch vs reference"
    print("KERNEL_OK")
</pallas_src>

<mosaic_0001>
module attributes {stable_mosaic.version = 11 : i64} {
  func.func @mnist_fused_kernel(%arg0: i32, %arg1: memref<768x160xbf16, #tpu.memory_space<vmem>>, %arg2: memref<160x384xbf16, #tpu.memory_space<vmem>>, %arg3: memref<1x192xf32, #tpu.memory_space<vmem>>, %arg4: memref<5x192x256xbf16, #tpu.memory_space<vmem>>, %arg5: memref<1x128xf32, #tpu.memory_space<vmem>>, %arg6: memref<4x128x128xbf16, #tpu.memory_space<vmem>>, %arg7: memref<1x128xf32, #tpu.memory_space<vmem>>, %arg8: memref<32x128xf32, #tpu.memory_space<vmem>>) attributes {dimension_semantics = [#tpu.dimension_semantics<parallel>], iteration_bounds = array<i64: 2>, scalar_prefetch = 0 : i64, scratch_operands = 0 : i64, tpu.core_type = #tpu.core_type<tc>, window_params = [{transform_indices = @transform_0, window_bounds = array<i64: 768, 160>}, {pipeline_mode = #tpu.pipeline_mode<synchronous>, transform_indices = @transform_1, window_bounds = array<i64: 160, 384>}, {pipeline_mode = #tpu.pipeline_mode<synchronous>, transform_indices = @transform_2, window_bounds = array<i64: 1, 192>}, {pipeline_mode = #tpu.pipeline_mode<synchronous>, transform_indices = @transform_3, window_bounds = array<i64: 5, 192, 256>}, {pipeline_mode = #tpu.pipeline_mode<synchronous>, transform_indices = @transform_4, window_bounds = array<i64: 1, 128>}, {pipeline_mode = #tpu.pipeline_mode<synchronous>, transform_indices = @transform_5, window_bounds = array<i64: 4, 128, 128>}, {pipeline_mode = #tpu.pipeline_mode<synchronous>, transform_indices = @transform_6, window_bounds = array<i64: 1, 128>}, {transform_indices = @transform_7, window_bounds = array<i64: 32, 128>}]} {
    %c0 = arith.constant 0 : index
    %c0_0 = arith.constant 0 : index
    %0 = vector.load %arg1[%c0, %c0_0] : memref<768x160xbf16, #tpu.memory_space<vmem>>, vector<768x160xbf16>
    %c0_1 = arith.constant 0 : index
    %c0_2 = arith.constant 0 : index
    %1 = vector.load %arg2[%c0_1, %c0_2] : memref<160x384xbf16, #tpu.memory_space<vmem>>, vector<160x384xbf16>
    %cst = arith.constant dense<0.000000e+00> : vector<768x384xf32>
    %2 = tpu.matmul %0, %1, %cst {dimension_numbers = #tpu.dot_dimension_numbers<[1], [0], [0], [1], [0, 0, 1, 1], [], []>} : vector<768x160xbf16>, vector<160x384xbf16>, vector<768x384xf32> -> vector<768x384xf32>
    %c0_3 = arith.constant 0 : index
    %c0_4 = arith.constant 0 : index
    %3 = vector.load %arg3[%c0_3, %c0_4] : memref<1x192xf32, #tpu.memory_space<vmem>>, vector<1x192xf32>
    %4 = vector.extract_strided_slice %2 {offsets = [0, 0], sizes = [384, 384], strides = [1, 1]} : vector<768x384xf32> to vector<384x384xf32>
    %5 = vector.extract_strided_slice %2 {offsets = [384, 0], sizes = [384, 384], strides = [1, 1]} : vector<768x384xf32> to vector<384x384xf32>
    %6 = arith.maximumf %4, %5 : vector<384x384xf32>
    %7 = vector.extract_strided_slice %6 {offsets = [0, 0], sizes = [384, 192], strides = [1, 1]} : vector<384x384xf32> to vector<384x192xf32>
    %8 = vector.extract_strided_slice %6 {offsets = [0, 192], sizes = [384, 192], strides = [1, 1]} : vector<384x384xf32> to vector<384x192xf32>
    %9 = arith.maximumf %7, %8 : vector<384x192xf32>
    %10 = vector.broadcast %3 : vector<1x192xf32> to vector<384x192xf32>
    %11 = arith.addf %9, %10 : vector<384x192xf32>
    %cst_5 = arith.constant 0.000000e+00 : f32
    %12 = vector.broadcast %cst_5 : f32 to vector<384x192xf32>
    %13 = arith.maximumf %11, %12 : vector<384x192xf32>
    %14 = arith.truncf %13 : vector<384x192xf32> to vector<384x192xbf16>
    %15 = vector.extract_strided_slice %14 {offsets = [0, 0], sizes = [128, 192], strides = [1, 1]} : vector<384x192xbf16> to vector<128x192xbf16>
    %c0_6 = arith.constant 0 : index
    %c0_7 = arith.constant 0 : index
    %c0_8 = arith.constant 0 : index
    %16 = vector.load %arg4[%c0_6, %c0_7, %c0_8] : memref<5x192x256xbf16, #tpu.memory_space<vmem>>, vector<1x192x256xbf16>
    %17 = vector.shape_cast %16 : vector<1x192x256xbf16> to vector<192x256xbf16>
    %cst_9 = arith.constant dense<0.000000e+00> : vector<128x256xf32>
    %18 = tpu.matmul %15, %17, %cst_9 {dimension_numbers = #tpu.dot_dimension_numbers<[1], [0], [0], [1], [0, 0, 1, 1], [], []>} : vector<128x192xbf16>, vector<192x256xbf16>, vector<128x256xf32> -> vector<128x256xf32>
    %19 = vector.extract_strided_slice %14 {offsets = [192, 0], sizes = [128, 192], strides = [1, 1]} : vector<384x192xbf16> to vector<128x192xbf16>
    %c1 = arith.constant 1 : index
    %c0_10 = arith.constant 0 : index
    %c0_11 = arith.constant 0 : index
    %20 = vector.load %arg4[%c1, %c0_10, %c0_11] : memref<5x192x256xbf16, #tpu.memory_space<vmem>>, vector<1x192x256xbf16>
    %21 = vector.shape_cast %20 : vector<1x192x256xbf16> to vector<192x256xbf16>
    %cst_12 = arith.constant dense<0.000000e+00> : vector<128x256xf32>
    %22 = tpu.matmul %19, %21, %cst_12 {dimension_numbers = #tpu.dot_dimension_numbers<[1], [0], [0], [1], [0, 0, 1, 1], [], []>} : vector<128x192xbf16>, vector<192x256xbf16>, vector<128x256xf32> -> vector<128x256xf32>
    %23 = arith.addf %18, %22 : vector<128x256xf32>
    %24 = vector.extract_strided_slice %14 {offsets = [32, 0], sizes = [128, 192], strides = [1, 1]} : vector<384x192xbf16> to vector<128x192xbf16>
    %c2 = arith.constant 2 : index
    %c0_13 = arith.constant 0 : index
    %c0_14 = arith.constant 0 : index
    %25 = vector.load %arg4[%c2, %c0_13, %c0_14] : memref<5x192x256xbf16, #tpu.memory_space<vmem>>, vector<1x192x256xbf16>
    %26 = vector.shape_cast %25 : vector<1x192x256xbf16> to vector<192x256xbf16>
    %cst_15 = arith.constant dense<0.000000e+00> : vector<128x256xf32>
    %27 = tpu.matmul %24, %26, %cst_15 {dimension_numbers = #tpu.dot_dimension_numbers<[1], [0], [0], [1], [0, 0, 1, 1], [], []>} : vector<128x192xbf16>, vector<192x256xbf16>, vector<128x256xf32> -> vector<128x256xf32>
    %28 = arith.addf %23, %27 : vector<128x256xf32>
    %29 = vector.extract_strided_slice %14 {offsets = [224, 0], sizes = [128, 192], strides = [1, 1]} : vector<384x192xbf16> to vector<128x192xbf16>
    %c3 = arith.constant 3 : index
    %c0_16 = arith.constant 0 : index
    %c0_17 = arith.constant 0 : index
    %30 = vector.load %arg4[%c3, %c0_16, %c0_17] : memref<5x192x256xbf16, #tpu.memory_space<vmem>>, vector<1x192x256xbf16>
    %31 = vector.shape_cast %30 : vector<1x192x256xbf16> to vector<192x256xbf16>
    %cst_18 = arith.constant dense<0.000000e+00> : vector<128x256xf32>
    %32 = tpu.matmul %29, %31, %cst_18 {dimension_numbers = #tpu.dot_dimension_numbers<[1], [0], [0], [1], [0, 0, 1, 1], [], []>} : vector<128x192xbf16>, vector<192x256xbf16>, vector<128x256xf32> -> vector<128x256xf32>
    %33 = arith.addf %28, %32 : vector<128x256xf32>
    %34 = vector.extract_strided_slice %14 {offsets = [64, 0], sizes = [128, 192], strides = [1, 1]} : vector<384x192xbf16> to vector<128x192xbf16>
    %c4 = arith.constant 4 : index
    %c0_19 = arith.constant 0 : index
    %c0_20 = arith.constant 0 : index
    %35 = vector.load %arg4[%c4, %c0_19, %c0_20] : memref<5x192x256xbf16, #tpu.memory_space<vmem>>, vector<1x192x256xbf16>
    %36 = vector.shape_cast %35 : vector<1x192x256xbf16> to vector<192x256xbf16>
    %cst_21 = arith.constant dense<0.000000e+00> : vector<128x256xf32>
    %37 = tpu.matmul %34, %36, %cst_21 {dimension_numbers = #tpu.dot_dimension_numbers<[1], [0], [0], [1], [0, 0, 1, 1], [], []>} : vector<128x192xbf16>, vector<192x256xbf16>, vector<128x256xf32> -> vector<128x256xf32>
    %38 = arith.addf %33, %37 : vector<128x256xf32>
    %39 = vector.extract_strided_slice %14 {offsets = [192, 0], sizes = [128, 192], strides = [1, 1]} : vector<384x192xbf16> to vector<128x192xbf16>
    %c0_22 = arith.constant 0 : index
    %c0_23 = arith.constant 0 : index
    %c0_24 = arith.constant 0 : index
    %40 = vector.load %arg4[%c0_22, %c0_23, %c0_24] : memref<5x192x256xbf16, #tpu.memory_space<vmem>>, vector<1x192x256xbf16>
    %41 = vector.shape_cast %40 : vector<1x192x256xbf16> to vector<192x256xbf16>
    %cst_25 = arith.constant dense<0.000000e+00> : vector<128x256xf32>
    %42 = tpu.matmul %39, %41, %cst_25 {dimension_numbers = #tpu.dot_dimension_numbers<[1], [0], [0], [1], [0, 0, 1, 1], [], []>} : vector<128x192xbf16>, vector<192x256xbf16>, vector<128x256xf32> -> vector<128x256xf32>
    %43 = vector.extract_strided_slice %14 {offsets = [32, 0], sizes = [128, 192], strides = [1, 1]} : vector<384x192xbf16> to vector<128x192xbf16>
    %c1_26 = arith.constant 1 : index
    %c0_27 = arith.constant 0 : index
    %c0_28 = arith.constant 0 : index
    %44 = vector.load %arg4[%c1_26, %c0_27, %c0_28] : memref<5x192x256xbf16, #tpu.memory_space<vmem>>, vector<1x192x256xbf16>
    %45 = vector.shape_cast %44 : vector<1x192x256xbf16> to vector<192x256xbf16>
    %cst_29 = arith.constant dense<0.000000e+00> : vector<128x256xf32>
    %46 = tpu.matmul %43, %45, %cst_29 {dimension_numbers = #tpu.dot_dimension_numbers<[1], [0], [0], [1], [0, 0, 1, 1], [], []>} : vector<128x192xbf16>, vector<192x256xbf16>, vector<128x256xf32> -> vector<128x256xf32>
    %47 = arith.addf %42, %46 : vector<128x256xf32>
    %48 = vector.extract_strided_slice %14 {offsets = [224, 0], sizes = [128, 192], strides = [1, 1]} : vector<384x192xbf16> to vector<128x192xbf16>
    %c2_30 = arith.constant 2 : index
    %c0_31 = arith.constant 0 : index
    %c0_32 = arith.constant 0 : index
    %49 = vector.load %arg4[%c2_30, %c0_31, %c0_32] : memref<5x192x256xbf16, #tpu.memory_space<vmem>>, vector<1x192x256xbf16>
    %50 = vector.shape_cast %49 : vector<1x192x256xbf16> to vector<192x256xbf16>
    %cst_33 = arith.constant dense<0.000000e+00> : vector<128x256xf32>
    %51 = tpu.matmul %48, %50, %cst_33 {dimension_numbers = #tpu.dot_dimension_numbers<[1], [0], [0], [1], [0, 0, 1, 1], [], []>} : vector<128x192xbf16>, vector<192x256xbf16>, vector<128x256xf32> -> vector<128x256xf32>
    %52 = arith.addf %47, %51 : vector<128x256xf32>
    %53 = vector.extract_strided_slice %14 {offsets = [64, 0], sizes = [128, 192], strides = [1, 1]} : vector<384x192xbf16> to vector<128x192xbf16>
    %c3_34 = arith.constant 3 : index
    %c0_35 = arith.constant 0 : index
    %c0_36 = arith.constant 0 : index
    %54 = vector.load %arg4[%c3_34, %c0_35, %c0_36] : memref<5x192x256xbf16, #tpu.memory_space<vmem>>, vector<1x192x256xbf16>
    %55 = vector.shape_cast %54 : vector<1x192x256xbf16> to vector<192x256xbf16>
    %cst_37 = arith.constant dense<0.000000e+00> : vector<128x256xf32>
    %56 = tpu.matmul %53, %55, %cst_37 {dimension_numbers = #tpu.dot_dimension_numbers<[1], [0], [0], [1], [0, 0, 1, 1], [], []>} : vector<128x192xbf16>, vector<192x256xbf16>, vector<128x256xf32> -> vector<128x256xf32>
    %57 = arith.addf %52, %56 : vector<128x256xf32>
    %58 = vector.extract_strided_slice %14 {offsets = [256, 0], sizes = [128, 192], strides = [1, 1]} : vector<384x192xbf16> to vector<128x192xbf16>
    %c4_38 = arith.constant 4 : index
    %c0_39 = arith.constant 0 : index
    %c0_40 = arith.constant 0 : index
    %59 = vector.load %arg4[%c4_38, %c0_39, %c0_40] : memref<5x192x256xbf16, #tpu.memory_space<vmem>>, vector<1x192x256xbf16>
    %60 = vector.shape_cast %59 : vector<1x192x256xbf16> to vector<192x256xbf16>
    %cst_41 = arith.constant dense<0.000000e+00> : vector<128x256xf32>
    %61 = tpu.matmul %58, %60, %cst_41 {dimension_numbers = #tpu.dot_dimension_numbers<[1], [0], [0], [1], [0, 0, 1, 1], [], []>} : vector<128x192xbf16>, vector<192x256xbf16>, vector<128x256xf32> -> vector<128x256xf32>
    %62 = arith.addf %57, %61 : vector<128x256xf32>
    %c0_42 = arith.constant 0 : index
    %c0_43 = arith.constant 0 : index
    %63 = vector.load %arg5[%c0_42, %c0_43] : memref<1x128xf32, #tpu.memory_space<vmem>>, vector<1x128xf32>
    %64 = arith.maximumf %38, %62 : vector<128x256xf32>
    %65 = vector.extract_strided_slice %64 {offsets = [0, 0], sizes = [128, 128], strides = [1, 1]} : vector<128x256xf32> to vector<128x128xf32>
    %66 = vector.extract_strided_slice %64 {offsets = [0, 128], sizes = [128, 128], strides = [1, 1]} : vector<128x256xf32> to vector<128x128xf32>
    %67 = arith.maximumf %65, %66 : vector<128x128xf32>
    %68 = vector.broadcast %63 : vector<1x128xf32> to vector<128x128xf32>
    %69 = arith.addf %67, %68 : vector<128x128xf32>
    %cst_44 = arith.constant 0.000000e+00 : f32
    %70 = vector.broadcast %cst_44 : f32 to vector<128x128xf32>
    %71 = arith.maximumf %69, %70 : vector<128x128xf32>
    %72 = arith.truncf %71 : vector<128x128xf32> to vector<128x128xbf16>
    %73 = vector.extract_strided_slice %72 {offsets = [0, 0], sizes = [32, 128], strides = [1, 1]} : vector<128x128xbf16> to vector<32x128xbf16>
    %c0_45 = arith.constant 0 : index
    %c0_46 = arith.constant 0 : index
    %c0_47 = arith.constant 0 : index
    %74 = vector.load %arg6[%c0_45, %c0_46, %c0_47] : memref<4x128x128xbf16, #tpu.memory_space<vmem>>, vector<1x128x128xbf16>
    %75 = vector.shape_cast %74 : vector<1x128x128xbf16> to vector<128x128xbf16>
    %cst_48 = arith.constant dense<0.000000e+00> : vector<32x128xf32>
    %76 = tpu.matmul %73, %75, %cst_48 {dimension_numbers = #tpu.dot_dimension_numbers<[1], [0], [0], [1], [0, 0, 1, 1], [], []>} : vector<32x128xbf16>, vector<128x128xbf16>, vector<32x128xf32> -> vector<32x128xf32>
    %77 = vector.extract_strided_slice %72 {offsets = [32, 0], sizes = [32, 128], strides = [1, 1]} : vector<128x128xbf16> to vector<32x128xbf16>
    %c1_49 = arith.constant 1 : index
    %c0_50 = arith.constant 0 : index
    %c0_51 = arith.constant 0 : index
    %78 = vector.load %arg6[%c1_49, %c0_50, %c0_51] : memref<4x128x128xbf16, #tpu.memory_space<vmem>>, vector<1x128x128xbf16>
    %79 = vector.shape_cast %78 : vector<1x128x128xbf16> to vector<128x128xbf16>
    %cst_52 = arith.constant dense<0.000000e+00> : vector<32x128xf32>
    %80 = tpu.matmul %77, %79, %cst_52 {dimension_numbers = #tpu.dot_dimension_numbers<[1], [0], [0], [1], [0, 0, 1, 1], [], []>} : vector<32x128xbf16>, vector<128x128xbf16>, vector<32x128xf32> -> vector<32x128xf32>
    %81 = arith.addf %76, %80 : vector<32x128xf32>
    %82 = vector.extract_strided_slice %72 {offsets = [64, 0], sizes = [32, 128], strides = [1, 1]} : vector<128x128xbf16> to vector<32x128xbf16>
    %c2_53 = arith.constant 2 : index
    %c0_54 = arith.constant 0 : index
    %c0_55 = arith.constant 0 : index
    %83 = vector.load %arg6[%c2_53, %c0_54, %c0_55] : memref<4x128x128xbf16, #tpu.memory_space<vmem>>, vector<1x128x128xbf16>
    %84 = vector.shape_cast %83 : vector<1x128x128xbf16> to vector<128x128xbf16>
    %cst_56 = arith.constant dense<0.000000e+00> : vector<32x128xf32>
    %85 = tpu.matmul %82, %84, %cst_56 {dimension_numbers = #tpu.dot_dimension_numbers<[1], [0], [0], [1], [0, 0, 1, 1], [], []>} : vector<32x128xbf16>, vector<128x128xbf16>, vector<32x128xf32> -> vector<32x128xf32>
    %86 = arith.addf %81, %85 : vector<32x128xf32>
    %87 = vector.extract_strided_slice %72 {offsets = [96, 0], sizes = [32, 128], strides = [1, 1]} : vector<128x128xbf16> to vector<32x128xbf16>
    %c3_57 = arith.constant 3 : index
    %c0_58 = arith.constant 0 : index
    %c0_59 = arith.constant 0 : index
    %88 = vector.load %arg6[%c3_57, %c0_58, %c0_59] : memref<4x128x128xbf16, #tpu.memory_space<vmem>>, vector<1x128x128xbf16>
    %89 = vector.shape_cast %88 : vector<1x128x128xbf16> to vector<128x128xbf16>
    %cst_60 = arith.constant dense<0.000000e+00> : vector<32x128xf32>
    %90 = tpu.matmul %87, %89, %cst_60 {dimension_numbers = #tpu.dot_dimension_numbers<[1], [0], [0], [1], [0, 0, 1, 1], [], []>} : vector<32x128xbf16>, vector<128x128xbf16>, vector<32x128xf32> -> vector<32x128xf32>
    %91 = arith.addf %86, %90 : vector<32x128xf32>
    %c0_61 = arith.constant 0 : index
    %c0_62 = arith.constant 0 : index
    %92 = vector.load %arg7[%c0_61, %c0_62] : memref<1x128xf32, #tpu.memory_space<vmem>>, vector<1x128xf32>
    %93 = vector.broadcast %92 : vector<1x128xf32> to vector<32x128xf32>
    %94 = arith.addf %91, %93 : vector<32x128xf32>
    %95 = tpu.iota {dimensions = array<i32: 1>} : vector<32x128xi32>
    %c10_i32 = arith.constant 10 : i32
    %96 = vector.broadcast %c10_i32 : i32 to vector<32x128xi32>
    %97 = arith.cmpi slt, %95, %96 : vector<32x128xi32>
    %cst_63 = arith.constant -1.000000e+30 : f32
    %98 = vector.broadcast %cst_63 : f32 to vector<32x128xf32>
    %99 = arith.select %97, %94, %98 : vector<32x128xi1>, vector<32x128xf32>
    %cst_64 = arith.constant dense<0xFF800000> : vector<32xf32>
    %100 = vector.multi_reduction <maximumf>, %99, %cst_64 [1] : vector<32x128xf32> to vector<32xf32>
    %101 = vector.shape_cast %100 : vector<32xf32> to vector<32x1xf32>
    %102 = vector.broadcast %101 : vector<32x1xf32> to vector<32x128xf32>
    %103 = arith.subf %99, %102 : vector<32x128xf32>
    %104 = math.exp %103 : vector<32x128xf32>
    %cst_65 = arith.constant dense<0.000000e+00> : vector<32xf32>
    %105 = vector.multi_reduction <add>, %104, %cst_65 [1] : vector<32x128xf32> to vector<32xf32>
    %106 = vector.shape_cast %105 : vector<32xf32> to vector<32x1xf32>
    %107 = math.log %106 : vector<32x1xf32>
    %108 = vector.broadcast %107 : vector<32x1xf32> to vector<32x128xf32>
    %109 = arith.subf %103, %108 : vector<32x128xf32>
    %c0_66 = arith.constant 0 : index
    %c0_67 = arith.constant 0 : index
    %110 = vector.load %arg8[%c0_66, %c0_67] : memref<32x128xf32, #tpu.memory_space<vmem>>, vector<32x128xf32>
    tpu.vector_store %arg8[%c0_66, %c0_67], %109 {strides = array<i32>} : memref<32x128xf32, #tpu.memory_space<vmem>>, vector<32x128xf32>,
    return
  }
  func.func @transform_0(%arg0: i32) -> (i32, i32) {
    %c0_i32 = arith.constant 0 : i32
    %c0_i32_0 = arith.constant 0 : i32
    return %arg0, %c0_i32 : i32, i32
  }
  func.func @transform_1(%arg0: i32) -> (i32, i32) {
    %c0_i32 = arith.constant 0 : i32
    %c0_i32_0 = arith.constant 0 : i32
    %c0_i32_1 = arith.constant 0 : i32
    return %c0_i32, %c0_i32_0 : i32, i32
  }
  func.func @transform_2(%arg0: i32) -> (i32, i32) {
    %c0_i32 = arith.constant 0 : i32
    %c0_i32_0 = arith.constant 0 : i32
    %c0_i32_1 = arith.constant 0 : i32
    return %c0_i32, %c0_i32_0 : i32, i32
  }
  func.func @transform_3(%arg0: i32) -> (i32, i32, i32) {
    %c0_i32 = arith.constant 0 : i32
    %c0_i32_0 = arith.constant 0 : i32
    %c0_i32_1 = arith.constant 0 : i32
    %c0_i32_2 = arith.constant 0 : i32
    return %c0_i32, %c0_i32_0, %c0_i32_1 : i32, i32, i32
  }
  func.func @transform_4(%arg0: i32) -> (i32, i32) {
    %c0_i32 = arith.constant 0 : i32
    %c0_i32_0 = arith.constant 0 : i32
    %c0_i32_1 = arith.constant 0 : i32
    return %c0_i32, %c0_i32_0 : i32, i32
  }
  func.func @transform_5(%arg0: i32) -> (i32, i32, i32) {
    %c0_i32 = arith.constant 0 : i32
    %c0_i32_0 = arith.constant 0 : i32
    %c0_i32_1 = arith.constant 0 : i32
    %c0_i32_2 = arith.constant 0 : i32
    return %c0_i32, %c0_i32_0, %c0_i32_1 : i32, i32, i32
  }
  func.func @transform_6(%arg0: i32) -> (i32, i32) {
    %c0_i32 = arith.constant 0 : i32
    %c0_i32_0 = arith.constant 0 : i32
    %c0_i32_1 = arith.constant 0 : i32
    return %c0_i32, %c0_i32_0 : i32, i32
  }
  func.func @transform_7(%arg0: i32) -> (i32, i32) {
    %c0_i32 = arith.constant 0 : i32
    %c0_i32_0 = arith.constant 0 : i32
    return %arg0, %c0_i32 : i32, i32
  }
}

</mosaic_0001>

<llo_original>
// kernel: tile.13
$region0: #{tile.13}
  #allocation0 [shape = 's32[1]{0}', space=sflag, size = 0x4, scoped, tag = 'scoped memory for tile.13']
  %s0 = inlined_call_operand.vmem [shape: f32[16], index: 0, kind: input, shape index: {}]
  %s1 = inlined_call_operand.vmem [shape: f32[12,16], index: 1, kind: output, shape index: {}]
  // Predicated region
  $region2: #{tile.13} parent=0 // pred_check
    _
  $region3: #{tile.13} parent=0 // pred_check_branch
    %3 = sbr.rel (0) target = $region5
  $region4: #{tile.13} parent=0 // pred_region
    _
  $region5: #{tile.13} parent=0 // pred_fallthru
    _
  %v4 = vld [vmem:[%s0] ss:$0 sm:$0xff]
  %5 = vst [vmem:[%s1] sm:$0xff] %v4
  %s6 = scalar_lea.vmem %s1, 8
  %7 = vst [vmem:[%s6] sm:$0xff] %v4

// kernel: tile.14
$region0: #{tile.14}
  %s0 = inlined_call_operand.vmem [shape: f32[12,16], index: 0, kind: input, shape index: {}]
  %s1 = inlined_call_operand.vmem [shape: f32[1,192], index: 1, kind: output, shape index: {}]
  $region1: #{tile.14} parent=0
    #allocation0 [shape = 'u8[8192]{0}', space=vmem, size = 0x2000, scoped, tag = 'scoped mem for output reshape']
    %s2 = smov 3
    %v3 = vld [vmem:[%s0] ss:$8 sm:%s2]
    %vm4 = vcmask 130048
    %5 = vst.msk [vmem:[#allocation0] ss:$8 sm:$0x3] %vm4, %v3
    %s6 = scalar_lea.vmem %s0, 7
    %v7 = vld [vmem:[%s6] sm:$0x1]
    %8 = vrot.lane.b32.xlu0 %v7, 112
    %v9 = vpop.permute.xlu0 %8
    %vm10 = vcmask 1048448
    %11 = vst.msk [vmem:[#allocation0] sm:$0x1] %vm10, %v9
    %s12 = scalar_lea.vmem %s0, 6
    %v13 = vld [vmem:[%s12] sm:$0x1]
    %14 = vrot.lane.b32.xlu0 %v13, 96
    %v15 = vpop.permute.xlu0 %14
    %vm16 = vcmask 917248
    %17 = vst.msk [vmem:[#allocation0] sm:$0x1] %vm16, %v15
    %s18 = scalar_lea.vmem %s0, 5
    %v19 = vld [vmem:[%s18] sm:$0x1]
    %20 = vrot.lane.b32.xlu0 %v19, 80
    %v21 = vpop.permute.xlu0 %20
    %vm22 = vcmask 786048
    %23 = vst.msk [vmem:[#allocation0] sm:$0x1] %vm22, %v21
    %s24 = scalar_lea.vmem %s0, 4
    %v25 = vld [vmem:[%s24] sm:$0x1]
    %26 = vrot.lane.b32.xlu0 %v25, 64
    %v27 = vpop.permute.xlu0 %26
    %vm28 = vcmask 654848
    %29 = vst.msk [vmem:[#allocation0] sm:$0x1] %vm28, %v27
    %s30 = scalar_lea.vmem %s0, 3
    %s31 = smov 3
    %v32 = vld [vmem:[%s30] ss:$8 sm:%s31]
    %33 = vrot.lane.b32.xlu0 %v32, 48
    %v34 = vpop.permute.xlu0 %33
    %vm35 = vcmask 523648
    %36 = vst.msk [vmem:[#allocation0] ss:$8 sm:$0x3] %vm35, %v34
    %s37 = scalar_lea.vmem %s0, 2
    %s38 = smov 3
    %v39 = vld [vmem:[%s37] ss:$8 sm:%s38]
    %40 = vrot.lane.b32.xlu0 %v39, 32
    %v41 = vpop.permute.xlu0 %40
    %vm42 = vcmask 392448
    %43 = vst.msk [vmem:[#allocation0] ss:$8 sm:$0x3] %vm42, %v41
    %s44 = scalar_lea.vmem %s0, 1
    %s45 = smov 3
    %v46 = vld [vmem:[%s44] ss:$8 sm:%s45]
    %47 = vrot.lane.b32.xlu0 %v46, 16
    %v48 = vpop.permute.xlu0 %47
    %vm49 = vcmask 261248
    %50 = vst.msk [vmem:[#allocation0] ss:$8 sm:$0x3] %vm49, %v48
    %s52 = ssub.s32 2, 1
    %v53 = vld [vmem:[#allocation0] sm:%s52]
    %s55 = ssub.s32 2, 1
    %56 = vst [vmem:[%s1] sm:%s55] %v53
    %s57 = scalar_lea.vmem [#allocation0], 8
    %v58 = vld [vmem:[%s57] sm:%s52]
    %s60 = ssub.s32 2, 1
    %s61 = scalar_lea.vmem %s1, 1
    %62 = vst [vmem:[%s61] sm:%s60] %v58

// kernel: tile.18
$region0: #{tile.18}
  #allocation0 [shape = 's32[1]{0}', space=sflag, size = 0x4, scoped, tag = 'scoped memory for tile.18']
  %s0 = inlined_call_operand.vmem [shape: f32[32], index: 0, kind: input, shape index: {}]
  %s1 = inlined_call_operand.vmem [shape: f32[4,32], index: 1, kind: output, shape index: {}]
  // Predicated region
  $region2: #{tile.18} parent=0 // pred_check
    _
  $region3: #{tile.18} parent=0 // pred_check_branch
    %3 = sbr.rel (0) target = $region5
  $region4: #{tile.18} parent=0 // pred_region
    _
  $region5: #{tile.18} parent=0 // pred_fallthru
    _
  %v4 = vld [vmem:[%s0] ss:$0 sm:$0xff]
  %5 = vst [vmem:[%s1] sm:$0xf] %v4

// kernel: tile.19
$region0: #{tile.19}
  %s0 = inlined_call_operand.vmem [shape: f32[4,32], index: 0, kind: input, shape index: {}]
  %s1 = inlined_call_operand.vmem [shape: f32[1,128], index: 1, kind: output, shape index: {}]
  $region1: #{tile.19} parent=0
    #allocation0 [shape = 'u8[4096]{0}', space=vmem, size = 0x1000, scoped, tag = 'scoped mem for output reshape']
    #allocation1 [shape = 'u8[4096]{0}', space=vmem, size = 0x1000, scoped, tag = 'scoped mem for input reshape']
    %s3 = ssub.s32 16, 1
    %v4 = vld [vmem:[%s0] sm:%s3]
    %5 = vst [vmem:[#allocation1] sm:%s3] %v4
    %v6 = vld [vmem:[#allocation1] sm:$0x1]
    %vm7 = vcmask 261120
    %8 = vst.msk [vmem:[#allocation0] sm:$0x1] %vm7, %v6
    %s9 = scalar_lea.vmem [#allocation1], 3
    %v10 = vld [vmem:[%s9] sm:$0x1]
    %11 = vrot.lane.b32.xlu0 %v10, 96
    %v12 = vpop.permute.xlu0 %11
    %vm13 = vcmask 1048320
    %14 = vst.msk [vmem:[#allocation0] sm:$0x1] %vm13, %v12
    %s15 = scalar_lea.vmem [#allocation1], 2
    %v16 = vld [vmem:[%s15] sm:$0x1]
    %17 = vrot.lane.b32.xlu0 %v16, 64
    %v18 = vpop.permute.xlu0 %17
    %vm19 = vcmask 785920
    %20 = vst.msk [vmem:[#allocation0] sm:$0x1] %vm19, %v18
    %s21 = scalar_lea.vmem [#allocation1], 1
    %v22 = vld [vmem:[%s21] sm:$0x1]
    %23 = vrot.lane.b32.xlu0 %v22, 32
    %v24 = vpop.permute.xlu0 %23
    %vm25 = vcmask 523520
    %26 = vst.msk [vmem:[#allocation0] sm:$0x1] %vm25, %v24
    %s28 = ssub.s32 2, 1
    %v29 = vld [vmem:[#allocation0] sm:%s28]
    %s31 = ssub.s32 2, 1
    %32 = vst [vmem:[%s1] sm:%s31] %v29

// kernel: mnist_cnn_forward.1
$region0: #{mnist_cnn_forward.1}
  #allocation0 [shape = 'u32[]', space=smem, size = 0x4, offset = 0x4, fixed_abs, tag = 'smem constant byte address 0x4 - core index']
  #allocation1 [shape = 'u32[72,128]{1,0:T(1,128)}', space=vmem, size = 0x9000, scoped, tag = 'internal scratch']
  %s0 = inlined_call_operand.vmem [shape: bf16[1536,160], index: 0, kind: input, shape index: {}]
  %s1 = inlined_call_operand.vmem [shape: bf16[160,384], index: 1, kind: input, shape index: {}]
  %s2 = inlined_call_operand.vmem [shape: f32[1,192], index: 2, kind: input, shape index: {}]
  %s3 = inlined_call_operand.vmem [shape: bf16[5,192,256], index: 3, kind: input, shape index: {}]
  %s4 = inlined_call_operand.vmem [shape: f32[1,128], index: 4, kind: input, shape index: {}]
  %s5 = inlined_call_operand.vmem [shape: bf16[4,128,128], index: 5, kind: input, shape index: {}]
  %s6 = inlined_call_operand.vmem [shape: f32[1,128], index: 6, kind: input, shape index: {}]
  %s7 = inlined_call_operand.vmem [shape: f32[64,128], index: 7, kind: output, shape index: {}]
  %s8 = sld [smem:[#allocation0]]
  $region61: #{mnist_cnn_forward.1} parent=0
    _
  %s10 = ssub.s32 1, %s8
  %s11 = scalar_select 0, %s10, %s8
  loop: start=0, step=1, limit=4
  $region2: #{mnist_cnn_forward.1} parent=0 // loop_pre_header
    _
  $region3: #{mnist_cnn_forward.1} parent=0 // loop_header
    %s13 = sphi 0, %s17
    %p14 = scmp.ge.s32.totalorder %s13, 4
    %s23 = sphi 0, %s25
    %s26 = sphi 0, %s23
    %s27 = sphi 0, %s26
    %s43 = sphi 0, %s27
    %s47 = sphi 0, %s47
    %s49 = sphi 0, %s47
    %s50 = sphi 0, %s49
    %s64 = sphi 0, %s50
    %s68 = sphi 0, %s68
    %s70 = sphi 0, %s68
    %s71 = sphi 0, %s70
    %s85 = sphi 0, %s71
    %s89 = sphi 0, %s89
    %s91 = sphi 0, %s89
    %s92 = sphi 0, %s91
    %s106 = sphi 0, %s92
    %s110 = sphi 0, %s110
    %s112 = sphi 0, %s110
    %s113 = sphi 0, %s112
    %s127 = sphi 0, %s113
    %s131 = sphi 0, %s131
    %s133 = sphi 0, %s131
    %s134 = sphi 0, %s133
    %s148 = sphi 0, %s134
    %s152 = sphi 0, %s152
    %s154 = sphi 0, %s152
    %s155 = sphi 0, %s154
    %s169 = sphi 0, %s155
    %s175 = sphi 0, %s177
    %s178 = sphi 0, %s175
    %s179 = sphi 0, %s178
    %s195 = sphi 0, %s179
  $region4: #{mnist_cnn_forward.1} parent=0 // loop_header_branch
    %16 = sbr.rel (%p14) target = $region8
  $region5: #{mnist_cnn_forward.1} parent=0 // loop_body
    %s18 = ssub.s32 %s13, 1
    %s19 = ssub.s32 %s13, 2
    %s20 = sadd.s32 %s13, 1
    %s21 = ssub.s32 %s13, %s20
    %p22 = scmp.eq.s32.totalorder %s21, 0
    %s24 = sadd.s32 %s23, 1
    %s25 = scalar_select %p22, %s23, %s24
    %p28 = pneg %p22
    %p29 = scmp.eq.s32.totalorder %s13, 1
    %p30 = por %p28, %p29
    %p31 = scmp.ne.s32.totalorder %s23, %s26
    %p32 = scmp.eq.s32.totalorder %s13, 0
    %p33 = por %p31, %p32
    %p34 = scmp.ne.s32.totalorder %s23, %s26
    %p35 = scmp.eq.s32.totalorder %s18, 1
    %p36 = por %p34, %p35
    %p37 = scmp.ne.s32.totalorder %s26, %s27
    %p38 = scmp.eq.s32.totalorder %s18, 0
    %p39 = por %p37, %p38
    %p40 = scmp.ne.s32.totalorder %s26, %s27
    %p41 = scmp.eq.s32.totalorder %s19, 1
    %p42 = por %p40, %p41
    %p44 = scmp.ne.s32.totalorder %s27, %s43
    %p45 = scmp.eq.s32.totalorder %s19, 0
    %p46 = por %p44, %p45
    %s48 = sadd.s32 %s47, 1
    %p51 = scmp.eq.s32.totalorder %s13, 1
    %p52 = scmp.ne.s32.totalorder %s47, %s49
    %p53 = scmp.eq.s32.totalorder %s13, 0
    %p54 = por %p52, %p53
    %p55 = scmp.ne.s32.totalorder %s47, %s49
    %p56 = scmp.eq.s32.totalorder %s18, 1
    %p57 = por %p55, %p56
    %p58 = scmp.ne.s32.totalorder %s49, %s50
    %p59 = scmp.eq.s32.totalorder %s18, 0
    %p60 = por %p58, %p59
    %p61 = scmp.ne.s32.totalorder %s49, %s50
    %p62 = scmp.eq.s32.totalorder %s19, 1
    %p63 = por %p61, %p62
    %p65 = scmp.ne.s32.totalorder %s50, %s64
    %p66 = scmp.eq.s32.totalorder %s19, 0
    %p67 = por %p65, %p66
    %s69 = sadd.s32 %s68, 1
    %p72 = scmp.eq.s32.totalorder %s13, 1
    %p73 = scmp.ne.s32.totalorder %s68, %s70
    %p74 = scmp.eq.s32.totalorder %s13, 0
    %p75 = por %p73, %p74
    %p76 = scmp.ne.s32.totalorder %s68, %s70
    %p77 = scmp.eq.s32.totalorder %s18, 1
    %p78 = por %p76, %p77
    %p79 = scmp.ne.s32.totalorder %s70, %s71
    %p80 = scmp.eq.s32.totalorder %s18, 0
    %p81 = por %p79, %p80
    %p82 = scmp.ne.s32.totalorder %s70, %s71
    %p83 = scmp.eq.s32.totalorder %s19, 1
    %p84 = por %p82, %p83
    %p86 = scmp.ne.s32.totalorder %s71, %s85
    %p87 = scmp.eq.s32.totalorder %s19, 0
    %p88 = por %p86, %p87
    %s90 = sadd.s32 %s89, 1
    %p93 = scmp.eq.s32.totalorder %s13, 1
    %p94 = scmp.ne.s32.totalorder %s89, %s91
    %p95 = scmp.eq.s32.totalorder %s13, 0
    %p96 = por %p94, %p95
    %p97 = scmp.ne.s32.totalorder %s89, %s91
    %p98 = scmp.eq.s32.totalorder %s18, 1
    %p99 = por %p97, %p98
    %p100 = scmp.ne.s32.totalorder %s91, %s92
    %p101 = scmp.eq.s32.totalorder %s18, 0
    %p102 = por %p100, %p101
    %p103 = scmp.ne.s32.totalorder %s91, %s92
    %p104 = scmp.eq.s32.totalorder %s19, 1
    %p105 = por %p103, %p104
    %p107 = scmp.ne.s32.totalorder %s92, %s106
    %p108 = scmp.eq.s32.totalorder %s19, 0
    %p109 = por %p107, %p108
    %s111 = sadd.s32 %s110, 1
    %p114 = scmp.eq.s32.totalorder %s13, 1
    %p115 = scmp.ne.s32.totalorder %s110, %s112
    %p116 = scmp.eq.s32.totalorder %s13, 0
    %p117 = por %p115, %p116
    %p118 = scmp.ne.s32.totalorder %s110, %s112
    %p119 = scmp.eq.s32.totalorder %s18, 1
    %p120 = por %p118, %p119
    %p121 = scmp.ne.s32.totalorder %s112, %s113
    %p122 = scmp.eq.s32.totalorder %s18, 0
    %p123 = por %p121, %p122
    %p124 = scmp.ne.s32.totalorder %s112, %s113
    %p125 = scmp.eq.s32.totalorder %s19, 1
    %p126 = por %p124, %p125
    %p128 = scmp.ne.s32.totalorder %s113, %s127
    %p129 = scmp.eq.s32.totalorder %s19, 0
    %p130 = por %p128, %p129
    %s132 = sadd.s32 %s131, 1
    %p135 = scmp.eq.s32.totalorder %s13, 1
    %p136 = scmp.ne.s32.totalorder %s131, %s133
    %p137 = scmp.eq.s32.totalorder %s13, 0
    %p138 = por %p136, %p137
    %p139 = scmp.ne.s32.totalorder %s131, %s133
    %p140 = scmp.eq.s32.totalorder %s18, 1
    %p141 = por %p139, %p140
    %p142 = scmp.ne.s32.totalorder %s133, %s134
    %p143 = scmp.eq.s32.totalorder %s18, 0
    %p144 = por %p142, %p143
    %p145 = scmp.ne.s32.totalorder %s133, %s134
    %p146 = scmp.eq.s32.totalorder %s19, 1
    %p147 = por %p145, %p146
    %p149 = scmp.ne.s32.totalorder %s134, %s148
    %p150 = scmp.eq.s32.totalorder %s19, 0
    %p151 = por %p149, %p150
    %s153 = sadd.s32 %s152, 1
    %p156 = scmp.eq.s32.totalorder %s13, 1
    %p157 = scmp.ne.s32.totalorder %s152, %s154
    %p158 = scmp.eq.s32.totalorder %s13, 0
    %p159 = por %p157, %p158
    %p160 = scmp.ne.s32.totalorder %s152, %s154
    %p161 = scmp.eq.s32.totalorder %s18, 1
    %p162 = por %p160, %p161
    %p163 = scmp.ne.s32.totalorder %s154, %s155
    %p164 = scmp.eq.s32.totalorder %s18, 0
    %p165 = por %p163, %p164
    %p166 = scmp.ne.s32.totalorder %s154, %s155
    %p167 = scmp.eq.s32.totalorder %s19, 1
    %p168 = por %p166, %p167
    %p170 = scmp.ne.s32.totalorder %s155, %s169
    %p171 = scmp.eq.s32.totalorder %s19, 0
    %p172 = por %p170, %p171
    %s173 = ssub.s32 %s13, %s20
    %p174 = scmp.eq.s32.totalorder %s173, 0
    %s176 = sadd.s32 %s175, 1
    %s177 = scalar_select %p174, %s175, %s176
    %p180 = pneg %p174
    %p181 = scmp.eq.s32.totalorder %s13, 1
    %p182 = por %p180, %p181
    %p183 = scmp.ne.s32.totalorder %s175, %s178
    %p184 = scmp.eq.s32.totalorder %s13, 0
    %p185 = por %p183, %p184
    %p186 = scmp.ne.s32.totalorder %s175, %s178
    %p187 = scmp.eq.s32.totalorder %s18, 1
    %p188 = por %p186, %p187
    %p189 = scmp.ne.s32.totalorder %s178, %s179
    %p190 = scmp.eq.s32.totalorder %s18, 0
    %p191 = por %p189, %p190
    %p192 = scmp.ne.s32.totalorder %s178, %s179
    %p193 = scmp.eq.s32.totalorder %s19, 1
    %p194 = por %p192, %p193
    %p196 = scmp.ne.s32.totalorder %s179, %s195
    %p197 = scmp.eq.s32.totalorder %s19, 0
    %p198 = por %p196, %p197
    %p199 = scmp.le.s32.totalorder 1, %s13
    %p200 = scmp.lt.s32.totalorder %s13, 3
    %p201 = pnand %p199, %p200
    %p202 = pneg %p201
    // Predicated region
    $region9: #{mnist_cnn_forward.1} parent=5 // pred_check
      _
    $region10: #{mnist_cnn_forward.1} parent=5 // pred_check_branch
      %204 = sbr.rel (%p201) target = $region12
    $region11: #{mnist_cnn_forward.1} parent=5 // pred_region
      %s205 = ssub.s32 %s13, 1
      // Predicated region
      $region13: #{mnist_cnn_forward.1} parent=11 // pred_check
        %p206 = pneg %p60
      $region14: #{mnist_cnn_forward.1} parent=11 // pred_check_branch
        %208 = sbr.rel (%p206) target = $region16
      $region15: #{mnist_cnn_forward.1} parent=11 // pred_region
        _
      $region16: #{mnist_cnn_forward.1} parent=11 // pred_fallthru
        _
      // Predicated region
      $region17: #{mnist_cnn_forward.1} parent=11 // pred_check
        %p209 = pneg %p81
      $region18: #{mnist_cnn_forward.1} parent=11 // pred_check_branch
        %211 = sbr.rel (%p209) target = $region20
      $region19: #{mnist_cnn_forward.1} parent=11 // pred_region
        _
      $region20: #{mnist_cnn_forward.1} parent=11 // pred_fallthru
        _
      // Predicated region
      $region21: #{mnist_cnn_forward.1} parent=11 // pred_check
        %p212 = pneg %p102
      $region22: #{mnist_cnn_forward.1} parent=11 // pred_check_branch
        %214 = sbr.rel (%p212) target = $region24
      $region23: #{mnist_cnn_forward.1} parent=11 // pred_region
        _
      $region24: #{mnist_cnn_forward.1} parent=11 // pred_fallthru
        _
      // Predicated region
      $region25: #{mnist_cnn_forward.1} parent=11 // pred_check
        %p215 = pneg %p123
      $region26: #{mnist_cnn_forward.1} parent=11 // pred_check_branch
        %217 = sbr.rel (%p215) target = $region28
      $region27: #{mnist_cnn_forward.1} parent=11 // pred_region
        _
      $region28: #{mnist_cnn_forward.1} parent=11 // pred_fallthru
        _
      // Predicated region
      $region29: #{mnist_cnn_forward.1} parent=11 // pred_check
        %p218 = pneg %p144
      $region30: #{mnist_cnn_forward.1} parent=11 // pred_check_branch
        %220 = sbr.rel (%p218) target = $region32
      $region31: #{mnist_cnn_forward.1} parent=11 // pred_region
        _
      $region32: #{mnist_cnn_forward.1} parent=11 // pred_fallthru
        _
      // Predicated region
      $region33: #{mnist_cnn_forward.1} parent=11 // pred_check
        %p221 = pneg %p165
      $region34: #{mnist_cnn_forward.1} parent=11 // pred_check_branch
        %223 = sbr.rel (%p221) target = $region36
      $region35: #{mnist_cnn_forward.1} parent=11 // pred_region
        _
      $region36: #{mnist_cnn_forward.1} parent=11 // pred_fallthru
        _
    $region12: #{mnist_cnn_forward.1} parent=5 // pred_fallthru
      _
    %p224 = scmp.lt.s32.totalorder %s13, 2
    // Predicated region
    $region37: #{mnist_cnn_forward.1} parent=5 // pred_check
      %p225 = pneg %p224
    $region38: #{mnist_cnn_forward.1} parent=5 // pred_check_branch
      %227 = sbr.rel (%p225) target = $region40
    $region39: #{mnist_cnn_forward.1} parent=5 // pred_region
      // Predicated region
      $region41: #{mnist_cnn_forward.1} parent=39 // pred_check
        %p228 = pneg %p33
      $region42: #{mnist_cnn_forward.1} parent=39 // pred_check_branch
        %230 = sbr.rel (%p228) target = $region44
      $region43: #{mnist_cnn_forward.1} parent=39 // pred_region
        %s231 = smul.u32 96, %s13
        %p232 = scmp.lt.s32.totalorder %s231, 191
        %s233 = scalar_select %p232, %s231, 191
        %s234 = smul.addr %s233, 2
        %s235 = smul.addr %s234, 4
        %s236 = scalar_lea.vmem %s0, %s235
        %s237 = smul.u32 96, %s13
      $region44: #{mnist_cnn_forward.1} parent=39 // pred_fallthru
        _
    $region40: #{mnist_cnn_forward.1} parent=5 // pred_fallthru
      _
    %p238 = scmp.le.s32.totalorder 1, %s13
    %p239 = scmp.lt.s32.totalorder %s13, 3
    %p240 = pnand %p238, %p239
    %p241 = pneg %p240
    // Predicated region
    $region45: #{mnist_cnn_forward.1} parent=5 // pred_check
      _
    $region46: #{mnist_cnn_forward.1} parent=5 // pred_check_branch
      %243 = sbr.rel (%p240) target = $region48
    $region47: #{mnist_cnn_forward.1} parent=5 // pred_region
      %s244 = ssub.s32 %s13, 1
      %s245 = smul.u32 96, %s18
      %p246 = scmp.lt.s32.totalorder %s245, 191
      %s247 = scalar_select %p246, %s245, 191
      %s248 = smul.addr %s247, 2
      %s249 = smul.addr %s248, 4
      %s250 = scalar_lea.vmem %s0, %s249
      %p251 = pneg %p39
      %p252 = pneg %p36
      %p253 = pneg %p60
      %p254 = pneg %p57
      %p255 = pneg %p81
      %p256 = pneg %p78
      %p257 = pneg %p102
      %p258 = pneg %p99
      %p259 = pneg %p123
      %p260 = pneg %p120
      %p261 = pneg %p144
      %p262 = pneg %p141
      %p263 = pneg %p165
      %p264 = pneg %p162
      %p265 = pneg %p191
      %p266 = pneg %p188
      %s267 = smul.u32 4, %s18
      %p268 = scmp.lt.s32.totalorder %s267, 7
      %s269 = scalar_select %p268, %s267, 7
      %s270 = smul.addr %s269, 8
      %s271 = scalar_lea.vmem %s7, %s270
      %s272 = smul.u32 96, %s18
      %p273 = scmp.lt.s32.totalorder %s272, 191
      %s274 = scalar_select %p273, %s272, 191
      %s275 = smul.addr %s274, 2
      %s276 = smul.addr %s275, 4
      %s277 = scalar_lea.vmem %s0, %s276
      %s278 = smul.u32 96, %s18
      %s279 = smul.u32 4, %s18
      %p280 = scmp.lt.s32.totalorder %s279, 7
      %s281 = scalar_select %p280, %s279, 7
      %s282 = smul.addr %s281, 8
      %s283 = scalar_lea.vmem %s7, %s282
      %s284 = smul.u32 4, %s18
      %v286 = vld [vmem:[%s277] sm:$0xff]
      %v287 = vld [vmem:[%s277 + $0x8] sm:$0xff]
      %v288 = vld [vmem:[%s277 + $0x10] sm:$0xff]
      %v289 = vld [vmem:[%s277 + $0x18] sm:$0xff]
      %v290 = vld [vmem:[%s277 + $0x20] sm:$0xff]
      %v291 = vld [vmem:[%s277 + $0x28] sm:$0xff]
      %v292 = vld [vmem:[%s277 + $0x30] sm:$0xff]
      %v293 = vld [vmem:[%s277 + $0x38] sm:$0xff]
      %v294 = vld [vmem:[%s277 + $0x40] sm:$0xff]
      %v295 = vld [vmem:[%s277 + $0x48] sm:$0xff]
      %v296 = vld [vmem:[%s277 + $0x50] sm:$0xff]
      %v297 = vld [vmem:[%s277 + $0x58] sm:$0xff]
      %v298 = vld [vmem:[%s277 + $0x60] sm:$0xff]
      %v299 = vld [vmem:[%s277 + $0x68] sm:$0xff]
      %v300 = vld [vmem:[%s277 + $0x70] sm:$0xff]
      %v301 = vld [vmem:[%s277 + $0x78] sm:$0xff]
      %v302 = vld [vmem:[%s277 + $0x80] sm:$0xff]
      %v303 = vld [vmem:[%s277 + $0x88] sm:$0xff]
      %v304 = vld [vmem:[%s277 + $0x90] sm:$0xff]
      %v305 = vld [vmem:[%s277 + $0x98] sm:$0xff]
      %v306 = vld [vmem:[%s277 + $0xa0] sm:$0xff]
      %v307 = vld [vmem:[%s277 + $0xa8] sm:$0xff]
      %v308 = vld [vmem:[%s277 + $0xb0] sm:$0xff]
      %v309 = vld [vmem:[%s277 + $0xb8] sm:$0xff]
      %v310 = vld [vmem:[%s277 + $0xc0] sm:$0xff]
      %v311 = vld [vmem:[%s277 + $0xc8] sm:$0xff]
      %v312 = vld [vmem:[%s277 + $0xd0] sm:$0xff]
      %v313 = vld [vmem:[%s277 + $0xd8] sm:$0xff]
      %v314 = vld [vmem:[%s277 + $0xe0] sm:$0xff]
      %v315 = vld [vmem:[%s277 + $0xe8] sm:$0xff]
      %v316 = vld [vmem:[%s277 + $0xf0] sm:$0xff]
      %v317 = vld [vmem:[%s277 + $0xf8] sm:$0xff]
      %v318 = vld [vmem:[%s277 + $0x100] sm:$0xff]
      %v319 = vld [vmem:[%s277 + $0x108] sm:$0xff]
      %v320 = vld [vmem:[%s277 + $0x110] sm:$0xff]
      %v321 = vld [vmem:[%s277 + $0x118] sm:$0xff]
      %v322 = vld [vmem:[%s277 + $0x120] sm:$0xff]
      %v323 = vld [vmem:[%s277 + $0x128] sm:$0xff]
      %v324 = vld [vmem:[%s277 + $0x130] sm:$0xff]
      %v325 = vld [vmem:[%s277 + $0x138] sm:$0xff]
      %v326 = vld [vmem:[%s277 + $0x140] sm:$0xff]
      %v327 = vld [vmem:[%s277 + $0x148] sm:$0xff]
      %v328 = vld [vmem:[%s277 + $0x150] sm:$0xff]
      %v329 = vld [vmem:[%s277 + $0x158] sm:$0xff]
      %v330 = vld [vmem:[%s277 + $0x160] sm:$0xff]
      %v331 = vld [vmem:[%s277 + $0x168] sm:$0xff]
      %v332 = vld [vmem:[%s277 + $0x170] sm:$0xff]
      %v333 = vld [vmem:[%s277 + $0x178] sm:$0xff]
      %v334 = vld [vmem:[%s277 + $0x180] sm:$0xff]
      %v335 = vld [vmem:[%s277 + $0x188] sm:$0xff]
      %v336 = vld [vmem:[%s277 + $0x190] sm:$0xff]
      %v337 = vld [vmem:[%s277 + $0x198] sm:$0xff]
      %v338 = vld [vmem:[%s277 + $0x1a0] sm:$0xff]
      %v339 = vld [vmem:[%s277 + $0x1a8] sm:$0xff]
      %v340 = vld [vmem:[%s277 + $0x1b0] sm:$0xff]
      %v341 = vld [vmem:[%s277 + $0x1b8] sm:$0xff]
      %v342 = vld [vmem:[%s277 + $0x1c0] sm:$0xff]
      %v343 = vld [vmem:[%s277 + $0x1c8] sm:$0xff]
      %v344 = vld [vmem:[%s277 + $0x1d0] sm:$0xff]
      %v345 = vld [vmem:[%s277 + $0x1d8] sm:$0xff]
      %v346 = vld [vmem:[%s277 + $0x1e0] sm:$0xff]
      %v347 = vld [vmem:[%s277 + $0x1e8] sm:$0xff]
      %v348 = vld [vmem:[%s277 + $0x1f0] sm:$0xff]
      %v349 = vld [vmem:[%s277 + $0x1f8] sm:$0xff]
      %v350 = vld [vmem:[%s277 + $0x200] sm:$0xff]
      %v351 = vld [vmem:[%s277 + $0x208] sm:$0xff]
      %v352 = vld [vmem:[%s277 + $0x210] sm:$0xff]
      %v353 = vld [vmem:[%s277 + $0x218] sm:$0xff]
      %v354 = vld [vmem:[%s277 + $0x220] sm:$0xff]
      %v355 = vld [vmem:[%s277 + $0x228] sm:$0xff]
      %v356 = vld [vmem:[%s277 + $0x230] sm:$0xff]
      %v357 = vld [vmem:[%s277 + $0x238] sm:$0xff]
      %v358 = vld [vmem:[%s277 + $0x240] sm:$0xff]
      %v359 = vld [vmem:[%s277 + $0x248] sm:$0xff]
      %v360 = vld [vmem:[%s277 + $0x250] sm:$0xff]
      %v361 = vld [vmem:[%s277 + $0x258] sm:$0xff]
      %v362 = vld [vmem:[%s277 + $0x260] sm:$0xff]
      %v363 = vld [vmem:[%s277 + $0x268] sm:$0xff]
      %v364 = vld [vmem:[%s277 + $0x270] sm:$0xff]
      %v365 = vld [vmem:[%s277 + $0x278] sm:$0xff]
      %v366 = vld [vmem:[%s277 + $0x280] sm:$0xff]
      %v367 = vld [vmem:[%s277 + $0x288] sm:$0xff]
      %v368 = vld [vmem:[%s277 + $0x290] sm:$0xff]
      %v369 = vld [vmem:[%s277 + $0x298] sm:$0xff]
      %v370 = vld [vmem:[%s277 + $0x2a0] sm:$0xff]
      %v371 = vld [vmem:[%s277 + $0x2a8] sm:$0xff]
      %v372 = vld [vmem:[%s277 + $0x2b0] sm:$0xff]
      %v373 = vld [vmem:[%s277 + $0x2b8] sm:$0xff]
      %v374 = vld [vmem:[%s277 + $0x2c0] sm:$0xff]
      %v375 = vld [vmem:[%s277 + $0x2c8] sm:$0xff]
      %v376 = vld [vmem:[%s277 + $0x2d0] sm:$0xff]
      %v377 = vld [vmem:[%s277 + $0x2d8] sm:$0xff]
      %v378 = vld [vmem:[%s277 + $0x2e0] sm:$0xff]
      %v379 = vld [vmem:[%s277 + $0x2e8] sm:$0xff]
      %v380 = vld [vmem:[%s277 + $0x2f0] sm:$0xff]
      %v381 = vld [vmem:[%s277 + $0x2f8] sm:$0xff]
      %v382 = vld [vmem:[%s1] sm:$0xff]
      %v383 = vld [vmem:[%s1 + $0x8] sm:$0xf]
      %v384 = vld [vmem:[%s1 + $0xc] sm:$0xff]
      %v385 = vld [vmem:[%s1 + $0x14] sm:$0xf]
      %v386 = vld [vmem:[%s1 + $0x18] sm:$0xff]
      %v387 = vld [vmem:[%s1 + $0x20] sm:$0xf]
      %v388 = vld [vmem:[%s1 + $0x24] sm:$0xff]
      %v389 = vld [vmem:[%s1 + $0x2c] sm:$0xf]
      %v390 = vld [vmem:[%s1 + $0x30] sm:$0xff]
      %v391 = vld [vmem:[%s1 + $0x38] sm:$0xf]
      %v392 = vld [vmem:[%s1 + $0x3c] sm:$0xff]
      %v393 = vld [vmem:[%s1 + $0x44] sm:$0xf]
      %v394 = vld [vmem:[%s1 + $0x48] sm:$0xff]
      %v395 = vld [vmem:[%s1 + $0x50] sm:$0xf]
      %v396 = vld [vmem:[%s1 + $0x54] sm:$0xff]
      %v397 = vld [vmem:[%s1 + $0x5c] sm:$0xf]
      %v398 = vld [vmem:[%s1 + $0x60] sm:$0xff]
      %v399 = vld [vmem:[%s1 + $0x68] sm:$0xf]
      %v400 = vld [vmem:[%s1 + $0x6c] sm:$0xff]
      %v401 = vld [vmem:[%s1 + $0x74] sm:$0xf]
      %v402 = vld [vmem:[%s1 + $0x78] sm:$0xff]
      %v403 = vld [vmem:[%s1 + $0x80] sm:$0xf]
      %v404 = vld [vmem:[%s1 + $0x84] sm:$0xff]
      %v405 = vld [vmem:[%s1 + $0x8c] sm:$0xf]
      %v406 = vld [vmem:[%s1 + $0x90] sm:$0xff]
      %v407 = vld [vmem:[%s1 + $0x98] sm:$0xf]
      %v408 = vld [vmem:[%s1 + $0x9c] sm:$0xff]
      %v409 = vld [vmem:[%s1 + $0xa4] sm:$0xf]
      %v410 = vld [vmem:[%s1 + $0xa8] sm:$0xff]
      %v411 = vld [vmem:[%s1 + $0xb0] sm:$0xf]
      %v412 = vld [vmem:[%s1 + $0xb4] sm:$0xff]
      %v413 = vld [vmem:[%s1 + $0xbc] sm:$0xf]
      %v414 = vld [vmem:[%s1 + $0xc0] sm:$0xff]
      %v415 = vld [vmem:[%s1 + $0xc8] sm:$0xf]
      %v416 = vld [vmem:[%s1 + $0xcc] sm:$0xff]
      %v417 = vld [vmem:[%s1 + $0xd4] sm:$0xf]
      %v418 = vld [vmem:[%s1 + $0xd8] sm:$0xff]
      %v419 = vld [vmem:[%s1 + $0xe0] sm:$0xf]
      %v420 = vld [vmem:[%s1 + $0xe4] sm:$0xff]
      %v421 = vld [vmem:[%s1 + $0xec] sm:$0xf]
      %v518 = vunpack.c.l.b16 %v286
      %v519 = vunpack.c.h.b16 %v286
      %v520 = vunpack.c.l.b16 %v287
      %v521 = vunpack.c.h.b16 %v287
      %v522 = vunpack.c.l.b16 %v288
      %v523 = vunpack.c.h.b16 %v288
      %v524 = vunpack.c.l.b16 %v289
      %v525 = vunpack.c.h.b16 %v289
      %v526 = vunpack.c.l.b16 %v290
      %v527 = vunpack.c.h.b16 %v290
      %v528 = vunpack.c.l.b16 %v291
      %v529 = vunpack.c.h.b16 %v291
      %v530 = vunpack.c.l.b16 %v292
      %v531 = vunpack.c.h.b16 %v292
      %v532 = vunpack.c.l.b16 %v293
      %v533 = vunpack.c.h.b16 %v293
      %v534 = vunpack.c.l.b16 %v294
      %v535 = vunpack.c.h.b16 %v294
      %v536 = vunpack.c.l.b16 %v295
      %v537 = vunpack.c.h.b16 %v295
      %v538 = vunpack.c.l.b16 %v296
      %v539 = vunpack.c.h.b16 %v296
      %v540 = vunpack.c.l.b16 %v297
      %v541 = vunpack.c.h.b16 %v297
      %v542 = vunpack.c.l.b16 %v298
      %v543 = vunpack.c.h.b16 %v298
      %v544 = vunpack.c.l.b16 %v299
      %v545 = vunpack.c.h.b16 %v299
      %v546 = vunpack.c.l.b16 %v300
      %v547 = vunpack.c.h.b16 %v300
      %v548 = vunpack.c.l.b16 %v301
      %v549 = vunpack.c.h.b16 %v301
      %v550 = vunpack.c.l.b16 %v302
      %v551 = vunpack.c.h.b16 %v302
      %v552 = vunpack.c.l.b16 %v303
      %v553 = vunpack.c.h.b16 %v303
      %v554 = vunpack.c.l.b16 %v304
      %v555 = vunpack.c.h.b16 %v304
      %v556 = vunpack.c.l.b16 %v305
      %v557 = vunpack.c.h.b16 %v305
      %v558 = vunpack.c.l.b16 %v306
      %v559 = vunpack.c.h.b16 %v306
      %v560 = vunpack.c.l.b16 %v307
      %v561 = vunpack.c.h.b16 %v307
      %v562 = vunpack.c.l.b16 %v308
      %v563 = vunpack.c.h.b16 %v308
      %v564 = vunpack.c.l.b16 %v309
      %v565 = vunpack.c.h.b16 %v309
      %v566 = vunpack.c.l.b16 %v310
      %v567 = vunpack.c.h.b16 %v310
      %v568 = vunpack.c.l.b16 %v311
      %v569 = vunpack.c.h.b16 %v311
      %v570 = vunpack.c.l.b16 %v312
      %v571 = vunpack.c.h.b16 %v312
      %v572 = vunpack.c.l.b16 %v313
      %v573 = vunpack.c.h.b16 %v313
      %v574 = vunpack.c.l.b16 %v314
      %v575 = vunpack.c.h.b16 %v314
      %v576 = vunpack.c.l.b16 %v315
      %v577 = vunpack.c.h.b16 %v315
      %v578 = vunpack.c.l.b16 %v316
      %v579 = vunpack.c.h.b16 %v316
      %v580 = vunpack.c.l.b16 %v317
      %v581 = vunpack.c.h.b16 %v317
      %v582 = vunpack.c.l.b16 %v318
      %v583 = vunpack.c.h.b16 %v318
      %v584 = vunpack.c.l.b16 %v319
      %v585 = vunpack.c.h.b16 %v319
      %v586 = vunpack.c.l.b16 %v320
      %v587 = vunpack.c.h.b16 %v320
      %v588 = vunpack.c.l.b16 %v321
      %v589 = vunpack.c.h.b16 %v321
      %v590 = vunpack.c.l.b16 %v322
      %v591 = vunpack.c.h.b16 %v322
      %v592 = vunpack.c.l.b16 %v323
      %v593 = vunpack.c.h.b16 %v323
      %v594 = vunpack.c.l.b16 %v324
      %v595 = vunpack.c.h.b16 %v324
      %v596 = vunpack.c.l.b16 %v325
      %v597 = vunpack.c.h.b16 %v325
      %v598 = vunpack.c.l.b16 %v326
      %v599 = vunpack.c.h.b16 %v326
      %v600 = vunpack.c.l.b16 %v327
      %v601 = vunpack.c.h.b16 %v327
      %v602 = vunpack.c.l.b16 %v328
      %v603 = vunpack.c.h.b16 %v328
      %v604 = vunpack.c.l.b16 %v329
      %v605 = vunpack.c.h.b16 %v329
      %v606 = vunpack.c.l.b16 %v330
      %v607 = vunpack.c.h.b16 %v330
      %v608 = vunpack.c.l.b16 %v331
      %v609 = vunpack.c.h.b16 %v331
      %v610 = vunpack.c.l.b16 %v332
      %v611 = vunpack.c.h.b16 %v332
      %v612 = vunpack.c.l.b16 %v333
      %v613 = vunpack.c.h.b16 %v333
      %v614 = vunpack.c.l.b16 %v334
      %v615 = vunpack.c.h.b16 %v334
      %v616 = vunpack.c.l.b16 %v335
      %v617 = vunpack.c.h.b16 %v335
      %v618 = vunpack.c.l.b16 %v336
      %v619 = vunpack.c.h.b16 %v336
      %v620 = vunpack.c.l.b16 %v337
      %v621 = vunpack.c.h.b16 %v337
      %v622 = vunpack.c.l.b16 %v338
      %v623 = vunpack.c.h.b16 %v338
      %v624 = vunpack.c.l.b16 %v339
      %v625 = vunpack.c.h.b16 %v339
      %v626 = vunpack.c.l.b16 %v340
      %v627 = vunpack.c.h.b16 %v340
      %v628 = vunpack.c.l.b16 %v341
      %v629 = vunpack.c.h.b16 %v341
      %v630 = vunpack.c.l.b16 %v342
      %v631 = vunpack.c.h.b16 %v342
      %v632 = vunpack.c.l.b16 %v343
      %v633 = vunpack.c.h.b16 %v343
      %v634 = vunpack.c.l.b16 %v344
      %v635 = vunpack.c.h.b16 %v344
      %v636 = vunpack.c.l.b16 %v345
      %v637 = vunpack.c.h.b16 %v345
      %v638 = vunpack.c.l.b16 %v346
      %v639 = vunpack.c.h.b16 %v346
      %v640 = vunpack.c.l.b16 %v347
      %v641 = vunpack.c.h.b16 %v347
      %v642 = vunpack.c.l.b16 %v348
      %v643 = vunpack.c.h.b16 %v348
      %v644 = vunpack.c.l.b16 %v349
      %v645 = vunpack.c.h.b16 %v349
      %v646 = vunpack.c.l.b16 %v350
      %v647 = vunpack.c.h.b16 %v350
      %v648 = vunpack.c.l.b16 %v351
      %v649 = vunpack.c.h.b16 %v351
      %v650 = vunpack.c.l.b16 %v352
      %v651 = vunpack.c.h.b16 %v352
      %v652 = vunpack.c.l.b16 %v353
      %v653 = vunpack.c.h.b16 %v353
      %v654 = vunpack.c.l.b16 %v354
      %v655 = vunpack.c.h.b16 %v354
      %v656 = vunpack.c.l.b16 %v355
      %v657 = vunpack.c.h.b16 %v355
      %v658 = vunpack.c.l.b16 %v356
      %v659 = vunpack.c.h.b16 %v356
      %v660 = vunpack.c.l.b16 %v357
      %v661 = vunpack.c.h.b16 %v357
      %v662 = vunpack.c.l.b16 %v358
      %v663 = vunpack.c.h.b16 %v358
      %v664 = vunpack.c.l.b16 %v359
      %v665 = vunpack.c.h.b16 %v359
      %v666 = vunpack.c.l.b16 %v360
      %v667 = vunpack.c.h.b16 %v360
      %v668 = vunpack.c.l.b16 %v361
      %v669 = vunpack.c.h.b16 %v361
      %v670 = vunpack.c.l.b16 %v362
      %v671 = vunpack.c.h.b16 %v362
      %v672 = vunpack.c.l.b16 %v363
      %v673 = vunpack.c.h.b16 %v363
      %v674 = vunpack.c.l.b16 %v364
      %v675 = vunpack.c.h.b16 %v364
      %v676 = vunpack.c.l.b16 %v365
      %v677 = vunpack.c.h.b16 %v365
      %v678 = vunpack.c.l.b16 %v366
      %v679 = vunpack.c.h.b16 %v366
      %v680 = vunpack.c.l.b16 %v367
      %v681 = vunpack.c.h.b16 %v367
      %v682 = vunpack.c.l.b16 %v368
      %v683 = vunpack.c.h.b16 %v368
      %v684 = vunpack.c.l.b16 %v369
      %v685 = vunpack.c.h.b16 %v369
      %v686 = vunpack.c.l.b16 %v370
      %v687 = vunpack.c.h.b16 %v370
      %v688 = vunpack.c.l.b16 %v371
      %v689 = vunpack.c.h.b16 %v371
      %v690 = vunpack.c.l.b16 %v372
      %v691 = vunpack.c.h.b16 %v372
      %v692 = vunpack.c.l.b16 %v373
      %v693 = vunpack.c.h.b16 %v373
      %v694 = vunpack.c.l.b16 %v374
      %v695 = vunpack.c.h.b16 %v374
      %v696 = vunpack.c.l.b16 %v375
      %v697 = vunpack.c.h.b16 %v375
      %v698 = vunpack.c.l.b16 %v376
      %v699 = vunpack.c.h.b16 %v376
      %v700 = vunpack.c.l.b16 %v377
      %v701 = vunpack.c.h.b16 %v377
      %v702 = vunpack.c.l.b16 %v378
      %v703 = vunpack.c.h.b16 %v378
      %v704 = vunpack.c.l.b16 %v379
      %v705 = vunpack.c.h.b16 %v379
      %v706 = vunpack.c.l.b16 %v380
      %v707 = vunpack.c.h.b16 %v380
      %v708 = vunpack.c.l.b16 %v381
      %v709 = vunpack.c.h.b16 %v381
      %v710 = vpack.c.b16 %v520, %v518
      %v711 = vpack.c.b16 %v521, %v519
      %v712 = vpack.c.b16 %v524, %v522
      %v713 = vpack.c.b16 %v525, %v523
      %v714 = vpack.c.b16 %v528, %v526
      %v715 = vpack.c.b16 %v529, %v527
      %v716 = vpack.c.b16 %v532, %v530
      %v717 = vpack.c.b16 %v533, %v531
      %v718 = vpack.c.b16 %v536, %v534
      %v719 = vpack.c.b16 %v537, %v535
      %v720 = vpack.c.b16 %v540, %v538
      %v721 = vpack.c.b16 %v541, %v539
      %v722 = vpack.c.b16 %v544, %v542
      %v723 = vpack.c.b16 %v545, %v543
      %v724 = vpack.c.b16 %v548, %v546
      %v725 = vpack.c.b16 %v549, %v547
      %v726 = vpack.c.b16 %v552, %v550
      %v727 = vpack.c.b16 %v553, %v551
      %v728 = vpack.c.b16 %v556, %v554
      %v729 = vpack.c.b16 %v557, %v555
      %v730 = vpack.c.b16 %v560, %v558
      %v731 = vpack.c.b16 %v561, %v559
      %v732 = vpack.c.b16 %v564, %v562
      %v733 = vpack.c.b16 %v565, %v563
      %v734 = vpack.c.b16 %v568, %v566
      %v735 = vpack.c.b16 %v569, %v567
      %v736 = vpack.c.b16 %v572, %v570
      %v737 = vpack.c.b16 %v573, %v571
      %v738 = vpack.c.b16 %v576, %v574
      %v739 = vpack.c.b16 %v577, %v575
      %v740 = vpack.c.b16 %v580, %v578
      %v741 = vpack.c.b16 %v581, %v579
      %v742 = vpack.c.b16 %v584, %v582
      %v743 = vpack.c.b16 %v585, %v583
      %v744 = vpack.c.b16 %v588, %v586
      %v745 = vpack.c.b16 %v589, %v587
      %v746 = vpack.c.b16 %v592, %v590
      %v747 = vpack.c.b16 %v593, %v591
      %v748 = vpack.c.b16 %v596, %v594
      %v749 = vpack.c.b16 %v597, %v595
      %v750 = vpack.c.b16 %v600, %v598
      %v751 = vpack.c.b16 %v601, %v599
      %v752 = vpack.c.b16 %v604, %v602
      %v753 = vpack.c.b16 %v605, %v603
      %v754 = vpack.c.b16 %v608, %v606
      %v755 = vpack.c.b16 %v609, %v607
      %v756 = vpack.c.b16 %v612, %v610
      %v757 = vpack.c.b16 %v613, %v611
      %v758 = vpack.c.b16 %v616, %v614
      %v759 = vpack.c.b16 %v617, %v615
      %v760 = vpack.c.b16 %v620, %v618
      %v761 = vpack.c.b16 %v621, %v619
      %v762 = vpack.c.b16 %v624, %v622
      %v763 = vpack.c.b16 %v625, %v623
      %v764 = vpack.c.b16 %v628, %v626
      %v765 = vpack.c.b16 %v629, %v627
      %v766 = vpack.c.b16 %v632, %v630
      %v767 = vpack.c.b16 %v633, %v631
      %v768 = vpack.c.b16 %v636, %v634
      %v769 = vpack.c.b16 %v637, %v635
      %v770 = vpack.c.b16 %v640, %v638
      %v771 = vpack.c.b16 %v641, %v639
      %v772 = vpack.c.b16 %v644, %v642
      %v773 = vpack.c.b16 %v645, %v643
      %v774 = vpack.c.b16 %v648, %v646
      %v775 = vpack.c.b16 %v649, %v647
      %v776 = vpack.c.b16 %v652, %v650
      %v777 = vpack.c.b16 %v653, %v651
      %v778 = vpack.c.b16 %v656, %v654
      %v779 = vpack.c.b16 %v657, %v655
      %v780 = vpack.c.b16 %v660, %v658
      %v781 = vpack.c.b16 %v661, %v659
      %v782 = vpack.c.b16 %v664, %v662
      %v783 = vpack.c.b16 %v665, %v663
      %v784 = vpack.c.b16 %v668, %v666
      %v785 = vpack.c.b16 %v669, %v667
      %v786 = vpack.c.b16 %v672, %v670
      %v787 = vpack.c.b16 %v673, %v671
      %v788 = vpack.c.b16 %v676, %v674
      %v789 = vpack.c.b16 %v677, %v675
      %v790 = vpack.c.b16 %v680, %v678
      %v791 = vpack.c.b16 %v681, %v679
      %v792 = vpack.c.b16 %v684, %v682
      %v793 = vpack.c.b16 %v685, %v683
      %v794 = vpack.c.b16 %v688, %v686
      %v795 = vpack.c.b16 %v689, %v687
      %v796 = vpack.c.b16 %v692, %v690
      %v797 = vpack.c.b16 %v693, %v691
      %v798 = vpack.c.b16 %v696, %v694
      %v799 = vpack.c.b16 %v697, %v695
      %v800 = vpack.c.b16 %v700, %v698
      %v801 = vpack.c.b16 %v701, %v699
      %v802 = vpack.c.b16 %v704, %v702
      %v803 = vpack.c.b16 %v705, %v703
      %v804 = vpack.c.b16 %v708, %v706
      %v805 = vpack.c.b16 %v709, %v707
      %v894 = vunpack.c.l.b16 %v382
      %v895 = vunpack.c.h.b16 %v382
      %v896 = vunpack.c.l.b16 %v383
      %v897 = vunpack.c.l.b16 %v384
      %v898 = vunpack.c.h.b16 %v384
      %v899 = vunpack.c.l.b16 %v385
      %v900 = vunpack.c.l.b16 %v386
      %v901 = vunpack.c.h.b16 %v386
      %v902 = vunpack.c.l.b16 %v387
      %v903 = vunpack.c.l.b16 %v388
      %v904 = vunpack.c.h.b16 %v388
      %v905 = vunpack.c.l.b16 %v389
      %v906 = vunpack.c.l.b16 %v390
      %v907 = vunpack.c.h.b16 %v390
      %v908 = vunpack.c.l.b16 %v391
      %v909 = vunpack.c.l.b16 %v392
      %v910 = vunpack.c.h.b16 %v392
      %v911 = vunpack.c.l.b16 %v393
      %v912 = vunpack.c.l.b16 %v394
      %v913 = vunpack.c.h.b16 %v394
      %v914 = vunpack.c.l.b16 %v395
      %v915 = vunpack.c.l.b16 %v396
      %v916 = vunpack.c.h.b16 %v396
      %v917 = vunpack.c.l.b16 %v397
      %v918 = vunpack.c.l.b16 %v398
      %v919 = vunpack.c.h.b16 %v398
      %v920 = vunpack.c.l.b16 %v399
      %v921 = vunpack.c.l.b16 %v400
      %v922 = vunpack.c.h.b16 %v400
      %v923 = vunpack.c.l.b16 %v401
      %v924 = vunpack.c.l.b16 %v402
      %v925 = vunpack.c.h.b16 %v402
      %v926 = vunpack.c.l.b16 %v403
      %v927 = vunpack.c.l.b16 %v404
      %v928 = vunpack.c.h.b16 %v404
      %v929 = vunpack.c.l.b16 %v405
      %v930 = vunpack.c.l.b16 %v406
      %v931 = vunpack.c.h.b16 %v406
      %v932 = vunpack.c.l.b16 %v407
      %v933 = vunpack.c.l.b16 %v408
      %v934 = vunpack.c.h.b16 %v408
      %v935 = vunpack.c.l.b16 %v409
      %v936 = vunpack.c.l.b16 %v410
      %v937 = vunpack.c.h.b16 %v410
      %v938 = vunpack.c.l.b16 %v411
      %v939 = vunpack.c.l.b16 %v412
      %v940 = vunpack.c.h.b16 %v412
      %v941 = vunpack.c.l.b16 %v413
      %v942 = vunpack.c.l.b16 %v414
      %v943 = vunpack.c.h.b16 %v414
      %v944 = vunpack.c.l.b16 %v415
      %v945 = vunpack.c.l.b16 %v416
      %v946 = vunpack.c.h.b16 %v416
      %v947 = vunpack.c.l.b16 %v417
      %v948 = vunpack.c.l.b16 %v418
      %v949 = vunpack.c.h.b16 %v418
      %v950 = vunpack.c.l.b16 %v419
      %v951 = vunpack.c.l.b16 %v420
      %v952 = vunpack.c.h.b16 %v420
      %v953 = vunpack.c.l.b16 %v421
      %v954 = vpack.c.b16 %v897, %v894
      %v955 = vpack.c.b16 %v898, %v895
      %v956 = vpack.c.b16 %v899, %v896
      %v957 = vpack.c.b16 %v903, %v900
      %v958 = vpack.c.b16 %v904, %v901
      %v959 = vpack.c.b16 %v905, %v902
      %v960 = vpack.c.b16 %v909, %v906
      %v961 = vpack.c.b16 %v910, %v907
      %v962 = vpack.c.b16 %v911, %v908
      %v963 = vpack.c.b16 %v915, %v912
      %v964 = vpack.c.b16 %v916, %v913
      %v965 = vpack.c.b16 %v917, %v914
      %v966 = vpack.c.b16 %v921, %v918
      %v967 = vpack.c.b16 %v922, %v919
      %v968 = vpack.c.b16 %v923, %v920
      %v969 = vpack.c.b16 %v927, %v924
      %v970 = vpack.c.b16 %v928, %v925
      %v971 = vpack.c.b16 %v929, %v926
      %v972 = vpack.c.b16 %v933, %v930
      %v973 = vpack.c.b16 %v934, %v931
      %v974 = vpack.c.b16 %v935, %v932
      %v975 = vpack.c.b16 %v939, %v936
      %v976 = vpack.c.b16 %v940, %v937
      %v977 = vpack.c.b16 %v941, %v938
      %v978 = vpack.c.b16 %v945, %v942
      %v979 = vpack.c.b16 %v946, %v943
      %v980 = vpack.c.b16 %v947, %v944
      %v981 = vpack.c.b16 %v951, %v948
      %v982 = vpack.c.b16 %v952, %v949
      %v983 = vpack.c.b16 %v953, %v950
      %vm1014 = vcmask 261120
      %v1016 = vsel %vm1014, %v711, 0
      %v1019 = vsel %vm1014, %v713, 0
      %v1022 = vsel %vm1014, %v715, 0
      %v1025 = vsel %vm1014, %v717, 0
      %v1028 = vsel %vm1014, %v719, 0
      %v1031 = vsel %vm1014, %v721, 0
      %v1034 = vsel %vm1014, %v723, 0
      %v1037 = vsel %vm1014, %v725, 0
      %v1040 = vsel %vm1014, %v727, 0
      %v1043 = vsel %vm1014, %v729, 0
      %v1046 = vsel %vm1014, %v731, 0
      %v1049 = vsel %vm1014, %v733, 0
      %v1052 = vsel %vm1014, %v735, 0
      %v1055 = vsel %vm1014, %v737, 0
      %v1058 = vsel %vm1014, %v739, 0
      %v1061 = vsel %vm1014, %v741, 0
      %v1064 = vsel %vm1014, %v743, 0
      %v1067 = vsel %vm1014, %v745, 0
      %v1070 = vsel %vm1014, %v747, 0
      %v1073 = vsel %vm1014, %v749, 0
      %v1076 = vsel %vm1014, %v751, 0
      %v1079 = vsel %vm1014, %v753, 0
      %v1082 = vsel %vm1014, %v755, 0
      %v1085 = vsel %vm1014, %v757, 0
      %v1088 = vsel %vm1014, %v759, 0
      %v1091 = vsel %vm1014, %v761, 0
      %v1094 = vsel %vm1014, %v763, 0
      %v1097 = vsel %vm1014, %v765, 0
      %v1100 = vsel %vm1014, %v767, 0
      %v1103 = vsel %vm1014, %v769, 0
      %v1106 = vsel %vm1014, %v771, 0
      %v1109 = vsel %vm1014, %v773, 0
      %v1112 = vsel %vm1014, %v775, 0
      %v1115 = vsel %vm1014, %v777, 0
      %v1118 = vsel %vm1014, %v779, 0
      %v1121 = vsel %vm1014, %v781, 0
      %v1124 = vsel %vm1014, %v783, 0
      %v1127 = vsel %vm1014, %v785, 0
      %v1130 = vsel %vm1014, %v787, 0
      %v1133 = vsel %vm1014, %v789, 0
      %v1136 = vsel %vm1014, %v791, 0
      %v1139 = vsel %vm1014, %v793, 0
      %v1142 = vsel %vm1014, %v795, 0
      %v1145 = vsel %vm1014, %v797, 0
      %v1148 = vsel %vm1014, %v799, 0
      %v1151 = vsel %vm1014, %v801, 0
      %v1154 = vsel %vm1014, %v803, 0
      %v1157 = vsel %vm1014, %v805, 0
      %1159 = vmatpush.bf16.msra.mxu0 %v975
      %1160 = vmatpush.bf16.msra.mxu0 %v972
      %1161 = vmatpush.bf16.msra.mxu0 %v969
      %1162 = vmatpush.bf16.msra.mxu0 %v966
      %1163 = vmatpush.bf16.msra.mxu0 %v963
      %1164 = vmatpush.bf16.msra.mxu0 %v960
      %1165 = vmatpush.bf16.msra.mxu0 %v957
      %1166 = vmatpush.bf16.msra.mxu0 %v954
      %1167 = vmatmul.bf16.gmra.mxu0 %v710
      %v1168 = vpop.f32.mrf.mxu0
      %v1169 = vadd.f32 0.0, %v1168
      %v1170 = vpop.f32.mrf.mxu0
      %v1171 = vadd.f32 0.0, %v1170
      %1172 = vmatmul.bf16.gmra.mxu0 %v712
      %v1173 = vpop.f32.mrf.mxu0
      %v1174 = vadd.f32 0.0, %v1173
      %v1175 = vpop.f32.mrf.mxu0
      %v1176 = vadd.f32 0.0, %v1175
      %1177 = vmatmul.bf16.gmra.mxu0 %v714
      %v1178 = vpop.f32.mrf.mxu0
      %v1179 = vadd.f32 0.0, %v1178
      %v1180 = vpop.f32.mrf.mxu0
      %v1181 = vadd.f32 0.0, %v1180
      %1182 = vmatmul.bf16.gmra.mxu0 %v716
      %v1183 = vpop.f32.mrf.mxu0
      %v1184 = vadd.f32 0.0, %v1183
      %v1185 = vpop.f32.mrf.mxu0
      %v1186 = vadd.f32 0.0, %v1185
      %1187 = vmatmul.bf16.gmra.mxu0 %v718
      %v1188 = vpop.f32.mrf.mxu0
      %v1189 = vadd.f32 0.0, %v1188
      %v1190 = vpop.f32.mrf.mxu0
      %v1191 = vadd.f32 0.0, %v1190
      %1192 = vmatmul.bf16.gmra.mxu0 %v720
      %v1193 = vpop.f32.mrf.mxu0
      %v1194 = vadd.f32 0.0, %v1193
      %v1195 = vpop.f32.mrf.mxu0
      %v1196 = vadd.f32 0.0, %v1195
      %1197 = vmatmul.bf16.gmra.mxu0 %v722
      %v1198 = vpop.f32.mrf.mxu0
      %v1199 = vadd.f32 0.0, %v1198
      %v1200 = vpop.f32.mrf.mxu0
      %v1201 = vadd.f32 0.0, %v1200
      %1202 = vmatmul.bf16.gmra.mxu0 %v724
      %v1203 = vpop.f32.mrf.mxu0
      %v1204 = vadd.f32 0.0, %v1203
      %v1205 = vpop.f32.mrf.mxu0
      %v1206 = vadd.f32 0.0, %v1205
      %1207 = vmatmul.bf16.gmra.mxu0 %v726
      %v1208 = vpop.f32.mrf.mxu0
      %v1209 = vadd.f32 0.0, %v1208
      %v1210 = vpop.f32.mrf.mxu0
      %v1211 = vadd.f32 0.0, %v1210
      %1212 = vmatmul.bf16.gmra.mxu0 %v728
      %v1213 = vpop.f32.mrf.mxu0
      %v1214 = vadd.f32 0.0, %v1213
      %v1215 = vpop.f32.mrf.mxu0
      %v1216 = vadd.f32 0.0, %v1215
      %1217 = vmatmul.bf16.gmra.mxu0 %v730
      %v1218 = vpop.f32.mrf.mxu0
      %v1219 = vadd.f32 0.0, %v1218
      %v1220 = vpop.f32.mrf.mxu0
      %v1221 = vadd.f32 0.0, %v1220
      %1222 = vmatmul.bf16.gmra.mxu0 %v732
      %v1223 = vpop.f32.mrf.mxu0
      %v1224 = vadd.f32 0.0, %v1223
      %v1225 = vpop.f32.mrf.mxu0
      %v1226 = vadd.f32 0.0, %v1225
      %1227 = vmatmul.bf16.gmra.mxu0 %v734
      %v1228 = vpop.f32.mrf.mxu0
      %v1229 = vadd.f32 0.0, %v1228
      %v1230 = vpop.f32.mrf.mxu0
      %v1231 = vadd.f32 0.0, %v1230
      %1232 = vmatmul.bf16.gmra.mxu0 %v736
      %v1233 = vpop.f32.mrf.mxu0
      %v1234 = vadd.f32 0.0, %v1233
      %v1235 = vpop.f32.mrf.mxu0
      %v1236 = vadd.f32 0.0, %v1235
      %1237 = vmatmul.bf16.gmra.mxu0 %v738
      %v1238 = vpop.f32.mrf.mxu0
      %v1239 = vadd.f32 0.0, %v1238
      %v1240 = vpop.f32.mrf.mxu0
      %v1241 = vadd.f32 0.0, %v1240
      %1242 = vmatmul.bf16.gmra.mxu0 %v740
      %v1243 = vpop.f32.mrf.mxu0
      %v1244 = vadd.f32 0.0, %v1243
      %v1245 = vpop.f32.mrf.mxu0
      %v1246 = vadd.f32 0.0, %v1245
      %1247 = vmatmul.bf16.gmra.mxu0 %v742
      %v1248 = vpop.f32.mrf.mxu0
      %v1249 = vadd.f32 0.0, %v1248
      %v1250 = vpop.f32.mrf.mxu0
      %v1251 = vadd.f32 0.0, %v1250
      %1252 = vmatmul.bf16.gmra.mxu0 %v744
      %v1253 = vpop.f32.mrf.mxu0
      %v1254 = vadd.f32 0.0, %v1253
      %v1255 = vpop.f32.mrf.mxu0
      %v1256 = vadd.f32 0.0, %v1255
      %1257 = vmatmul.bf16.gmra.mxu0 %v746
      %v1258 = vpop.f32.mrf.mxu0
      %v1259 = vadd.f32 0.0, %v1258
      %v1260 = vpop.f32.mrf.mxu0
      %v1261 = vadd.f32 0.0, %v1260
      %1262 = vmatmul.bf16.gmra.mxu0 %v748
      %v1263 = vpop.f32.mrf.mxu0
      %v1264 = vadd.f32 0.0, %v1263
      %v1265 = vpop.f32.mrf.mxu0
      %v1266 = vadd.f32 0.0, %v1265
      %1267 = vmatmul.bf16.gmra.mxu0 %v750
      %v1268 = vpop.f32.mrf.mxu0
      %v1269 = vadd.f32 0.0, %v1268
      %v1270 = vpop.f32.mrf.mxu0
      %v1271 = vadd.f32 0.0, %v1270
      %1272 = vmatmul.bf16.gmra.mxu0 %v752
      %v1273 = vpop.f32.mrf.mxu0
      %v1274 = vadd.f32 0.0, %v1273
      %v1275 = vpop.f32.mrf.mxu0
      %v1276 = vadd.f32 0.0, %v1275
      %1277 = vmatmul.bf16.gmra.mxu0 %v754
      %v1278 = vpop.f32.mrf.mxu0
      %v1279 = vadd.f32 0.0, %v1278
      %v1280 = vpop.f32.mrf.mxu0
      %v1281 = vadd.f32 0.0, %v1280
      %1282 = vmatmul.bf16.gmra.mxu0 %v756
      %v1283 = vpop.f32.mrf.mxu0
      %v1284 = vadd.f32 0.0, %v1283
      %v1285 = vpop.f32.mrf.mxu0
      %v1286 = vadd.f32 0.0, %v1285
      %1287 = vmatmul.bf16.gmra.mxu0 %v758
      %v1288 = vpop.f32.mrf.mxu0
      %v1289 = vadd.f32 0.0, %v1288
      %v1290 = vpop.f32.mrf.mxu0
      %v1291 = vadd.f32 0.0, %v1290
      %1292 = vmatmul.bf16.gmra.mxu0 %v760
      %v1293 = vpop.f32.mrf.mxu0
      %v1294 = vadd.f32 0.0, %v1293
      %v1295 = vpop.f32.mrf.mxu0
      %v1296 = vadd.f32 0.0, %v1295
      %1297 = vmatmul.bf16.gmra.mxu0 %v762
      %v1298 = vpop.f32.mrf.mxu0
      %v1299 = vadd.f32 0.0, %v1298
      %v1300 = vpop.f32.mrf.mxu0
      %v1301 = vadd.f32 0.0, %v1300
      %1302 = vmatmul.bf16.gmra.mxu0 %v764
      %v1303 = vpop.f32.mrf.mxu0
      %v1304 = vadd.f32 0.0, %v1303
      %v1305 = vpop.f32.mrf.mxu0
      %v1306 = vadd.f32 0.0, %v1305
      %1307 = vmatmul.bf16.gmra.mxu0 %v766
      %v1308 = vpop.f32.mrf.mxu0
      %v1309 = vadd.f32 0.0, %v1308
      %v1310 = vpop.f32.mrf.mxu0
      %v1311 = vadd.f32 0.0, %v1310
      %1312 = vmatmul.bf16.gmra.mxu0 %v768
      %v1313 = vpop.f32.mrf.mxu0
      %v1314 = vadd.f32 0.0, %v1313
      %v1315 = vpop.f32.mrf.mxu0
      %v1316 = vadd.f32 0.0, %v1315
      %1317 = vmatmul.bf16.gmra.mxu0 %v770
      %v1318 = vpop.f32.mrf.mxu0
      %v1319 = vadd.f32 0.0, %v1318
      %v1320 = vpop.f32.mrf.mxu0
      %v1321 = vadd.f32 0.0, %v1320
      %1322 = vmatmul.bf16.gmra.mxu0 %v772
      %v1323 = vpop.f32.mrf.mxu0
      %v1324 = vadd.f32 0.0, %v1323
      %v1325 = vpop.f32.mrf.mxu0
      %v1326 = vadd.f32 0.0, %v1325
      %1327 = vmatmul.bf16.gmra.mxu0 %v774
      %v1328 = vpop.f32.mrf.mxu0
      %v1329 = vadd.f32 0.0, %v1328
      %v1330 = vpop.f32.mrf.mxu0
      %v1331 = vadd.f32 0.0, %v1330
      %1332 = vmatmul.bf16.gmra.mxu0 %v776
      %v1333 = vpop.f32.mrf.mxu0
      %v1334 = vadd.f32 0.0, %v1333
      %v1335 = vpop.f32.mrf.mxu0
      %v1336 = vadd.f32 0.0, %v1335
      %1337 = vmatmul.bf16.gmra.mxu0 %v778
      %v1338 = vpop.f32.mrf.mxu0
      %v1339 = vadd.f32 0.0, %v1338
      %v1340 = vpop.f32.mrf.mxu0
      %v1341 = vadd.f32 0.0, %v1340
      %1342 = vmatmul.bf16.gmra.mxu0 %v780
      %v1343 = vpop.f32.mrf.mxu0
      %v1344 = vadd.f32 0.0, %v1343
      %v1345 = vpop.f32.mrf.mxu0
      %v1346 = vadd.f32 0.0, %v1345
      %1347 = vmatmul.bf16.gmra.mxu0 %v782
      %v1348 = vpop.f32.mrf.mxu0
      %v1349 = vadd.f32 0.0, %v1348
      %v1350 = vpop.f32.mrf.mxu0
      %v1351 = vadd.f32 0.0, %v1350
      %1352 = vmatmul.bf16.gmra.mxu0 %v784
      %v1353 = vpop.f32.mrf.mxu0
      %v1354 = vadd.f32 0.0, %v1353
      %v1355 = vpop.f32.mrf.mxu0
      %v1356 = vadd.f32 0.0, %v1355
      %1357 = vmatmul.bf16.gmra.mxu0 %v786
      %v1358 = vpop.f32.mrf.mxu0
      %v1359 = vadd.f32 0.0, %v1358
      %v1360 = vpop.f32.mrf.mxu0
      %v1361 = vadd.f32 0.0, %v1360
      %1362 = vmatmul.bf16.gmra.mxu0 %v788
      %v1363 = vpop.f32.mrf.mxu0
      %v1364 = vadd.f32 0.0, %v1363
      %v1365 = vpop.f32.mrf.mxu0
      %v1366 = vadd.f32 0.0, %v1365
      %1367 = vmatmul.bf16.gmra.mxu0 %v790
      %v1368 = vpop.f32.mrf.mxu0
      %v1369 = vadd.f32 0.0, %v1368
      %v1370 = vpop.f32.mrf.mxu0
      %v1371 = vadd.f32 0.0, %v1370
      %1372 = vmatmul.bf16.gmra.mxu0 %v792
      %v1373 = vpop.f32.mrf.mxu0
      %v1374 = vadd.f32 0.0, %v1373
      %v1375 = vpop.f32.mrf.mxu0
      %v1376 = vadd.f32 0.0, %v1375
      %1377 = vmatmul.bf16.gmra.mxu0 %v794
      %v1378 = vpop.f32.mrf.mxu0
      %v1379 = vadd.f32 0.0, %v1378
      %v1380 = vpop.f32.mrf.mxu0
      %v1381 = vadd.f32 0.0, %v1380
      %1382 = vmatmul.bf16.gmra.mxu0 %v796
      %v1383 = vpop.f32.mrf.mxu0
      %v1384 = vadd.f32 0.0, %v1383
      %v1385 = vpop.f32.mrf.mxu0
      %v1386 = vadd.f32 0.0, %v1385
      %1387 = vmatmul.bf16.gmra.mxu0 %v798
      %v1388 = vpop.f32.mrf.mxu0
      %v1389 = vadd.f32 0.0, %v1388
      %v1390 = vpop.f32.mrf.mxu0
      %v1391 = vadd.f32 0.0, %v1390
      %1392 = vmatmul.bf16.gmra.mxu0 %v800
      %v1393 = vpop.f32.mrf.mxu0
      %v1394 = vadd.f32 0.0, %v1393
      %v1395 = vpop.f32.mrf.mxu0
      %v1396 = vadd.f32 0.0, %v1395
      %1397 = vmatmul.bf16.gmra.mxu0 %v802
      %v1398 = vpop.f32.mrf.mxu0
      %v1399 = vadd.f32 0.0, %v1398
      %v1400 = vpop.f32.mrf.mxu0
      %v1401 = vadd.f32 0.0, %v1400
      %1402 = vmatmul.bf16.gmra.mxu0 %v804
      %v1403 = vpop.f32.mrf.mxu0
      %v1404 = vadd.f32 0.0, %v1403
      %v1405 = vpop.f32.mrf.mxu0
      %v1406 = vadd.f32 0.0, %v1405
      %1407 = vdwg.mxu0
      %1408 = vmatpush.bf16.msra.mxu0 0
      %1409 = vmatpush.bf16.msra.mxu0 0
      %1410 = vmatpush.bf16.msra.mxu0 0
      %1411 = vmatpush.bf16.msra.mxu0 0
      %1412 = vmatpush.bf16.msra.mxu0 0
      %1413 = vmatpush.bf16.msra.mxu0 0
      %1414 = vmatpush.bf16.msra.mxu0 %v981
      %1415 = vmatpush.bf16.msra.mxu0 %v978
      %1416 = vmatmul.bf16.gmra.mxu0 %v1016
      %v1417 = vpop.f32.mrf.mxu0
      %v1418 = vadd.f32 %v1169, %v1417
      %v1419 = vpop.f32.mrf.mxu0
      %v1420 = vadd.f32 %v1171, %v1419
      %1421 = vmatmul.bf16.gmra.mxu0 %v1019
      %v1422 = vpop.f32.mrf.mxu0
      %v1423 = vadd.f32 %v1174, %v1422
      %v1424 = vpop.f32.mrf.mxu0
      %v1425 = vadd.f32 %v1176, %v1424
      %1426 = vmatmul.bf16.gmra.mxu0 %v1022
      %v1427 = vpop.f32.mrf.mxu0
      %v1428 = vadd.f32 %v1179, %v1427
      %v1429 = vpop.f32.mrf.mxu0
      %v1430 = vadd.f32 %v1181, %v1429
      %1431 = vmatmul.bf16.gmra.mxu0 %v1025
      %v1432 = vpop.f32.mrf.mxu0
      %v1433 = vadd.f32 %v1184, %v1432
      %v1434 = vpop.f32.mrf.mxu0
      %v1435 = vadd.f32 %v1186, %v1434
      %1436 = vmatmul.bf16.gmra.mxu0 %v1028
      %v1437 = vpop.f32.mrf.mxu0
      %v1438 = vadd.f32 %v1189, %v1437
      %v1439 = vpop.f32.mrf.mxu0
      %v1440 = vadd.f32 %v1191, %v1439
      %1441 = vmatmul.bf16.gmra.mxu0 %v1031
      %v1442 = vpop.f32.mrf.mxu0
      %v1443 = vadd.f32 %v1194, %v1442
      %v1444 = vpop.f32.mrf.mxu0
      %v1445 = vadd.f32 %v1196, %v1444
      %1446 = vmatmul.bf16.gmra.mxu0 %v1034
      %v1447 = vpop.f32.mrf.mxu0
      %v1448 = vadd.f32 %v1199, %v1447
      %v1449 = vpop.f32.mrf.mxu0
      %v1450 = vadd.f32 %v1201, %v1449
      %1451 = vmatmul.bf16.gmra.mxu0 %v1037
      %v1452 = vpop.f32.mrf.mxu0
      %v1453 = vadd.f32 %v1204, %v1452
      %v1454 = vpop.f32.mrf.mxu0
      %v1455 = vadd.f32 %v1206, %v1454
      %1456 = vmatmul.bf16.gmra.mxu0 %v1040
      %v1457 = vpop.f32.mrf.mxu0
      %v1458 = vadd.f32 %v1209, %v1457
      %v1459 = vpop.f32.mrf.mxu0
      %v1460 = vadd.f32 %v1211, %v1459
      %1461 = vmatmul.bf16.gmra.mxu0 %v1043
      %v1462 = vpop.f32.mrf.mxu0
      %v1463 = vadd.f32 %v1214, %v1462
      %v1464 = vpop.f32.mrf.mxu0
      %v1465 = vadd.f32 %v1216, %v1464
      %1466 = vmatmul.bf16.gmra.mxu0 %v1046
      %v1467 = vpop.f32.mrf.mxu0
      %v1468 = vadd.f32 %v1219, %v1467
      %v1469 = vpop.f32.mrf.mxu0
      %v1470 = vadd.f32 %v1221, %v1469
      %1471 = vmatmul.bf16.gmra.mxu0 %v1049
      %v1472 = vpop.f32.mrf.mxu0
      %v1473 = vadd.f32 %v1224, %v1472
      %v1474 = vpop.f32.mrf.mxu0
      %v1475 = vadd.f32 %v1226, %v1474
      %1476 = vmatmul.bf16.gmra.mxu0 %v1052
      %v1477 = vpop.f32.mrf.mxu0
      %v1478 = vadd.f32 %v1229, %v1477
      %v1479 = vpop.f32.mrf.mxu0
      %v1480 = vadd.f32 %v1231, %v1479
      %1481 = vmatmul.bf16.gmra.mxu0 %v1055
      %v1482 = vpop.f32.mrf.mxu0
      %v1483 = vadd.f32 %v1234, %v1482
      %v1484 = vpop.f32.mrf.mxu0
      %v1485 = vadd.f32 %v1236, %v1484
      %1486 = vmatmul.bf16.gmra.mxu0 %v1058
      %v1487 = vpop.f32.mrf.mxu0
      %v1488 = vadd.f32 %v1239, %v1487
      %v1489 = vpop.f32.mrf.mxu0
      %v1490 = vadd.f32 %v1241, %v1489
      %1491 = vmatmul.bf16.gmra.mxu0 %v1061
      %v1492 = vpop.f32.mrf.mxu0
      %v1493 = vadd.f32 %v1244, %v1492
      %v1494 = vpop.f32.mrf.mxu0
      %v1495 = vadd.f32 %v1246, %v1494
      %1496 = vmatmul.bf16.gmra.mxu0 %v1064
      %v1497 = vpop.f32.mrf.mxu0
      %v1498 = vadd.f32 %v1249, %v1497
      %v1499 = vpop.f32.mrf.mxu0
      %v1500 = vadd.f32 %v1251, %v1499
      %1501 = vmatmul.bf16.gmra.mxu0 %v1067
      %v1502 = vpop.f32.mrf.mxu0
      %v1503 = vadd.f32 %v1254, %v1502
      %v1504 = vpop.f32.mrf.mxu0
      %v1505 = vadd.f32 %v1256, %v1504
      %1506 = vmatmul.bf16.gmra.mxu0 %v1070
      %v1507 = vpop.f32.mrf.mxu0
      %v1508 = vadd.f32 %v1259, %v1507
      %v1509 = vpop.f32.mrf.mxu0
      %v1510 = vadd.f32 %v1261, %v1509
      %1511 = vmatmul.bf16.gmra.mxu0 %v1073
      %v1512 = vpop.f32.mrf.mxu0
      %v1513 = vadd.f32 %v1264, %v1512
      %v1514 = vpop.f32.mrf.mxu0
      %v1515 = vadd.f32 %v1266, %v1514
      %1516 = vmatmul.bf16.gmra.mxu0 %v1076
      %v1517 = vpop.f32.mrf.mxu0
      %v1518 = vadd.f32 %v1269, %v1517
      %v1519 = vpop.f32.mrf.mxu0
      %v1520 = vadd.f32 %v1271, %v1519
      %1521 = vmatmul.bf16.gmra.mxu0 %v1079
      %v1522 = vpop.f32.mrf.mxu0
      %v1523 = vadd.f32 %v1274, %v1522
      %v1524 = vpop.f32.mrf.mxu0
      %v1525 = vadd.f32 %v1276, %v1524
      %1526 = vmatmul.bf16.gmra.mxu0 %v1082
      %v1527 = vpop.f32.mrf.mxu0
      %v1528 = vadd.f32 %v1279, %v1527
      %v1529 = vpop.f32.mrf.mxu0
      %v1530 = vadd.f32 %v1281, %v1529
      %1531 = vmatmul.bf16.gmra.mxu0 %v1085
      %v1532 = vpop.f32.mrf.mxu0
      %v1533 = vadd.f32 %v1284, %v1532
      %v1534 = vpop.f32.mrf.mxu0
      %v1535 = vadd.f32 %v1286, %v1534
      %1536 = vmatmul.bf16.gmra.mxu0 %v1088
      %v1537 = vpop.f32.mrf.mxu0
      %v1538 = vadd.f32 %v1289, %v1537
      %v1539 = vpop.f32.mrf.mxu0
      %v1540 = vadd.f32 %v1291, %v1539
      %1541 = vmatmul.bf16.gmra.mxu0 %v1091
      %v1542 = vpop.f32.mrf.mxu0
      %v1543 = vadd.f32 %v1294, %v1542
      %v1544 = vpop.f32.mrf.mxu0
      %v1545 = vadd.f32 %v1296, %v1544
      %1546 = vmatmul.bf16.gmra.mxu0 %v1094
      %v1547 = vpop.f32.mrf.mxu0
      %v1548 = vadd.f32 %v1299, %v1547
      %v1549 = vpop.f32.mrf.mxu0
      %v1550 = vadd.f32 %v1301, %v1549
      %1551 = vmatmul.bf16.gmra.mxu0 %v1097
      %v1552 = vpop.f32.mrf.mxu0
      %v1553 = vadd.f32 %v1304, %v1552
      %v1554 = vpop.f32.mrf.mxu0
      %v1555 = vadd.f32 %v1306, %v1554
      %1556 = vmatmul.bf16.gmra.mxu0 %v1100
      %v1557 = vpop.f32.mrf.mxu0
      %v1558 = vadd.f32 %v1309, %v1557
      %v1559 = vpop.f32.mrf.mxu0
      %v1560 = vadd.f32 %v1311, %v1559
      %1561 = vmatmul.bf16.gmra.mxu0 %v1103
      %v1562 = vpop.f32.mrf.mxu0
      %v1563 = vadd.f32 %v1314, %v1562
      %v1564 = vpop.f32.mrf.mxu0
      %v1565 = vadd.f32 %v1316, %v1564
      %1566 = vmatmul.bf16.gmra.mxu0 %v1106
      %v1567 = vpop.f32.mrf.mxu0
      %v1568 = vadd.f32 %v1319, %v1567
      %v1569 = vpop.f32.mrf.mxu0
      %v1570 = vadd.f32 %v1321, %v1569
      %1571 = vmatmul.bf16.gmra.mxu0 %v1109
      %v1572 = vpop.f32.mrf.mxu0
      %v1573 = vadd.f32 %v1324, %v1572
      %v1574 = vpop.f32.mrf.mxu0
      %v1575 = vadd.f32 %v1326, %v1574
      %1576 = vmatmul.bf16.gmra.mxu0 %v1112
      %v1577 = vpop.f32.mrf.mxu0
      %v1578 = vadd.f32 %v1329, %v1577
      %v1579 = vpop.f32.mrf.mxu0
      %v1580 = vadd.f32 %v1331, %v1579
      %1581 = vmatmul.bf16.gmra.mxu0 %v1115
      %v1582 = vpop.f32.mrf.mxu0
      %v1583 = vadd.f32 %v1334, %v1582
      %v1584 = vpop.f32.mrf.mxu0
      %v1585 = vadd.f32 %v1336, %v1584
      %1586 = vmatmul.bf16.gmra.mxu0 %v1118
      %v1587 = vpop.f32.mrf.mxu0
      %v1588 = vadd.f32 %v1339, %v1587
      %v1589 = vpop.f32.mrf.mxu0
      %v1590 = vadd.f32 %v1341, %v1589
      %1591 = vmatmul.bf16.gmra.mxu0 %v1121
      %v1592 = vpop.f32.mrf.mxu0
      %v1593 = vadd.f32 %v1344, %v1592
      %v1594 = vpop.f32.mrf.mxu0
      %v1595 = vadd.f32 %v1346, %v1594
      %1596 = vmatmul.bf16.gmra.mxu0 %v1124
      %v1597 = vpop.f32.mrf.mxu0
      %v1598 = vadd.f32 %v1349, %v1597
      %v1599 = vpop.f32.mrf.mxu0
      %v1600 = vadd.f32 %v1351, %v1599
      %1601 = vmatmul.bf16.gmra.mxu0 %v1127
      %v1602 = vpop.f32.mrf.mxu0
      %v1603 = vadd.f32 %v1354, %v1602
      %v1604 = vpop.f32.mrf.mxu0
      %v1605 = vadd.f32 %v1356, %v1604
      %1606 = vmatmul.bf16.gmra.mxu0 %v1130
      %v1607 = vpop.f32.mrf.mxu0
      %v1608 = vadd.f32 %v1359, %v1607
      %v1609 = vpop.f32.mrf.mxu0
      %v1610 = vadd.f32 %v1361, %v1609
      %1611 = vmatmul.bf16.gmra.mxu0 %v1133
      %v1612 = vpop.f32.mrf.mxu0
      %v1613 = vadd.f32 %v1364, %v1612
      %v1614 = vpop.f32.mrf.mxu0
      %v1615 = vadd.f32 %v1366, %v1614
      %1616 = vmatmul.bf16.gmra.mxu0 %v1136
      %v1617 = vpop.f32.mrf.mxu0
      %v1618 = vadd.f32 %v1369, %v1617
      %v1619 = vpop.f32.mrf.mxu0
      %v1620 = vadd.f32 %v1371, %v1619
      %1621 = vmatmul.bf16.gmra.mxu0 %v1139
      %v1622 = vpop.f32.mrf.mxu0
      %v1623 = vadd.f32 %v1374, %v1622
      %v1624 = vpop.f32.mrf.mxu0
      %v1625 = vadd.f32 %v1376, %v1624
      %1626 = vmatmul.bf16.gmra.mxu0 %v1142
      %v1627 = vpop.f32.mrf.mxu0
      %v1628 = vadd.f32 %v1379, %v1627
      %v1629 = vpop.f32.mrf.mxu0
      %v1630 = vadd.f32 %v1381, %v1629
      %1631 = vmatmul.bf16.gmra.mxu0 %v1145
      %v1632 = vpop.f32.mrf.mxu0
      %v1633 = vadd.f32 %v1384, %v1632
      %v1634 = vpop.f32.mrf.mxu0
      %v1635 = vadd.f32 %v1386, %v1634
      %1636 = vmatmul.bf16.gmra.mxu0 %v1148
      %v1637 = vpop.f32.mrf.mxu0
      %v1638 = vadd.f32 %v1389, %v1637
      %v1639 = vpop.f32.mrf.mxu0
      %v1640 = vadd.f32 %v1391, %v1639
      %1641 = vmatmul.bf16.gmra.mxu0 %v1151
      %v1642 = vpop.f32.mrf.mxu0
      %v1643 = vadd.f32 %v1394, %v1642
      %v1644 = vpop.f32.mrf.mxu0
      %v1645 = vadd.f32 %v1396, %v1644
      %1646 = vmatmul.bf16.gmra.mxu0 %v1154
      %v1647 = vpop.f32.mrf.mxu0
      %v1648 = vadd.f32 %v1399, %v1647
      %v1649 = vpop.f32.mrf.mxu0
      %v1650 = vadd.f32 %v1401, %v1649
      %1651 = vmatmul.bf16.gmra.mxu0 %v1157
      %v1652 = vpop.f32.mrf.mxu0
      %v1653 = vadd.f32 %v1404, %v1652
      %v1654 = vpop.f32.mrf.mxu0
      %v1655 = vadd.f32 %v1406, %v1654
      %1656 = vdwg.mxu0
      %1657 = vmatpush.bf16.msra.mxu0 %v976
      %1658 = vmatpush.bf16.msra.mxu0 %v973
      %1659 = vmatpush.bf16.msra.mxu0 %v970
      %1660 = vmatpush.bf16.msra.mxu0 %v967
      %1661 = vmatpush.bf16.msra.mxu0 %v964
      %1662 = vmatpush.bf16.msra.mxu0 %v961
      %1663 = vmatpush.bf16.msra.mxu0 %v958
      %1664 = vmatpush.bf16.msra.mxu0 %v955
      %1665 = vmatmul.bf16.gmra.mxu0 %v710
      %v1666 = vpop.f32.mrf.mxu0
      %v1667 = vadd.f32 0.0, %v1666
      %v1668 = vpop.f32.mrf.mxu0
      %v1669 = vadd.f32 0.0, %v1668
      %1670 = vmatmul.bf16.gmra.mxu0 %v712
      %v1671 = vpop.f32.mrf.mxu0
      %v1672 = vadd.f32 0.0, %v1671
      %v1673 = vpop.f32.mrf.mxu0
      %v1674 = vadd.f32 0.0, %v1673
      %1675 = vmatmul.bf16.gmra.mxu0 %v714
      %v1676 = vpop.f32.mrf.mxu0
      %v1677 = vadd.f32 0.0, %v1676
      %v1678 = vpop.f32.mrf.mxu0
      %v1679 = vadd.f32 0.0, %v1678
      %1680 = vmatmul.bf16.gmra.mxu0 %v716
      %v1681 = vpop.f32.mrf.mxu0
      %v1682 = vadd.f32 0.0, %v1681
      %v1683 = vpop.f32.mrf.mxu0
      %v1684 = vadd.f32 0.0, %v1683
      %1685 = vmatmul.bf16.gmra.mxu0 %v718
      %v1686 = vpop.f32.mrf.mxu0
      %v1687 = vadd.f32 0.0, %v1686
      %v1688 = vpop.f32.mrf.mxu0
      %v1689 = vadd.f32 0.0, %v1688
      %1690 = vmatmul.bf16.gmra.mxu0 %v720
      %v1691 = vpop.f32.mrf.mxu0
      %v1692 = vadd.f32 0.0, %v1691
      %v1693 = vpop.f32.mrf.mxu0
      %v1694 = vadd.f32 0.0, %v1693
      %1695 = vmatmul.bf16.gmra.mxu0 %v722
      %v1696 = vpop.f32.mrf.mxu0
      %v1697 = vadd.f32 0.0, %v1696
      %v1698 = vpop.f32.mrf.mxu0
      %v1699 = vadd.f32 0.0, %v1698
      %1700 = vmatmul.bf16.gmra.mxu0 %v724
      %v1701 = vpop.f32.mrf.mxu0
      %v1702 = vadd.f32 0.0, %v1701
      %v1703 = vpop.f32.mrf.mxu0
      %v1704 = vadd.f32 0.0, %v1703
      %1705 = vmatmul.bf16.gmra.mxu0 %v726
      %v1706 = vpop.f32.mrf.mxu0
      %v1707 = vadd.f32 0.0, %v1706
      %v1708 = vpop.f32.mrf.mxu0
      %v1709 = vadd.f32 0.0, %v1708
      %1710 = vmatmul.bf16.gmra.mxu0 %v728
      %v1711 = vpop.f32.mrf.mxu0
      %v1712 = vadd.f32 0.0, %v1711
      %v1713 = vpop.f32.mrf.mxu0
      %v1714 = vadd.f32 0.0, %v1713
      %1715 = vmatmul.bf16.gmra.mxu0 %v730
      %v1716 = vpop.f32.mrf.mxu0
      %v1717 = vadd.f32 0.0, %v1716
      %v1718 = vpop.f32.mrf.mxu0
      %v1719 = vadd.f32 0.0, %v1718
      %1720 = vmatmul.bf16.gmra.mxu0 %v732
      %v1721 = vpop.f32.mrf.mxu0
      %v1722 = vadd.f32 0.0, %v1721
      %v1723 = vpop.f32.mrf.mxu0
      %v1724 = vadd.f32 0.0, %v1723
      %1725 = vmatmul.bf16.gmra.mxu0 %v734
      %v1726 = vpop.f32.mrf.mxu0
      %v1727 = vadd.f32 0.0, %v1726
      %v1728 = vpop.f32.mrf.mxu0
      %v1729 = vadd.f32 0.0, %v1728
      %1730 = vmatmul.bf16.gmra.mxu0 %v736
      %v1731 = vpop.f32.mrf.mxu0
      %v1732 = vadd.f32 0.0, %v1731
      %v1733 = vpop.f32.mrf.mxu0
      %v1734 = vadd.f32 0.0, %v1733
      %1735 = vmatmul.bf16.gmra.mxu0 %v738
      %v1736 = vpop.f32.mrf.mxu0
      %v1737 = vadd.f32 0.0, %v1736
      %v1738 = vpop.f32.mrf.mxu0
      %v1739 = vadd.f32 0.0, %v1738
      %1740 = vmatmul.bf16.gmra.mxu0 %v740
      %v1741 = vpop.f32.mrf.mxu0
      %v1742 = vadd.f32 0.0, %v1741
      %v1743 = vpop.f32.mrf.mxu0
      %v1744 = vadd.f32 0.0, %v1743
      %1745 = vmatmul.bf16.gmra.mxu0 %v742
      %v1746 = vpop.f32.mrf.mxu0
      %v1747 = vadd.f32 0.0, %v1746
      %v1748 = vpop.f32.mrf.mxu0
      %v1749 = vadd.f32 0.0, %v1748
      %1750 = vmatmul.bf16.gmra.mxu0 %v744
      %v1751 = vpop.f32.mrf.mxu0
      %v1752 = vadd.f32 0.0, %v1751
      %v1753 = vpop.f32.mrf.mxu0
      %v1754 = vadd.f32 0.0, %v1753
      %1755 = vmatmul.bf16.gmra.mxu0 %v746
      %v1756 = vpop.f32.mrf.mxu0
      %v1757 = vadd.f32 0.0, %v1756
      %v1758 = vpop.f32.mrf.mxu0
      %v1759 = vadd.f32 0.0, %v1758
      %1760 = vmatmul.bf16.gmra.mxu0 %v748
      %v1761 = vpop.f32.mrf.mxu0
      %v1762 = vadd.f32 0.0, %v1761
      %v1763 = vpop.f32.mrf.mxu0
      %v1764 = vadd.f32 0.0, %v1763
      %1765 = vmatmul.bf16.gmra.mxu0 %v750
      %v1766 = vpop.f32.mrf.mxu0
      %v1767 = vadd.f32 0.0, %v1766
      %v1768 = vpop.f32.mrf.mxu0
      %v1769 = vadd.f32 0.0, %v1768
      %1770 = vmatmul.bf16.gmra.mxu0 %v752
      %v1771 = vpop.f32.mrf.mxu0
      %v1772 = vadd.f32 0.0, %v1771
      %v1773 = vpop.f32.mrf.mxu0
      %v1774 = vadd.f32 0.0, %v1773
      %1775 = vmatmul.bf16.gmra.mxu0 %v754
      %v1776 = vpop.f32.mrf.mxu0
      %v1777 = vadd.f32 0.0, %v1776
      %v1778 = vpop.f32.mrf.mxu0
      %v1779 = vadd.f32 0.0, %v1778
      %1780 = vmatmul.bf16.gmra.mxu0 %v756
      %v1781 = vpop.f32.mrf.mxu0
      %v1782 = vadd.f32 0.0, %v1781
      %v1783 = vpop.f32.mrf.mxu0
      %v1784 = vadd.f32 0.0, %v1783
      %1785 = vmatmul.bf16.gmra.mxu0 %v758
      %v1786 = vpop.f32.mrf.mxu0
      %v1787 = vadd.f32 0.0, %v1786
      %v1788 = vpop.f32.mrf.mxu0
      %v1789 = vadd.f32 0.0, %v1788
      %1790 = vmatmul.bf16.gmra.mxu0 %v760
      %v1791 = vpop.f32.mrf.mxu0
      %v1792 = vadd.f32 0.0, %v1791
      %v1793 = vpop.f32.mrf.mxu0
      %v1794 = vadd.f32 0.0, %v1793
      %1795 = vmatmul.bf16.gmra.mxu0 %v762
      %v1796 = vpop.f32.mrf.mxu0
      %v1797 = vadd.f32 0.0, %v1796
      %v1798 = vpop.f32.mrf.mxu0
      %v1799 = vadd.f32 0.0, %v1798
      %1800 = vmatmul.bf16.gmra.mxu0 %v764
      %v1801 = vpop.f32.mrf.mxu0
      %v1802 = vadd.f32 0.0, %v1801
      %v1803 = vpop.f32.mrf.mxu0
      %v1804 = vadd.f32 0.0, %v1803
      %1805 = vmatmul.bf16.gmra.mxu0 %v766
      %v1806 = vpop.f32.mrf.mxu0
      %v1807 = vadd.f32 0.0, %v1806
      %v1808 = vpop.f32.mrf.mxu0
      %v1809 = vadd.f32 0.0, %v1808
      %1810 = vmatmul.bf16.gmra.mxu0 %v768
      %v1811 = vpop.f32.mrf.mxu0
      %v1812 = vadd.f32 0.0, %v1811
      %v1813 = vpop.f32.mrf.mxu0
      %v1814 = vadd.f32 0.0, %v1813
      %1815 = vmatmul.bf16.gmra.mxu0 %v770
      %v1816 = vpop.f32.mrf.mxu0
      %v1817 = vadd.f32 0.0, %v1816
      %v1818 = vpop.f32.mrf.mxu0
      %v1819 = vadd.f32 0.0, %v1818
      %1820 = vmatmul.bf16.gmra.mxu0 %v772
      %v1821 = vpop.f32.mrf.mxu0
      %v1822 = vadd.f32 0.0, %v1821
      %v1823 = vpop.f32.mrf.mxu0
      %v1824 = vadd.f32 0.0, %v1823
      %1825 = vmatmul.bf16.gmra.mxu0 %v774
      %v1826 = vpop.f32.mrf.mxu0
      %v1827 = vadd.f32 0.0, %v1826
      %v1828 = vpop.f32.mrf.mxu0
      %v1829 = vadd.f32 0.0, %v1828
      %1830 = vmatmul.bf16.gmra.mxu0 %v776
      %v1831 = vpop.f32.mrf.mxu0
      %v1832 = vadd.f32 0.0, %v1831
      %v1833 = vpop.f32.mrf.mxu0
      %v1834 = vadd.f32 0.0, %v1833
      %1835 = vmatmul.bf16.gmra.mxu0 %v778
      %v1836 = vpop.f32.mrf.mxu0
      %v1837 = vadd.f32 0.0, %v1836
      %v1838 = vpop.f32.mrf.mxu0
      %v1839 = vadd.f32 0.0, %v1838
      %1840 = vmatmul.bf16.gmra.mxu0 %v780
      %v1841 = vpop.f32.mrf.mxu0
      %v1842 = vadd.f32 0.0, %v1841
      %v1843 = vpop.f32.mrf.mxu0
      %v1844 = vadd.f32 0.0, %v1843
      %1845 = vmatmul.bf16.gmra.mxu0 %v782
      %v1846 = vpop.f32.mrf.mxu0
      %v1847 = vadd.f32 0.0, %v1846
      %v1848 = vpop.f32.mrf.mxu0
      %v1849 = vadd.f32 0.0, %v1848
      %1850 = vmatmul.bf16.gmra.mxu0 %v784
      %v1851 = vpop.f32.mrf.mxu0
      %v1852 = vadd.f32 0.0, %v1851
      %v1853 = vpop.f32.mrf.mxu0
      %v1854 = vadd.f32 0.0, %v1853
      %1855 = vmatmul.bf16.gmra.mxu0 %v786
      %v1856 = vpop.f32.mrf.mxu0
      %v1857 = vadd.f32 0.0, %v1856
      %v1858 = vpop.f32.mrf.mxu0
      %v1859 = vadd.f32 0.0, %v1858
      %1860 = vmatmul.bf16.gmra.mxu0 %v788
      %v1861 = vpop.f32.mrf.mxu0
      %v1862 = vadd.f32 0.0, %v1861
      %v1863 = vpop.f32.mrf.mxu0
      %v1864 = vadd.f32 0.0, %v1863
      %1865 = vmatmul.bf16.gmra.mxu0 %v790
      %v1866 = vpop.f32.mrf.mxu0
      %v1867 = vadd.f32 0.0, %v1866
      %v1868 = vpop.f32.mrf.mxu0
      %v1869 = vadd.f32 0.0, %v1868
      %1870 = vmatmul.bf16.gmra.mxu0 %v792
      %v1871 = vpop.f32.mrf.mxu0
      %v1872 = vadd.f32 0.0, %v1871
      %v1873 = vpop.f32.mrf.mxu0
      %v1874 = vadd.f32 0.0, %v1873
      %1875 = vmatmul.bf16.gmra.mxu0 %v794
      %v1876 = vpop.f32.mrf.mxu0
      %v1877 = vadd.f32 0.0, %v1876
      %v1878 = vpop.f32.mrf.mxu0
      %v1879 = vadd.f32 0.0, %v1878
      %1880 = vmatmul.bf16.gmra.mxu0 %v796
      %v1881 = vpop.f32.mrf.mxu0
      %v1882 = vadd.f32 0.0, %v1881
      %v1883 = vpop.f32.mrf.mxu0
      %v1884 = vadd.f32 0.0, %v1883
      %1885 = vmatmul.bf16.gmra.mxu0 %v798
      %v1886 = vpop.f32.mrf.mxu0
      %v1887 = vadd.f32 0.0, %v1886
      %v1888 = vpop.f32.mrf.mxu0
      %v1889 = vadd.f32 0.0, %v1888
      %1890 = vmatmul.bf16.gmra.mxu0 %v800
      %v1891 = vpop.f32.mrf.mxu0
      %v1892 = vadd.f32 0.0, %v1891
      %v1893 = vpop.f32.mrf.mxu0
      %v1894 = vadd.f32 0.0, %v1893
      %1895 = vmatmul.bf16.gmra.mxu0 %v802
      %v1896 = vpop.f32.mrf.mxu0
      %v1897 = vadd.f32 0.0, %v1896
      %v1898 = vpop.f32.mrf.mxu0
      %v1899 = vadd.f32 0.0, %v1898
      %1900 = vmatmul.bf16.gmra.mxu0 %v804
      %v1901 = vpop.f32.mrf.mxu0
      %v1902 = vadd.f32 0.0, %v1901
      %v1903 = vpop.f32.mrf.mxu0
      %v1904 = vadd.f32 0.0, %v1903
      %1905 = vdwg.mxu0
      %1906 = vmatpush.bf16.msra.mxu0 0
      %1907 = vmatpush.bf16.msra.mxu0 0
      %1908 = vmatpush.bf16.msra.mxu0 0
      %1909 = vmatpush.bf16.msra.mxu0 0
      %1910 = vmatpush.bf16.msra.mxu0 0
      %1911 = vmatpush.bf16.msra.mxu0 0
      %1912 = vmatpush.bf16.msra.mxu0 %v982
      %1913 = vmatpush.bf16.msra.mxu0 %v979
      %1914 = vmatmul.bf16.gmra.mxu0 %v1016
      %v1915 = vpop.f32.mrf.mxu0
      %v1916 = vadd.f32 %v1667, %v1915
      %v1917 = vpop.f32.mrf.mxu0
      %v1918 = vadd.f32 %v1669, %v1917
      %1919 = vmatmul.bf16.gmra.mxu0 %v1019
      %v1920 = vpop.f32.mrf.mxu0
      %v1921 = vadd.f32 %v1672, %v1920
      %v1922 = vpop.f32.mrf.mxu0
      %v1923 = vadd.f32 %v1674, %v1922
      %1924 = vmatmul.bf16.gmra.mxu0 %v1022
      %v1925 = vpop.f32.mrf.mxu0
      %v1926 = vadd.f32 %v1677, %v1925
      %v1927 = vpop.f32.mrf.mxu0
      %v1928 = vadd.f32 %v1679, %v1927
      %1929 = vmatmul.bf16.gmra.mxu0 %v1025
      %v1930 = vpop.f32.mrf.mxu0
      %v1931 = vadd.f32 %v1682, %v1930
      %v1932 = vpop.f32.mrf.mxu0
      %v1933 = vadd.f32 %v1684, %v1932
      %1934 = vmatmul.bf16.gmra.mxu0 %v1028
      %v1935 = vpop.f32.mrf.mxu0
      %v1936 = vadd.f32 %v1687, %v1935
      %v1937 = vpop.f32.mrf.mxu0
      %v1938 = vadd.f32 %v1689, %v1937
      %1939 = vmatmul.bf16.gmra.mxu0 %v1031
      %v1940 = vpop.f32.mrf.mxu0
      %v1941 = vadd.f32 %v1692, %v1940
      %v1942 = vpop.f32.mrf.mxu0
      %v1943 = vadd.f32 %v1694, %v1942
      %1944 = vmatmul.bf16.gmra.mxu0 %v1034
      %v1945 = vpop.f32.mrf.mxu0
      %v1946 = vadd.f32 %v1697, %v1945
      %v1947 = vpop.f32.mrf.mxu0
      %v1948 = vadd.f32 %v1699, %v1947
      %1949 = vmatmul.bf16.gmra.mxu0 %v1037
      %v1950 = vpop.f32.mrf.mxu0
      %v1951 = vadd.f32 %v1702, %v1950
      %v1952 = vpop.f32.mrf.mxu0
      %v1953 = vadd.f32 %v1704, %v1952
      %1954 = vmatmul.bf16.gmra.mxu0 %v1040
      %v1955 = vpop.f32.mrf.mxu0
      %v1956 = vadd.f32 %v1707, %v1955
      %v1957 = vpop.f32.mrf.mxu0
      %v1958 = vadd.f32 %v1709, %v1957
      %1959 = vmatmul.bf16.gmra.mxu0 %v1043
      %v1960 = vpop.f32.mrf.mxu0
      %v1961 = vadd.f32 %v1712, %v1960
      %v1962 = vpop.f32.mrf.mxu0
      %v1963 = vadd.f32 %v1714, %v1962
      %1964 = vmatmul.bf16.gmra.mxu0 %v1046
      %v1965 = vpop.f32.mrf.mxu0
      %v1966 = vadd.f32 %v1717, %v1965
      %v1967 = vpop.f32.mrf.mxu0
      %v1968 = vadd.f32 %v1719, %v1967
      %1969 = vmatmul.bf16.gmra.mxu0 %v1049
      %v1970 = vpop.f32.mrf.mxu0
      %v1971 = vadd.f32 %v1722, %v1970
      %v1972 = vpop.f32.mrf.mxu0
      %v1973 = vadd.f32 %v1724, %v1972
      %1974 = vmatmul.bf16.gmra.mxu0 %v1052
      %v1975 = vpop.f32.mrf.mxu0
      %v1976 = vadd.f32 %v1727, %v1975
      %v1977 = vpop.f32.mrf.mxu0
      %v1978 = vadd.f32 %v1729, %v1977
      %1979 = vmatmul.bf16.gmra.mxu0 %v1055
      %v1980 = vpop.f32.mrf.mxu0
      %v1981 = vadd.f32 %v1732, %v1980
      %v1982 = vpop.f32.mrf.mxu0
      %v1983 = vadd.f32 %v1734, %v1982
      %1984 = vmatmul.bf16.gmra.mxu0 %v1058
      %v1985 = vpop.f32.mrf.mxu0
      %v1986 = vadd.f32 %v1737, %v1985
      %v1987 = vpop.f32.mrf.mxu0
      %v1988 = vadd.f32 %v1739, %v1987
      %1989 = vmatmul.bf16.gmra.mxu0 %v1061
      %v1990 = vpop.f32.mrf.mxu0
      %v1991 = vadd.f32 %v1742, %v1990
      %v1992 = vpop.f32.mrf.mxu0
      %v1993 = vadd.f32 %v1744, %v1992
      %1994 = vmatmul.bf16.gmra.mxu0 %v1064
      %v1995 = vpop.f32.mrf.mxu0
      %v1996 = vadd.f32 %v1747, %v1995
      %v1997 = vpop.f32.mrf.mxu0
      %v1998 = vadd.f32 %v1749, %v1997
      %1999 = vmatmul.bf16.gmra.mxu0 %v1067
      %v2000 = vpop.f32.mrf.mxu0
      %v2001 = vadd.f32 %v1752, %v2000
      %v2002 = vpop.f32.mrf.mxu0
      %v2003 = vadd.f32 %v1754, %v2002
      %2004 = vmatmul.bf16.gmra.mxu0 %v1070
      %v2005 = vpop.f32.mrf.mxu0
      %v2006 = vadd.f32 %v1757, %v2005
      %v2007 = vpop.f32.mrf.mxu0
      %v2008 = vadd.f32 %v1759, %v2007
      %2009 = vmatmul.bf16.gmra.mxu0 %v1073
      %v2010 = vpop.f32.mrf.mxu0
      %v2011 = vadd.f32 %v1762, %v2010
      %v2012 = vpop.f32.mrf.mxu0
      %v2013 = vadd.f32 %v1764, %v2012
      %2014 = vmatmul.bf16.gmra.mxu0 %v1076
      %v2015 = vpop.f32.mrf.mxu0
      %v2016 = vadd.f32 %v1767, %v2015
      %v2017 = vpop.f32.mrf.mxu0
      %v2018 = vadd.f32 %v1769, %v2017
      %2019 = vmatmul.bf16.gmra.mxu0 %v1079
      %v2020 = vpop.f32.mrf.mxu0
      %v2021 = vadd.f32 %v1772, %v2020
      %v2022 = vpop.f32.mrf.mxu0
      %v2023 = vadd.f32 %v1774, %v2022
      %2024 = vmatmul.bf16.gmra.mxu0 %v1082
      %v2025 = vpop.f32.mrf.mxu0
      %v2026 = vadd.f32 %v1777, %v2025
      %v2027 = vpop.f32.mrf.mxu0
      %v2028 = vadd.f32 %v1779, %v2027
      %2029 = vmatmul.bf16.gmra.mxu0 %v1085
      %v2030 = vpop.f32.mrf.mxu0
      %v2031 = vadd.f32 %v1782, %v2030
      %v2032 = vpop.f32.mrf.mxu0
      %v2033 = vadd.f32 %v1784, %v2032
      %2034 = vmatmul.bf16.gmra.mxu0 %v1088
      %v2035 = vpop.f32.mrf.mxu0
      %v2036 = vadd.f32 %v1787, %v2035
      %v2037 = vpop.f32.mrf.mxu0
      %v2038 = vadd.f32 %v1789, %v2037
      %2039 = vmatmul.bf16.gmra.mxu0 %v1091
      %v2040 = vpop.f32.mrf.mxu0
      %v2041 = vadd.f32 %v1792, %v2040
      %v2042 = vpop.f32.mrf.mxu0
      %v2043 = vadd.f32 %v1794, %v2042
      %2044 = vmatmul.bf16.gmra.mxu0 %v1094
      %v2045 = vpop.f32.mrf.mxu0
      %v2046 = vadd.f32 %v1797, %v2045
      %v2047 = vpop.f32.mrf.mxu0
      %v2048 = vadd.f32 %v1799, %v2047
      %2049 = vmatmul.bf16.gmra.mxu0 %v1097
      %v2050 = vpop.f32.mrf.mxu0
      %v2051 = vadd.f32 %v1802, %v2050
      %v2052 = vpop.f32.mrf.mxu0
      %v2053 = vadd.f32 %v1804, %v2052
      %2054 = vmatmul.bf16.gmra.mxu0 %v1100
      %v2055 = vpop.f32.mrf.mxu0
      %v2056 = vadd.f32 %v1807, %v2055
      %v2057 = vpop.f32.mrf.mxu0
      %v2058 = vadd.f32 %v1809, %v2057
      %2059 = vmatmul.bf16.gmra.mxu0 %v1103
      %v2060 = vpop.f32.mrf.mxu0
      %v2061 = vadd.f32 %v1812, %v2060
      %v2062 = vpop.f32.mrf.mxu0
      %v2063 = vadd.f32 %v1814, %v2062
      %2064 = vmatmul.bf16.gmra.mxu0 %v1106
      %v2065 = vpop.f32.mrf.mxu0
      %v2066 = vadd.f32 %v1817, %v2065
      %v2067 = vpop.f32.mrf.mxu0
      %v2068 = vadd.f32 %v1819, %v2067
      %2069 = vmatmul.bf16.gmra.mxu0 %v1109
      %v2070 = vpop.f32.mrf.mxu0
      %v2071 = vadd.f32 %v1822, %v2070
      %v2072 = vpop.f32.mrf.mxu0
      %v2073 = vadd.f32 %v1824, %v2072
      %2074 = vmatmul.bf16.gmra.mxu0 %v1112
      %v2075 = vpop.f32.mrf.mxu0
      %v2076 = vadd.f32 %v1827, %v2075
      %v2077 = vpop.f32.mrf.mxu0
      %v2078 = vadd.f32 %v1829, %v2077
      %2079 = vmatmul.bf16.gmra.mxu0 %v1115
      %v2080 = vpop.f32.mrf.mxu0
      %v2081 = vadd.f32 %v1832, %v2080
      %v2082 = vpop.f32.mrf.mxu0
      %v2083 = vadd.f32 %v1834, %v2082
      %2084 = vmatmul.bf16.gmra.mxu0 %v1118
      %v2085 = vpop.f32.mrf.mxu0
      %v2086 = vadd.f32 %v1837, %v2085
      %v2087 = vpop.f32.mrf.mxu0
      %v2088 = vadd.f32 %v1839, %v2087
      %2089 = vmatmul.bf16.gmra.mxu0 %v1121
      %v2090 = vpop.f32.mrf.mxu0
      %v2091 = vadd.f32 %v1842, %v2090
      %v2092 = vpop.f32.mrf.mxu0
      %v2093 = vadd.f32 %v1844, %v2092
      %2094 = vmatmul.bf16.gmra.mxu0 %v1124
      %v2095 = vpop.f32.mrf.mxu0
      %v2096 = vadd.f32 %v1847, %v2095
      %v2097 = vpop.f32.mrf.mxu0
      %v2098 = vadd.f32 %v1849, %v2097
      %2099 = vmatmul.bf16.gmra.mxu0 %v1127
      %v2100 = vpop.f32.mrf.mxu0
      %v2101 = vadd.f32 %v1852, %v2100
      %v2102 = vpop.f32.mrf.mxu0
      %v2103 = vadd.f32 %v1854, %v2102
      %2104 = vmatmul.bf16.gmra.mxu0 %v1130
      %v2105 = vpop.f32.mrf.mxu0
      %v2106 = vadd.f32 %v1857, %v2105
      %v2107 = vpop.f32.mrf.mxu0
      %v2108 = vadd.f32 %v1859, %v2107
      %2109 = vmatmul.bf16.gmra.mxu0 %v1133
      %v2110 = vpop.f32.mrf.mxu0
      %v2111 = vadd.f32 %v1862, %v2110
      %v2112 = vpop.f32.mrf.mxu0
      %v2113 = vadd.f32 %v1864, %v2112
      %2114 = vmatmul.bf16.gmra.mxu0 %v1136
      %v2115 = vpop.f32.mrf.mxu0
      %v2116 = vadd.f32 %v1867, %v2115
      %v2117 = vpop.f32.mrf.mxu0
      %v2118 = vadd.f32 %v1869, %v2117
      %2119 = vmatmul.bf16.gmra.mxu0 %v1139
      %v2120 = vpop.f32.mrf.mxu0
      %v2121 = vadd.f32 %v1872, %v2120
      %v2122 = vpop.f32.mrf.mxu0
      %v2123 = vadd.f32 %v1874, %v2122
      %2124 = vmatmul.bf16.gmra.mxu0 %v1142
      %v2125 = vpop.f32.mrf.mxu0
      %v2126 = vadd.f32 %v1877, %v2125
      %v2127 = vpop.f32.mrf.mxu0
      %v2128 = vadd.f32 %v1879, %v2127
      %2129 = vmatmul.bf16.gmra.mxu0 %v1145
      %v2130 = vpop.f32.mrf.mxu0
      %v2131 = vadd.f32 %v1882, %v2130
      %v2132 = vpop.f32.mrf.mxu0
      %v2133 = vadd.f32 %v1884, %v2132
      %2134 = vmatmul.bf16.gmra.mxu0 %v1148
      %v2135 = vpop.f32.mrf.mxu0
      %v2136 = vadd.f32 %v1887, %v2135
      %v2137 = vpop.f32.mrf.mxu0
      %v2138 = vadd.f32 %v1889, %v2137
      %2139 = vmatmul.bf16.gmra.mxu0 %v1151
      %v2140 = vpop.f32.mrf.mxu0
      %v2141 = vadd.f32 %v1892, %v2140
      %v2142 = vpop.f32.mrf.mxu0
      %v2143 = vadd.f32 %v1894, %v2142
      %2144 = vmatmul.bf16.gmra.mxu0 %v1154
      %v2145 = vpop.f32.mrf.mxu0
      %v2146 = vadd.f32 %v1897, %v2145
      %v2147 = vpop.f32.mrf.mxu0
      %v2148 = vadd.f32 %v1899, %v2147
      %2149 = vmatmul.bf16.gmra.mxu0 %v1157
      %v2150 = vpop.f32.mrf.mxu0
      %v2151 = vadd.f32 %v1902, %v2150
      %v2152 = vpop.f32.mrf.mxu0
      %v2153 = vadd.f32 %v1904, %v2152
      %2154 = vdwg.mxu0
      %2155 = vmatpush.bf16.msra.mxu0 %v977
      %2156 = vmatpush.bf16.msra.mxu0 %v974
      %2157 = vmatpush.bf16.msra.mxu0 %v971
      %2158 = vmatpush.bf16.msra.mxu0 %v968
      %2159 = vmatpush.bf16.msra.mxu0 %v965
      %2160 = vmatpush.bf16.msra.mxu0 %v962
      %2161 = vmatpush.bf16.msra.mxu0 %v959
      %2162 = vmatpush.bf16.msra.mxu0 %v956
      %2163 = vmatmul.bf16.gmra.mxu0 %v710
      %v2164 = vpop.f32.mrf.mxu0
      %v2165 = vadd.f32 0.0, %v2164
      %v2166 = vpop.f32.mrf.mxu0
      %v2167 = vadd.f32 0.0, %v2166
      %2168 = vmatmul.bf16.gmra.mxu0 %v712
      %v2169 = vpop.f32.mrf.mxu0
      %v2170 = vadd.f32 0.0, %v2169
      %v2171 = vpop.f32.mrf.mxu0
      %v2172 = vadd.f32 0.0, %v2171
      %2173 = vmatmul.bf16.gmra.mxu0 %v714
      %v2174 = vpop.f32.mrf.mxu0
      %v2175 = vadd.f32 0.0, %v2174
      %v2176 = vpop.f32.mrf.mxu0
      %v2177 = vadd.f32 0.0, %v2176
      %2178 = vmatmul.bf16.gmra.mxu0 %v716
      %v2179 = vpop.f32.mrf.mxu0
      %v2180 = vadd.f32 0.0, %v2179
      %v2181 = vpop.f32.mrf.mxu0
      %v2182 = vadd.f32 0.0, %v2181
      %2183 = vmatmul.bf16.gmra.mxu0 %v718
      %v2184 = vpop.f32.mrf.mxu0
      %v2185 = vadd.f32 0.0, %v2184
      %v2186 = vpop.f32.mrf.mxu0
      %v2187 = vadd.f32 0.0, %v2186
      %2188 = vmatmul.bf16.gmra.mxu0 %v720
      %v2189 = vpop.f32.mrf.mxu0
      %v2190 = vadd.f32 0.0, %v2189
      %v2191 = vpop.f32.mrf.mxu0
      %v2192 = vadd.f32 0.0, %v2191
      %2193 = vmatmul.bf16.gmra.mxu0 %v722
      %v2194 = vpop.f32.mrf.mxu0
      %v2195 = vadd.f32 0.0, %v2194
      %v2196 = vpop.f32.mrf.mxu0
      %v2197 = vadd.f32 0.0, %v2196
      %2198 = vmatmul.bf16.gmra.mxu0 %v724
      %v2199 = vpop.f32.mrf.mxu0
      %v2200 = vadd.f32 0.0, %v2199
      %v2201 = vpop.f32.mrf.mxu0
      %v2202 = vadd.f32 0.0, %v2201
      %2203 = vmatmul.bf16.gmra.mxu0 %v726
      %v2204 = vpop.f32.mrf.mxu0
      %v2205 = vadd.f32 0.0, %v2204
      %v2206 = vpop.f32.mrf.mxu0
      %v2207 = vadd.f32 0.0, %v2206
      %2208 = vmatmul.bf16.gmra.mxu0 %v728
      %v2209 = vpop.f32.mrf.mxu0
      %v2210 = vadd.f32 0.0, %v2209
      %v2211 = vpop.f32.mrf.mxu0
      %v2212 = vadd.f32 0.0, %v2211
      %2213 = vmatmul.bf16.gmra.mxu0 %v730
      %v2214 = vpop.f32.mrf.mxu0
      %v2215 = vadd.f32 0.0, %v2214
      %v2216 = vpop.f32.mrf.mxu0
      %v2217 = vadd.f32 0.0, %v2216
      %2218 = vmatmul.bf16.gmra.mxu0 %v732
      %v2219 = vpop.f32.mrf.mxu0
      %v2220 = vadd.f32 0.0, %v2219
      %v2221 = vpop.f32.mrf.mxu0
      %v2222 = vadd.f32 0.0, %v2221
      %2223 = vmatmul.bf16.gmra.mxu0 %v734
      %v2224 = vpop.f32.mrf.mxu0
      %v2225 = vadd.f32 0.0, %v2224
      %v2226 = vpop.f32.mrf.mxu0
      %v2227 = vadd.f32 0.0, %v2226
      %2228 = vmatmul.bf16.gmra.mxu0 %v736
      %v2229 = vpop.f32.mrf.mxu0
      %v2230 = vadd.f32 0.0, %v2229
      %v2231 = vpop.f32.mrf.mxu0
      %v2232 = vadd.f32 0.0, %v2231
      %2233 = vmatmul.bf16.gmra.mxu0 %v738
      %v2234 = vpop.f32.mrf.mxu0
      %v2235 = vadd.f32 0.0, %v2234
      %v2236 = vpop.f32.mrf.mxu0
      %v2237 = vadd.f32 0.0, %v2236
      %2238 = vmatmul.bf16.gmra.mxu0 %v740
      %v2239 = vpop.f32.mrf.mxu0
      %v2240 = vadd.f32 0.0, %v2239
      %v2241 = vpop.f32.mrf.mxu0
      %v2242 = vadd.f32 0.0, %v2241
      %2243 = vmatmul.bf16.gmra.mxu0 %v742
      %v2244 = vpop.f32.mrf.mxu0
      %v2245 = vadd.f32 0.0, %v2244
      %v2246 = vpop.f32.mrf.mxu0
      %v2247 = vadd.f32 0.0, %v2246
      %2248 = vmatmul.bf16.gmra.mxu0 %v744
      %v2249 = vpop.f32.mrf.mxu0
      %v2250 = vadd.f32 0.0, %v2249
      %v2251 = vpop.f32.mrf.mxu0
      %v2252 = vadd.f32 0.0, %v2251
      %2253 = vmatmul.bf16.gmra.mxu0 %v746
      %v2254 = vpop.f32.mrf.mxu0
      %v2255 = vadd.f32 0.0, %v2254
      %v2256 = vpop.f32.mrf.mxu0
      %v2257 = vadd.f32 0.0, %v2256
      %2258 = vmatmul.bf16.gmra.mxu0 %v748
      %v2259 = vpop.f32.mrf.mxu0
      %v2260 = vadd.f32 0.0, %v2259
      %v2261 = vpop.f32.mrf.mxu0
      %v2262 = vadd.f32 0.0, %v2261
      %2263 = vmatmul.bf16.gmra.mxu0 %v750
      %v2264 = vpop.f32.mrf.mxu0
      %v2265 = vadd.f32 0.0, %v2264
      %v2266 = vpop.f32.mrf.mxu0
      %v2267 = vadd.f32 0.0, %v2266
      %2268 = vmatmul.bf16.gmra.mxu0 %v752
      %v2269 = vpop.f32.mrf.mxu0
      %v2270 = vadd.f32 0.0, %v2269
      %v2271 = vpop.f32.mrf.mxu0
      %v2272 = vadd.f32 0.0, %v2271
      %2273 = vmatmul.bf16.gmra.mxu0 %v754
      %v2274 = vpop.f32.mrf.mxu0
      %v2275 = vadd.f32 0.0, %v2274
      %v2276 = vpop.f32.mrf.mxu0
      %v2277 = vadd.f32 0.0, %v2276
      %2278 = vmatmul.bf16.gmra.mxu0 %v756
      %v2279 = vpop.f32.mrf.mxu0
      %v2280 = vadd.f32 0.0, %v2279
      %v2281 = vpop.f32.mrf.mxu0
      %v2282 = vadd.f32 0.0, %v2281
      %2283 = vmatmul.bf16.gmra.mxu0 %v758
      %v2284 = vpop.f32.mrf.mxu0
      %v2285 = vadd.f32 0.0, %v2284
      %v2286 = vpop.f32.mrf.mxu0
      %v2287 = vadd.f32 0.0, %v2286
      %2288 = vmatmul.bf16.gmra.mxu0 %v760
      %v2289 = vpop.f32.mrf.mxu0
      %v2290 = vadd.f32 0.0, %v2289
      %v2291 = vpop.f32.mrf.mxu0
      %v2292 = vadd.f32 0.0, %v2291
      %2293 = vmatmul.bf16.gmra.mxu0 %v762
      %v2294 = vpop.f32.mrf.mxu0
      %v2295 = vadd.f32 0.0, %v2294
      %v2296 = vpop.f32.mrf.mxu0
      %v2297 = vadd.f32 0.0, %v2296
      %2298 = vmatmul.bf16.gmra.mxu0 %v764
      %v2299 = vpop.f32.mrf.mxu0
      %v2300 = vadd.f32 0.0, %v2299
      %v2301 = vpop.f32.mrf.mxu0
      %v2302 = vadd.f32 0.0, %v2301
      %2303 = vmatmul.bf16.gmra.mxu0 %v766
      %v2304 = vpop.f32.mrf.mxu0
      %v2305 = vadd.f32 0.0, %v2304
      %v2306 = vpop.f32.mrf.mxu0
      %v2307 = vadd.f32 0.0, %v2306
      %2308 = vmatmul.bf16.gmra.mxu0 %v768
      %v2309 = vpop.f32.mrf.mxu0
      %v2310 = vadd.f32 0.0, %v2309
      %v2311 = vpop.f32.mrf.mxu0
      %v2312 = vadd.f32 0.0, %v2311
      %2313 = vmatmul.bf16.gmra.mxu0 %v770
      %v2314 = vpop.f32.mrf.mxu0
      %v2315 = vadd.f32 0.0, %v2314
      %v2316 = vpop.f32.mrf.mxu0
      %v2317 = vadd.f32 0.0, %v2316
      %2318 = vmatmul.bf16.gmra.mxu0 %v772
      %v2319 = vpop.f32.mrf.mxu0
      %v2320 = vadd.f32 0.0, %v2319
      %v2321 = vpop.f32.mrf.mxu0
      %v2322 = vadd.f32 0.0, %v2321
      %2323 = vmatmul.bf16.gmra.mxu0 %v774
      %v2324 = vpop.f32.mrf.mxu0
      %v2325 = vadd.f32 0.0, %v2324
      %v2326 = vpop.f32.mrf.mxu0
      %v2327 = vadd.f32 0.0, %v2326
      %2328 = vmatmul.bf16.gmra.mxu0 %v776
      %v2329 = vpop.f32.mrf.mxu0
      %v2330 = vadd.f32 0.0, %v2329
      %v2331 = vpop.f32.mrf.mxu0
      %v2332 = vadd.f32 0.0, %v2331
      %2333 = vmatmul.bf16.gmra.mxu0 %v778
      %v2334 = vpop.f32.mrf.mxu0
      %v2335 = vadd.f32 0.0, %v2334
      %v2336 = vpop.f32.mrf.mxu0
      %v2337 = vadd.f32 0.0, %v2336
      %2338 = vmatmul.bf16.gmra.mxu0 %v780
      %v2339 = vpop.f32.mrf.mxu0
      %v2340 = vadd.f32 0.0, %v2339
      %v2341 = vpop.f32.mrf.mxu0
      %v2342 = vadd.f32 0.0, %v2341
      %2343 = vmatmul.bf16.gmra.mxu0 %v782
      %v2344 = vpop.f32.mrf.mxu0
      %v2345 = vadd.f32 0.0, %v2344
      %v2346 = vpop.f32.mrf.mxu0
      %v2347 = vadd.f32 0.0, %v2346
      %2348 = vmatmul.bf16.gmra.mxu0 %v784
      %v2349 = vpop.f32.mrf.mxu0
      %v2350 = vadd.f32 0.0, %v2349
      %v2351 = vpop.f32.mrf.mxu0
      %v2352 = vadd.f32 0.0, %v2351
      %2353 = vmatmul.bf16.gmra.mxu0 %v786
      %v2354 = vpop.f32.mrf.mxu0
      %v2355 = vadd.f32 0.0, %v2354
      %v2356 = vpop.f32.mrf.mxu0
      %v2357 = vadd.f32 0.0, %v2356
      %2358 = vmatmul.bf16.gmra.mxu0 %v788
      %v2359 = vpop.f32.mrf.mxu0
      %v2360 = vadd.f32 0.0, %v2359
      %v2361 = vpop.f32.mrf.mxu0
      %v2362 = vadd.f32 0.0, %v2361
      %2363 = vmatmul.bf16.gmra.mxu0 %v790
      %v2364 = vpop.f32.mrf.mxu0
      %v2365 = vadd.f32 0.0, %v2364
      %v2366 = vpop.f32.mrf.mxu0
      %v2367 = vadd.f32 0.0, %v2366
      %2368 = vmatmul.bf16.gmra.mxu0 %v792
      %v2369 = vpop.f32.mrf.mxu0
      %v2370 = vadd.f32 0.0, %v2369
      %v2371 = vpop.f32.mrf.mxu0
      %v2372 = vadd.f32 0.0, %v2371
      %2373 = vmatmul.bf16.gmra.mxu0 %v794
      %v2374 = vpop.f32.mrf.mxu0
      %v2375 = vadd.f32 0.0, %v2374
      %v2376 = vpop.f32.mrf.mxu0
      %v2377 = vadd.f32 0.0, %v2376
      %2378 = vmatmul.bf16.gmra.mxu0 %v796
      %v2379 = vpop.f32.mrf.mxu0
      %v2380 = vadd.f32 0.0, %v2379
      %v2381 = vpop.f32.mrf.mxu0
      %v2382 = vadd.f32 0.0, %v2381
      %2383 = vmatmul.bf16.gmra.mxu0 %v798
      %v2384 = vpop.f32.mrf.mxu0
      %v2385 = vadd.f32 0.0, %v2384
      %v2386 = vpop.f32.mrf.mxu0
      %v2387 = vadd.f32 0.0, %v2386
      %2388 = vmatmul.bf16.gmra.mxu0 %v800
      %v2389 = vpop.f32.mrf.mxu0
      %v2390 = vadd.f32 0.0, %v2389
      %v2391 = vpop.f32.mrf.mxu0
      %v2392 = vadd.f32 0.0, %v2391
      %2393 = vmatmul.bf16.gmra.mxu0 %v802
      %v2394 = vpop.f32.mrf.mxu0
      %v2395 = vadd.f32 0.0, %v2394
      %v2396 = vpop.f32.mrf.mxu0
      %v2397 = vadd.f32 0.0, %v2396
      %2398 = vmatmul.bf16.gmra.mxu0 %v804
      %v2399 = vpop.f32.mrf.mxu0
      %v2400 = vadd.f32 0.0, %v2399
      %v2401 = vpop.f32.mrf.mxu0
      %v2402 = vadd.f32 0.0, %v2401
      %2403 = vdwg.mxu0
      %2404 = vmatpush.bf16.msra.mxu0 0
      %2405 = vmatpush.bf16.msra.mxu0 0
      %2406 = vmatpush.bf16.msra.mxu0 0
      %2407 = vmatpush.bf16.msra.mxu0 0
      %2408 = vmatpush.bf16.msra.mxu0 0
      %2409 = vmatpush.bf16.msra.mxu0 0
      %2410 = vmatpush.bf16.msra.mxu0 %v983
      %2411 = vmatpush.bf16.msra.mxu0 %v980
      %2412 = vmatmul.bf16.gmra.mxu0 %v1016
      %v2413 = vpop.f32.mrf.mxu0
      %v2414 = vadd.f32 %v2165, %v2413
      %v2415 = vpop.f32.mrf.mxu0
      %v2416 = vadd.f32 %v2167, %v2415
      %2417 = vmatmul.bf16.gmra.mxu0 %v1019
      %v2418 = vpop.f32.mrf.mxu0
      %v2419 = vadd.f32 %v2170, %v2418
      %v2420 = vpop.f32.mrf.mxu0
      %v2421 = vadd.f32 %v2172, %v2420
      %2422 = vmatmul.bf16.gmra.mxu0 %v1022
      %v2423 = vpop.f32.mrf.mxu0
      %v2424 = vadd.f32 %v2175, %v2423
      %v2425 = vpop.f32.mrf.mxu0
      %v2426 = vadd.f32 %v2177, %v2425
      %2427 = vmatmul.bf16.gmra.mxu0 %v1025
      %v2428 = vpop.f32.mrf.mxu0
      %v2429 = vadd.f32 %v2180, %v2428
      %v2430 = vpop.f32.mrf.mxu0
      %v2431 = vadd.f32 %v2182, %v2430
      %2432 = vmatmul.bf16.gmra.mxu0 %v1028
      %v2433 = vpop.f32.mrf.mxu0
      %v2434 = vadd.f32 %v2185, %v2433
      %v2435 = vpop.f32.mrf.mxu0
      %v2436 = vadd.f32 %v2187, %v2435
      %2437 = vmatmul.bf16.gmra.mxu0 %v1031
      %v2438 = vpop.f32.mrf.mxu0
      %v2439 = vadd.f32 %v2190, %v2438
      %v2440 = vpop.f32.mrf.mxu0
      %v2441 = vadd.f32 %v2192, %v2440
      %2442 = vmatmul.bf16.gmra.mxu0 %v1034
      %v2443 = vpop.f32.mrf.mxu0
      %v2444 = vadd.f32 %v2195, %v2443
      %v2445 = vpop.f32.mrf.mxu0
      %v2446 = vadd.f32 %v2197, %v2445
      %2447 = vmatmul.bf16.gmra.mxu0 %v1037
      %v2448 = vpop.f32.mrf.mxu0
      %v2449 = vadd.f32 %v2200, %v2448
      %v2450 = vpop.f32.mrf.mxu0
      %v2451 = vadd.f32 %v2202, %v2450
      %2452 = vmatmul.bf16.gmra.mxu0 %v1040
      %v2453 = vpop.f32.mrf.mxu0
      %v2454 = vadd.f32 %v2205, %v2453
      %v2455 = vpop.f32.mrf.mxu0
      %v2456 = vadd.f32 %v2207, %v2455
      %2457 = vmatmul.bf16.gmra.mxu0 %v1043
      %v2458 = vpop.f32.mrf.mxu0
      %v2459 = vadd.f32 %v2210, %v2458
      %v2460 = vpop.f32.mrf.mxu0
      %v2461 = vadd.f32 %v2212, %v2460
      %2462 = vmatmul.bf16.gmra.mxu0 %v1046
      %v2463 = vpop.f32.mrf.mxu0
      %v2464 = vadd.f32 %v2215, %v2463
      %v2465 = vpop.f32.mrf.mxu0
      %v2466 = vadd.f32 %v2217, %v2465
      %2467 = vmatmul.bf16.gmra.mxu0 %v1049
      %v2468 = vpop.f32.mrf.mxu0
      %v2469 = vadd.f32 %v2220, %v2468
      %v2470 = vpop.f32.mrf.mxu0
      %v2471 = vadd.f32 %v2222, %v2470
      %2472 = vmatmul.bf16.gmra.mxu0 %v1052
      %v2473 = vpop.f32.mrf.mxu0
      %v2474 = vadd.f32 %v2225, %v2473
      %v2475 = vpop.f32.mrf.mxu0
      %v2476 = vadd.f32 %v2227, %v2475
      %2477 = vmatmul.bf16.gmra.mxu0 %v1055
      %v2478 = vpop.f32.mrf.mxu0
      %v2479 = vadd.f32 %v2230, %v2478
      %v2480 = vpop.f32.mrf.mxu0
      %v2481 = vadd.f32 %v2232, %v2480
      %2482 = vmatmul.bf16.gmra.mxu0 %v1058
      %v2483 = vpop.f32.mrf.mxu0
      %v2484 = vadd.f32 %v2235, %v2483
      %v2485 = vpop.f32.mrf.mxu0
      %v2486 = vadd.f32 %v2237, %v2485
      %2487 = vmatmul.bf16.gmra.mxu0 %v1061
      %v2488 = vpop.f32.mrf.mxu0
      %v2489 = vadd.f32 %v2240, %v2488
      %v2490 = vpop.f32.mrf.mxu0
      %v2491 = vadd.f32 %v2242, %v2490
      %2492 = vmatmul.bf16.gmra.mxu0 %v1064
      %v2493 = vpop.f32.mrf.mxu0
      %v2494 = vadd.f32 %v2245, %v2493
      %v2495 = vpop.f32.mrf.mxu0
      %v2496 = vadd.f32 %v2247, %v2495
      %2497 = vmatmul.bf16.gmra.mxu0 %v1067
      %v2498 = vpop.f32.mrf.mxu0
      %v2499 = vadd.f32 %v2250, %v2498
      %v2500 = vpop.f32.mrf.mxu0
      %v2501 = vadd.f32 %v2252, %v2500
      %2502 = vmatmul.bf16.gmra.mxu0 %v1070
      %v2503 = vpop.f32.mrf.mxu0
      %v2504 = vadd.f32 %v2255, %v2503
      %v2505 = vpop.f32.mrf.mxu0
      %v2506 = vadd.f32 %v2257, %v2505
      %2507 = vmatmul.bf16.gmra.mxu0 %v1073
      %v2508 = vpop.f32.mrf.mxu0
      %v2509 = vadd.f32 %v2260, %v2508
      %v2510 = vpop.f32.mrf.mxu0
      %v2511 = vadd.f32 %v2262, %v2510
      %2512 = vmatmul.bf16.gmra.mxu0 %v1076
      %v2513 = vpop.f32.mrf.mxu0
      %v2514 = vadd.f32 %v2265, %v2513
      %v2515 = vpop.f32.mrf.mxu0
      %v2516 = vadd.f32 %v2267, %v2515
      %2517 = vmatmul.bf16.gmra.mxu0 %v1079
      %v2518 = vpop.f32.mrf.mxu0
      %v2519 = vadd.f32 %v2270, %v2518
      %v2520 = vpop.f32.mrf.mxu0
      %v2521 = vadd.f32 %v2272, %v2520
      %2522 = vmatmul.bf16.gmra.mxu0 %v1082
      %v2523 = vpop.f32.mrf.mxu0
      %v2524 = vadd.f32 %v2275, %v2523
      %v2525 = vpop.f32.mrf.mxu0
      %v2526 = vadd.f32 %v2277, %v2525
      %2527 = vmatmul.bf16.gmra.mxu0 %v1085
      %v2528 = vpop.f32.mrf.mxu0
      %v2529 = vadd.f32 %v2280, %v2528
      %v2530 = vpop.f32.mrf.mxu0
      %v2531 = vadd.f32 %v2282, %v2530
      %2532 = vmatmul.bf16.gmra.mxu0 %v1088
      %v2533 = vpop.f32.mrf.mxu0
      %v2534 = vadd.f32 %v2285, %v2533
      %v2535 = vpop.f32.mrf.mxu0
      %v2536 = vadd.f32 %v2287, %v2535
      %2537 = vmatmul.bf16.gmra.mxu0 %v1091
      %v2538 = vpop.f32.mrf.mxu0
      %v2539 = vadd.f32 %v2290, %v2538
      %v2540 = vpop.f32.mrf.mxu0
      %v2541 = vadd.f32 %v2292, %v2540
      %2542 = vmatmul.bf16.gmra.mxu0 %v1094
      %v2543 = vpop.f32.mrf.mxu0
      %v2544 = vadd.f32 %v2295, %v2543
      %v2545 = vpop.f32.mrf.mxu0
      %v2546 = vadd.f32 %v2297, %v2545
      %2547 = vmatmul.bf16.gmra.mxu0 %v1097
      %v2548 = vpop.f32.mrf.mxu0
      %v2549 = vadd.f32 %v2300, %v2548
      %v2550 = vpop.f32.mrf.mxu0
      %v2551 = vadd.f32 %v2302, %v2550
      %2552 = vmatmul.bf16.gmra.mxu0 %v1100
      %v2553 = vpop.f32.mrf.mxu0
      %v2554 = vadd.f32 %v2305, %v2553
      %v2555 = vpop.f32.mrf.mxu0
      %v2556 = vadd.f32 %v2307, %v2555
      %2557 = vmatmul.bf16.gmra.mxu0 %v1103
      %v2558 = vpop.f32.mrf.mxu0
      %v2559 = vadd.f32 %v2310, %v2558
      %v2560 = vpop.f32.mrf.mxu0
      %v2561 = vadd.f32 %v2312, %v2560
      %2562 = vmatmul.bf16.gmra.mxu0 %v1106
      %v2563 = vpop.f32.mrf.mxu0
      %v2564 = vadd.f32 %v2315, %v2563
      %v2565 = vpop.f32.mrf.mxu0
      %v2566 = vadd.f32 %v2317, %v2565
      %2567 = vmatmul.bf16.gmra.mxu0 %v1109
      %v2568 = vpop.f32.mrf.mxu0
      %v2569 = vadd.f32 %v2320, %v2568
      %v2570 = vpop.f32.mrf.mxu0
      %v2571 = vadd.f32 %v2322, %v2570
      %2572 = vmatmul.bf16.gmra.mxu0 %v1112
      %v2573 = vpop.f32.mrf.mxu0
      %v2574 = vadd.f32 %v2325, %v2573
      %v2575 = vpop.f32.mrf.mxu0
      %v2576 = vadd.f32 %v2327, %v2575
      %2577 = vmatmul.bf16.gmra.mxu0 %v1115
      %v2578 = vpop.f32.mrf.mxu0
      %v2579 = vadd.f32 %v2330, %v2578
      %v2580 = vpop.f32.mrf.mxu0
      %v2581 = vadd.f32 %v2332, %v2580
      %2582 = vmatmul.bf16.gmra.mxu0 %v1118
      %v2583 = vpop.f32.mrf.mxu0
      %v2584 = vadd.f32 %v2335, %v2583
      %v2585 = vpop.f32.mrf.mxu0
      %v2586 = vadd.f32 %v2337, %v2585
      %2587 = vmatmul.bf16.gmra.mxu0 %v1121
      %v2588 = vpop.f32.mrf.mxu0
      %v2589 = vadd.f32 %v2340, %v2588
      %v2590 = vpop.f32.mrf.mxu0
      %v2591 = vadd.f32 %v2342, %v2590
      %2592 = vmatmul.bf16.gmra.mxu0 %v1124
      %v2593 = vpop.f32.mrf.mxu0
      %v2594 = vadd.f32 %v2345, %v2593
      %v2595 = vpop.f32.mrf.mxu0
      %v2596 = vadd.f32 %v2347, %v2595
      %2597 = vmatmul.bf16.gmra.mxu0 %v1127
      %v2598 = vpop.f32.mrf.mxu0
      %v2599 = vadd.f32 %v2350, %v2598
      %v2600 = vpop.f32.mrf.mxu0
      %v2601 = vadd.f32 %v2352, %v2600
      %2602 = vmatmul.bf16.gmra.mxu0 %v1130
      %v2603 = vpop.f32.mrf.mxu0
      %v2604 = vadd.f32 %v2355, %v2603
      %v2605 = vpop.f32.mrf.mxu0
      %v2606 = vadd.f32 %v2357, %v2605
      %2607 = vmatmul.bf16.gmra.mxu0 %v1133
      %v2608 = vpop.f32.mrf.mxu0
      %v2609 = vadd.f32 %v2360, %v2608
      %v2610 = vpop.f32.mrf.mxu0
      %v2611 = vadd.f32 %v2362, %v2610
      %2612 = vmatmul.bf16.gmra.mxu0 %v1136
      %v2613 = vpop.f32.mrf.mxu0
      %v2614 = vadd.f32 %v2365, %v2613
      %v2615 = vpop.f32.mrf.mxu0
      %v2616 = vadd.f32 %v2367, %v2615
      %2617 = vmatmul.bf16.gmra.mxu0 %v1139
      %v2618 = vpop.f32.mrf.mxu0
      %v2619 = vadd.f32 %v2370, %v2618
      %v2620 = vpop.f32.mrf.mxu0
      %v2621 = vadd.f32 %v2372, %v2620
      %2622 = vmatmul.bf16.gmra.mxu0 %v1142
      %v2623 = vpop.f32.mrf.mxu0
      %v2624 = vadd.f32 %v2375, %v2623
      %v2625 = vpop.f32.mrf.mxu0
      %v2626 = vadd.f32 %v2377, %v2625
      %2627 = vmatmul.bf16.gmra.mxu0 %v1145
      %v2628 = vpop.f32.mrf.mxu0
      %v2629 = vadd.f32 %v2380, %v2628
      %v2630 = vpop.f32.mrf.mxu0
      %v2631 = vadd.f32 %v2382, %v2630
      %2632 = vmatmul.bf16.gmra.mxu0 %v1148
      %v2633 = vpop.f32.mrf.mxu0
      %v2634 = vadd.f32 %v2385, %v2633
      %v2635 = vpop.f32.mrf.mxu0
      %v2636 = vadd.f32 %v2387, %v2635
      %2637 = vmatmul.bf16.gmra.mxu0 %v1151
      %v2638 = vpop.f32.mrf.mxu0
      %v2639 = vadd.f32 %v2390, %v2638
      %v2640 = vpop.f32.mrf.mxu0
      %v2641 = vadd.f32 %v2392, %v2640
      %2642 = vmatmul.bf16.gmra.mxu0 %v1154
      %v2643 = vpop.f32.mrf.mxu0
      %v2644 = vadd.f32 %v2395, %v2643
      %v2645 = vpop.f32.mrf.mxu0
      %v2646 = vadd.f32 %v2397, %v2645
      %2647 = vmatmul.bf16.gmra.mxu0 %v1157
      %v2648 = vpop.f32.mrf.mxu0
      %v2649 = vadd.f32 %v2400, %v2648
      %v2650 = vpop.f32.mrf.mxu0
      %v2651 = vadd.f32 %v2402, %v2650
      %2652 = vdwg.mxu0
      %v2653 = vld [vmem:[%s2] sm:$0x3]
      %v2654 = vmax.f32 %v1418, %v1538
      %v2655 = vmax.f32 %v1916, %v2036
      %v2656 = vmax.f32 %v2414, %v2534
      %v2657 = vmax.f32 %v1420, %v1540
      %v2658 = vmax.f32 %v1918, %v2038
      %v2659 = vmax.f32 %v2416, %v2536
      %v2660 = vmax.f32 %v1423, %v1543
      %v2661 = vmax.f32 %v1921, %v2041
      %v2662 = vmax.f32 %v2419, %v2539
      %v2663 = vmax.f32 %v1425, %v1545
      %v2664 = vmax.f32 %v1923, %v2043
      %v2665 = vmax.f32 %v2421, %v2541
      %v2666 = vmax.f32 %v1428, %v1548
      %v2667 = vmax.f32 %v1926, %v2046
      %v2668 = vmax.f32 %v2424, %v2544
      %v2669 = vmax.f32 %v1430, %v1550
      %v2670 = vmax.f32 %v1928, %v2048
      %v2671 = vmax.f32 %v2426, %v2546
      %v2672 = vmax.f32 %v1433, %v1553
      %v2673 = vmax.f32 %v1931, %v2051
      %v2674 = vmax.f32 %v2429, %v2549
      %v2675 = vmax.f32 %v1435, %v1555
      %v2676 = vmax.f32 %v1933, %v2053
      %v2677 = vmax.f32 %v2431, %v2551
      %v2678 = vmax.f32 %v1438, %v1558
      %v2679 = vmax.f32 %v1936, %v2056
      %v2680 = vmax.f32 %v2434, %v2554
      %v2681 = vmax.f32 %v1440, %v1560
      %v2682 = vmax.f32 %v1938, %v2058
      %v2683 = vmax.f32 %v2436, %v2556
      %v2684 = vmax.f32 %v1443, %v1563
      %v2685 = vmax.f32 %v1941, %v2061
      %v2686 = vmax.f32 %v2439, %v2559
      %v2687 = vmax.f32 %v1445, %v1565
      %v2688 = vmax.f32 %v1943, %v2063
      %v2689 = vmax.f32 %v2441, %v2561
      %v2690 = vmax.f32 %v1448, %v1568
      %v2691 = vmax.f32 %v1946, %v2066
      %v2692 = vmax.f32 %v2444, %v2564
      %v2693 = vmax.f32 %v1450, %v1570
      %v2694 = vmax.f32 %v1948, %v2068
      %v2695 = vmax.f32 %v2446, %v2566
      %v2696 = vmax.f32 %v1453, %v1573
      %v2697 = vmax.f32 %v1951, %v2071
      %v2698 = vmax.f32 %v2449, %v2569
      %v2699 = vmax.f32 %v1455, %v1575
      %v2700 = vmax.f32 %v1953, %v2073
      %v2701 = vmax.f32 %v2451, %v2571
      %v2702 = vmax.f32 %v1458, %v1578
      %v2703 = vmax.f32 %v1956, %v2076
      %v2704 = vmax.f32 %v2454, %v2574
      %v2705 = vmax.f32 %v1460, %v1580
      %v2706 = vmax.f32 %v1958, %v2078
      %v2707 = vmax.f32 %v2456, %v2576
      %v2708 = vmax.f32 %v1463, %v1583
      %v2709 = vmax.f32 %v1961, %v2081
      %v2710 = vmax.f32 %v2459, %v2579
      %v2711 = vmax.f32 %v1465, %v1585
      %v2712 = vmax.f32 %v1963, %v2083
      %v2713 = vmax.f32 %v2461, %v2581
      %v2714 = vmax.f32 %v1468, %v1588
      %v2715 = vmax.f32 %v1966, %v2086
      %v2716 = vmax.f32 %v2464, %v2584
      %v2717 = vmax.f32 %v1470, %v1590
      %v2718 = vmax.f32 %v1968, %v2088
      %v2719 = vmax.f32 %v2466, %v2586
      %v2720 = vmax.f32 %v1473, %v1593
      %v2721 = vmax.f32 %v1971, %v2091
      %v2722 = vmax.f32 %v2469, %v2589
      %v2723 = vmax.f32 %v1475, %v1595
      %v2724 = vmax.f32 %v1973, %v2093
      %v2725 = vmax.f32 %v2471, %v2591
      %v2726 = vmax.f32 %v1478, %v1598
      %v2727 = vmax.f32 %v1976, %v2096
      %v2728 = vmax.f32 %v2474, %v2594
      %v2729 = vmax.f32 %v1480, %v1600
      %v2730 = vmax.f32 %v1978, %v2098
      %v2731 = vmax.f32 %v2476, %v2596
      %v2732 = vmax.f32 %v1483, %v1603
      %v2733 = vmax.f32 %v1981, %v2101
      %v2734 = vmax.f32 %v2479, %v2599
      %v2735 = vmax.f32 %v1485, %v1605
      %v2736 = vmax.f32 %v1983, %v2103
      %v2737 = vmax.f32 %v2481, %v2601
      %v2738 = vmax.f32 %v1488, %v1608
      %v2739 = vmax.f32 %v1986, %v2106
      %v2740 = vmax.f32 %v2484, %v2604
      %v2741 = vmax.f32 %v1490, %v1610
      %v2742 = vmax.f32 %v1988, %v2108
      %v2743 = vmax.f32 %v2486, %v2606
      %v2744 = vmax.f32 %v1493, %v1613
      %v2745 = vmax.f32 %v1991, %v2111
      %v2746 = vmax.f32 %v2489, %v2609
      %v2747 = vmax.f32 %v1495, %v1615
      %v2748 = vmax.f32 %v1993, %v2113
      %v2749 = vmax.f32 %v2491, %v2611
      %v2750 = vmax.f32 %v1498, %v1618
      %v2751 = vmax.f32 %v1996, %v2116
      %v2752 = vmax.f32 %v2494, %v2614
      %v2753 = vmax.f32 %v1500, %v1620
      %v2754 = vmax.f32 %v1998, %v2118
      %v2755 = vmax.f32 %v2496, %v2616
      %v2756 = vmax.f32 %v1503, %v1623
      %v2757 = vmax.f32 %v2001, %v2121
      %v2758 = vmax.f32 %v2499, %v2619
      %v2759 = vmax.f32 %v1505, %v1625
      %v2760 = vmax.f32 %v2003, %v2123
      %v2761 = vmax.f32 %v2501, %v2621
      %v2762 = vmax.f32 %v1508, %v1628
      %v2763 = vmax.f32 %v2006, %v2126
      %v2764 = vmax.f32 %v2504, %v2624
      %v2765 = vmax.f32 %v1510, %v1630
      %v2766 = vmax.f32 %v2008, %v2128
      %v2767 = vmax.f32 %v2506, %v2626
      %v2768 = vmax.f32 %v1513, %v1633
      %v2769 = vmax.f32 %v2011, %v2131
      %v2770 = vmax.f32 %v2509, %v2629
      %v2771 = vmax.f32 %v1515, %v1635
      %v2772 = vmax.f32 %v2013, %v2133
      %v2773 = vmax.f32 %v2511, %v2631
      %v2774 = vmax.f32 %v1518, %v1638
      %v2775 = vmax.f32 %v2016, %v2136
      %v2776 = vmax.f32 %v2514, %v2634
      %v2777 = vmax.f32 %v1520, %v1640
      %v2778 = vmax.f32 %v2018, %v2138
      %v2779 = vmax.f32 %v2516, %v2636
      %v2780 = vmax.f32 %v1523, %v1643
      %v2781 = vmax.f32 %v2021, %v2141
      %v2782 = vmax.f32 %v2519, %v2639
      %v2783 = vmax.f32 %v1525, %v1645
      %v2784 = vmax.f32 %v2023, %v2143
      %v2785 = vmax.f32 %v2521, %v2641
      %v2786 = vmax.f32 %v1528, %v1648
      %v2787 = vmax.f32 %v2026, %v2146
      %v2788 = vmax.f32 %v2524, %v2644
      %v2789 = vmax.f32 %v1530, %v1650
      %v2790 = vmax.f32 %v2028, %v2148
      %v2791 = vmax.f32 %v2526, %v2646
      %v2792 = vmax.f32 %v1533, %v1653
      %v2793 = vmax.f32 %v2031, %v2151
      %v2794 = vmax.f32 %v2529, %v2649
      %v2795 = vmax.f32 %v1535, %v1655
      %v2796 = vmax.f32 %v2033, %v2153
      %v2797 = vmax.f32 %v2531, %v2651
      %2894 = vrot.lane.b32.xlu0 %v2655, 64
      %v2895 = vpop.permute.xlu0 %2894
      %2896 = vrot.lane.b32.xlu0 %v2656, 64
      %v2897 = vpop.permute.xlu0 %2896
      %2898 = vrot.lane.b32.xlu0 %v2658, 64
      %v2899 = vpop.permute.xlu0 %2898
      %2900 = vrot.lane.b32.xlu0 %v2659, 64
      %v2901 = vpop.permute.xlu0 %2900
      %2902 = vrot.lane.b32.xlu0 %v2661, 64
      %v2903 = vpop.permute.xlu0 %2902
      %2904 = vrot.lane.b32.xlu0 %v2662, 64
      %v2905 = vpop.permute.xlu0 %2904
      %2906 = vrot.lane.b32.xlu0 %v2664, 64
      %v2907 = vpop.permute.xlu0 %2906
      %2908 = vrot.lane.b32.xlu0 %v2665, 64
      %v2909 = vpop.permute.xlu0 %2908
      %2910 = vrot.lane.b32.xlu0 %v2667, 64
      %v2911 = vpop.permute.xlu0 %2910
      %2912 = vrot.lane.b32.xlu0 %v2668, 64
      %v2913 = vpop.permute.xlu0 %2912
      %2914 = vrot.lane.b32.xlu0 %v2670, 64
      %v2915 = vpop.permute.xlu0 %2914
      %2916 = vrot.lane.b32.xlu0 %v2671, 64
      %v2917 = vpop.permute.xlu0 %2916
      %2918 = vrot.lane.b32.xlu0 %v2673, 64
      %v2919 = vpop.permute.xlu0 %2918
      %2920 = vrot.lane.b32.xlu0 %v2674, 64
      %v2921 = vpop.permute.xlu0 %2920
      %2922 = vrot.lane.b32.xlu0 %v2676, 64
      %v2923 = vpop.permute.xlu0 %2922
      %2924 = vrot.lane.b32.xlu0 %v2677, 64
      %v2925 = vpop.permute.xlu0 %2924
      %2926 = vrot.lane.b32.xlu0 %v2679, 64
      %v2927 = vpop.permute.xlu0 %2926
      %2928 = vrot.lane.b32.xlu0 %v2680, 64
      %v2929 = vpop.permute.xlu0 %2928
      %2930 = vrot.lane.b32.xlu0 %v2682, 64
      %v2931 = vpop.permute.xlu0 %2930
      %2932 = vrot.lane.b32.xlu0 %v2683, 64
      %v2933 = vpop.permute.xlu0 %2932
      %2934 = vrot.lane.b32.xlu0 %v2685, 64
      %v2935 = vpop.permute.xlu0 %2934
      %2936 = vrot.lane.b32.xlu0 %v2686, 64
      %v2937 = vpop.permute.xlu0 %2936
      %2938 = vrot.lane.b32.xlu0 %v2688, 64
      %v2939 = vpop.permute.xlu0 %2938
      %2940 = vrot.lane.b32.xlu0 %v2689, 64
      %v2941 = vpop.permute.xlu0 %2940
      %2942 = vrot.lane.b32.xlu0 %v2691, 64
      %v2943 = vpop.permute.xlu0 %2942
      %2944 = vrot.lane.b32.xlu0 %v2692, 64
      %v2945 = vpop.permute.xlu0 %2944
      %2946 = vrot.lane.b32.xlu0 %v2694, 64
      %v2947 = vpop.permute.xlu0 %2946
      %2948 = vrot.lane.b32.xlu0 %v2695, 64
      %v2949 = vpop.permute.xlu0 %2948
      %2950 = vrot.lane.b32.xlu0 %v2697, 64
      %v2951 = vpop.permute.xlu0 %2950
      %2952 = vrot.lane.b32.xlu0 %v2698, 64
      %v2953 = vpop.permute.xlu0 %2952
      %2954 = vrot.lane.b32.xlu0 %v2700, 64
      %v2955 = vpop.permute.xlu0 %2954
      %2956 = vrot.lane.b32.xlu0 %v2701, 64
      %v2957 = vpop.permute.xlu0 %2956
      %2958 = vrot.lane.b32.xlu0 %v2703, 64
      %v2959 = vpop.permute.xlu0 %2958
      %2960 = vrot.lane.b32.xlu0 %v2704, 64
      %v2961 = vpop.permute.xlu0 %2960
      %2962 = vrot.lane.b32.xlu0 %v2706, 64
      %v2963 = vpop.permute.xlu0 %2962
      %2964 = vrot.lane.b32.xlu0 %v2707, 64
      %v2965 = vpop.permute.xlu0 %2964
      %2966 = vrot.lane.b32.xlu0 %v2709, 64
      %v2967 = vpop.permute.xlu0 %2966
      %2968 = vrot.lane.b32.xlu0 %v2710, 64
      %v2969 = vpop.permute.xlu0 %2968
      %2970 = vrot.lane.b32.xlu0 %v2712, 64
      %v2971 = vpop.permute.xlu0 %2970
      %2972 = vrot.lane.b32.xlu0 %v2713, 64
      %v2973 = vpop.permute.xlu0 %2972
      %2974 = vrot.lane.b32.xlu0 %v2715, 64
      %v2975 = vpop.permute.xlu0 %2974
      %2976 = vrot.lane.b32.xlu0 %v2716, 64
      %v2977 = vpop.permute.xlu0 %2976
      %2978 = vrot.lane.b32.xlu0 %v2718, 64
      %v2979 = vpop.permute.xlu0 %2978
      %2980 = vrot.lane.b32.xlu0 %v2719, 64
      %v2981 = vpop.permute.xlu0 %2980
      %2982 = vrot.lane.b32.xlu0 %v2721, 64
      %v2983 = vpop.permute.xlu0 %2982
      %2984 = vrot.lane.b32.xlu0 %v2722, 64
      %v2985 = vpop.permute.xlu0 %2984
      %2986 = vrot.lane.b32.xlu0 %v2724, 64
      %v2987 = vpop.permute.xlu0 %2986
      %2988 = vrot.lane.b32.xlu0 %v2725, 64
      %v2989 = vpop.permute.xlu0 %2988
      %2990 = vrot.lane.b32.xlu0 %v2727, 64
      %v2991 = vpop.permute.xlu0 %2990
      %2992 = vrot.lane.b32.xlu0 %v2728, 64
      %v2993 = vpop.permute.xlu0 %2992
      %2994 = vrot.lane.b32.xlu0 %v2730, 64
      %v2995 = vpop.permute.xlu0 %2994
      %2996 = vrot.lane.b32.xlu0 %v2731, 64
      %v2997 = vpop.permute.xlu0 %2996
      %2998 = vrot.lane.b32.xlu0 %v2733, 64
      %v2999 = vpop.permute.xlu0 %2998
      %3000 = vrot.lane.b32.xlu0 %v2734, 64
      %v3001 = vpop.permute.xlu0 %3000
      %3002 = vrot.lane.b32.xlu0 %v2736, 64
      %v3003 = vpop.permute.xlu0 %3002
      %3004 = vrot.lane.b32.xlu0 %v2737, 64
      %v3005 = vpop.permute.xlu0 %3004
      %3006 = vrot.lane.b32.xlu0 %v2739, 64
      %v3007 = vpop.permute.xlu0 %3006
      %3008 = vrot.lane.b32.xlu0 %v2740, 64
      %v3009 = vpop.permute.xlu0 %3008
      %3010 = vrot.lane.b32.xlu0 %v2742, 64
      %v3011 = vpop.permute.xlu0 %3010
      %3012 = vrot.lane.b32.xlu0 %v2743, 64
      %v3013 = vpop.permute.xlu0 %3012
      %3014 = vrot.lane.b32.xlu0 %v2745, 64
      %v3015 = vpop.permute.xlu0 %3014
      %3016 = vrot.lane.b32.xlu0 %v2746, 64
      %v3017 = vpop.permute.xlu0 %3016
      %3018 = vrot.lane.b32.xlu0 %v2748, 64
      %v3019 = vpop.permute.xlu0 %3018
      %3020 = vrot.lane.b32.xlu0 %v2749, 64
      %v3021 = vpop.permute.xlu0 %3020
      %3022 = vrot.lane.b32.xlu0 %v2751, 64
      %v3023 = vpop.permute.xlu0 %3022
      %3024 = vrot.lane.b32.xlu0 %v2752, 64
      %v3025 = vpop.permute.xlu0 %3024
      %3026 = vrot.lane.b32.xlu0 %v2754, 64
      %v3027 = vpop.permute.xlu0 %3026
      %3028 = vrot.lane.b32.xlu0 %v2755, 64
      %v3029 = vpop.permute.xlu0 %3028
      %3030 = vrot.lane.b32.xlu0 %v2757, 64
      %v3031 = vpop.permute.xlu0 %3030
      %3032 = vrot.lane.b32.xlu0 %v2758, 64
      %v3033 = vpop.permute.xlu0 %3032
      %3034 = vrot.lane.b32.xlu0 %v2760, 64
      %v3035 = vpop.permute.xlu0 %3034
      %3036 = vrot.lane.b32.xlu0 %v2761, 64
      %v3037 = vpop.permute.xlu0 %3036
      %3038 = vrot.lane.b32.xlu0 %v2763, 64
      %v3039 = vpop.permute.xlu0 %3038
      %3040 = vrot.lane.b32.xlu0 %v2764, 64
      %v3041 = vpop.permute.xlu0 %3040
      %3042 = vrot.lane.b32.xlu0 %v2766, 64
      %v3043 = vpop.permute.xlu0 %3042
      %3044 = vrot.lane.b32.xlu0 %v2767, 64
      %v3045 = vpop.permute.xlu0 %3044
      %3046 = vrot.lane.b32.xlu0 %v2769, 64
      %v3047 = vpop.permute.xlu0 %3046
      %3048 = vrot.lane.b32.xlu0 %v2770, 64
      %v3049 = vpop.permute.xlu0 %3048
      %3050 = vrot.lane.b32.xlu0 %v2772, 64
      %v3051 = vpop.permute.xlu0 %3050
      %3052 = vrot.lane.b32.xlu0 %v2773, 64
      %v3053 = vpop.permute.xlu0 %3052
      %3054 = vrot.lane.b32.xlu0 %v2775, 64
      %v3055 = vpop.permute.xlu0 %3054
      %3056 = vrot.lane.b32.xlu0 %v2776, 64
      %v3057 = vpop.permute.xlu0 %3056
      %3058 = vrot.lane.b32.xlu0 %v2778, 64
      %v3059 = vpop.permute.xlu0 %3058
      %3060 = vrot.lane.b32.xlu0 %v2779, 64
      %v3061 = vpop.permute.xlu0 %3060
      %3062 = vrot.lane.b32.xlu0 %v2781, 64
      %v3063 = vpop.permute.xlu0 %3062
      %3064 = vrot.lane.b32.xlu0 %v2782, 64
      %v3065 = vpop.permute.xlu0 %3064
      %3066 = vrot.lane.b32.xlu0 %v2784, 64
      %v3067 = vpop.permute.xlu0 %3066
      %3068 = vrot.lane.b32.xlu0 %v2785, 64
      %v3069 = vpop.permute.xlu0 %3068
      %3070 = vrot.lane.b32.xlu0 %v2787, 64
      %v3071 = vpop.permute.xlu0 %3070
      %3072 = vrot.lane.b32.xlu0 %v2788, 64
      %v3073 = vpop.permute.xlu0 %3072
      %3074 = vrot.lane.b32.xlu0 %v2790, 64
      %v3075 = vpop.permute.xlu0 %3074
      %3076 = vrot.lane.b32.xlu0 %v2791, 64
      %v3077 = vpop.permute.xlu0 %3076
      %3078 = vrot.lane.b32.xlu0 %v2793, 64
      %v3079 = vpop.permute.xlu0 %3078
      %3080 = vrot.lane.b32.xlu0 %v2794, 64
      %v3081 = vpop.permute.xlu0 %3080
      %3082 = vrot.lane.b32.xlu0 %v2796, 64
      %v3083 = vpop.permute.xlu0 %3082
      %3084 = vrot.lane.b32.xlu0 %v2797, 64
      %v3085 = vpop.permute.xlu0 %3084
      %vm3086 = vcmask 523264
      %v3087 = vsel %vm3086, %v2895, %v2897
      %v3088 = vsel %vm3086, %v2899, %v2901
      %v3089 = vsel %vm3086, %v2903, %v2905
      %v3090 = vsel %vm3086, %v2907, %v2909
      %v3091 = vsel %vm3086, %v2911, %v2913
      %v3092 = vsel %vm3086, %v2915, %v2917
      %v3093 = vsel %vm3086, %v2919, %v2921
      %v3094 = vsel %vm3086, %v2923, %v2925
      %v3095 = vsel %vm3086, %v2927, %v2929
      %v3096 = vsel %vm3086, %v2931, %v2933
      %v3097 = vsel %vm3086, %v2935, %v2937
      %v3098 = vsel %vm3086, %v2939, %v2941
      %v3099 = vsel %vm3086, %v2943, %v2945
      %v3100 = vsel %vm3086, %v2947, %v2949
      %v3101 = vsel %vm3086, %v2951, %v2953
      %v3102 = vsel %vm3086, %v2955, %v2957
      %v3103 = vsel %vm3086, %v2959, %v2961
      %v3104 = vsel %vm3086, %v2963, %v2965
      %v3105 = vsel %vm3086, %v2967, %v2969
      %v3106 = vsel %vm3086, %v2971, %v2973
      %v3107 = vsel %vm3086, %v2975, %v2977
      %v3108 = vsel %vm3086, %v2979, %v2981
      %v3109 = vsel %vm3086, %v2983, %v2985
      %v3110 = vsel %vm3086, %v2987, %v2989
      %v3111 = vsel %vm3086, %v2991, %v2993
      %v3112 = vsel %vm3086, %v2995, %v2997
      %v3113 = vsel %vm3086, %v2999, %v3001
      %v3114 = vsel %vm3086, %v3003, %v3005
      %v3115 = vsel %vm3086, %v3007, %v3009
      %v3116 = vsel %vm3086, %v3011, %v3013
      %v3117 = vsel %vm3086, %v3015, %v3017
      %v3118 = vsel %vm3086, %v3019, %v3021
      %v3119 = vsel %vm3086, %v3023, %v3025
      %v3120 = vsel %vm3086, %v3027, %v3029
      %v3121 = vsel %vm3086, %v3031, %v3033
      %v3122 = vsel %vm3086, %v3035, %v3037
      %v3123 = vsel %vm3086, %v3039, %v3041
      %v3124 = vsel %vm3086, %v3043, %v3045
      %v3125 = vsel %vm3086, %v3047, %v3049
      %v3126 = vsel %vm3086, %v3051, %v3053
      %v3127 = vsel %vm3086, %v3055, %v3057
      %v3128 = vsel %vm3086, %v3059, %v3061
      %v3129 = vsel %vm3086, %v3063, %v3065
      %v3130 = vsel %vm3086, %v3067, %v3069
      %v3131 = vsel %vm3086, %v3071, %v3073
      %v3132 = vsel %vm3086, %v3075, %v3077
      %v3133 = vsel %vm3086, %v3079, %v3081
      %v3134 = vsel %vm3086, %v3083, %v3085
      %v3231 = vmax.f32 %v2654, %v3087
      %v3232 = vmax.f32 %v2655, %v2897
      %v3233 = vmax.f32 %v2657, %v3088
      %v3234 = vmax.f32 %v2658, %v2901
      %v3235 = vmax.f32 %v2660, %v3089
      %v3236 = vmax.f32 %v2661, %v2905
      %v3237 = vmax.f32 %v2663, %v3090
      %v3238 = vmax.f32 %v2664, %v2909
      %v3239 = vmax.f32 %v2666, %v3091
      %v3240 = vmax.f32 %v2667, %v2913
      %v3241 = vmax.f32 %v2669, %v3092
      %v3242 = vmax.f32 %v2670, %v2917
      %v3243 = vmax.f32 %v2672, %v3093
      %v3244 = vmax.f32 %v2673, %v2921
      %v3245 = vmax.f32 %v2675, %v3094
      %v3246 = vmax.f32 %v2676, %v2925
      %v3247 = vmax.f32 %v2678, %v3095
      %v3248 = vmax.f32 %v2679, %v2929
      %v3249 = vmax.f32 %v2681, %v3096
      %v3250 = vmax.f32 %v2682, %v2933
      %v3251 = vmax.f32 %v2684, %v3097
      %v3252 = vmax.f32 %v2685, %v2937
      %v3253 = vmax.f32 %v2687, %v3098
      %v3254 = vmax.f32 %v2688, %v2941
      %v3255 = vmax.f32 %v2690, %v3099
      %v3256 = vmax.f32 %v2691, %v2945
      %v3257 = vmax.f32 %v2693, %v3100
      %v3258 = vmax.f32 %v2694, %v2949
      %v3259 = vmax.f32 %v2696, %v3101
      %v3260 = vmax.f32 %v2697, %v2953
      %v3261 = vmax.f32 %v2699, %v3102
      %v3262 = vmax.f32 %v2700, %v2957
      %v3263 = vmax.f32 %v2702, %v3103
      %v3264 = vmax.f32 %v2703, %v2961
      %v3265 = vmax.f32 %v2705, %v3104
      %v3266 = vmax.f32 %v2706, %v2965
      %v3267 = vmax.f32 %v2708, %v3105
      %v3268 = vmax.f32 %v2709, %v2969
      %v3269 = vmax.f32 %v2711, %v3106
      %v3270 = vmax.f32 %v2712, %v2973
      %v3271 = vmax.f32 %v2714, %v3107
      %v3272 = vmax.f32 %v2715, %v2977
      %v3273 = vmax.f32 %v2717, %v3108
      %v3274 = vmax.f32 %v2718, %v2981
      %v3275 = vmax.f32 %v2720, %v3109
      %v3276 = vmax.f32 %v2721, %v2985
      %v3277 = vmax.f32 %v2723, %v3110
      %v3278 = vmax.f32 %v2724, %v2989
      %v3279 = vmax.f32 %v2726, %v3111
      %v3280 = vmax.f32 %v2727, %v2993
      %v3281 = vmax.f32 %v2729, %v3112
      %v3282 = vmax.f32 %v2730, %v2997
      %v3283 = vmax.f32 %v2732, %v3113
      %v3284 = vmax.f32 %v2733, %v3001
      %v3285 = vmax.f32 %v2735, %v3114
      %v3286 = vmax.f32 %v2736, %v3005
      %v3287 = vmax.f32 %v2738, %v3115
      %v3288 = vmax.f32 %v2739, %v3009
      %v3289 = vmax.f32 %v2741, %v3116
      %v3290 = vmax.f32 %v2742, %v3013
      %v3291 = vmax.f32 %v2744, %v3117
      %v3292 = vmax.f32 %v2745, %v3017
      %v3293 = vmax.f32 %v2747, %v3118
      %v3294 = vmax.f32 %v2748, %v3021
      %v3295 = vmax.f32 %v2750, %v3119
      %v3296 = vmax.f32 %v2751, %v3025
      %v3297 = vmax.f32 %v2753, %v3120
      %v3298 = vmax.f32 %v2754, %v3029
      %v3299 = vmax.f32 %v2756, %v3121
      %v3300 = vmax.f32 %v2757, %v3033
      %v3301 = vmax.f32 %v2759, %v3122
      %v3302 = vmax.f32 %v2760, %v3037
      %v3303 = vmax.f32 %v2762, %v3123
      %v3304 = vmax.f32 %v2763, %v3041
      %v3305 = vmax.f32 %v2765, %v3124
      %v3306 = vmax.f32 %v2766, %v3045
      %v3307 = vmax.f32 %v2768, %v3125
      %v3308 = vmax.f32 %v2769, %v3049
      %v3309 = vmax.f32 %v2771, %v3126
      %v3310 = vmax.f32 %v2772, %v3053
      %v3311 = vmax.f32 %v2774, %v3127
      %v3312 = vmax.f32 %v2775, %v3057
      %v3313 = vmax.f32 %v2777, %v3128
      %v3314 = vmax.f32 %v2778, %v3061
      %v3315 = vmax.f32 %v2780, %v3129
      %v3316 = vmax.f32 %v2781, %v3065
      %v3317 = vmax.f32 %v2783, %v3130
      %v3318 = vmax.f32 %v2784, %v3069
      %v3319 = vmax.f32 %v2786, %v3131
      %v3320 = vmax.f32 %v2787, %v3073
      %v3321 = vmax.f32 %v2789, %v3132
      %v3322 = vmax.f32 %v2790, %v3077
      %v3323 = vmax.f32 %v2792, %v3133
      %v3324 = vmax.f32 %v2793, %v3081
      %v3325 = vmax.f32 %v2795, %v3134
      %v3326 = vmax.f32 %v2796, %v3085
      %v3328 = vperm.slane %v2653, 0
      %v3329 = vperm.slane %v2653, 1
      %v3332 = vadd.f32 %v3231, %v3328
      %v3333 = vadd.f32 %v3232, %v3329
      %v3334 = vadd.f32 %v3233, %v3328
      %v3335 = vadd.f32 %v3234, %v3329
      %v3336 = vadd.f32 %v3235, %v3328
      %v3337 = vadd.f32 %v3236, %v3329
      %v3338 = vadd.f32 %v3237, %v3328
      %v3339 = vadd.f32 %v3238, %v3329
      %v3340 = vadd.f32 %v3239, %v3328
      %v3341 = vadd.f32 %v3240, %v3329
      %v3342 = vadd.f32 %v3241, %v3328
      %v3343 = vadd.f32 %v3242, %v3329
      %v3344 = vadd.f32 %v3243, %v3328
      %v3345 = vadd.f32 %v3244, %v3329
      %v3346 = vadd.f32 %v3245, %v3328
      %v3347 = vadd.f32 %v3246, %v3329
      %v3348 = vadd.f32 %v3247, %v3328
      %v3349 = vadd.f32 %v3248, %v3329
      %v3350 = vadd.f32 %v3249, %v3328
      %v3351 = vadd.f32 %v3250, %v3329
      %v3352 = vadd.f32 %v3251, %v3328
      %v3353 = vadd.f32 %v3252, %v3329
      %v3354 = vadd.f32 %v3253, %v3328
      %v3355 = vadd.f32 %v3254, %v3329
      %v3356 = vadd.f32 %v3255, %v3328
      %v3357 = vadd.f32 %v3256, %v3329
      %v3358 = vadd.f32 %v3257, %v3328
      %v3359 = vadd.f32 %v3258, %v3329
      %v3360 = vadd.f32 %v3259, %v3328
      %v3361 = vadd.f32 %v3260, %v3329
      %v3362 = vadd.f32 %v3261, %v3328
      %v3363 = vadd.f32 %v3262, %v3329
      %v3364 = vadd.f32 %v3263, %v3328
      %v3365 = vadd.f32 %v3264, %v3329
      %v3366 = vadd.f32 %v3265, %v3328
      %v3367 = vadd.f32 %v3266, %v3329
      %v3368 = vadd.f32 %v3267, %v3328
      %v3369 = vadd.f32 %v3268, %v3329
      %v3370 = vadd.f32 %v3269, %v3328
      %v3371 = vadd.f32 %v3270, %v3329
      %v3372 = vadd.f32 %v3271, %v3328
      %v3373 = vadd.f32 %v3272, %v3329
      %v3374 = vadd.f32 %v3273, %v3328
      %v3375 = vadd.f32 %v3274, %v3329
      %v3376 = vadd.f32 %v3275, %v3328
      %v3377 = vadd.f32 %v3276, %v3329
      %v3378 = vadd.f32 %v3277, %v3328
      %v3379 = vadd.f32 %v3278, %v3329
      %v3380 = vadd.f32 %v3279, %v3328
      %v3381 = vadd.f32 %v3280, %v3329
      %v3382 = vadd.f32 %v3281, %v3328
      %v3383 = vadd.f32 %v3282, %v3329
      %v3384 = vadd.f32 %v3283, %v3328
      %v3385 = vadd.f32 %v3284, %v3329
      %v3386 = vadd.f32 %v3285, %v3328
      %v3387 = vadd.f32 %v3286, %v3329
      %v3388 = vadd.f32 %v3287, %v3328
      %v3389 = vadd.f32 %v3288, %v3329
      %v3390 = vadd.f32 %v3289, %v3328
      %v3391 = vadd.f32 %v3290, %v3329
      %v3392 = vadd.f32 %v3291, %v3328
      %v3393 = vadd.f32 %v3292, %v3329
      %v3394 = vadd.f32 %v3293, %v3328
      %v3395 = vadd.f32 %v3294, %v3329
      %v3396 = vadd.f32 %v3295, %v3328
      %v3397 = vadd.f32 %v3296, %v3329
      %v3398 = vadd.f32 %v3297, %v3328
      %v3399 = vadd.f32 %v3298, %v3329
      %v3400 = vadd.f32 %v3299, %v3328
      %v3401 = vadd.f32 %v3300, %v3329
      %v3402 = vadd.f32 %v3301, %v3328
      %v3403 = vadd.f32 %v3302, %v3329
      %v3404 = vadd.f32 %v3303, %v3328
      %v3405 = vadd.f32 %v3304, %v3329
      %v3406 = vadd.f32 %v3305, %v3328
      %v3407 = vadd.f32 %v3306, %v3329
      %v3408 = vadd.f32 %v3307, %v3328
      %v3409 = vadd.f32 %v3308, %v3329
      %v3410 = vadd.f32 %v3309, %v3328
      %v3411 = vadd.f32 %v3310, %v3329
      %v3412 = vadd.f32 %v3311, %v3328
      %v3413 = vadd.f32 %v3312, %v3329
      %v3414 = vadd.f32 %v3313, %v3328
      %v3415 = vadd.f32 %v3314, %v3329
      %v3416 = vadd.f32 %v3315, %v3328
      %v3417 = vadd.f32 %v3316, %v3329
      %v3418 = vadd.f32 %v3317, %v3328
      %v3419 = vadd.f32 %v3318, %v3329
      %v3420 = vadd.f32 %v3319, %v3328
      %v3421 = vadd.f32 %v3320, %v3329
      %v3422 = vadd.f32 %v3321, %v3328
      %v3423 = vadd.f32 %v3322, %v3329
      %v3424 = vadd.f32 %v3323, %v3328
      %v3425 = vadd.f32 %v3324, %v3329
      %v3426 = vadd.f32 %v3325, %v3328
      %v3427 = vadd.f32 %v3326, %v3329
      %v3428 = vmax.f32 %v3332, 0.0
      %v3429 = vmax.f32 %v3333, 0.0
      %v3430 = vmax.f32 %v3334, 0.0
      %v3431 = vmax.f32 %v3335, 0.0
      %v3432 = vmax.f32 %v3336, 0.0
      %v3433 = vmax.f32 %v3337, 0.0
      %v3434 = vmax.f32 %v3338, 0.0
      %v3435 = vmax.f32 %v3339, 0.0
      %v3436 = vmax.f32 %v3340, 0.0
      %v3437 = vmax.f32 %v3341, 0.0
      %v3438 = vmax.f32 %v3342, 0.0
      %v3439 = vmax.f32 %v3343, 0.0
      %v3440 = vmax.f32 %v3344, 0.0
      %v3441 = vmax.f32 %v3345, 0.0
      %v3442 = vmax.f32 %v3346, 0.0
      %v3443 = vmax.f32 %v3347, 0.0
      %v3444 = vmax.f32 %v3348, 0.0
      %v3445 = vmax.f32 %v3349, 0.0
      %v3446 = vmax.f32 %v3350, 0.0
      %v3447 = vmax.f32 %v3351, 0.0
      %v3448 = vmax.f32 %v3352, 0.0
      %v3449 = vmax.f32 %v3353, 0.0
      %v3450 = vmax.f32 %v3354, 0.0
      %v3451 = vmax.f32 %v3355, 0.0
      %v3452 = vmax.f32 %v3356, 0.0
      %v3453 = vmax.f32 %v3357, 0.0
      %v3454 = vmax.f32 %v3358, 0.0
      %v3455 = vmax.f32 %v3359, 0.0
      %v3456 = vmax.f32 %v3360, 0.0
      %v3457 = vmax.f32 %v3361, 0.0
      %v3458 = vmax.f32 %v3362, 0.0
      %v3459 = vmax.f32 %v3363, 0.0
      %v3460 = vmax.f32 %v3364, 0.0
      %v3461 = vmax.f32 %v3365, 0.0
      %v3462 = vmax.f32 %v3366, 0.0
      %v3463 = vmax.f32 %v3367, 0.0
      %v3464 = vmax.f32 %v3368, 0.0
      %v3465 = vmax.f32 %v3369, 0.0
      %v3466 = vmax.f32 %v3370, 0.0
      %v3467 = vmax.f32 %v3371, 0.0
      %v3468 = vmax.f32 %v3372, 0.0
      %v3469 = vmax.f32 %v3373, 0.0
      %v3470 = vmax.f32 %v3374, 0.0
      %v3471 = vmax.f32 %v3375, 0.0
      %v3472 = vmax.f32 %v3376, 0.0
      %v3473 = vmax.f32 %v3377, 0.0
      %v3474 = vmax.f32 %v3378, 0.0
      %v3475 = vmax.f32 %v3379, 0.0
      %v3476 = vmax.f32 %v3380, 0.0
      %v3477 = vmax.f32 %v3381, 0.0
      %v3478 = vmax.f32 %v3382, 0.0
      %v3479 = vmax.f32 %v3383, 0.0
      %v3480 = vmax.f32 %v3384, 0.0
      %v3481 = vmax.f32 %v3385, 0.0
      %v3482 = vmax.f32 %v3386, 0.0
      %v3483 = vmax.f32 %v3387, 0.0
      %v3484 = vmax.f32 %v3388, 0.0
      %v3485 = vmax.f32 %v3389, 0.0
      %v3486 = vmax.f32 %v3390, 0.0
      %v3487 = vmax.f32 %v3391, 0.0
      %v3488 = vmax.f32 %v3392, 0.0
      %v3489 = vmax.f32 %v3393, 0.0
      %v3490 = vmax.f32 %v3394, 0.0
      %v3491 = vmax.f32 %v3395, 0.0
      %v3492 = vmax.f32 %v3396, 0.0
      %v3493 = vmax.f32 %v3397, 0.0
      %v3494 = vmax.f32 %v3398, 0.0
      %v3495 = vmax.f32 %v3399, 0.0
      %v3496 = vmax.f32 %v3400, 0.0
      %v3497 = vmax.f32 %v3401, 0.0
      %v3498 = vmax.f32 %v3402, 0.0
      %v3499 = vmax.f32 %v3403, 0.0
      %v3500 = vmax.f32 %v3404, 0.0
      %v3501 = vmax.f32 %v3405, 0.0
      %v3502 = vmax.f32 %v3406, 0.0
      %v3503 = vmax.f32 %v3407, 0.0
      %v3504 = vmax.f32 %v3408, 0.0
      %v3505 = vmax.f32 %v3409, 0.0
      %v3506 = vmax.f32 %v3410, 0.0
      %v3507 = vmax.f32 %v3411, 0.0
      %v3508 = vmax.f32 %v3412, 0.0
      %v3509 = vmax.f32 %v3413, 0.0
      %v3510 = vmax.f32 %v3414, 0.0
      %v3511 = vmax.f32 %v3415, 0.0
      %v3512 = vmax.f32 %v3416, 0.0
      %v3513 = vmax.f32 %v3417, 0.0
      %v3514 = vmax.f32 %v3418, 0.0
      %v3515 = vmax.f32 %v3419, 0.0
      %v3516 = vmax.f32 %v3420, 0.0
      %v3517 = vmax.f32 %v3421, 0.0
      %v3518 = vmax.f32 %v3422, 0.0
      %v3519 = vmax.f32 %v3423, 0.0
      %v3520 = vmax.f32 %v3424, 0.0
      %v3521 = vmax.f32 %v3425, 0.0
      %v3522 = vmax.f32 %v3426, 0.0
      %v3523 = vmax.f32 %v3427, 0.0
      %v3524 = vpack.c.bf16 %v3429, %v3428
      %v3525 = vpack.c.bf16 %v3431, %v3430
      %v3526 = vpack.c.bf16 %v3433, %v3432
      %v3527 = vpack.c.bf16 %v3435, %v3434
      %v3528 = vpack.c.bf16 %v3437, %v3436
      %v3529 = vpack.c.bf16 %v3439, %v3438
      %v3530 = vpack.c.bf16 %v3441, %v3440
      %v3531 = vpack.c.bf16 %v3443, %v3442
      %v3532 = vpack.c.bf16 %v3445, %v3444
      %v3533 = vpack.c.bf16 %v3447, %v3446
      %v3534 = vpack.c.bf16 %v3449, %v3448
      %v3535 = vpack.c.bf16 %v3451, %v3450
      %v3536 = vpack.c.bf16 %v3453, %v3452
      %v3537 = vpack.c.bf16 %v3455, %v3454
      %v3538 = vpack.c.bf16 %v3457, %v3456
      %v3539 = vpack.c.bf16 %v3459, %v3458
      %v3540 = vpack.c.bf16 %v3461, %v3460
      %v3541 = vpack.c.bf16 %v3463, %v3462
      %v3542 = vpack.c.bf16 %v3465, %v3464
      %v3543 = vpack.c.bf16 %v3467, %v3466
      %v3544 = vpack.c.bf16 %v3469, %v3468
      %v3545 = vpack.c.bf16 %v3471, %v3470
      %v3546 = vpack.c.bf16 %v3473, %v3472
      %v3547 = vpack.c.bf16 %v3475, %v3474
      %v3548 = vpack.c.bf16 %v3477, %v3476
      %v3549 = vpack.c.bf16 %v3479, %v3478
      %v3550 = vpack.c.bf16 %v3481, %v3480
      %v3551 = vpack.c.bf16 %v3483, %v3482
      %v3552 = vpack.c.bf16 %v3485, %v3484
      %v3553 = vpack.c.bf16 %v3487, %v3486
      %v3554 = vpack.c.bf16 %v3489, %v3488
      %v3555 = vpack.c.bf16 %v3491, %v3490
      %v3556 = vpack.c.bf16 %v3493, %v3492
      %v3557 = vpack.c.bf16 %v3495, %v3494
      %v3558 = vpack.c.bf16 %v3497, %v3496
      %v3559 = vpack.c.bf16 %v3499, %v3498
      %v3560 = vpack.c.bf16 %v3501, %v3500
      %v3561 = vpack.c.bf16 %v3503, %v3502
      %v3562 = vpack.c.bf16 %v3505, %v3504
      %v3563 = vpack.c.bf16 %v3507, %v3506
      %v3564 = vpack.c.bf16 %v3509, %v3508
      %v3565 = vpack.c.bf16 %v3511, %v3510
      %v3566 = vpack.c.bf16 %v3513, %v3512
      %v3567 = vpack.c.bf16 %v3515, %v3514
      %v3568 = vpack.c.bf16 %v3517, %v3516
      %v3569 = vpack.c.bf16 %v3519, %v3518
      %v3570 = vpack.c.bf16 %v3521, %v3520
      %v3571 = vpack.c.bf16 %v3523, %v3522
      %v3572 = vld [vmem:[%s3] sm:$0xff]
      %v3573 = vld [vmem:[%s3 + $0x8] sm:$0xff]
      %v3574 = vld [vmem:[%s3 + $0x10] sm:$0xff]
      %v3575 = vld [vmem:[%s3 + $0x18] sm:$0xff]
      %v3576 = vld [vmem:[%s3 + $0x20] sm:$0xff]
      %v3577 = vld [vmem:[%s3 + $0x28] sm:$0xff]
      %v3578 = vld [vmem:[%s3 + $0x30] sm:$0xff]
      %v3579 = vld [vmem:[%s3 + $0x38] sm:$0xff]
      %v3580 = vld [vmem:[%s3 + $0x40] sm:$0xff]
      %v3581 = vld [vmem:[%s3 + $0x48] sm:$0xff]
      %v3582 = vld [vmem:[%s3 + $0x50] sm:$0xff]
      %v3583 = vld [vmem:[%s3 + $0x58] sm:$0xff]
      %v3584 = vld [vmem:[%s3 + $0x60] sm:$0xff]
      %v3585 = vld [vmem:[%s3 + $0x68] sm:$0xff]
      %v3586 = vld [vmem:[%s3 + $0x70] sm:$0xff]
      %v3587 = vld [vmem:[%s3 + $0x78] sm:$0xff]
      %v3588 = vld [vmem:[%s3 + $0x80] sm:$0xff]
      %v3589 = vld [vmem:[%s3 + $0x88] sm:$0xff]
      %v3590 = vld [vmem:[%s3 + $0x90] sm:$0xff]
      %v3591 = vld [vmem:[%s3 + $0x98] sm:$0xff]
      %v3592 = vld [vmem:[%s3 + $0xa0] sm:$0xff]
      %v3593 = vld [vmem:[%s3 + $0xa8] sm:$0xff]
      %v3594 = vld [vmem:[%s3 + $0xb0] sm:$0xff]
      %v3595 = vld [vmem:[%s3 + $0xb8] sm:$0xff]
      %s3596 = scalar_lea.vmem %s3, 192
      %v3597 = vld [vmem:[%s3596] sm:$0xff]
      %v3598 = vld [vmem:[%s3596 + $0x8] sm:$0xff]
      %v3599 = vld [vmem:[%s3596 + $0x10] sm:$0xff]
      %v3600 = vld [vmem:[%s3596 + $0x18] sm:$0xff]
      %v3601 = vld [vmem:[%s3596 + $0x20] sm:$0xff]
      %v3602 = vld [vmem:[%s3596 + $0x28] sm:$0xff]
      %v3603 = vld [vmem:[%s3596 + $0x30] sm:$0xff]
      %v3604 = vld [vmem:[%s3596 + $0x38] sm:$0xff]
      %v3605 = vld [vmem:[%s3596 + $0x40] sm:$0xff]
      %v3606 = vld [vmem:[%s3596 + $0x48] sm:$0xff]
      %v3607 = vld [vmem:[%s3596 + $0x50] sm:$0xff]
      %v3608 = vld [vmem:[%s3596 + $0x58] sm:$0xff]
      %v3609 = vld [vmem:[%s3596 + $0x60] sm:$0xff]
      %v3610 = vld [vmem:[%s3596 + $0x68] sm:$0xff]
      %v3611 = vld [vmem:[%s3596 + $0x70] sm:$0xff]
      %v3612 = vld [vmem:[%s3596 + $0x78] sm:$0xff]
      %v3613 = vld [vmem:[%s3596 + $0x80] sm:$0xff]
      %v3614 = vld [vmem:[%s3596 + $0x88] sm:$0xff]
      %v3615 = vld [vmem:[%s3596 + $0x90] sm:$0xff]
      %v3616 = vld [vmem:[%s3596 + $0x98] sm:$0xff]
      %v3617 = vld [vmem:[%s3596 + $0xa0] sm:$0xff]
      %v3618 = vld [vmem:[%s3596 + $0xa8] sm:$0xff]
      %v3619 = vld [vmem:[%s3596 + $0xb0] sm:$0xff]
      %v3620 = vld [vmem:[%s3596 + $0xb8] sm:$0xff]
      %v3637 = vunpack.c.l.b16 %v3548
      %v3638 = vunpack.c.h.b16 %v3548
      %v3639 = vunpack.c.l.b16 %v3549
      %v3640 = vunpack.c.h.b16 %v3549
      %v3641 = vunpack.c.l.b16 %v3550
      %v3642 = vunpack.c.h.b16 %v3550
      %v3643 = vunpack.c.l.b16 %v3551
      %v3644 = vunpack.c.h.b16 %v3551
      %v3645 = vunpack.c.l.b16 %v3552
      %v3646 = vunpack.c.h.b16 %v3552
      %v3647 = vunpack.c.l.b16 %v3553
      %v3648 = vunpack.c.h.b16 %v3553
      %v3649 = vunpack.c.l.b16 %v3554
      %v3650 = vunpack.c.h.b16 %v3554
      %v3651 = vunpack.c.l.b16 %v3555
      %v3652 = vunpack.c.h.b16 %v3555
      %v3653 = vunpack.c.l.b16 %v3556
      %v3654 = vunpack.c.h.b16 %v3556
      %v3655 = vunpack.c.l.b16 %v3557
      %v3656 = vunpack.c.h.b16 %v3557
      %v3657 = vunpack.c.l.b16 %v3558
      %v3658 = vunpack.c.h.b16 %v3558
      %v3659 = vunpack.c.l.b16 %v3559
      %v3660 = vunpack.c.h.b16 %v3559
      %v3661 = vunpack.c.l.b16 %v3560
      %v3662 = vunpack.c.h.b16 %v3560
      %v3663 = vunpack.c.l.b16 %v3561
      %v3664 = vunpack.c.h.b16 %v3561
      %v3665 = vunpack.c.l.b16 %v3562
      %v3666 = vunpack.c.h.b16 %v3562
      %v3667 = vunpack.c.l.b16 %v3563
      %v3668 = vunpack.c.h.b16 %v3563
      %v3669 = vpack.c.b16 %v3639, %v3637
      %v3670 = vpack.c.b16 %v3640, %v3638
      %v3671 = vpack.c.b16 %v3643, %v3641
      %v3672 = vpack.c.b16 %v3644, %v3642
      %v3673 = vpack.c.b16 %v3647, %v3645
      %v3674 = vpack.c.b16 %v3648, %v3646
      %v3675 = vpack.c.b16 %v3651, %v3649
      %v3676 = vpack.c.b16 %v3652, %v3650
      %v3677 = vpack.c.b16 %v3655, %v3653
      %v3678 = vpack.c.b16 %v3656, %v3654
      %v3679 = vpack.c.b16 %v3659, %v3657
      %v3680 = vpack.c.b16 %v3660, %v3658
      %v3681 = vpack.c.b16 %v3663, %v3661
      %v3682 = vpack.c.b16 %v3664, %v3662
      %v3683 = vpack.c.b16 %v3667, %v3665
      %v3684 = vpack.c.b16 %v3668, %v3666
      %v3717 = vunpack.c.l.b16 %v3597
      %v3718 = vunpack.c.h.b16 %v3597
      %v3719 = vunpack.c.l.b16 %v3598
      %v3720 = vunpack.c.h.b16 %v3598
      %v3721 = vunpack.c.l.b16 %v3599
      %v3722 = vunpack.c.h.b16 %v3599
      %v3723 = vunpack.c.l.b16 %v3600
      %v3724 = vunpack.c.h.b16 %v3600
      %v3725 = vunpack.c.l.b16 %v3601
      %v3726 = vunpack.c.h.b16 %v3601
      %v3727 = vunpack.c.l.b16 %v3602
      %v3728 = vunpack.c.h.b16 %v3602
      %v3729 = vunpack.c.l.b16 %v3603
      %v3730 = vunpack.c.h.b16 %v3603
      %v3731 = vunpack.c.l.b16 %v3604
      %v3732 = vunpack.c.h.b16 %v3604
      %v3733 = vunpack.c.l.b16 %v3605
      %v3734 = vunpack.c.h.b16 %v3605
      %v3735 = vunpack.c.l.b16 %v3606
      %v3736 = vunpack.c.h.b16 %v3606
      %v3737 = vunpack.c.l.b16 %v3607
      %v3738 = vunpack.c.h.b16 %v3607
      %v3739 = vunpack.c.l.b16 %v3608
      %v3740 = vunpack.c.h.b16 %v3608
      %v3741 = vunpack.c.l.b16 %v3609
      %v3742 = vunpack.c.h.b16 %v3609
      %v3743 = vunpack.c.l.b16 %v3610
      %v3744 = vunpack.c.h.b16 %v3610
      %v3745 = vunpack.c.l.b16 %v3611
      %v3746 = vunpack.c.h.b16 %v3611
      %v3747 = vunpack.c.l.b16 %v3612
      %v3748 = vunpack.c.h.b16 %v3612
      %v3749 = vunpack.c.l.b16 %v3613
      %v3750 = vunpack.c.h.b16 %v3613
      %v3751 = vunpack.c.l.b16 %v3614
      %v3752 = vunpack.c.h.b16 %v3614
      %v3753 = vunpack.c.l.b16 %v3615
      %v3754 = vunpack.c.h.b16 %v3615
      %v3755 = vunpack.c.l.b16 %v3616
      %v3756 = vunpack.c.h.b16 %v3616
      %v3757 = vunpack.c.l.b16 %v3617
      %v3758 = vunpack.c.h.b16 %v3617
      %v3759 = vunpack.c.l.b16 %v3618
      %v3760 = vunpack.c.h.b16 %v3618
      %v3761 = vunpack.c.l.b16 %v3619
      %v3762 = vunpack.c.h.b16 %v3619
      %v3763 = vunpack.c.l.b16 %v3620
      %v3764 = vunpack.c.h.b16 %v3620
      %v3765 = vpack.c.b16 %v3719, %v3717
      %v3766 = vpack.c.b16 %v3720, %v3718
      %v3767 = vpack.c.b16 %v3723, %v3721
      %v3768 = vpack.c.b16 %v3724, %v3722
      %v3769 = vpack.c.b16 %v3727, %v3725
      %v3770 = vpack.c.b16 %v3728, %v3726
      %v3771 = vpack.c.b16 %v3731, %v3729
      %v3772 = vpack.c.b16 %v3732, %v3730
      %v3773 = vpack.c.b16 %v3735, %v3733
      %v3774 = vpack.c.b16 %v3736, %v3734
      %v3775 = vpack.c.b16 %v3739, %v3737
      %v3776 = vpack.c.b16 %v3740, %v3738
      %v3777 = vpack.c.b16 %v3743, %v3741
      %v3778 = vpack.c.b16 %v3744, %v3742
      %v3779 = vpack.c.b16 %v3747, %v3745
      %v3780 = vpack.c.b16 %v3748, %v3746
      %v3781 = vpack.c.b16 %v3751, %v3749
      %v3782 = vpack.c.b16 %v3752, %v3750
      %v3783 = vpack.c.b16 %v3755, %v3753
      %v3784 = vpack.c.b16 %v3756, %v3754
      %v3785 = vpack.c.b16 %v3759, %v3757
      %v3786 = vpack.c.b16 %v3760, %v3758
      %v3787 = vpack.c.b16 %v3763, %v3761
      %v3788 = vpack.c.b16 %v3764, %v3762
      %v3814 = vsel %vm3086, %v3670, 0
      %v3817 = vsel %vm3086, %v3672, 0
      %v3820 = vsel %vm3086, %v3674, 0
      %v3823 = vsel %vm3086, %v3676, 0
      %v3826 = vsel %vm3086, %v3678, 0
      %v3829 = vsel %vm3086, %v3680, 0
      %v3832 = vsel %vm3086, %v3682, 0
      %v3835 = vsel %vm3086, %v3684, 0
      %3837 = vmatpush.bf16.msra.mxu0 %v3779
      %3838 = vmatpush.bf16.msra.mxu0 %v3777
      %3839 = vmatpush.bf16.msra.mxu0 %v3775
      %3840 = vmatpush.bf16.msra.mxu0 %v3773
      %3841 = vmatpush.bf16.msra.mxu0 %v3771
      %3842 = vmatpush.bf16.msra.mxu0 %v3769
      %3843 = vmatpush.bf16.msra.mxu0 %v3767
      %3844 = vmatpush.bf16.msra.mxu0 %v3765
      %3845 = vmatmul.bf16.gmra.mxu0 %v3669
      %v3846 = vpop.f32.mrf.mxu0
      %v3847 = vadd.f32 0.0, %v3846
      %v3848 = vpop.f32.mrf.mxu0
      %v3849 = vadd.f32 0.0, %v3848
      %3850 = vmatmul.bf16.gmra.mxu0 %v3671
      %v3851 = vpop.f32.mrf.mxu0
      %v3852 = vadd.f32 0.0, %v3851
      %v3853 = vpop.f32.mrf.mxu0
      %v3854 = vadd.f32 0.0, %v3853
      %3855 = vmatmul.bf16.gmra.mxu0 %v3673
      %v3856 = vpop.f32.mrf.mxu0
      %v3857 = vadd.f32 0.0, %v3856
      %v3858 = vpop.f32.mrf.mxu0
      %v3859 = vadd.f32 0.0, %v3858
      %3860 = vmatmul.bf16.gmra.mxu0 %v3675
      %v3861 = vpop.f32.mrf.mxu0
      %v3862 = vadd.f32 0.0, %v3861
      %v3863 = vpop.f32.mrf.mxu0
      %v3864 = vadd.f32 0.0, %v3863
      %3865 = vmatmul.bf16.gmra.mxu0 %v3677
      %v3866 = vpop.f32.mrf.mxu0
      %v3867 = vadd.f32 0.0, %v3866
      %v3868 = vpop.f32.mrf.mxu0
      %v3869 = vadd.f32 0.0, %v3868
      %3870 = vmatmul.bf16.gmra.mxu0 %v3679
      %v3871 = vpop.f32.mrf.mxu0
      %v3872 = vadd.f32 0.0, %v3871
      %v3873 = vpop.f32.mrf.mxu0
      %v3874 = vadd.f32 0.0, %v3873
      %3875 = vmatmul.bf16.gmra.mxu0 %v3681
      %v3876 = vpop.f32.mrf.mxu0
      %v3877 = vadd.f32 0.0, %v3876
      %v3878 = vpop.f32.mrf.mxu0
      %v3879 = vadd.f32 0.0, %v3878
      %3880 = vmatmul.bf16.gmra.mxu0 %v3683
      %v3881 = vpop.f32.mrf.mxu0
      %v3882 = vadd.f32 0.0, %v3881
      %v3883 = vpop.f32.mrf.mxu0
      %v3884 = vadd.f32 0.0, %v3883
      %3885 = vdwg.mxu0
      %3886 = vmatpush.bf16.msra.mxu0 0
      %3887 = vmatpush.bf16.msra.mxu0 0
      %3888 = vmatpush.bf16.msra.mxu0 0
      %3889 = vmatpush.bf16.msra.mxu0 0
      %3890 = vmatpush.bf16.msra.mxu0 %v3787
      %3891 = vmatpush.bf16.msra.mxu0 %v3785
      %3892 = vmatpush.bf16.msra.mxu0 %v3783
      %3893 = vmatpush.bf16.msra.mxu0 %v3781
      %3894 = vmatmul.bf16.gmra.mxu0 %v3814
      %v3895 = vpop.f32.mrf.mxu0
      %v3896 = vadd.f32 %v3847, %v3895
      %v3897 = vpop.f32.mrf.mxu0
      %v3898 = vadd.f32 %v3849, %v3897
      %3899 = vmatmul.bf16.gmra.mxu0 %v3817
      %v3900 = vpop.f32.mrf.mxu0
      %v3901 = vadd.f32 %v3852, %v3900
      %v3902 = vpop.f32.mrf.mxu0
      %v3903 = vadd.f32 %v3854, %v3902
      %3904 = vmatmul.bf16.gmra.mxu0 %v3820
      %v3905 = vpop.f32.mrf.mxu0
      %v3906 = vadd.f32 %v3857, %v3905
      %v3907 = vpop.f32.mrf.mxu0
      %v3908 = vadd.f32 %v3859, %v3907
      %3909 = vmatmul.bf16.gmra.mxu0 %v3823
      %v3910 = vpop.f32.mrf.mxu0
      %v3911 = vadd.f32 %v3862, %v3910
      %v3912 = vpop.f32.mrf.mxu0
      %v3913 = vadd.f32 %v3864, %v3912
      %3914 = vmatmul.bf16.gmra.mxu0 %v3826
      %v3915 = vpop.f32.mrf.mxu0
      %v3916 = vadd.f32 %v3867, %v3915
      %v3917 = vpop.f32.mrf.mxu0
      %v3918 = vadd.f32 %v3869, %v3917
      %3919 = vmatmul.bf16.gmra.mxu0 %v3829
      %v3920 = vpop.f32.mrf.mxu0
      %v3921 = vadd.f32 %v3872, %v3920
      %v3922 = vpop.f32.mrf.mxu0
      %v3923 = vadd.f32 %v3874, %v3922
      %3924 = vmatmul.bf16.gmra.mxu0 %v3832
      %v3925 = vpop.f32.mrf.mxu0
      %v3926 = vadd.f32 %v3877, %v3925
      %v3927 = vpop.f32.mrf.mxu0
      %v3928 = vadd.f32 %v3879, %v3927
      %3929 = vmatmul.bf16.gmra.mxu0 %v3835
      %v3930 = vpop.f32.mrf.mxu0
      %v3931 = vadd.f32 %v3882, %v3930
      %v3932 = vpop.f32.mrf.mxu0
      %v3933 = vadd.f32 %v3884, %v3932
      %3934 = vdwg.mxu0
      %3935 = vmatpush.bf16.msra.mxu0 %v3780
      %3936 = vmatpush.bf16.msra.mxu0 %v3778
      %3937 = vmatpush.bf16.msra.mxu0 %v3776
      %3938 = vmatpush.bf16.msra.mxu0 %v3774
      %3939 = vmatpush.bf16.msra.mxu0 %v3772
      %3940 = vmatpush.bf16.msra.mxu0 %v3770
      %3941 = vmatpush.bf16.msra.mxu0 %v3768
      %3942 = vmatpush.bf16.msra.mxu0 %v3766
      %3943 = vmatmul.bf16.gmra.mxu0 %v3669
      %v3944 = vpop.f32.mrf.mxu0
      %v3945 = vadd.f32 0.0, %v3944
      %v3946 = vpop.f32.mrf.mxu0
      %v3947 = vadd.f32 0.0, %v3946
      %3948 = vmatmul.bf16.gmra.mxu0 %v3671
      %v3949 = vpop.f32.mrf.mxu0
      %v3950 = vadd.f32 0.0, %v3949
      %v3951 = vpop.f32.mrf.mxu0
      %v3952 = vadd.f32 0.0, %v3951
      %3953 = vmatmul.bf16.gmra.mxu0 %v3673
      %v3954 = vpop.f32.mrf.mxu0
      %v3955 = vadd.f32 0.0, %v3954
      %v3956 = vpop.f32.mrf.mxu0
      %v3957 = vadd.f32 0.0, %v3956
      %3958 = vmatmul.bf16.gmra.mxu0 %v3675
      %v3959 = vpop.f32.mrf.mxu0
      %v3960 = vadd.f32 0.0, %v3959
      %v3961 = vpop.f32.mrf.mxu0
      %v3962 = vadd.f32 0.0, %v3961
      %3963 = vmatmul.bf16.gmra.mxu0 %v3677
      %v3964 = vpop.f32.mrf.mxu0
      %v3965 = vadd.f32 0.0, %v3964
      %v3966 = vpop.f32.mrf.mxu0
      %v3967 = vadd.f32 0.0, %v3966
      %3968 = vmatmul.bf16.gmra.mxu0 %v3679
      %v3969 = vpop.f32.mrf.mxu0
      %v3970 = vadd.f32 0.0, %v3969
      %v3971 = vpop.f32.mrf.mxu0
      %v3972 = vadd.f32 0.0, %v3971
      %3973 = vmatmul.bf16.gmra.mxu0 %v3681
      %v3974 = vpop.f32.mrf.mxu0
      %v3975 = vadd.f32 0.0, %v3974
      %v3976 = vpop.f32.mrf.mxu0
      %v3977 = vadd.f32 0.0, %v3976
      %3978 = vmatmul.bf16.gmra.mxu0 %v3683
      %v3979 = vpop.f32.mrf.mxu0
      %v3980 = vadd.f32 0.0, %v3979
      %v3981 = vpop.f32.mrf.mxu0
      %v3982 = vadd.f32 0.0, %v3981
      %3983 = vdwg.mxu0
      %3984 = vmatpush.bf16.msra.mxu0 0
      %3985 = vmatpush.bf16.msra.mxu0 0
      %3986 = vmatpush.bf16.msra.mxu0 0
      %3987 = vmatpush.bf16.msra.mxu0 0
      %3988 = vmatpush.bf16.msra.mxu0 %v3788
      %3989 = vmatpush.bf16.msra.mxu0 %v3786
      %3990 = vmatpush.bf16.msra.mxu0 %v3784
      %3991 = vmatpush.bf16.msra.mxu0 %v3782
      %3992 = vmatmul.bf16.gmra.mxu0 %v3814
      %v3993 = vpop.f32.mrf.mxu0
      %v3994 = vadd.f32 %v3945, %v3993
      %v3995 = vpop.f32.mrf.mxu0
      %v3996 = vadd.f32 %v3947, %v3995
      %3997 = vmatmul.bf16.gmra.mxu0 %v3817
      %v3998 = vpop.f32.mrf.mxu0
      %v3999 = vadd.f32 %v3950, %v3998
      %v4000 = vpop.f32.mrf.mxu0
      %v4001 = vadd.f32 %v3952, %v4000
      %4002 = vmatmul.bf16.gmra.mxu0 %v3820
      %v4003 = vpop.f32.mrf.mxu0
      %v4004 = vadd.f32 %v3955, %v4003
      %v4005 = vpop.f32.mrf.mxu0
      %v4006 = vadd.f32 %v3957, %v4005
      %4007 = vmatmul.bf16.gmra.mxu0 %v3823
      %v4008 = vpop.f32.mrf.mxu0
      %v4009 = vadd.f32 %v3960, %v4008
      %v4010 = vpop.f32.mrf.mxu0
      %v4011 = vadd.f32 %v3962, %v4010
      %4012 = vmatmul.bf16.gmra.mxu0 %v3826
      %v4013 = vpop.f32.mrf.mxu0
      %v4014 = vadd.f32 %v3965, %v4013
      %v4015 = vpop.f32.mrf.mxu0
      %v4016 = vadd.f32 %v3967, %v4015
      %4017 = vmatmul.bf16.gmra.mxu0 %v3829
      %v4018 = vpop.f32.mrf.mxu0
      %v4019 = vadd.f32 %v3970, %v4018
      %v4020 = vpop.f32.mrf.mxu0
      %v4021 = vadd.f32 %v3972, %v4020
      %4022 = vmatmul.bf16.gmra.mxu0 %v3832
      %v4023 = vpop.f32.mrf.mxu0
      %v4024 = vadd.f32 %v3975, %v4023
      %v4025 = vpop.f32.mrf.mxu0
      %v4026 = vadd.f32 %v3977, %v4025
      %4027 = vmatmul.bf16.gmra.mxu0 %v3835
      %v4028 = vpop.f32.mrf.mxu0
      %v4029 = vadd.f32 %v3980, %v4028
      %v4030 = vpop.f32.mrf.mxu0
      %v4031 = vadd.f32 %v3982, %v4030
      %4032 = vdwg.mxu0
      %v4049 = vunpack.c.l.b16 %v3524
      %v4050 = vunpack.c.h.b16 %v3524
      %v4051 = vunpack.c.l.b16 %v3525
      %v4052 = vunpack.c.h.b16 %v3525
      %v4053 = vunpack.c.l.b16 %v3526
      %v4054 = vunpack.c.h.b16 %v3526
      %v4055 = vunpack.c.l.b16 %v3527
      %v4056 = vunpack.c.h.b16 %v3527
      %v4057 = vunpack.c.l.b16 %v3528
      %v4058 = vunpack.c.h.b16 %v3528
      %v4059 = vunpack.c.l.b16 %v3529
      %v4060 = vunpack.c.h.b16 %v3529
      %v4061 = vunpack.c.l.b16 %v3530
      %v4062 = vunpack.c.h.b16 %v3530
      %v4063 = vunpack.c.l.b16 %v3531
      %v4064 = vunpack.c.h.b16 %v3531
      %v4065 = vunpack.c.l.b16 %v3532
      %v4066 = vunpack.c.h.b16 %v3532
      %v4067 = vunpack.c.l.b16 %v3533
      %v4068 = vunpack.c.h.b16 %v3533
      %v4069 = vunpack.c.l.b16 %v3534
      %v4070 = vunpack.c.h.b16 %v3534
      %v4071 = vunpack.c.l.b16 %v3535
      %v4072 = vunpack.c.h.b16 %v3535
      %v4073 = vunpack.c.l.b16 %v3536
      %v4074 = vunpack.c.h.b16 %v3536
      %v4075 = vunpack.c.l.b16 %v3537
      %v4076 = vunpack.c.h.b16 %v3537
      %v4077 = vunpack.c.l.b16 %v3538
      %v4078 = vunpack.c.h.b16 %v3538
      %v4079 = vunpack.c.l.b16 %v3539
      %v4080 = vunpack.c.h.b16 %v3539
      %v4081 = vpack.c.b16 %v4051, %v4049
      %v4082 = vpack.c.b16 %v4052, %v4050
      %v4083 = vpack.c.b16 %v4055, %v4053
      %v4084 = vpack.c.b16 %v4056, %v4054
      %v4085 = vpack.c.b16 %v4059, %v4057
      %v4086 = vpack.c.b16 %v4060, %v4058
      %v4087 = vpack.c.b16 %v4063, %v4061
      %v4088 = vpack.c.b16 %v4064, %v4062
      %v4089 = vpack.c.b16 %v4067, %v4065
      %v4090 = vpack.c.b16 %v4068, %v4066
      %v4091 = vpack.c.b16 %v4071, %v4069
      %v4092 = vpack.c.b16 %v4072, %v4070
      %v4093 = vpack.c.b16 %v4075, %v4073
      %v4094 = vpack.c.b16 %v4076, %v4074
      %v4095 = vpack.c.b16 %v4079, %v4077
      %v4096 = vpack.c.b16 %v4080, %v4078
      %v4129 = vunpack.c.l.b16 %v3572
      %v4130 = vunpack.c.h.b16 %v3572
      %v4131 = vunpack.c.l.b16 %v3573
      %v4132 = vunpack.c.h.b16 %v3573
      %v4133 = vunpack.c.l.b16 %v3574
      %v4134 = vunpack.c.h.b16 %v3574
      %v4135 = vunpack.c.l.b16 %v3575
      %v4136 = vunpack.c.h.b16 %v3575
      %v4137 = vunpack.c.l.b16 %v3576
      %v4138 = vunpack.c.h.b16 %v3576
      %v4139 = vunpack.c.l.b16 %v3577
      %v4140 = vunpack.c.h.b16 %v3577
      %v4141 = vunpack.c.l.b16 %v3578
      %v4142 = vunpack.c.h.b16 %v3578
      %v4143 = vunpack.c.l.b16 %v3579
      %v4144 = vunpack.c.h.b16 %v3579
      %v4145 = vunpack.c.l.b16 %v3580
      %v4146 = vunpack.c.h.b16 %v3580
      %v4147 = vunpack.c.l.b16 %v3581
      %v4148 = vunpack.c.h.b16 %v3581
      %v4149 = vunpack.c.l.b16 %v3582
      %v4150 = vunpack.c.h.b16 %v3582
      %v4151 = vunpack.c.l.b16 %v3583
      %v4152 = vunpack.c.h.b16 %v3583
      %v4153 = vunpack.c.l.b16 %v3584
      %v4154 = vunpack.c.h.b16 %v3584
      %v4155 = vunpack.c.l.b16 %v3585
      %v4156 = vunpack.c.h.b16 %v3585
      %v4157 = vunpack.c.l.b16 %v3586
      %v4158 = vunpack.c.h.b16 %v3586
      %v4159 = vunpack.c.l.b16 %v3587
      %v4160 = vunpack.c.h.b16 %v3587
      %v4161 = vunpack.c.l.b16 %v3588
      %v4162 = vunpack.c.h.b16 %v3588
      %v4163 = vunpack.c.l.b16 %v3589
      %v4164 = vunpack.c.h.b16 %v3589
      %v4165 = vunpack.c.l.b16 %v3590
      %v4166 = vunpack.c.h.b16 %v3590
      %v4167 = vunpack.c.l.b16 %v3591
      %v4168 = vunpack.c.h.b16 %v3591
      %v4169 = vunpack.c.l.b16 %v3592
      %v4170 = vunpack.c.h.b16 %v3592
      %v4171 = vunpack.c.l.b16 %v3593
      %v4172 = vunpack.c.h.b16 %v3593
      %v4173 = vunpack.c.l.b16 %v3594
      %v4174 = vunpack.c.h.b16 %v3594
      %v4175 = vunpack.c.l.b16 %v3595
      %v4176 = vunpack.c.h.b16 %v3595
      %v4177 = vpack.c.b16 %v4131, %v4129
      %v4178 = vpack.c.b16 %v4132, %v4130
      %v4179 = vpack.c.b16 %v4135, %v4133
      %v4180 = vpack.c.b16 %v4136, %v4134
      %v4181 = vpack.c.b16 %v4139, %v4137
      %v4182 = vpack.c.b16 %v4140, %v4138
      %v4183 = vpack.c.b16 %v4143, %v4141
      %v4184 = vpack.c.b16 %v4144, %v4142
      %v4185 = vpack.c.b16 %v4147, %v4145
      %v4186 = vpack.c.b16 %v4148, %v4146
      %v4187 = vpack.c.b16 %v4151, %v4149
      %v4188 = vpack.c.b16 %v4152, %v4150
      %v4189 = vpack.c.b16 %v4155, %v4153
      %v4190 = vpack.c.b16 %v4156, %v4154
      %v4191 = vpack.c.b16 %v4159, %v4157
      %v4192 = vpack.c.b16 %v4160, %v4158
      %v4193 = vpack.c.b16 %v4163, %v4161
      %v4194 = vpack.c.b16 %v4164, %v4162
      %v4195 = vpack.c.b16 %v4167, %v4165
      %v4196 = vpack.c.b16 %v4168, %v4166
      %v4197 = vpack.c.b16 %v4171, %v4169
      %v4198 = vpack.c.b16 %v4172, %v4170
      %v4199 = vpack.c.b16 %v4175, %v4173
      %v4200 = vpack.c.b16 %v4176, %v4174
      %v4226 = vsel %vm3086, %v4082, 0
      %v4229 = vsel %vm3086, %v4084, 0
      %v4232 = vsel %vm3086, %v4086, 0
      %v4235 = vsel %vm3086, %v4088, 0
      %v4238 = vsel %vm3086, %v4090, 0
      %v4241 = vsel %vm3086, %v4092, 0
      %v4244 = vsel %vm3086, %v4094, 0
      %v4247 = vsel %vm3086, %v4096, 0
      %4249 = vmatpush.bf16.msra.mxu0 %v4191
      %4250 = vmatpush.bf16.msra.mxu0 %v4189
      %4251 = vmatpush.bf16.msra.mxu0 %v4187
      %4252 = vmatpush.bf16.msra.mxu0 %v4185
      %4253 = vmatpush.bf16.msra.mxu0 %v4183
      %4254 = vmatpush.bf16.msra.mxu0 %v4181
      %4255 = vmatpush.bf16.msra.mxu0 %v4179
      %4256 = vmatpush.bf16.msra.mxu0 %v4177
      %4257 = vmatmul.bf16.gmra.mxu0 %v4081
      %v4258 = vpop.f32.mrf.mxu0
      %v4259 = vadd.f32 %v3896, %v4258
      %v4260 = vpop.f32.mrf.mxu0
      %v4261 = vadd.f32 %v3898, %v4260
      %4262 = vmatmul.bf16.gmra.mxu0 %v4083
      %v4263 = vpop.f32.mrf.mxu0
      %v4264 = vadd.f32 %v3901, %v4263
      %v4265 = vpop.f32.mrf.mxu0
      %v4266 = vadd.f32 %v3903, %v4265
      %4267 = vmatmul.bf16.gmra.mxu0 %v4085
      %v4268 = vpop.f32.mrf.mxu0
      %v4269 = vadd.f32 %v3906, %v4268
      %v4270 = vpop.f32.mrf.mxu0
      %v4271 = vadd.f32 %v3908, %v4270
      %4272 = vmatmul.bf16.gmra.mxu0 %v4087
      %v4273 = vpop.f32.mrf.mxu0
      %v4274 = vadd.f32 %v3911, %v4273
      %v4275 = vpop.f32.mrf.mxu0
      %v4276 = vadd.f32 %v3913, %v4275
      %4277 = vmatmul.bf16.gmra.mxu0 %v4089
      %v4278 = vpop.f32.mrf.mxu0
      %v4279 = vadd.f32 %v3916, %v4278
      %v4280 = vpop.f32.mrf.mxu0
      %v4281 = vadd.f32 %v3918, %v4280
      %4282 = vmatmul.bf16.gmra.mxu0 %v4091
      %v4283 = vpop.f32.mrf.mxu0
      %v4284 = vadd.f32 %v3921, %v4283
      %v4285 = vpop.f32.mrf.mxu0
      %v4286 = vadd.f32 %v3923, %v4285
      %4287 = vmatmul.bf16.gmra.mxu0 %v4093
      %v4288 = vpop.f32.mrf.mxu0
      %v4289 = vadd.f32 %v3926, %v4288
      %v4290 = vpop.f32.mrf.mxu0
      %v4291 = vadd.f32 %v3928, %v4290
      %4292 = vmatmul.bf16.gmra.mxu0 %v4095
      %v4293 = vpop.f32.mrf.mxu0
      %v4294 = vadd.f32 %v3931, %v4293
      %v4295 = vpop.f32.mrf.mxu0
      %v4296 = vadd.f32 %v3933, %v4295
      %4297 = vdwg.mxu0
      %4298 = vmatpush.bf16.msra.mxu0 0
      %4299 = vmatpush.bf16.msra.mxu0 0
      %4300 = vmatpush.bf16.msra.mxu0 0
      %4301 = vmatpush.bf16.msra.mxu0 0
      %4302 = vmatpush.bf16.msra.mxu0 %v4199
      %4303 = vmatpush.bf16.msra.mxu0 %v4197
      %4304 = vmatpush.bf16.msra.mxu0 %v4195
      %4305 = vmatpush.bf16.msra.mxu0 %v4193
      %4306 = vmatmul.bf16.gmra.mxu0 %v4226
      %v4307 = vpop.f32.mrf.mxu0
      %v4308 = vadd.f32 %v4259, %v4307
      %v4309 = vpop.f32.mrf.mxu0
      %v4310 = vadd.f32 %v4261, %v4309
      %4311 = vmatmul.bf16.gmra.mxu0 %v4229
      %v4312 = vpop.f32.mrf.mxu0
      %v4313 = vadd.f32 %v4264, %v4312
      %v4314 = vpop.f32.mrf.mxu0
      %v4315 = vadd.f32 %v4266, %v4314
      %4316 = vmatmul.bf16.gmra.mxu0 %v4232
      %v4317 = vpop.f32.mrf.mxu0
      %v4318 = vadd.f32 %v4269, %v4317
      %v4319 = vpop.f32.mrf.mxu0
      %v4320 = vadd.f32 %v4271, %v4319
      %4321 = vmatmul.bf16.gmra.mxu0 %v4235
      %v4322 = vpop.f32.mrf.mxu0
      %v4323 = vadd.f32 %v4274, %v4322
      %v4324 = vpop.f32.mrf.mxu0
      %v4325 = vadd.f32 %v4276, %v4324
      %4326 = vmatmul.bf16.gmra.mxu0 %v4238
      %v4327 = vpop.f32.mrf.mxu0
      %v4328 = vadd.f32 %v4279, %v4327
      %v4329 = vpop.f32.mrf.mxu0
      %v4330 = vadd.f32 %v4281, %v4329
      %4331 = vmatmul.bf16.gmra.mxu0 %v4241
      %v4332 = vpop.f32.mrf.mxu0
      %v4333 = vadd.f32 %v4284, %v4332
      %v4334 = vpop.f32.mrf.mxu0
      %v4335 = vadd.f32 %v4286, %v4334
      %4336 = vmatmul.bf16.gmra.mxu0 %v4244
      %v4337 = vpop.f32.mrf.mxu0
      %v4338 = vadd.f32 %v4289, %v4337
      %v4339 = vpop.f32.mrf.mxu0
      %v4340 = vadd.f32 %v4291, %v4339
      %4341 = vmatmul.bf16.gmra.mxu0 %v4247
      %v4342 = vpop.f32.mrf.mxu0
      %v4343 = vadd.f32 %v4294, %v4342
      %v4344 = vpop.f32.mrf.mxu0
      %v4345 = vadd.f32 %v4296, %v4344
      %4346 = vdwg.mxu0
      %4347 = vmatpush.bf16.msra.mxu0 %v4192
      %4348 = vmatpush.bf16.msra.mxu0 %v4190
      %4349 = vmatpush.bf16.msra.mxu0 %v4188
      %4350 = vmatpush.bf16.msra.mxu0 %v4186
      %4351 = vmatpush.bf16.msra.mxu0 %v4184
      %4352 = vmatpush.bf16.msra.mxu0 %v4182
      %4353 = vmatpush.bf16.msra.mxu0 %v4180
      %4354 = vmatpush.bf16.msra.mxu0 %v4178
      %4355 = vmatmul.bf16.gmra.mxu0 %v4081
      %v4356 = vpop.f32.mrf.mxu0
      %v4357 = vadd.f32 %v3994, %v4356
      %v4358 = vpop.f32.mrf.mxu0
      %v4359 = vadd.f32 %v3996, %v4358
      %4360 = vmatmul.bf16.gmra.mxu0 %v4083
      %v4361 = vpop.f32.mrf.mxu0
      %v4362 = vadd.f32 %v3999, %v4361
      %v4363 = vpop.f32.mrf.mxu0
      %v4364 = vadd.f32 %v4001, %v4363
      %4365 = vmatmul.bf16.gmra.mxu0 %v4085
      %v4366 = vpop.f32.mrf.mxu0
      %v4367 = vadd.f32 %v4004, %v4366
      %v4368 = vpop.f32.mrf.mxu0
      %v4369 = vadd.f32 %v4006, %v4368
      %4370 = vmatmul.bf16.gmra.mxu0 %v4087
      %v4371 = vpop.f32.mrf.mxu0
      %v4372 = vadd.f32 %v4009, %v4371
      %v4373 = vpop.f32.mrf.mxu0
      %v4374 = vadd.f32 %v4011, %v4373
      %4375 = vmatmul.bf16.gmra.mxu0 %v4089
      %v4376 = vpop.f32.mrf.mxu0
      %v4377 = vadd.f32 %v4014, %v4376
      %v4378 = vpop.f32.mrf.mxu0
      %v4379 = vadd.f32 %v4016, %v4378
      %4380 = vmatmul.bf16.gmra.mxu0 %v4091
      %v4381 = vpop.f32.mrf.mxu0
      %v4382 = vadd.f32 %v4019, %v4381
      %v4383 = vpop.f32.mrf.mxu0
      %v4384 = vadd.f32 %v4021, %v4383
      %4385 = vmatmul.bf16.gmra.mxu0 %v4093
      %v4386 = vpop.f32.mrf.mxu0
      %v4387 = vadd.f32 %v4024, %v4386
      %v4388 = vpop.f32.mrf.mxu0
      %v4389 = vadd.f32 %v4026, %v4388
      %4390 = vmatmul.bf16.gmra.mxu0 %v4095
      %v4391 = vpop.f32.mrf.mxu0
      %v4392 = vadd.f32 %v4029, %v4391
      %v4393 = vpop.f32.mrf.mxu0
      %v4394 = vadd.f32 %v4031, %v4393
      %4395 = vdwg.mxu0
      %4396 = vmatpush.bf16.msra.mxu0 0
      %4397 = vmatpush.bf16.msra.mxu0 0
      %4398 = vmatpush.bf16.msra.mxu0 0
      %4399 = vmatpush.bf16.msra.mxu0 0
      %4400 = vmatpush.bf16.msra.mxu0 %v4200
      %4401 = vmatpush.bf16.msra.mxu0 %v4198
      %4402 = vmatpush.bf16.msra.mxu0 %v4196
      %4403 = vmatpush.bf16.msra.mxu0 %v4194
      %4404 = vmatmul.bf16.gmra.mxu0 %v4226
      %v4405 = vpop.f32.mrf.mxu0
      %v4406 = vadd.f32 %v4357, %v4405
      %v4407 = vpop.f32.mrf.mxu0
      %v4408 = vadd.f32 %v4359, %v4407
      %4409 = vmatmul.bf16.gmra.mxu0 %v4229
      %v4410 = vpop.f32.mrf.mxu0
      %v4411 = vadd.f32 %v4362, %v4410
      %v4412 = vpop.f32.mrf.mxu0
      %v4413 = vadd.f32 %v4364, %v4412
      %4414 = vmatmul.bf16.gmra.mxu0 %v4232
      %v4415 = vpop.f32.mrf.mxu0
      %v4416 = vadd.f32 %v4367, %v4415
      %v4417 = vpop.f32.mrf.mxu0
      %v4418 = vadd.f32 %v4369, %v4417
      %4419 = vmatmul.bf16.gmra.mxu0 %v4235
      %v4420 = vpop.f32.mrf.mxu0
      %v4421 = vadd.f32 %v4372, %v4420
      %v4422 = vpop.f32.mrf.mxu0
      %v4423 = vadd.f32 %v4374, %v4422
      %4424 = vmatmul.bf16.gmra.mxu0 %v4238
      %v4425 = vpop.f32.mrf.mxu0
      %v4426 = vadd.f32 %v4377, %v4425
      %v4427 = vpop.f32.mrf.mxu0
      %v4428 = vadd.f32 %v4379, %v4427
      %4429 = vmatmul.bf16.gmra.mxu0 %v4241
      %v4430 = vpop.f32.mrf.mxu0
      %v4431 = vadd.f32 %v4382, %v4430
      %v4432 = vpop.f32.mrf.mxu0
      %v4433 = vadd.f32 %v4384, %v4432
      %4434 = vmatmul.bf16.gmra.mxu0 %v4244
      %v4435 = vpop.f32.mrf.mxu0
      %v4436 = vadd.f32 %v4387, %v4435
      %v4437 = vpop.f32.mrf.mxu0
      %v4438 = vadd.f32 %v4389, %v4437
      %4439 = vmatmul.bf16.gmra.mxu0 %v4247
      %v4440 = vpop.f32.mrf.mxu0
      %v4441 = vadd.f32 %v4392, %v4440
      %v4442 = vpop.f32.mrf.mxu0
      %v4443 = vadd.f32 %v4394, %v4442
      %4444 = vdwg.mxu0
      %s4445 = scalar_lea.vmem %s3, 384
      %v4446 = vld [vmem:[%s4445] sm:$0xff]
      %v4447 = vld [vmem:[%s4445 + $0x8] sm:$0xff]
      %v4448 = vld [vmem:[%s4445 + $0x10] sm:$0xff]
      %v4449 = vld [vmem:[%s4445 + $0x18] sm:$0xff]
      %v4450 = vld [vmem:[%s4445 + $0x20] sm:$0xff]
      %v4451 = vld [vmem:[%s4445 + $0x28] sm:$0xff]
      %v4452 = vld [vmem:[%s4445 + $0x30] sm:$0xff]
      %v4453 = vld [vmem:[%s4445 + $0x38] sm:$0xff]
      %v4454 = vld [vmem:[%s4445 + $0x40] sm:$0xff]
      %v4455 = vld [vmem:[%s4445 + $0x48] sm:$0xff]
      %v4456 = vld [vmem:[%s4445 + $0x50] sm:$0xff]
      %v4457 = vld [vmem:[%s4445 + $0x58] sm:$0xff]
      %v4458 = vld [vmem:[%s4445 + $0x60] sm:$0xff]
      %v4459 = vld [vmem:[%s4445 + $0x68] sm:$0xff]
      %v4460 = vld [vmem:[%s4445 + $0x70] sm:$0xff]
      %v4461 = vld [vmem:[%s4445 + $0x78] sm:$0xff]
      %v4462 = vld [vmem:[%s4445 + $0x80] sm:$0xff]
      %v4463 = vld [vmem:[%s4445 + $0x88] sm:$0xff]
      %v4464 = vld [vmem:[%s4445 + $0x90] sm:$0xff]
      %v4465 = vld [vmem:[%s4445 + $0x98] sm:$0xff]
      %v4466 = vld [vmem:[%s4445 + $0xa0] sm:$0xff]
      %v4467 = vld [vmem:[%s4445 + $0xa8] sm:$0xff]
      %v4468 = vld [vmem:[%s4445 + $0xb0] sm:$0xff]
      %v4469 = vld [vmem:[%s4445 + $0xb8] sm:$0xff]
      %v4474 = vunpack.c.l.b16 %v3540
      %v4475 = vunpack.c.h.b16 %v3540
      %v4476 = vunpack.c.l.b16 %v3541
      %v4477 = vunpack.c.h.b16 %v3541
      %v4478 = vunpack.c.l.b16 %v3542
      %v4479 = vunpack.c.h.b16 %v3542
      %v4480 = vunpack.c.l.b16 %v3543
      %v4481 = vunpack.c.h.b16 %v3543
      %v4482 = vpack.c.b16 %v4476, %v4474
      %v4483 = vpack.c.b16 %v4477, %v4475
      %v4484 = vpack.c.b16 %v4480, %v4478
      %v4485 = vpack.c.b16 %v4481, %v4479
      %v4512 = vunpack.c.l.b16 %v4446
      %v4513 = vunpack.c.h.b16 %v4446
      %v4514 = vunpack.c.l.b16 %v4447
      %v4515 = vunpack.c.h.b16 %v4447
      %v4516 = vunpack.c.l.b16 %v4448
      %v4517 = vunpack.c.h.b16 %v4448
      %v4518 = vunpack.c.l.b16 %v4449
      %v4519 = vunpack.c.h.b16 %v4449
      %v4520 = vunpack.c.l.b16 %v4450
      %v4521 = vunpack.c.h.b16 %v4450
      %v4522 = vunpack.c.l.b16 %v4451
      %v4523 = vunpack.c.h.b16 %v4451
      %v4524 = vunpack.c.l.b16 %v4452
      %v4525 = vunpack.c.h.b16 %v4452
      %v4526 = vunpack.c.l.b16 %v4453
      %v4527 = vunpack.c.h.b16 %v4453
      %v4528 = vunpack.c.l.b16 %v4454
      %v4529 = vunpack.c.h.b16 %v4454
      %v4530 = vunpack.c.l.b16 %v4455
      %v4531 = vunpack.c.h.b16 %v4455
      %v4532 = vunpack.c.l.b16 %v4456
      %v4533 = vunpack.c.h.b16 %v4456
      %v4534 = vunpack.c.l.b16 %v4457
      %v4535 = vunpack.c.h.b16 %v4457
      %v4536 = vunpack.c.l.b16 %v4458
      %v4537 = vunpack.c.h.b16 %v4458
      %v4538 = vunpack.c.l.b16 %v4459
      %v4539 = vunpack.c.h.b16 %v4459
      %v4540 = vunpack.c.l.b16 %v4460
      %v4541 = vunpack.c.h.b16 %v4460
      %v4542 = vunpack.c.l.b16 %v4461
      %v4543 = vunpack.c.h.b16 %v4461
      %v4544 = vunpack.c.l.b16 %v4462
      %v4545 = vunpack.c.h.b16 %v4462
      %v4546 = vunpack.c.l.b16 %v4463
      %v4547 = vunpack.c.h.b16 %v4463
      %v4548 = vunpack.c.l.b16 %v4464
      %v4549 = vunpack.c.h.b16 %v4464
      %v4550 = vunpack.c.l.b16 %v4465
      %v4551 = vunpack.c.h.b16 %v4465
      %v4552 = vunpack.c.l.b16 %v4466
      %v4553 = vunpack.c.h.b16 %v4466
      %v4554 = vunpack.c.l.b16 %v4467
      %v4555 = vunpack.c.h.b16 %v4467
      %v4556 = vunpack.c.l.b16 %v4468
      %v4557 = vunpack.c.h.b16 %v4468
      %v4558 = vunpack.c.l.b16 %v4469
      %v4559 = vunpack.c.h.b16 %v4469
      %v4560 = vpack.c.b16 %v4514, %v4512
      %v4561 = vpack.c.b16 %v4515, %v4513
      %v4562 = vpack.c.b16 %v4518, %v4516
      %v4563 = vpack.c.b16 %v4519, %v4517
      %v4564 = vpack.c.b16 %v4522, %v4520
      %v4565 = vpack.c.b16 %v4523, %v4521
      %v4566 = vpack.c.b16 %v4526, %v4524
      %v4567 = vpack.c.b16 %v4527, %v4525
      %v4568 = vpack.c.b16 %v4530, %v4528
      %v4569 = vpack.c.b16 %v4531, %v4529
      %v4570 = vpack.c.b16 %v4534, %v4532
      %v4571 = vpack.c.b16 %v4535, %v4533
      %v4572 = vpack.c.b16 %v4538, %v4536
      %v4573 = vpack.c.b16 %v4539, %v4537
      %v4574 = vpack.c.b16 %v4542, %v4540
      %v4575 = vpack.c.b16 %v4543, %v4541
      %v4576 = vpack.c.b16 %v4546, %v4544
      %v4577 = vpack.c.b16 %v4547, %v4545
      %v4578 = vpack.c.b16 %v4550, %v4548
      %v4579 = vpack.c.b16 %v4551, %v4549
      %v4580 = vpack.c.b16 %v4554, %v4552
      %v4581 = vpack.c.b16 %v4555, %v4553
      %v4582 = vpack.c.b16 %v4558, %v4556
      %v4583 = vpack.c.b16 %v4559, %v4557
      %v4609 = vsel %vm3086, %v4483, 0
      %v4612 = vsel %vm3086, %v4485, 0
      %4614 = vmatpush.bf16.msra.mxu0 %v4574
      %4615 = vmatpush.bf16.msra.mxu0 %v4572
      %4616 = vmatpush.bf16.msra.mxu0 %v4570
      %4617 = vmatpush.bf16.msra.mxu0 %v4568
      %4618 = vmatpush.bf16.msra.mxu0 %v4566
      %4619 = vmatpush.bf16.msra.mxu0 %v4564
      %4620 = vmatpush.bf16.msra.mxu0 %v4562
      %4621 = vmatpush.bf16.msra.mxu0 %v4560
      %4622 = vmatmul.bf16.gmra.mxu0 %v4085
      %v4623 = vpop.f32.mrf.mxu0
      %v4624 = vadd.f32 0.0, %v4623
      %v4625 = vpop.f32.mrf.mxu0
      %v4626 = vadd.f32 0.0, %v4625
      %4627 = vmatmul.bf16.gmra.mxu0 %v4087
      %v4628 = vpop.f32.mrf.mxu0
      %v4629 = vadd.f32 0.0, %v4628
      %v4630 = vpop.f32.mrf.mxu0
      %v4631 = vadd.f32 0.0, %v4630
      %4632 = vmatmul.bf16.gmra.mxu0 %v4089
      %v4633 = vpop.f32.mrf.mxu0
      %v4634 = vadd.f32 0.0, %v4633
      %v4635 = vpop.f32.mrf.mxu0
      %v4636 = vadd.f32 0.0, %v4635
      %4637 = vmatmul.bf16.gmra.mxu0 %v4091
      %v4638 = vpop.f32.mrf.mxu0
      %v4639 = vadd.f32 0.0, %v4638
      %v4640 = vpop.f32.mrf.mxu0
      %v4641 = vadd.f32 0.0, %v4640
      %4642 = vmatmul.bf16.gmra.mxu0 %v4093
      %v4643 = vpop.f32.mrf.mxu0
      %v4644 = vadd.f32 0.0, %v4643
      %v4645 = vpop.f32.mrf.mxu0
      %v4646 = vadd.f32 0.0, %v4645
      %4647 = vmatmul.bf16.gmra.mxu0 %v4095
      %v4648 = vpop.f32.mrf.mxu0
      %v4649 = vadd.f32 0.0, %v4648
      %v4650 = vpop.f32.mrf.mxu0
      %v4651 = vadd.f32 0.0, %v4650
      %4652 = vmatmul.bf16.gmra.mxu0 %v4482
      %v4653 = vpop.f32.mrf.mxu0
      %v4654 = vadd.f32 0.0, %v4653
      %v4655 = vpop.f32.mrf.mxu0
      %v4656 = vadd.f32 0.0, %v4655
      %4657 = vmatmul.bf16.gmra.mxu0 %v4484
      %v4658 = vpop.f32.mrf.mxu0
      %v4659 = vadd.f32 0.0, %v4658
      %v4660 = vpop.f32.mrf.mxu0
      %v4661 = vadd.f32 0.0, %v4660
      %4662 = vdwg.mxu0
      %4663 = vmatpush.bf16.msra.mxu0 0
      %4664 = vmatpush.bf16.msra.mxu0 0
      %4665 = vmatpush.bf16.msra.mxu0 0
      %4666 = vmatpush.bf16.msra.mxu0 0
      %4667 = vmatpush.bf16.msra.mxu0 %v4582
      %4668 = vmatpush.bf16.msra.mxu0 %v4580
      %4669 = vmatpush.bf16.msra.mxu0 %v4578
      %4670 = vmatpush.bf16.msra.mxu0 %v4576
      %4671 = vmatmul.bf16.gmra.mxu0 %v4232
      %v4672 = vpop.f32.mrf.mxu0
      %v4673 = vadd.f32 %v4624, %v4672
      %v4674 = vpop.f32.mrf.mxu0
      %v4675 = vadd.f32 %v4626, %v4674
      %4676 = vmatmul.bf16.gmra.mxu0 %v4235
      %v4677 = vpop.f32.mrf.mxu0
      %v4678 = vadd.f32 %v4629, %v4677
      %v4679 = vpop.f32.mrf.mxu0
      %v4680 = vadd.f32 %v4631, %v4679
      %4681 = vmatmul.bf16.gmra.mxu0 %v4238
      %v4682 = vpop.f32.mrf.mxu0
      %v4683 = vadd.f32 %v4634, %v4682
      %v4684 = vpop.f32.mrf.mxu0
      %v4685 = vadd.f32 %v4636, %v4684
      %4686 = vmatmul.bf16.gmra.mxu0 %v4241
      %v4687 = vpop.f32.mrf.mxu0
      %v4688 = vadd.f32 %v4639, %v4687
      %v4689 = vpop.f32.mrf.mxu0
      %v4690 = vadd.f32 %v4641, %v4689
      %4691 = vmatmul.bf16.gmra.mxu0 %v4244
      %v4692 = vpop.f32.mrf.mxu0
      %v4693 = vadd.f32 %v4644, %v4692
      %v4694 = vpop.f32.mrf.mxu0
      %v4695 = vadd.f32 %v4646, %v4694
      %4696 = vmatmul.bf16.gmra.mxu0 %v4247
      %v4697 = vpop.f32.mrf.mxu0
      %v4698 = vadd.f32 %v4649, %v4697
      %v4699 = vpop.f32.mrf.mxu0
      %v4700 = vadd.f32 %v4651, %v4699
      %4701 = vmatmul.bf16.gmra.mxu0 %v4609
      %v4702 = vpop.f32.mrf.mxu0
      %v4703 = vadd.f32 %v4654, %v4702
      %v4704 = vpop.f32.mrf.mxu0
      %v4705 = vadd.f32 %v4656, %v4704
      %4706 = vmatmul.bf16.gmra.mxu0 %v4612
      %v4707 = vpop.f32.mrf.mxu0
      %v4708 = vadd.f32 %v4659, %v4707
      %v4709 = vpop.f32.mrf.mxu0
      %v4710 = vadd.f32 %v4661, %v4709
      %4711 = vdwg.mxu0
      %4712 = vmatpush.bf16.msra.mxu0 %v4575
      %4713 = vmatpush.bf16.msra.mxu0 %v4573
      %4714 = vmatpush.bf16.msra.mxu0 %v4571
      %4715 = vmatpush.bf16.msra.mxu0 %v4569
      %4716 = vmatpush.bf16.msra.mxu0 %v4567
      %4717 = vmatpush.bf16.msra.mxu0 %v4565
      %4718 = vmatpush.bf16.msra.mxu0 %v4563
      %4719 = vmatpush.bf16.msra.mxu0 %v4561
      %4720 = vmatmul.bf16.gmra.mxu0 %v4085
      %v4721 = vpop.f32.mrf.mxu0
      %v4722 = vadd.f32 0.0, %v4721
      %v4723 = vpop.f32.mrf.mxu0
      %v4724 = vadd.f32 0.0, %v4723
      %4725 = vmatmul.bf16.gmra.mxu0 %v4087
      %v4726 = vpop.f32.mrf.mxu0
      %v4727 = vadd.f32 0.0, %v4726
      %v4728 = vpop.f32.mrf.mxu0
      %v4729 = vadd.f32 0.0, %v4728
      %4730 = vmatmul.bf16.gmra.mxu0 %v4089
      %v4731 = vpop.f32.mrf.mxu0
      %v4732 = vadd.f32 0.0, %v4731
      %v4733 = vpop.f32.mrf.mxu0
      %v4734 = vadd.f32 0.0, %v4733
      %4735 = vmatmul.bf16.gmra.mxu0 %v4091
      %v4736 = vpop.f32.mrf.mxu0
      %v4737 = vadd.f32 0.0, %v4736
      %v4738 = vpop.f32.mrf.mxu0
      %v4739 = vadd.f32 0.0, %v4738
      %4740 = vmatmul.bf16.gmra.mxu0 %v4093
      %v4741 = vpop.f32.mrf.mxu0
      %v4742 = vadd.f32 0.0, %v4741
      %v4743 = vpop.f32.mrf.mxu0
      %v4744 = vadd.f32 0.0, %v4743
      %4745 = vmatmul.bf16.gmra.mxu0 %v4095
      %v4746 = vpop.f32.mrf.mxu0
      %v4747 = vadd.f32 0.0, %v4746
      %v4748 = vpop.f32.mrf.mxu0
      %v4749 = vadd.f32 0.0, %v4748
      %4750 = vmatmul.bf16.gmra.mxu0 %v4482
      %v4751 = vpop.f32.mrf.mxu0
      %v4752 = vadd.f32 0.0, %v4751
      %v4753 = vpop.f32.mrf.mxu0
      %v4754 = vadd.f32 0.0, %v4753
      %4755 = vmatmul.bf16.gmra.mxu0 %v4484
      %v4756 = vpop.f32.mrf.mxu0
      %v4757 = vadd.f32 0.0, %v4756
      %v4758 = vpop.f32.mrf.mxu0
      %v4759 = vadd.f32 0.0, %v4758
      %4760 = vdwg.mxu0
      %4761 = vmatpush.bf16.msra.mxu0 0
      %4762 = vmatpush.bf16.msra.mxu0 0
      %4763 = vmatpush.bf16.msra.mxu0 0
      %4764 = vmatpush.bf16.msra.mxu0 0
      %4765 = vmatpush.bf16.msra.mxu0 %v4583
      %4766 = vmatpush.bf16.msra.mxu0 %v4581
      %4767 = vmatpush.bf16.msra.mxu0 %v4579
      %4768 = vmatpush.bf16.msra.mxu0 %v4577
      %4769 = vmatmul.bf16.gmra.mxu0 %v4232
      %v4770 = vpop.f32.mrf.mxu0
      %v4771 = vadd.f32 %v4722, %v4770
      %v4772 = vpop.f32.mrf.mxu0
      %v4773 = vadd.f32 %v4724, %v4772
      %4774 = vmatmul.bf16.gmra.mxu0 %v4235
      %v4775 = vpop.f32.mrf.mxu0
      %v4776 = vadd.f32 %v4727, %v4775
      %v4777 = vpop.f32.mrf.mxu0
      %v4778 = vadd.f32 %v4729, %v4777
      %4779 = vmatmul.bf16.gmra.mxu0 %v4238
      %v4780 = vpop.f32.mrf.mxu0
      %v4781 = vadd.f32 %v4732, %v4780
      %v4782 = vpop.f32.mrf.mxu0
      %v4783 = vadd.f32 %v4734, %v4782
      %4784 = vmatmul.bf16.gmra.mxu0 %v4241
      %v4785 = vpop.f32.mrf.mxu0
      %v4786 = vadd.f32 %v4737, %v4785
      %v4787 = vpop.f32.mrf.mxu0
      %v4788 = vadd.f32 %v4739, %v4787
      %4789 = vmatmul.bf16.gmra.mxu0 %v4244
      %v4790 = vpop.f32.mrf.mxu0
      %v4791 = vadd.f32 %v4742, %v4790
      %v4792 = vpop.f32.mrf.mxu0
      %v4793 = vadd.f32 %v4744, %v4792
      %4794 = vmatmul.bf16.gmra.mxu0 %v4247
      %v4795 = vpop.f32.mrf.mxu0
      %v4796 = vadd.f32 %v4747, %v4795
      %v4797 = vpop.f32.mrf.mxu0
      %v4798 = vadd.f32 %v4749, %v4797
      %4799 = vmatmul.bf16.gmra.mxu0 %v4609
      %v4800 = vpop.f32.mrf.mxu0
      %v4801 = vadd.f32 %v4752, %v4800
      %v4802 = vpop.f32.mrf.mxu0
      %v4803 = vadd.f32 %v4754, %v4802
      %4804 = vmatmul.bf16.gmra.mxu0 %v4612
      %v4805 = vpop.f32.mrf.mxu0
      %v4806 = vadd.f32 %v4757, %v4805
      %v4807 = vpop.f32.mrf.mxu0
      %v4808 = vadd.f32 %v4759, %v4807
      %4809 = vdwg.mxu0
      %v4810 = vadd.f32 %v4308, %v4673
      %v4811 = vadd.f32 %v4406, %v4771
      %v4812 = vadd.f32 %v4310, %v4675
      %v4813 = vadd.f32 %v4408, %v4773
      %v4814 = vadd.f32 %v4313, %v4678
      %v4815 = vadd.f32 %v4411, %v4776
      %v4816 = vadd.f32 %v4315, %v4680
      %v4817 = vadd.f32 %v4413, %v4778
      %v4818 = vadd.f32 %v4318, %v4683
      %v4819 = vadd.f32 %v4416, %v4781
      %v4820 = vadd.f32 %v4320, %v4685
      %v4821 = vadd.f32 %v4418, %v4783
      %v4822 = vadd.f32 %v4323, %v4688
      %v4823 = vadd.f32 %v4421, %v4786
      %v4824 = vadd.f32 %v4325, %v4690
      %v4825 = vadd.f32 %v4423, %v4788
      %v4826 = vadd.f32 %v4328, %v4693
      %v4827 = vadd.f32 %v4426, %v4791
      %v4828 = vadd.f32 %v4330, %v4695
      %v4829 = vadd.f32 %v4428, %v4793
      %v4830 = vadd.f32 %v4333, %v4698
      %v4831 = vadd.f32 %v4431, %v4796
      %v4832 = vadd.f32 %v4335, %v4700
      %v4833 = vadd.f32 %v4433, %v4798
      %v4834 = vadd.f32 %v4338, %v4703
      %v4835 = vadd.f32 %v4436, %v4801
      %v4836 = vadd.f32 %v4340, %v4705
      %v4837 = vadd.f32 %v4438, %v4803
      %v4838 = vadd.f32 %v4343, %v4708
      %v4839 = vadd.f32 %v4441, %v4806
      %v4840 = vadd.f32 %v4345, %v4710
      %v4841 = vadd.f32 %v4443, %v4808
      %s4842 = scalar_lea.vmem %s3, 576
      %v4843 = vld [vmem:[%s4842] sm:$0xff]
      %v4844 = vld [vmem:[%s4842 + $0x8] sm:$0xff]
      %v4845 = vld [vmem:[%s4842 + $0x10] sm:$0xff]
      %v4846 = vld [vmem:[%s4842 + $0x18] sm:$0xff]
      %v4847 = vld [vmem:[%s4842 + $0x20] sm:$0xff]
      %v4848 = vld [vmem:[%s4842 + $0x28] sm:$0xff]
      %v4849 = vld [vmem:[%s4842 + $0x30] sm:$0xff]
      %v4850 = vld [vmem:[%s4842 + $0x38] sm:$0xff]
      %v4851 = vld [vmem:[%s4842 + $0x40] sm:$0xff]
      %v4852 = vld [vmem:[%s4842 + $0x48] sm:$0xff]
      %v4853 = vld [vmem:[%s4842 + $0x50] sm:$0xff]
      %v4854 = vld [vmem:[%s4842 + $0x58] sm:$0xff]
      %v4855 = vld [vmem:[%s4842 + $0x60] sm:$0xff]
      %v4856 = vld [vmem:[%s4842 + $0x68] sm:$0xff]
      %v4857 = vld [vmem:[%s4842 + $0x70] sm:$0xff]
      %v4858 = vld [vmem:[%s4842 + $0x78] sm:$0xff]
      %v4859 = vld [vmem:[%s4842 + $0x80] sm:$0xff]
      %v4860 = vld [vmem:[%s4842 + $0x88] sm:$0xff]
      %v4861 = vld [vmem:[%s4842 + $0x90] sm:$0xff]
      %v4862 = vld [vmem:[%s4842 + $0x98] sm:$0xff]
      %v4863 = vld [vmem:[%s4842 + $0xa0] sm:$0xff]
      %v4864 = vld [vmem:[%s4842 + $0xa8] sm:$0xff]
      %v4865 = vld [vmem:[%s4842 + $0xb0] sm:$0xff]
      %v4866 = vld [vmem:[%s4842 + $0xb8] sm:$0xff]
      %v4871 = vunpack.c.l.b16 %v3564
      %v4872 = vunpack.c.h.b16 %v3564
      %v4873 = vunpack.c.l.b16 %v3565
      %v4874 = vunpack.c.h.b16 %v3565
      %v4875 = vunpack.c.l.b16 %v3566
      %v4876 = vunpack.c.h.b16 %v3566
      %v4877 = vunpack.c.l.b16 %v3567
      %v4878 = vunpack.c.h.b16 %v3567
      %v4879 = vpack.c.b16 %v4873, %v4871
      %v4880 = vpack.c.b16 %v4874, %v4872
      %v4881 = vpack.c.b16 %v4877, %v4875
      %v4882 = vpack.c.b16 %v4878, %v4876
      %v4909 = vunpack.c.l.b16 %v4843
      %v4910 = vunpack.c.h.b16 %v4843
      %v4911 = vunpack.c.l.b16 %v4844
      %v4912 = vunpack.c.h.b16 %v4844
      %v4913 = vunpack.c.l.b16 %v4845
      %v4914 = vunpack.c.h.b16 %v4845
      %v4915 = vunpack.c.l.b16 %v4846
      %v4916 = vunpack.c.h.b16 %v4846
      %v4917 = vunpack.c.l.b16 %v4847
      %v4918 = vunpack.c.h.b16 %v4847
      %v4919 = vunpack.c.l.b16 %v4848
      %v4920 = vunpack.c.h.b16 %v4848
      %v4921 = vunpack.c.l.b16 %v4849
      %v4922 = vunpack.c.h.b16 %v4849
      %v4923 = vunpack.c.l.b16 %v4850
      %v4924 = vunpack.c.h.b16 %v4850
      %v4925 = vunpack.c.l.b16 %v4851
      %v4926 = vunpack.c.h.b16 %v4851
      %v4927 = vunpack.c.l.b16 %v4852
      %v4928 = vunpack.c.h.b16 %v4852
      %v4929 = vunpack.c.l.b16 %v4853
      %v4930 = vunpack.c.h.b16 %v4853
      %v4931 = vunpack.c.l.b16 %v4854
      %v4932 = vunpack.c.h.b16 %v4854
      %v4933 = vunpack.c.l.b16 %v4855
      %v4934 = vunpack.c.h.b16 %v4855
      %v4935 = vunpack.c.l.b16 %v4856
      %v4936 = vunpack.c.h.b16 %v4856
      %v4937 = vunpack.c.l.b16 %v4857
      %v4938 = vunpack.c.h.b16 %v4857
      %v4939 = vunpack.c.l.b16 %v4858
      %v4940 = vunpack.c.h.b16 %v4858
      %v4941 = vunpack.c.l.b16 %v4859
      %v4942 = vunpack.c.h.b16 %v4859
      %v4943 = vunpack.c.l.b16 %v4860
      %v4944 = vunpack.c.h.b16 %v4860
      %v4945 = vunpack.c.l.b16 %v4861
      %v4946 = vunpack.c.h.b16 %v4861
      %v4947 = vunpack.c.l.b16 %v4862
      %v4948 = vunpack.c.h.b16 %v4862
      %v4949 = vunpack.c.l.b16 %v4863
      %v4950 = vunpack.c.h.b16 %v4863
      %v4951 = vunpack.c.l.b16 %v4864
      %v4952 = vunpack.c.h.b16 %v4864
      %v4953 = vunpack.c.l.b16 %v4865
      %v4954 = vunpack.c.h.b16 %v4865
      %v4955 = vunpack.c.l.b16 %v4866
      %v4956 = vunpack.c.h.b16 %v4866
      %v4957 = vpack.c.b16 %v4911, %v4909
      %v4958 = vpack.c.b16 %v4912, %v4910
      %v4959 = vpack.c.b16 %v4915, %v4913
      %v4960 = vpack.c.b16 %v4916, %v4914
      %v4961 = vpack.c.b16 %v4919, %v4917
      %v4962 = vpack.c.b16 %v4920, %v4918
      %v4963 = vpack.c.b16 %v4923, %v4921
      %v4964 = vpack.c.b16 %v4924, %v4922
      %v4965 = vpack.c.b16 %v4927, %v4925
      %v4966 = vpack.c.b16 %v4928, %v4926
      %v4967 = vpack.c.b16 %v4931, %v4929
      %v4968 = vpack.c.b16 %v4932, %v4930
      %v4969 = vpack.c.b16 %v4935, %v4933
      %v4970 = vpack.c.b16 %v4936, %v4934
      %v4971 = vpack.c.b16 %v4939, %v4937
      %v4972 = vpack.c.b16 %v4940, %v4938
      %v4973 = vpack.c.b16 %v4943, %v4941
      %v4974 = vpack.c.b16 %v4944, %v4942
      %v4975 = vpack.c.b16 %v4947, %v4945
      %v4976 = vpack.c.b16 %v4948, %v4946
      %v4977 = vpack.c.b16 %v4951, %v4949
      %v4978 = vpack.c.b16 %v4952, %v4950
      %v4979 = vpack.c.b16 %v4955, %v4953
      %v4980 = vpack.c.b16 %v4956, %v4954
      %v5006 = vsel %vm3086, %v4880, 0
      %v5009 = vsel %vm3086, %v4882, 0
      %5011 = vmatpush.bf16.msra.mxu0 %v4971
      %5012 = vmatpush.bf16.msra.mxu0 %v4969
      %5013 = vmatpush.bf16.msra.mxu0 %v4967
      %5014 = vmatpush.bf16.msra.mxu0 %v4965
      %5015 = vmatpush.bf16.msra.mxu0 %v4963
      %5016 = vmatpush.bf16.msra.mxu0 %v4961
      %5017 = vmatpush.bf16.msra.mxu0 %v4959
      %5018 = vmatpush.bf16.msra.mxu0 %v4957
      %5019 = vmatmul.bf16.gmra.mxu0 %v3673
      %v5020 = vpop.f32.mrf.mxu0
      %v5021 = vadd.f32 0.0, %v5020
      %v5022 = vpop.f32.mrf.mxu0
      %v5023 = vadd.f32 0.0, %v5022
      %5024 = vmatmul.bf16.gmra.mxu0 %v3675
      %v5025 = vpop.f32.mrf.mxu0
      %v5026 = vadd.f32 0.0, %v5025
      %v5027 = vpop.f32.mrf.mxu0
      %v5028 = vadd.f32 0.0, %v5027
      %5029 = vmatmul.bf16.gmra.mxu0 %v3677
      %v5030 = vpop.f32.mrf.mxu0
      %v5031 = vadd.f32 0.0, %v5030
      %v5032 = vpop.f32.mrf.mxu0
      %v5033 = vadd.f32 0.0, %v5032
      %5034 = vmatmul.bf16.gmra.mxu0 %v3679
      %v5035 = vpop.f32.mrf.mxu0
      %v5036 = vadd.f32 0.0, %v5035
      %v5037 = vpop.f32.mrf.mxu0
      %v5038 = vadd.f32 0.0, %v5037
      %5039 = vmatmul.bf16.gmra.mxu0 %v3681
      %v5040 = vpop.f32.mrf.mxu0
      %v5041 = vadd.f32 0.0, %v5040
      %v5042 = vpop.f32.mrf.mxu0
      %v5043 = vadd.f32 0.0, %v5042
      %5044 = vmatmul.bf16.gmra.mxu0 %v3683
      %v5045 = vpop.f32.mrf.mxu0
      %v5046 = vadd.f32 0.0, %v5045
      %v5047 = vpop.f32.mrf.mxu0
      %v5048 = vadd.f32 0.0, %v5047
      %5049 = vmatmul.bf16.gmra.mxu0 %v4879
      %v5050 = vpop.f32.mrf.mxu0
      %v5051 = vadd.f32 0.0, %v5050
      %v5052 = vpop.f32.mrf.mxu0
      %v5053 = vadd.f32 0.0, %v5052
      %5054 = vmatmul.bf16.gmra.mxu0 %v4881
      %v5055 = vpop.f32.mrf.mxu0
      %v5056 = vadd.f32 0.0, %v5055
      %v5057 = vpop.f32.mrf.mxu0
      %v5058 = vadd.f32 0.0, %v5057
      %5059 = vdwg.mxu0
      %5060 = vmatpush.bf16.msra.mxu0 0
      %5061 = vmatpush.bf16.msra.mxu0 0
      %5062 = vmatpush.bf16.msra.mxu0 0
      %5063 = vmatpush.bf16.msra.mxu0 0
      %5064 = vmatpush.bf16.msra.mxu0 %v4979
      %5065 = vmatpush.bf16.msra.mxu0 %v4977
      %5066 = vmatpush.bf16.msra.mxu0 %v4975
      %5067 = vmatpush.bf16.msra.mxu0 %v4973
      %5068 = vmatmul.bf16.gmra.mxu0 %v3820
      %v5069 = vpop.f32.mrf.mxu0
      %v5070 = vadd.f32 %v5021, %v5069
      %v5071 = vpop.f32.mrf.mxu0
      %v5072 = vadd.f32 %v5023, %v5071
      %5073 = vmatmul.bf16.gmra.mxu0 %v3823
      %v5074 = vpop.f32.mrf.mxu0
      %v5075 = vadd.f32 %v5026, %v5074
      %v5076 = vpop.f32.mrf.mxu0
      %v5077 = vadd.f32 %v5028, %v5076
      %5078 = vmatmul.bf16.gmra.mxu0 %v3826
      %v5079 = vpop.f32.mrf.mxu0
      %v5080 = vadd.f32 %v5031, %v5079
      %v5081 = vpop.f32.mrf.mxu0
      %v5082 = vadd.f32 %v5033, %v5081
      %5083 = vmatmul.bf16.gmra.mxu0 %v3829
      %v5084 = vpop.f32.mrf.mxu0
      %v5085 = vadd.f32 %v5036, %v5084
      %v5086 = vpop.f32.mrf.mxu0
      %v5087 = vadd.f32 %v5038, %v5086
      %5088 = vmatmul.bf16.gmra.mxu0 %v3832
      %v5089 = vpop.f32.mrf.mxu0
      %v5090 = vadd.f32 %v5041, %v5089
      %v5091 = vpop.f32.mrf.mxu0
      %v5092 = vadd.f32 %v5043, %v5091
      %5093 = vmatmul.bf16.gmra.mxu0 %v3835
      %v5094 = vpop.f32.mrf.mxu0
      %v5095 = vadd.f32 %v5046, %v5094
      %v5096 = vpop.f32.mrf.mxu0
      %v5097 = vadd.f32 %v5048, %v5096
      %5098 = vmatmul.bf16.gmra.mxu0 %v5006
      %v5099 = vpop.f32.mrf.mxu0
      %v5100 = vadd.f32 %v5051, %v5099
      %v5101 = vpop.f32.mrf.mxu0
      %v5102 = vadd.f32 %v5053, %v5101
      %5103 = vmatmul.bf16.gmra.mxu0 %v5009
      %v5104 = vpop.f32.mrf.mxu0
      %v5105 = vadd.f32 %v5056, %v5104
      %v5106 = vpop.f32.mrf.mxu0
      %v5107 = vadd.f32 %v5058, %v5106
      %5108 = vdwg.mxu0
      %5109 = vmatpush.bf16.msra.mxu0 %v4972
      %5110 = vmatpush.bf16.msra.mxu0 %v4970
      %5111 = vmatpush.bf16.msra.mxu0 %v4968
      %5112 = vmatpush.bf16.msra.mxu0 %v4966
      %5113 = vmatpush.bf16.msra.mxu0 %v4964
      %5114 = vmatpush.bf16.msra.mxu0 %v4962
      %5115 = vmatpush.bf16.msra.mxu0 %v4960
      %5116 = vmatpush.bf16.msra.mxu0 %v4958
      %5117 = vmatmul.bf16.gmra.mxu0 %v3673
      %v5118 = vpop.f32.mrf.mxu0
      %v5119 = vadd.f32 0.0, %v5118
      %v5120 = vpop.f32.mrf.mxu0
      %v5121 = vadd.f32 0.0, %v5120
      %5122 = vmatmul.bf16.gmra.mxu0 %v3675
      %v5123 = vpop.f32.mrf.mxu0
      %v5124 = vadd.f32 0.0, %v5123
      %v5125 = vpop.f32.mrf.mxu0
      %v5126 = vadd.f32 0.0, %v5125
      %5127 = vmatmul.bf16.gmra.mxu0 %v3677
      %v5128 = vpop.f32.mrf.mxu0
      %v5129 = vadd.f32 0.0, %v5128
      %v5130 = vpop.f32.mrf.mxu0
      %v5131 = vadd.f32 0.0, %v5130
      %5132 = vmatmul.bf16.gmra.mxu0 %v3679
      %v5133 = vpop.f32.mrf.mxu0
      %v5134 = vadd.f32 0.0, %v5133
      %v5135 = vpop.f32.mrf.mxu0
      %v5136 = vadd.f32 0.0, %v5135
      %5137 = vmatmul.bf16.gmra.mxu0 %v3681
      %v5138 = vpop.f32.mrf.mxu0
      %v5139 = vadd.f32 0.0, %v5138
      %v5140 = vpop.f32.mrf.mxu0
      %v5141 = vadd.f32 0.0, %v5140
      %5142 = vmatmul.bf16.gmra.mxu0 %v3683
      %v5143 = vpop.f32.mrf.mxu0
      %v5144 = vadd.f32 0.0, %v5143
      %v5145 = vpop.f32.mrf.mxu0
      %v5146 = vadd.f32 0.0, %v5145
      %5147 = vmatmul.bf16.gmra.mxu0 %v4879
      %v5148 = vpop.f32.mrf.mxu0
      %v5149 = vadd.f32 0.0, %v5148
      %v5150 = vpop.f32.mrf.mxu0
      %v5151 = vadd.f32 0.0, %v5150
      %5152 = vmatmul.bf16.gmra.mxu0 %v4881
      %v5153 = vpop.f32.mrf.mxu0
      %v5154 = vadd.f32 0.0, %v5153
      %v5155 = vpop.f32.mrf.mxu0
      %v5156 = vadd.f32 0.0, %v5155
      %5157 = vdwg.mxu0
      %5158 = vmatpush.bf16.msra.mxu0 0
      %5159 = vmatpush.bf16.msra.mxu0 0
      %5160 = vmatpush.bf16.msra.mxu0 0
      %5161 = vmatpush.bf16.msra.mxu0 0
      %5162 = vmatpush.bf16.msra.mxu0 %v4980
      %5163 = vmatpush.bf16.msra.mxu0 %v4978
      %5164 = vmatpush.bf16.msra.mxu0 %v4976
      %5165 = vmatpush.bf16.msra.mxu0 %v4974
      %5166 = vmatmul.bf16.gmra.mxu0 %v3820
      %v5167 = vpop.f32.mrf.mxu0
      %v5168 = vadd.f32 %v5119, %v5167
      %v5169 = vpop.f32.mrf.mxu0
      %v5170 = vadd.f32 %v5121, %v5169
      %5171 = vmatmul.bf16.gmra.mxu0 %v3823
      %v5172 = vpop.f32.mrf.mxu0
      %v5173 = vadd.f32 %v5124, %v5172
      %v5174 = vpop.f32.mrf.mxu0
      %v5175 = vadd.f32 %v5126, %v5174
      %5176 = vmatmul.bf16.gmra.mxu0 %v3826
      %v5177 = vpop.f32.mrf.mxu0
      %v5178 = vadd.f32 %v5129, %v5177
      %v5179 = vpop.f32.mrf.mxu0
      %v5180 = vadd.f32 %v5131, %v5179
      %5181 = vmatmul.bf16.gmra.mxu0 %v3829
      %v5182 = vpop.f32.mrf.mxu0
      %v5183 = vadd.f32 %v5134, %v5182
      %v5184 = vpop.f32.mrf.mxu0
      %v5185 = vadd.f32 %v5136, %v5184
      %5186 = vmatmul.bf16.gmra.mxu0 %v3832
      %v5187 = vpop.f32.mrf.mxu0
      %v5188 = vadd.f32 %v5139, %v5187
      %v5189 = vpop.f32.mrf.mxu0
      %v5190 = vadd.f32 %v5141, %v5189
      %5191 = vmatmul.bf16.gmra.mxu0 %v3835
      %v5192 = vpop.f32.mrf.mxu0
      %v5193 = vadd.f32 %v5144, %v5192
      %v5194 = vpop.f32.mrf.mxu0
      %v5195 = vadd.f32 %v5146, %v5194
      %5196 = vmatmul.bf16.gmra.mxu0 %v5006
      %v5197 = vpop.f32.mrf.mxu0
      %v5198 = vadd.f32 %v5149, %v5197
      %v5199 = vpop.f32.mrf.mxu0
      %v5200 = vadd.f32 %v5151, %v5199
      %5201 = vmatmul.bf16.gmra.mxu0 %v5009
      %v5202 = vpop.f32.mrf.mxu0
      %v5203 = vadd.f32 %v5154, %v5202
      %v5204 = vpop.f32.mrf.mxu0
      %v5205 = vadd.f32 %v5156, %v5204
      %5206 = vdwg.mxu0
      %v5207 = vadd.f32 %v4810, %v5070
      %v5208 = vadd.f32 %v4811, %v5168
      %v5209 = vadd.f32 %v4812, %v5072
      %v5210 = vadd.f32 %v4813, %v5170
      %v5211 = vadd.f32 %v4814, %v5075
      %v5212 = vadd.f32 %v4815, %v5173
      %v5213 = vadd.f32 %v4816, %v5077
      %v5214 = vadd.f32 %v4817, %v5175
      %v5215 = vadd.f32 %v4818, %v5080
      %v5216 = vadd.f32 %v4819, %v5178
      %v5217 = vadd.f32 %v4820, %v5082
      %v5218 = vadd.f32 %v4821, %v5180
      %v5219 = vadd.f32 %v4822, %v5085
      %v5220 = vadd.f32 %v4823, %v5183
      %v5221 = vadd.f32 %v4824, %v5087
      %v5222 = vadd.f32 %v4825, %v5185
      %v5223 = vadd.f32 %v4826, %v5090
      %v5224 = vadd.f32 %v4827, %v5188
      %v5225 = vadd.f32 %v4828, %v5092
      %v5226 = vadd.f32 %v4829, %v5190
      %v5227 = vadd.f32 %v4830, %v5095
      %v5228 = vadd.f32 %v4831, %v5193
      %v5229 = vadd.f32 %v4832, %v5097
      %v5230 = vadd.f32 %v4833, %v5195
      %v5231 = vadd.f32 %v4834, %v5100
      %v5232 = vadd.f32 %v4835, %v5198
      %v5233 = vadd.f32 %v4836, %v5102
      %v5234 = vadd.f32 %v4837, %v5200
      %v5235 = vadd.f32 %v4838, %v5105
      %v5236 = vadd.f32 %v4839, %v5203
      %v5237 = vadd.f32 %v4840, %v5107
      %v5238 = vadd.f32 %v4841, %v5205
      %s5239 = scalar_lea.vmem %s3, 768
      %v5240 = vld [vmem:[%s5239] sm:$0xff]
      %v5241 = vld [vmem:[%s5239 + $0x8] sm:$0xff]
      %v5242 = vld [vmem:[%s5239 + $0x10] sm:$0xff]
      %v5243 = vld [vmem:[%s5239 + $0x18] sm:$0xff]
      %v5244 = vld [vmem:[%s5239 + $0x20] sm:$0xff]
      %v5245 = vld [vmem:[%s5239 + $0x28] sm:$0xff]
      %v5246 = vld [vmem:[%s5239 + $0x30] sm:$0xff]
      %v5247 = vld [vmem:[%s5239 + $0x38] sm:$0xff]
      %v5248 = vld [vmem:[%s5239 + $0x40] sm:$0xff]
      %v5249 = vld [vmem:[%s5239 + $0x48] sm:$0xff]
      %v5250 = vld [vmem:[%s5239 + $0x50] sm:$0xff]
      %v5251 = vld [vmem:[%s5239 + $0x58] sm:$0xff]
      %v5252 = vld [vmem:[%s5239 + $0x60] sm:$0xff]
      %v5253 = vld [vmem:[%s5239 + $0x68] sm:$0xff]
      %v5254 = vld [vmem:[%s5239 + $0x70] sm:$0xff]
      %v5255 = vld [vmem:[%s5239 + $0x78] sm:$0xff]
      %v5256 = vld [vmem:[%s5239 + $0x80] sm:$0xff]
      %v5257 = vld [vmem:[%s5239 + $0x88] sm:$0xff]
      %v5258 = vld [vmem:[%s5239 + $0x90] sm:$0xff]
      %v5259 = vld [vmem:[%s5239 + $0x98] sm:$0xff]
      %v5260 = vld [vmem:[%s5239 + $0xa0] sm:$0xff]
      %v5261 = vld [vmem:[%s5239 + $0xa8] sm:$0xff]
      %v5262 = vld [vmem:[%s5239 + $0xb0] sm:$0xff]
      %v5263 = vld [vmem:[%s5239 + $0xb8] sm:$0xff]
      %v5268 = vunpack.c.l.b16 %v3544
      %v5269 = vunpack.c.h.b16 %v3544
      %v5270 = vunpack.c.l.b16 %v3545
      %v5271 = vunpack.c.h.b16 %v3545
      %v5272 = vunpack.c.l.b16 %v3546
      %v5273 = vunpack.c.h.b16 %v3546
      %v5274 = vunpack.c.l.b16 %v3547
      %v5275 = vunpack.c.h.b16 %v3547
      %v5276 = vpack.c.b16 %v5270, %v5268
      %v5277 = vpack.c.b16 %v5271, %v5269
      %v5278 = vpack.c.b16 %v5274, %v5272
      %v5279 = vpack.c.b16 %v5275, %v5273
      %v5306 = vunpack.c.l.b16 %v5240
      %v5307 = vunpack.c.h.b16 %v5240
      %v5308 = vunpack.c.l.b16 %v5241
      %v5309 = vunpack.c.h.b16 %v5241
      %v5310 = vunpack.c.l.b16 %v5242
      %v5311 = vunpack.c.h.b16 %v5242
      %v5312 = vunpack.c.l.b16 %v5243
      %v5313 = vunpack.c.h.b16 %v5243
      %v5314 = vunpack.c.l.b16 %v5244
      %v5315 = vunpack.c.h.b16 %v5244
      %v5316 = vunpack.c.l.b16 %v5245
      %v5317 = vunpack.c.h.b16 %v5245
      %v5318 = vunpack.c.l.b16 %v5246
      %v5319 = vunpack.c.h.b16 %v5246
      %v5320 = vunpack.c.l.b16 %v5247
      %v5321 = vunpack.c.h.b16 %v5247
      %v5322 = vunpack.c.l.b16 %v5248
      %v5323 = vunpack.c.h.b16 %v5248
      %v5324 = vunpack.c.l.b16 %v5249
      %v5325 = vunpack.c.h.b16 %v5249
      %v5326 = vunpack.c.l.b16 %v5250
      %v5327 = vunpack.c.h.b16 %v5250
      %v5328 = vunpack.c.l.b16 %v5251
      %v5329 = vunpack.c.h.b16 %v5251
      %v5330 = vunpack.c.l.b16 %v5252
      %v5331 = vunpack.c.h.b16 %v5252
      %v5332 = vunpack.c.l.b16 %v5253
      %v5333 = vunpack.c.h.b16 %v5253
      %v5334 = vunpack.c.l.b16 %v5254
      %v5335 = vunpack.c.h.b16 %v5254
      %v5336 = vunpack.c.l.b16 %v5255
      %v5337 = vunpack.c.h.b16 %v5255
      %v5338 = vunpack.c.l.b16 %v5256
      %v5339 = vunpack.c.h.b16 %v5256
      %v5340 = vunpack.c.l.b16 %v5257
      %v5341 = vunpack.c.h.b16 %v5257
      %v5342 = vunpack.c.l.b16 %v5258
      %v5343 = vunpack.c.h.b16 %v5258
      %v5344 = vunpack.c.l.b16 %v5259
      %v5345 = vunpack.c.h.b16 %v5259
      %v5346 = vunpack.c.l.b16 %v5260
      %v5347 = vunpack.c.h.b16 %v5260
      %v5348 = vunpack.c.l.b16 %v5261
      %v5349 = vunpack.c.h.b16 %v5261
      %v5350 = vunpack.c.l.b16 %v5262
      %v5351 = vunpack.c.h.b16 %v5262
      %v5352 = vunpack.c.l.b16 %v5263
      %v5353 = vunpack.c.h.b16 %v5263
      %v5354 = vpack.c.b16 %v5308, %v5306
      %v5355 = vpack.c.b16 %v5309, %v5307
      %v5356 = vpack.c.b16 %v5312, %v5310
      %v5357 = vpack.c.b16 %v5313, %v5311
      %v5358 = vpack.c.b16 %v5316, %v5314
      %v5359 = vpack.c.b16 %v5317, %v5315
      %v5360 = vpack.c.b16 %v5320, %v5318
      %v5361 = vpack.c.b16 %v5321, %v5319
      %v5362 = vpack.c.b16 %v5324, %v5322
      %v5363 = vpack.c.b16 %v5325, %v5323
      %v5364 = vpack.c.b16 %v5328, %v5326
      %v5365 = vpack.c.b16 %v5329, %v5327
      %v5366 = vpack.c.b16 %v5332, %v5330
      %v5367 = vpack.c.b16 %v5333, %v5331
      %v5368 = vpack.c.b16 %v5336, %v5334
      %v5369 = vpack.c.b16 %v5337, %v5335
      %v5370 = vpack.c.b16 %v5340, %v5338
      %v5371 = vpack.c.b16 %v5341, %v5339
      %v5372 = vpack.c.b16 %v5344, %v5342
      %v5373 = vpack.c.b16 %v5345, %v5343
      %v5374 = vpack.c.b16 %v5348, %v5346
      %v5375 = vpack.c.b16 %v5349, %v5347
      %v5376 = vpack.c.b16 %v5352, %v5350
      %v5377 = vpack.c.b16 %v5353, %v5351
      %v5403 = vsel %vm3086, %v5277, 0
      %v5406 = vsel %vm3086, %v5279, 0
      %5408 = vmatpush.bf16.msra.mxu0 %v5368
      %5409 = vmatpush.bf16.msra.mxu0 %v5366
      %5410 = vmatpush.bf16.msra.mxu0 %v5364
      %5411 = vmatpush.bf16.msra.mxu0 %v5362
      %5412 = vmatpush.bf16.msra.mxu0 %v5360
      %5413 = vmatpush.bf16.msra.mxu0 %v5358
      %5414 = vmatpush.bf16.msra.mxu0 %v5356
      %5415 = vmatpush.bf16.msra.mxu0 %v5354
      %5416 = vmatmul.bf16.gmra.mxu0 %v4089
      %v5417 = vpop.f32.mrf.mxu0
      %v5418 = vadd.f32 0.0, %v5417
      %v5419 = vpop.f32.mrf.mxu0
      %v5420 = vadd.f32 0.0, %v5419
      %5421 = vmatmul.bf16.gmra.mxu0 %v4091
      %v5422 = vpop.f32.mrf.mxu0
      %v5423 = vadd.f32 0.0, %v5422
      %v5424 = vpop.f32.mrf.mxu0
      %v5425 = vadd.f32 0.0, %v5424
      %5426 = vmatmul.bf16.gmra.mxu0 %v4093
      %v5427 = vpop.f32.mrf.mxu0
      %v5428 = vadd.f32 0.0, %v5427
      %v5429 = vpop.f32.mrf.mxu0
      %v5430 = vadd.f32 0.0, %v5429
      %5431 = vmatmul.bf16.gmra.mxu0 %v4095
      %v5432 = vpop.f32.mrf.mxu0
      %v5433 = vadd.f32 0.0, %v5432
      %v5434 = vpop.f32.mrf.mxu0
      %v5435 = vadd.f32 0.0, %v5434
      %5436 = vmatmul.bf16.gmra.mxu0 %v4482
      %v5437 = vpop.f32.mrf.mxu0
      %v5438 = vadd.f32 0.0, %v5437
      %v5439 = vpop.f32.mrf.mxu0
      %v5440 = vadd.f32 0.0, %v5439
      %5441 = vmatmul.bf16.gmra.mxu0 %v4484
      %v5442 = vpop.f32.mrf.mxu0
      %v5443 = vadd.f32 0.0, %v5442
      %v5444 = vpop.f32.mrf.mxu0
      %v5445 = vadd.f32 0.0, %v5444
      %5446 = vmatmul.bf16.gmra.mxu0 %v5276
      %v5447 = vpop.f32.mrf.mxu0
      %v5448 = vadd.f32 0.0, %v5447
      %v5449 = vpop.f32.mrf.mxu0
      %v5450 = vadd.f32 0.0, %v5449
      %5451 = vmatmul.bf16.gmra.mxu0 %v5278
      %v5452 = vpop.f32.mrf.mxu0
      %v5453 = vadd.f32 0.0, %v5452
      %v5454 = vpop.f32.mrf.mxu0
      %v5455 = vadd.f32 0.0, %v5454
      %5456 = vdwg.mxu0
      %5457 = vmatpush.bf16.msra.mxu0 0
      %5458 = vmatpush.bf16.msra.mxu0 0
      %5459 = vmatpush.bf16.msra.mxu0 0
      %5460 = vmatpush.bf16.msra.mxu0 0
      %5461 = vmatpush.bf16.msra.mxu0 %v5376
      %5462 = vmatpush.bf16.msra.mxu0 %v5374
      %5463 = vmatpush.bf16.msra.mxu0 %v5372
      %5464 = vmatpush.bf16.msra.mxu0 %v5370
      %5465 = vmatmul.bf16.gmra.mxu0 %v4238
      %v5466 = vpop.f32.mrf.mxu0
      %v5467 = vadd.f32 %v5418, %v5466
      %v5468 = vpop.f32.mrf.mxu0
      %v5469 = vadd.f32 %v5420, %v5468
      %5470 = vmatmul.bf16.gmra.mxu0 %v4241
      %v5471 = vpop.f32.mrf.mxu0
      %v5472 = vadd.f32 %v5423, %v5471
      %v5473 = vpop.f32.mrf.mxu0
      %v5474 = vadd.f32 %v5425, %v5473
      %5475 = vmatmul.bf16.gmra.mxu0 %v4244
      %v5476 = vpop.f32.mrf.mxu0
      %v5477 = vadd.f32 %v5428, %v5476
      %v5478 = vpop.f32.mrf.mxu0
      %v5479 = vadd.f32 %v5430, %v5478
      %5480 = vmatmul.bf16.gmra.mxu0 %v4247
      %v5481 = vpop.f32.mrf.mxu0
      %v5482 = vadd.f32 %v5433, %v5481
      %v5483 = vpop.f32.mrf.mxu0
      %v5484 = vadd.f32 %v5435, %v5483
      %5485 = vmatmul.bf16.gmra.mxu0 %v4609
      %v5486 = vpop.f32.mrf.mxu0
      %v5487 = vadd.f32 %v5438, %v5486
      %v5488 = vpop.f32.mrf.mxu0
      %v5489 = vadd.f32 %v5440, %v5488
      %5490 = vmatmul.bf16.gmra.mxu0 %v4612
      %v5491 = vpop.f32.mrf.mxu0
      %v5492 = vadd.f32 %v5443, %v5491
      %v5493 = vpop.f32.mrf.mxu0
      %v5494 = vadd.f32 %v5445, %v5493
      %5495 = vmatmul.bf16.gmra.mxu0 %v5403
      %v5496 = vpop.f32.mrf.mxu0
      %v5497 = vadd.f32 %v5448, %v5496
      %v5498 = vpop.f32.mrf.mxu0
      %v5499 = vadd.f32 %v5450, %v5498
      %5500 = vmatmul.bf16.gmra.mxu0 %v5406
      %v5501 = vpop.f32.mrf.mxu0
      %v5502 = vadd.f32 %v5453, %v5501
      %v5503 = vpop.f32.mrf.mxu0
      %v5504 = vadd.f32 %v5455, %v5503
      %5505 = vdwg.mxu0
      %5506 = vmatpush.bf16.msra.mxu0 %v5369
      %5507 = vmatpush.bf16.msra.mxu0 %v5367
      %5508 = vmatpush.bf16.msra.mxu0 %v5365
      %5509 = vmatpush.bf16.msra.mxu0 %v5363
      %5510 = vmatpush.bf16.msra.mxu0 %v5361
      %5511 = vmatpush.bf16.msra.mxu0 %v5359
      %5512 = vmatpush.bf16.msra.mxu0 %v5357
      %5513 = vmatpush.bf16.msra.mxu0 %v5355
      %5514 = vmatmul.bf16.gmra.mxu0 %v4089
      %v5515 = vpop.f32.mrf.mxu0
      %v5516 = vadd.f32 0.0, %v5515
      %v5517 = vpop.f32.mrf.mxu0
      %v5518 = vadd.f32 0.0, %v5517
      %5519 = vmatmul.bf16.gmra.mxu0 %v4091
      %v5520 = vpop.f32.mrf.mxu0
      %v5521 = vadd.f32 0.0, %v5520
      %v5522 = vpop.f32.mrf.mxu0
      %v5523 = vadd.f32 0.0, %v5522
      %5524 = vmatmul.bf16.gmra.mxu0 %v4093
      %v5525 = vpop.f32.mrf.mxu0
      %v5526 = vadd.f32 0.0, %v5525
      %v5527 = vpop.f32.mrf.mxu0
      %v5528 = vadd.f32 0.0, %v5527
      %5529 = vmatmul.bf16.gmra.mxu0 %v4095
      %v5530 = vpop.f32.mrf.mxu0
      %v5531 = vadd.f32 0.0, %v5530
      %v5532 = vpop.f32.mrf.mxu0
      %v5533 = vadd.f32 0.0, %v5532
      %5534 = vmatmul.bf16.gmra.mxu0 %v4482
      %v5535 = vpop.f32.mrf.mxu0
      %v5536 = vadd.f32 0.0, %v5535
      %v5537 = vpop.f32.mrf.mxu0
      %v5538 = vadd.f32 0.0, %v5537
      %5539 = vmatmul.bf16.gmra.mxu0 %v4484
      %v5540 = vpop.f32.mrf.mxu0
      %v5541 = vadd.f32 0.0, %v5540
      %v5542 = vpop.f32.mrf.mxu0
      %v5543 = vadd.f32 0.0, %v5542
      %5544 = vmatmul.bf16.gmra.mxu0 %v5276
      %v5545 = vpop.f32.mrf.mxu0
      %v5546 = vadd.f32 0.0, %v5545
      %v5547 = vpop.f32.mrf.mxu0
      %v5548 = vadd.f32 0.0, %v5547
      %5549 = vmatmul.bf16.gmra.mxu0 %v5278
      %v5550 = vpop.f32.mrf.mxu0
      %v5551 = vadd.f32 0.0, %v5550
      %v5552 = vpop.f32.mrf.mxu0
      %v5553 = vadd.f32 0.0, %v5552
      %5554 = vdwg.mxu0
      %5555 = vmatpush.bf16.msra.mxu0 0
      %5556 = vmatpush.bf16.msra.mxu0 0
      %5557 = vmatpush.bf16.msra.mxu0 0
      %5558 = vmatpush.bf16.msra.mxu0 0
      %5559 = vmatpush.bf16.msra.mxu0 %v5377
      %5560 = vmatpush.bf16.msra.mxu0 %v5375
      %5561 = vmatpush.bf16.msra.mxu0 %v5373
      %5562 = vmatpush.bf16.msra.mxu0 %v5371
      %5563 = vmatmul.bf16.gmra.mxu0 %v4238
      %v5564 = vpop.f32.mrf.mxu0
      %v5565 = vadd.f32 %v5516, %v5564
      %v5566 = vpop.f32.mrf.mxu0
      %v5567 = vadd.f32 %v5518, %v5566
      %5568 = vmatmul.bf16.gmra.mxu0 %v4241
      %v5569 = vpop.f32.mrf.mxu0
      %v5570 = vadd.f32 %v5521, %v5569
      %v5571 = vpop.f32.mrf.mxu0
      %v5572 = vadd.f32 %v5523, %v5571
      %5573 = vmatmul.bf16.gmra.mxu0 %v4244
      %v5574 = vpop.f32.mrf.mxu0
      %v5575 = vadd.f32 %v5526, %v5574
      %v5576 = vpop.f32.mrf.mxu0
      %v5577 = vadd.f32 %v5528, %v5576
      %5578 = vmatmul.bf16.gmra.mxu0 %v4247
      %v5579 = vpop.f32.mrf.mxu0
      %v5580 = vadd.f32 %v5531, %v5579
      %v5581 = vpop.f32.mrf.mxu0
      %v5582 = vadd.f32 %v5533, %v5581
      %5583 = vmatmul.bf16.gmra.mxu0 %v4609
      %v5584 = vpop.f32.mrf.mxu0
      %v5585 = vadd.f32 %v5536, %v5584
      %v5586 = vpop.f32.mrf.mxu0
      %v5587 = vadd.f32 %v5538, %v5586
      %5588 = vmatmul.bf16.gmra.mxu0 %v4612
      %v5589 = vpop.f32.mrf.mxu0
      %v5590 = vadd.f32 %v5541, %v5589
      %v5591 = vpop.f32.mrf.mxu0
      %v5592 = vadd.f32 %v5543, %v5591
      %5593 = vmatmul.bf16.gmra.mxu0 %v5403
      %v5594 = vpop.f32.mrf.mxu0
      %v5595 = vadd.f32 %v5546, %v5594
      %v5596 = vpop.f32.mrf.mxu0
      %v5597 = vadd.f32 %v5548, %v5596
      %5598 = vmatmul.bf16.gmra.mxu0 %v5406
      %v5599 = vpop.f32.mrf.mxu0
      %v5600 = vadd.f32 %v5551, %v5599
      %v5601 = vpop.f32.mrf.mxu0
      %v5602 = vadd.f32 %v5553, %v5601
      %5603 = vdwg.mxu0
      %v5604 = vadd.f32 %v5207, %v5467
      %v5605 = vadd.f32 %v5208, %v5565
      %v5606 = vadd.f32 %v5209, %v5469
      %v5607 = vadd.f32 %v5210, %v5567
      %v5608 = vadd.f32 %v5211, %v5472
      %v5609 = vadd.f32 %v5212, %v5570
      %v5610 = vadd.f32 %v5213, %v5474
      %v5611 = vadd.f32 %v5214, %v5572
      %v5612 = vadd.f32 %v5215, %v5477
      %v5613 = vadd.f32 %v5216, %v5575
      %v5614 = vadd.f32 %v5217, %v5479
      %v5615 = vadd.f32 %v5218, %v5577
      %v5616 = vadd.f32 %v5219, %v5482
      %v5617 = vadd.f32 %v5220, %v5580
      %v5618 = vadd.f32 %v5221, %v5484
      %v5619 = vadd.f32 %v5222, %v5582
      %v5620 = vadd.f32 %v5223, %v5487
      %v5621 = vadd.f32 %v5224, %v5585
      %v5622 = vadd.f32 %v5225, %v5489
      %v5623 = vadd.f32 %v5226, %v5587
      %v5624 = vadd.f32 %v5227, %v5492
      %v5625 = vadd.f32 %v5228, %v5590
      %v5626 = vadd.f32 %v5229, %v5494
      %v5627 = vadd.f32 %v5230, %v5592
      %v5628 = vadd.f32 %v5231, %v5497
      %v5629 = vadd.f32 %v5232, %v5595
      %v5630 = vadd.f32 %v5233, %v5499
      %v5631 = vadd.f32 %v5234, %v5597
      %v5632 = vadd.f32 %v5235, %v5502
      %v5633 = vadd.f32 %v5236, %v5600
      %v5634 = vadd.f32 %v5237, %v5504
      %v5635 = vadd.f32 %v5238, %v5602
      %5636 = vmatpush.bf16.msra.mxu0 %v3779
      %5637 = vmatpush.bf16.msra.mxu0 %v3777
      %5638 = vmatpush.bf16.msra.mxu0 %v3775
      %5639 = vmatpush.bf16.msra.mxu0 %v3773
      %5640 = vmatpush.bf16.msra.mxu0 %v3771
      %5641 = vmatpush.bf16.msra.mxu0 %v3769
      %5642 = vmatpush.bf16.msra.mxu0 %v3767
      %5643 = vmatpush.bf16.msra.mxu0 %v3765
      %5644 = vmatmul.bf16.gmra.mxu0 %v4085
      %v5645 = vpop.f32.mrf.mxu0
      %v5646 = vadd.f32 0.0, %v5645
      %v5647 = vpop.f32.mrf.mxu0
      %v5648 = vadd.f32 0.0, %v5647
      %5649 = vmatmul.bf16.gmra.mxu0 %v4087
      %v5650 = vpop.f32.mrf.mxu0
      %v5651 = vadd.f32 0.0, %v5650
      %v5652 = vpop.f32.mrf.mxu0
      %v5653 = vadd.f32 0.0, %v5652
      %5654 = vmatmul.bf16.gmra.mxu0 %v4089
      %v5655 = vpop.f32.mrf.mxu0
      %v5656 = vadd.f32 0.0, %v5655
      %v5657 = vpop.f32.mrf.mxu0
      %v5658 = vadd.f32 0.0, %v5657
      %5659 = vmatmul.bf16.gmra.mxu0 %v4091
      %v5660 = vpop.f32.mrf.mxu0
      %v5661 = vadd.f32 0.0, %v5660
      %v5662 = vpop.f32.mrf.mxu0
      %v5663 = vadd.f32 0.0, %v5662
      %5664 = vmatmul.bf16.gmra.mxu0 %v4093
      %v5665 = vpop.f32.mrf.mxu0
      %v5666 = vadd.f32 0.0, %v5665
      %v5667 = vpop.f32.mrf.mxu0
      %v5668 = vadd.f32 0.0, %v5667
      %5669 = vmatmul.bf16.gmra.mxu0 %v4095
      %v5670 = vpop.f32.mrf.mxu0
      %v5671 = vadd.f32 0.0, %v5670
      %v5672 = vpop.f32.mrf.mxu0
      %v5673 = vadd.f32 0.0, %v5672
      %5674 = vmatmul.bf16.gmra.mxu0 %v4482
      %v5675 = vpop.f32.mrf.mxu0
      %v5676 = vadd.f32 0.0, %v5675
      %v5677 = vpop.f32.mrf.mxu0
      %v5678 = vadd.f32 0.0, %v5677
      %5679 = vmatmul.bf16.gmra.mxu0 %v4484
      %v5680 = vpop.f32.mrf.mxu0
      %v5681 = vadd.f32 0.0, %v5680
      %v5682 = vpop.f32.mrf.mxu0
      %v5683 = vadd.f32 0.0, %v5682
      %5684 = vdwg.mxu0
      %5685 = vmatpush.bf16.msra.mxu0 0
      %5686 = vmatpush.bf16.msra.mxu0 0
      %5687 = vmatpush.bf16.msra.mxu0 0
      %5688 = vmatpush.bf16.msra.mxu0 0
      %5689 = vmatpush.bf16.msra.mxu0 %v3787
      %5690 = vmatpush.bf16.msra.mxu0 %v3785
      %5691 = vmatpush.bf16.msra.mxu0 %v3783
      %5692 = vmatpush.bf16.msra.mxu0 %v3781
      %5693 = vmatmul.bf16.gmra.mxu0 %v4232
      %v5694 = vpop.f32.mrf.mxu0
      %v5695 = vadd.f32 %v5646, %v5694
      %v5696 = vpop.f32.mrf.mxu0
      %v5697 = vadd.f32 %v5648, %v5696
      %5698 = vmatmul.bf16.gmra.mxu0 %v4235
      %v5699 = vpop.f32.mrf.mxu0
      %v5700 = vadd.f32 %v5651, %v5699
      %v5701 = vpop.f32.mrf.mxu0
      %v5702 = vadd.f32 %v5653, %v5701
      %5703 = vmatmul.bf16.gmra.mxu0 %v4238
      %v5704 = vpop.f32.mrf.mxu0
      %v5705 = vadd.f32 %v5656, %v5704
      %v5706 = vpop.f32.mrf.mxu0
      %v5707 = vadd.f32 %v5658, %v5706
      %5708 = vmatmul.bf16.gmra.mxu0 %v4241
      %v5709 = vpop.f32.mrf.mxu0
      %v5710 = vadd.f32 %v5661, %v5709
      %v5711 = vpop.f32.mrf.mxu0
      %v5712 = vadd.f32 %v5663, %v5711
      %5713 = vmatmul.bf16.gmra.mxu0 %v4244
      %v5714 = vpop.f32.mrf.mxu0
      %v5715 = vadd.f32 %v5666, %v5714
      %v5716 = vpop.f32.mrf.mxu0
      %v5717 = vadd.f32 %v5668, %v5716
      %5718 = vmatmul.bf16.gmra.mxu0 %v4247
      %v5719 = vpop.f32.mrf.mxu0
      %v5720 = vadd.f32 %v5671, %v5719
      %v5721 = vpop.f32.mrf.mxu0
      %v5722 = vadd.f32 %v5673, %v5721
      %5723 = vmatmul.bf16.gmra.mxu0 %v4609
      %v5724 = vpop.f32.mrf.mxu0
      %v5725 = vadd.f32 %v5676, %v5724
      %v5726 = vpop.f32.mrf.mxu0
      %v5727 = vadd.f32 %v5678, %v5726
      %5728 = vmatmul.bf16.gmra.mxu0 %v4612
      %v5729 = vpop.f32.mrf.mxu0
      %v5730 = vadd.f32 %v5681, %v5729
      %v5731 = vpop.f32.mrf.mxu0
      %v5732 = vadd.f32 %v5683, %v5731
      %5733 = vdwg.mxu0
      %5734 = vmatpush.bf16.msra.mxu0 %v3780
      %5735 = vmatpush.bf16.msra.mxu0 %v3778
      %5736 = vmatpush.bf16.msra.mxu0 %v3776
      %5737 = vmatpush.bf16.msra.mxu0 %v3774
      %5738 = vmatpush.bf16.msra.mxu0 %v3772
      %5739 = vmatpush.bf16.msra.mxu0 %v3770
      %5740 = vmatpush.bf16.msra.mxu0 %v3768
      %5741 = vmatpush.bf16.msra.mxu0 %v3766
      %5742 = vmatmul.bf16.gmra.mxu0 %v4085
      %v5743 = vpop.f32.mrf.mxu0
      %v5744 = vadd.f32 0.0, %v5743
      %v5745 = vpop.f32.mrf.mxu0
      %v5746 = vadd.f32 0.0, %v5745
      %5747 = vmatmul.bf16.gmra.mxu0 %v4087
      %v5748 = vpop.f32.mrf.mxu0
      %v5749 = vadd.f32 0.0, %v5748
      %v5750 = vpop.f32.mrf.mxu0
      %v5751 = vadd.f32 0.0, %v5750
      %5752 = vmatmul.bf16.gmra.mxu0 %v4089
      %v5753 = vpop.f32.mrf.mxu0
      %v5754 = vadd.f32 0.0, %v5753
      %v5755 = vpop.f32.mrf.mxu0
      %v5756 = vadd.f32 0.0, %v5755
      %5757 = vmatmul.bf16.gmra.mxu0 %v4091
      %v5758 = vpop.f32.mrf.mxu0
      %v5759 = vadd.f32 0.0, %v5758
      %v5760 = vpop.f32.mrf.mxu0
      %v5761 = vadd.f32 0.0, %v5760
      %5762 = vmatmul.bf16.gmra.mxu0 %v4093
      %v5763 = vpop.f32.mrf.mxu0
      %v5764 = vadd.f32 0.0, %v5763
      %v5765 = vpop.f32.mrf.mxu0
      %v5766 = vadd.f32 0.0, %v5765
      %5767 = vmatmul.bf16.gmra.mxu0 %v4095
      %v5768 = vpop.f32.mrf.mxu0
      %v5769 = vadd.f32 0.0, %v5768
      %v5770 = vpop.f32.mrf.mxu0
      %v5771 = vadd.f32 0.0, %v5770
      %5772 = vmatmul.bf16.gmra.mxu0 %v4482
      %v5773 = vpop.f32.mrf.mxu0
      %v5774 = vadd.f32 0.0, %v5773
      %v5775 = vpop.f32.mrf.mxu0
      %v5776 = vadd.f32 0.0, %v5775
      %5777 = vmatmul.bf16.gmra.mxu0 %v4484
      %v5778 = vpop.f32.mrf.mxu0
      %v5779 = vadd.f32 0.0, %v5778
      %v5780 = vpop.f32.mrf.mxu0
      %v5781 = vadd.f32 0.0, %v5780
      %5782 = vdwg.mxu0
      %5783 = vmatpush.bf16.msra.mxu0 0
      %5784 = vmatpush.bf16.msra.mxu0 0
      %5785 = vmatpush.bf16.msra.mxu0 0
      %5786 = vmatpush.bf16.msra.mxu0 0
      %5787 = vmatpush.bf16.msra.mxu0 %v3788
      %5788 = vmatpush.bf16.msra.mxu0 %v3786
      %5789 = vmatpush.bf16.msra.mxu0 %v3784
      %5790 = vmatpush.bf16.msra.mxu0 %v3782
      %5791 = vmatmul.bf16.gmra.mxu0 %v4232
      %v5792 = vpop.f32.mrf.mxu0
      %v5793 = vadd.f32 %v5744, %v5792
      %v5794 = vpop.f32.mrf.mxu0
      %v5795 = vadd.f32 %v5746, %v5794
      %5796 = vmatmul.bf16.gmra.mxu0 %v4235
      %v5797 = vpop.f32.mrf.mxu0
      %v5798 = vadd.f32 %v5749, %v5797
      %v5799 = vpop.f32.mrf.mxu0
      %v5800 = vadd.f32 %v5751, %v5799
      %5801 = vmatmul.bf16.gmra.mxu0 %v4238
      %v5802 = vpop.f32.mrf.mxu0
      %v5803 = vadd.f32 %v5754, %v5802
      %v5804 = vpop.f32.mrf.mxu0
      %v5805 = vadd.f32 %v5756, %v5804
      %5806 = vmatmul.bf16.gmra.mxu0 %v4241
      %v5807 = vpop.f32.mrf.mxu0
      %v5808 = vadd.f32 %v5759, %v5807
      %v5809 = vpop.f32.mrf.mxu0
      %v5810 = vadd.f32 %v5761, %v5809
      %5811 = vmatmul.bf16.gmra.mxu0 %v4244
      %v5812 = vpop.f32.mrf.mxu0
      %v5813 = vadd.f32 %v5764, %v5812
      %v5814 = vpop.f32.mrf.mxu0
      %v5815 = vadd.f32 %v5766, %v5814
      %5816 = vmatmul.bf16.gmra.mxu0 %v4247
      %v5817 = vpop.f32.mrf.mxu0
      %v5818 = vadd.f32 %v5769, %v5817
      %v5819 = vpop.f32.mrf.mxu0
      %v5820 = vadd.f32 %v5771, %v5819
      %5821 = vmatmul.bf16.gmra.mxu0 %v4609
      %v5822 = vpop.f32.mrf.mxu0
      %v5823 = vadd.f32 %v5774, %v5822
      %v5824 = vpop.f32.mrf.mxu0
      %v5825 = vadd.f32 %v5776, %v5824
      %5826 = vmatmul.bf16.gmra.mxu0 %v4612
      %v5827 = vpop.f32.mrf.mxu0
      %v5828 = vadd.f32 %v5779, %v5827
      %v5829 = vpop.f32.mrf.mxu0
      %v5830 = vadd.f32 %v5781, %v5829
      %5831 = vdwg.mxu0
      %5832 = vmatpush.bf16.msra.mxu0 %v4191
      %5833 = vmatpush.bf16.msra.mxu0 %v4189
      %5834 = vmatpush.bf16.msra.mxu0 %v4187
      %5835 = vmatpush.bf16.msra.mxu0 %v4185
      %5836 = vmatpush.bf16.msra.mxu0 %v4183
      %5837 = vmatpush.bf16.msra.mxu0 %v4181
      %5838 = vmatpush.bf16.msra.mxu0 %v4179
      %5839 = vmatpush.bf16.msra.mxu0 %v4177
      %5840 = vmatmul.bf16.gmra.mxu0 %v3669
      %v5841 = vpop.f32.mrf.mxu0
      %v5842 = vadd.f32 %v5695, %v5841
      %v5843 = vpop.f32.mrf.mxu0
      %v5844 = vadd.f32 %v5697, %v5843
      %5845 = vmatmul.bf16.gmra.mxu0 %v3671
      %v5846 = vpop.f32.mrf.mxu0
      %v5847 = vadd.f32 %v5700, %v5846
      %v5848 = vpop.f32.mrf.mxu0
      %v5849 = vadd.f32 %v5702, %v5848
      %5850 = vmatmul.bf16.gmra.mxu0 %v3673
      %v5851 = vpop.f32.mrf.mxu0
      %v5852 = vadd.f32 %v5705, %v5851
      %v5853 = vpop.f32.mrf.mxu0
      %v5854 = vadd.f32 %v5707, %v5853
      %5855 = vmatmul.bf16.gmra.mxu0 %v3675
      %v5856 = vpop.f32.mrf.mxu0
      %v5857 = vadd.f32 %v5710, %v5856
      %v5858 = vpop.f32.mrf.mxu0
      %v5859 = vadd.f32 %v5712, %v5858
      %5860 = vmatmul.bf16.gmra.mxu0 %v3677
      %v5861 = vpop.f32.mrf.mxu0
      %v5862 = vadd.f32 %v5715, %v5861
      %v5863 = vpop.f32.mrf.mxu0
      %v5864 = vadd.f32 %v5717, %v5863
      %5865 = vmatmul.bf16.gmra.mxu0 %v3679
      %v5866 = vpop.f32.mrf.mxu0
      %v5867 = vadd.f32 %v5720, %v5866
      %v5868 = vpop.f32.mrf.mxu0
      %v5869 = vadd.f32 %v5722, %v5868
      %5870 = vmatmul.bf16.gmra.mxu0 %v3681
      %v5871 = vpop.f32.mrf.mxu0
      %v5872 = vadd.f32 %v5725, %v5871
      %v5873 = vpop.f32.mrf.mxu0
      %v5874 = vadd.f32 %v5727, %v5873
      %5875 = vmatmul.bf16.gmra.mxu0 %v3683
      %v5876 = vpop.f32.mrf.mxu0
      %v5877 = vadd.f32 %v5730, %v5876
      %v5878 = vpop.f32.mrf.mxu0
      %v5879 = vadd.f32 %v5732, %v5878
      %5880 = vdwg.mxu0
      %5881 = vmatpush.bf16.msra.mxu0 0
      %5882 = vmatpush.bf16.msra.mxu0 0
      %5883 = vmatpush.bf16.msra.mxu0 0
      %5884 = vmatpush.bf16.msra.mxu0 0
      %5885 = vmatpush.bf16.msra.mxu0 %v4199
      %5886 = vmatpush.bf16.msra.mxu0 %v4197
      %5887 = vmatpush.bf16.msra.mxu0 %v4195
      %5888 = vmatpush.bf16.msra.mxu0 %v4193
      %5889 = vmatmul.bf16.gmra.mxu0 %v3814
      %v5890 = vpop.f32.mrf.mxu0
      %v5891 = vadd.f32 %v5842, %v5890
      %v5892 = vpop.f32.mrf.mxu0
      %v5893 = vadd.f32 %v5844, %v5892
      %5894 = vmatmul.bf16.gmra.mxu0 %v3817
      %v5895 = vpop.f32.mrf.mxu0
      %v5896 = vadd.f32 %v5847, %v5895
      %v5897 = vpop.f32.mrf.mxu0
      %v5898 = vadd.f32 %v5849, %v5897
      %5899 = vmatmul.bf16.gmra.mxu0 %v3820
      %v5900 = vpop.f32.mrf.mxu0
      %v5901 = vadd.f32 %v5852, %v5900
      %v5902 = vpop.f32.mrf.mxu0
      %v5903 = vadd.f32 %v5854, %v5902
      %5904 = vmatmul.bf16.gmra.mxu0 %v3823
      %v5905 = vpop.f32.mrf.mxu0
      %v5906 = vadd.f32 %v5857, %v5905
      %v5907 = vpop.f32.mrf.mxu0
      %v5908 = vadd.f32 %v5859, %v5907
      %5909 = vmatmul.bf16.gmra.mxu0 %v3826
      %v5910 = vpop.f32.mrf.mxu0
      %v5911 = vadd.f32 %v5862, %v5910
      %v5912 = vpop.f32.mrf.mxu0
      %v5913 = vadd.f32 %v5864, %v5912
      %5914 = vmatmul.bf16.gmra.mxu0 %v3829
      %v5915 = vpop.f32.mrf.mxu0
      %v5916 = vadd.f32 %v5867, %v5915
      %v5917 = vpop.f32.mrf.mxu0
      %v5918 = vadd.f32 %v5869, %v5917
      %5919 = vmatmul.bf16.gmra.mxu0 %v3832
      %v5920 = vpop.f32.mrf.mxu0
      %v5921 = vadd.f32 %v5872, %v5920
      %v5922 = vpop.f32.mrf.mxu0
      %v5923 = vadd.f32 %v5874, %v5922
      %5924 = vmatmul.bf16.gmra.mxu0 %v3835
      %v5925 = vpop.f32.mrf.mxu0
      %v5926 = vadd.f32 %v5877, %v5925
      %v5927 = vpop.f32.mrf.mxu0
      %v5928 = vadd.f32 %v5879, %v5927
      %5929 = vdwg.mxu0
      %5930 = vmatpush.bf16.msra.mxu0 %v4192
      %5931 = vmatpush.bf16.msra.mxu0 %v4190
      %5932 = vmatpush.bf16.msra.mxu0 %v4188
      %5933 = vmatpush.bf16.msra.mxu0 %v4186
      %5934 = vmatpush.bf16.msra.mxu0 %v4184
      %5935 = vmatpush.bf16.msra.mxu0 %v4182
      %5936 = vmatpush.bf16.msra.mxu0 %v4180
      %5937 = vmatpush.bf16.msra.mxu0 %v4178
      %5938 = vmatmul.bf16.gmra.mxu0 %v3669
      %v5939 = vpop.f32.mrf.mxu0
      %v5940 = vadd.f32 %v5793, %v5939
      %v5941 = vpop.f32.mrf.mxu0
      %v5942 = vadd.f32 %v5795, %v5941
      %5943 = vmatmul.bf16.gmra.mxu0 %v3671
      %v5944 = vpop.f32.mrf.mxu0
      %v5945 = vadd.f32 %v5798, %v5944
      %v5946 = vpop.f32.mrf.mxu0
      %v5947 = vadd.f32 %v5800, %v5946
      %5948 = vmatmul.bf16.gmra.mxu0 %v3673
      %v5949 = vpop.f32.mrf.mxu0
      %v5950 = vadd.f32 %v5803, %v5949
      %v5951 = vpop.f32.mrf.mxu0
      %v5952 = vadd.f32 %v5805, %v5951
      %5953 = vmatmul.bf16.gmra.mxu0 %v3675
      %v5954 = vpop.f32.mrf.mxu0
      %v5955 = vadd.f32 %v5808, %v5954
      %v5956 = vpop.f32.mrf.mxu0
      %v5957 = vadd.f32 %v5810, %v5956
      %5958 = vmatmul.bf16.gmra.mxu0 %v3677
      %v5959 = vpop.f32.mrf.mxu0
      %v5960 = vadd.f32 %v5813, %v5959
      %v5961 = vpop.f32.mrf.mxu0
      %v5962 = vadd.f32 %v5815, %v5961
      %5963 = vmatmul.bf16.gmra.mxu0 %v3679
      %v5964 = vpop.f32.mrf.mxu0
      %v5965 = vadd.f32 %v5818, %v5964
      %v5966 = vpop.f32.mrf.mxu0
      %v5967 = vadd.f32 %v5820, %v5966
      %5968 = vmatmul.bf16.gmra.mxu0 %v3681
      %v5969 = vpop.f32.mrf.mxu0
      %v5970 = vadd.f32 %v5823, %v5969
      %v5971 = vpop.f32.mrf.mxu0
      %v5972 = vadd.f32 %v5825, %v5971
      %5973 = vmatmul.bf16.gmra.mxu0 %v3683
      %v5974 = vpop.f32.mrf.mxu0
      %v5975 = vadd.f32 %v5828, %v5974
      %v5976 = vpop.f32.mrf.mxu0
      %v5977 = vadd.f32 %v5830, %v5976
      %5978 = vdwg.mxu0
      %5979 = vmatpush.bf16.msra.mxu0 0
      %5980 = vmatpush.bf16.msra.mxu0 0
      %5981 = vmatpush.bf16.msra.mxu0 0
      %5982 = vmatpush.bf16.msra.mxu0 0
      %5983 = vmatpush.bf16.msra.mxu0 %v4200
      %5984 = vmatpush.bf16.msra.mxu0 %v4198
      %5985 = vmatpush.bf16.msra.mxu0 %v4196
      %5986 = vmatpush.bf16.msra.mxu0 %v4194
      %5987 = vmatmul.bf16.gmra.mxu0 %v3814
      %v5988 = vpop.f32.mrf.mxu0
      %v5989 = vadd.f32 %v5940, %v5988
      %v5990 = vpop.f32.mrf.mxu0
      %v5991 = vadd.f32 %v5942, %v5990
      %5992 = vmatmul.bf16.gmra.mxu0 %v3817
      %v5993 = vpop.f32.mrf.mxu0
      %v5994 = vadd.f32 %v5945, %v5993
      %v5995 = vpop.f32.mrf.mxu0
      %v5996 = vadd.f32 %v5947, %v5995
      %5997 = vmatmul.bf16.gmra.mxu0 %v3820
      %v5998 = vpop.f32.mrf.mxu0
      %v5999 = vadd.f32 %v5950, %v5998
      %v6000 = vpop.f32.mrf.mxu0
      %v6001 = vadd.f32 %v5952, %v6000
      %6002 = vmatmul.bf16.gmra.mxu0 %v3823
      %v6003 = vpop.f32.mrf.mxu0
      %v6004 = vadd.f32 %v5955, %v6003
      %v6005 = vpop.f32.mrf.mxu0
      %v6006 = vadd.f32 %v5957, %v6005
      %6007 = vmatmul.bf16.gmra.mxu0 %v3826
      %v6008 = vpop.f32.mrf.mxu0
      %v6009 = vadd.f32 %v5960, %v6008
      %v6010 = vpop.f32.mrf.mxu0
      %v6011 = vadd.f32 %v5962, %v6010
      %6012 = vmatmul.bf16.gmra.mxu0 %v3829
      %v6013 = vpop.f32.mrf.mxu0
      %v6014 = vadd.f32 %v5965, %v6013
      %v6015 = vpop.f32.mrf.mxu0
      %v6016 = vadd.f32 %v5967, %v6015
      %6017 = vmatmul.bf16.gmra.mxu0 %v3832
      %v6018 = vpop.f32.mrf.mxu0
      %v6019 = vadd.f32 %v5970, %v6018
      %v6020 = vpop.f32.mrf.mxu0
      %v6021 = vadd.f32 %v5972, %v6020
      %6022 = vmatmul.bf16.gmra.mxu0 %v3835
      %v6023 = vpop.f32.mrf.mxu0
      %v6024 = vadd.f32 %v5975, %v6023
      %v6025 = vpop.f32.mrf.mxu0
      %v6026 = vadd.f32 %v5977, %v6025
      %6027 = vdwg.mxu0
      %6028 = vmatpush.bf16.msra.mxu0 %v4574
      %6029 = vmatpush.bf16.msra.mxu0 %v4572
      %6030 = vmatpush.bf16.msra.mxu0 %v4570
      %6031 = vmatpush.bf16.msra.mxu0 %v4568
      %6032 = vmatpush.bf16.msra.mxu0 %v4566
      %6033 = vmatpush.bf16.msra.mxu0 %v4564
      %6034 = vmatpush.bf16.msra.mxu0 %v4562
      %6035 = vmatpush.bf16.msra.mxu0 %v4560
      %6036 = vmatmul.bf16.gmra.mxu0 %v3673
      %v6037 = vpop.f32.mrf.mxu0
      %v6038 = vadd.f32 0.0, %v6037
      %v6039 = vpop.f32.mrf.mxu0
      %v6040 = vadd.f32 0.0, %v6039
      %6041 = vmatmul.bf16.gmra.mxu0 %v3675
      %v6042 = vpop.f32.mrf.mxu0
      %v6043 = vadd.f32 0.0, %v6042
      %v6044 = vpop.f32.mrf.mxu0
      %v6045 = vadd.f32 0.0, %v6044
      %6046 = vmatmul.bf16.gmra.mxu0 %v3677
      %v6047 = vpop.f32.mrf.mxu0
      %v6048 = vadd.f32 0.0, %v6047
      %v6049 = vpop.f32.mrf.mxu0
      %v6050 = vadd.f32 0.0, %v6049
      %6051 = vmatmul.bf16.gmra.mxu0 %v3679
      %v6052 = vpop.f32.mrf.mxu0
      %v6053 = vadd.f32 0.0, %v6052
      %v6054 = vpop.f32.mrf.mxu0
      %v6055 = vadd.f32 0.0, %v6054
      %6056 = vmatmul.bf16.gmra.mxu0 %v3681
      %v6057 = vpop.f32.mrf.mxu0
      %v6058 = vadd.f32 0.0, %v6057
      %v6059 = vpop.f32.mrf.mxu0
      %v6060 = vadd.f32 0.0, %v6059
      %6061 = vmatmul.bf16.gmra.mxu0 %v3683
      %v6062 = vpop.f32.mrf.mxu0
      %v6063 = vadd.f32 0.0, %v6062
      %v6064 = vpop.f32.mrf.mxu0
      %v6065 = vadd.f32 0.0, %v6064
      %6066 = vmatmul.bf16.gmra.mxu0 %v4879
      %v6067 = vpop.f32.mrf.mxu0
      %v6068 = vadd.f32 0.0, %v6067
      %v6069 = vpop.f32.mrf.mxu0
      %v6070 = vadd.f32 0.0, %v6069
      %6071 = vmatmul.bf16.gmra.mxu0 %v4881
      %v6072 = vpop.f32.mrf.mxu0
      %v6073 = vadd.f32 0.0, %v6072
      %v6074 = vpop.f32.mrf.mxu0
      %v6075 = vadd.f32 0.0, %v6074
      %6076 = vdwg.mxu0
      %6077 = vmatpush.bf16.msra.mxu0 0
      %6078 = vmatpush.bf16.msra.mxu0 0
      %6079 = vmatpush.bf16.msra.mxu0 0
      %6080 = vmatpush.bf16.msra.mxu0 0
      %6081 = vmatpush.bf16.msra.mxu0 %v4582
      %6082 = vmatpush.bf16.msra.mxu0 %v4580
      %6083 = vmatpush.bf16.msra.mxu0 %v4578
      %6084 = vmatpush.bf16.msra.mxu0 %v4576
      %6085 = vmatmul.bf16.gmra.mxu0 %v3820
      %v6086 = vpop.f32.mrf.mxu0
      %v6087 = vadd.f32 %v6038, %v6086
      %v6088 = vpop.f32.mrf.mxu0
      %v6089 = vadd.f32 %v6040, %v6088
      %6090 = vmatmul.bf16.gmra.mxu0 %v3823
      %v6091 = vpop.f32.mrf.mxu0
      %v6092 = vadd.f32 %v6043, %v6091
      %v6093 = vpop.f32.mrf.mxu0
      %v6094 = vadd.f32 %v6045, %v6093
      %6095 = vmatmul.bf16.gmra.mxu0 %v3826
      %v6096 = vpop.f32.mrf.mxu0
      %v6097 = vadd.f32 %v6048, %v6096
      %v6098 = vpop.f32.mrf.mxu0
      %v6099 = vadd.f32 %v6050, %v6098
      %6100 = vmatmul.bf16.gmra.mxu0 %v3829
      %v6101 = vpop.f32.mrf.mxu0
      %v6102 = vadd.f32 %v6053, %v6101
      %v6103 = vpop.f32.mrf.mxu0
      %v6104 = vadd.f32 %v6055, %v6103
      %6105 = vmatmul.bf16.gmra.mxu0 %v3832
      %v6106 = vpop.f32.mrf.mxu0
      %v6107 = vadd.f32 %v6058, %v6106
      %v6108 = vpop.f32.mrf.mxu0
      %v6109 = vadd.f32 %v6060, %v6108
      %6110 = vmatmul.bf16.gmra.mxu0 %v3835
      %v6111 = vpop.f32.mrf.mxu0
      %v6112 = vadd.f32 %v6063, %v6111
      %v6113 = vpop.f32.mrf.mxu0
      %v6114 = vadd.f32 %v6065, %v6113
      %6115 = vmatmul.bf16.gmra.mxu0 %v5006
      %v6116 = vpop.f32.mrf.mxu0
      %v6117 = vadd.f32 %v6068, %v6116
      %v6118 = vpop.f32.mrf.mxu0
      %v6119 = vadd.f32 %v6070, %v6118
      %6120 = vmatmul.bf16.gmra.mxu0 %v5009
      %v6121 = vpop.f32.mrf.mxu0
      %v6122 = vadd.f32 %v6073, %v6121
      %v6123 = vpop.f32.mrf.mxu0
      %v6124 = vadd.f32 %v6075, %v6123
      %6125 = vdwg.mxu0
      %6126 = vmatpush.bf16.msra.mxu0 %v4575
      %6127 = vmatpush.bf16.msra.mxu0 %v4573
      %6128 = vmatpush.bf16.msra.mxu0 %v4571
      %6129 = vmatpush.bf16.msra.mxu0 %v4569
      %6130 = vmatpush.bf16.msra.mxu0 %v4567
      %6131 = vmatpush.bf16.msra.mxu0 %v4565
      %6132 = vmatpush.bf16.msra.mxu0 %v4563
      %6133 = vmatpush.bf16.msra.mxu0 %v4561
      %6134 = vmatmul.bf16.gmra.mxu0 %v3673
      %v6135 = vpop.f32.mrf.mxu0
      %v6136 = vadd.f32 0.0, %v6135
      %v6137 = vpop.f32.mrf.mxu0
      %v6138 = vadd.f32 0.0, %v6137
      %6139 = vmatmul.bf16.gmra.mxu0 %v3675
      %v6140 = vpop.f32.mrf.mxu0
      %v6141 = vadd.f32 0.0, %v6140
      %v6142 = vpop.f32.mrf.mxu0
      %v6143 = vadd.f32 0.0, %v6142
      %6144 = vmatmul.bf16.gmra.mxu0 %v3677
      %v6145 = vpop.f32.mrf.mxu0
      %v6146 = vadd.f32 0.0, %v6145
      %v6147 = vpop.f32.mrf.mxu0
      %v6148 = vadd.f32 0.0, %v6147
      %6149 = vmatmul.bf16.gmra.mxu0 %v3679
      %v6150 = vpop.f32.mrf.mxu0
      %v6151 = vadd.f32 0.0, %v6150
      %v6152 = vpop.f32.mrf.mxu0
      %v6153 = vadd.f32 0.0, %v6152
      %6154 = vmatmul.bf16.gmra.mxu0 %v3681
      %v6155 = vpop.f32.mrf.mxu0
      %v6156 = vadd.f32 0.0, %v6155
      %v6157 = vpop.f32.mrf.mxu0
      %v6158 = vadd.f32 0.0, %v6157
      %6159 = vmatmul.bf16.gmra.mxu0 %v3683
      %v6160 = vpop.f32.mrf.mxu0
      %v6161 = vadd.f32 0.0, %v6160
      %v6162 = vpop.f32.mrf.mxu0
      %v6163 = vadd.f32 0.0, %v6162
      %6164 = vmatmul.bf16.gmra.mxu0 %v4879
      %v6165 = vpop.f32.mrf.mxu0
      %v6166 = vadd.f32 0.0, %v6165
      %v6167 = vpop.f32.mrf.mxu0
      %v6168 = vadd.f32 0.0, %v6167
      %6169 = vmatmul.bf16.gmra.mxu0 %v4881
      %v6170 = vpop.f32.mrf.mxu0
      %v6171 = vadd.f32 0.0, %v6170
      %v6172 = vpop.f32.mrf.mxu0
      %v6173 = vadd.f32 0.0, %v6172
      %6174 = vdwg.mxu0
      %6175 = vmatpush.bf16.msra.mxu0 0
      %6176 = vmatpush.bf16.msra.mxu0 0
      %6177 = vmatpush.bf16.msra.mxu0 0
      %6178 = vmatpush.bf16.msra.mxu0 0
      %6179 = vmatpush.bf16.msra.mxu0 %v4583
      %6180 = vmatpush.bf16.msra.mxu0 %v4581
      %6181 = vmatpush.bf16.msra.mxu0 %v4579
      %6182 = vmatpush.bf16.msra.mxu0 %v4577
      %6183 = vmatmul.bf16.gmra.mxu0 %v3820
      %v6184 = vpop.f32.mrf.mxu0
      %v6185 = vadd.f32 %v6136, %v6184
      %v6186 = vpop.f32.mrf.mxu0
      %v6187 = vadd.f32 %v6138, %v6186
      %6188 = vmatmul.bf16.gmra.mxu0 %v3823
      %v6189 = vpop.f32.mrf.mxu0
      %v6190 = vadd.f32 %v6141, %v6189
      %v6191 = vpop.f32.mrf.mxu0
      %v6192 = vadd.f32 %v6143, %v6191
      %6193 = vmatmul.bf16.gmra.mxu0 %v3826
      %v6194 = vpop.f32.mrf.mxu0
      %v6195 = vadd.f32 %v6146, %v6194
      %v6196 = vpop.f32.mrf.mxu0
      %v6197 = vadd.f32 %v6148, %v6196
      %6198 = vmatmul.bf16.gmra.mxu0 %v3829
      %v6199 = vpop.f32.mrf.mxu0
      %v6200 = vadd.f32 %v6151, %v6199
      %v6201 = vpop.f32.mrf.mxu0
      %v6202 = vadd.f32 %v6153, %v6201
      %6203 = vmatmul.bf16.gmra.mxu0 %v3832
      %v6204 = vpop.f32.mrf.mxu0
      %v6205 = vadd.f32 %v6156, %v6204
      %v6206 = vpop.f32.mrf.mxu0
      %v6207 = vadd.f32 %v6158, %v6206
      %6208 = vmatmul.bf16.gmra.mxu0 %v3835
      %v6209 = vpop.f32.mrf.mxu0
      %v6210 = vadd.f32 %v6161, %v6209
      %v6211 = vpop.f32.mrf.mxu0
      %v6212 = vadd.f32 %v6163, %v6211
      %6213 = vmatmul.bf16.gmra.mxu0 %v5006
      %v6214 = vpop.f32.mrf.mxu0
      %v6215 = vadd.f32 %v6166, %v6214
      %v6216 = vpop.f32.mrf.mxu0
      %v6217 = vadd.f32 %v6168, %v6216
      %6218 = vmatmul.bf16.gmra.mxu0 %v5009
      %v6219 = vpop.f32.mrf.mxu0
      %v6220 = vadd.f32 %v6171, %v6219
      %v6221 = vpop.f32.mrf.mxu0
      %v6222 = vadd.f32 %v6173, %v6221
      %6223 = vdwg.mxu0
      %v6224 = vadd.f32 %v5891, %v6087
      %v6225 = vadd.f32 %v5989, %v6185
      %v6226 = vadd.f32 %v5893, %v6089
      %v6227 = vadd.f32 %v5991, %v6187
      %v6228 = vadd.f32 %v5896, %v6092
      %v6229 = vadd.f32 %v5994, %v6190
      %v6230 = vadd.f32 %v5898, %v6094
      %v6231 = vadd.f32 %v5996, %v6192
      %v6232 = vadd.f32 %v5901, %v6097
      %v6233 = vadd.f32 %v5999, %v6195
      %v6234 = vadd.f32 %v5903, %v6099
      %v6235 = vadd.f32 %v6001, %v6197
      %v6236 = vadd.f32 %v5906, %v6102
      %v6237 = vadd.f32 %v6004, %v6200
      %v6238 = vadd.f32 %v5908, %v6104
      %v6239 = vadd.f32 %v6006, %v6202
      %v6240 = vadd.f32 %v5911, %v6107
      %v6241 = vadd.f32 %v6009, %v6205
      %v6242 = vadd.f32 %v5913, %v6109
      %v6243 = vadd.f32 %v6011, %v6207
      %v6244 = vadd.f32 %v5916, %v6112
      %v6245 = vadd.f32 %v6014, %v6210
      %v6246 = vadd.f32 %v5918, %v6114
      %v6247 = vadd.f32 %v6016, %v6212
      %v6248 = vadd.f32 %v5921, %v6117
      %v6249 = vadd.f32 %v6019, %v6215
      %v6250 = vadd.f32 %v5923, %v6119
      %v6251 = vadd.f32 %v6021, %v6217
      %v6252 = vadd.f32 %v5926, %v6122
      %v6253 = vadd.f32 %v6024, %v6220
      %v6254 = vadd.f32 %v5928, %v6124
      %v6255 = vadd.f32 %v6026, %v6222
      %6256 = vmatpush.bf16.msra.mxu0 %v4971
      %6257 = vmatpush.bf16.msra.mxu0 %v4969
      %6258 = vmatpush.bf16.msra.mxu0 %v4967
      %6259 = vmatpush.bf16.msra.mxu0 %v4965
      %6260 = vmatpush.bf16.msra.mxu0 %v4963
      %6261 = vmatpush.bf16.msra.mxu0 %v4961
      %6262 = vmatpush.bf16.msra.mxu0 %v4959
      %6263 = vmatpush.bf16.msra.mxu0 %v4957
      %6264 = vmatmul.bf16.gmra.mxu0 %v4089
      %v6265 = vpop.f32.mrf.mxu0
      %v6266 = vadd.f32 0.0, %v6265
      %v6267 = vpop.f32.mrf.mxu0
      %v6268 = vadd.f32 0.0, %v6267
      %6269 = vmatmul.bf16.gmra.mxu0 %v4091
      %v6270 = vpop.f32.mrf.mxu0
      %v6271 = vadd.f32 0.0, %v6270
      %v6272 = vpop.f32.mrf.mxu0
      %v6273 = vadd.f32 0.0, %v6272
      %6274 = vmatmul.bf16.gmra.mxu0 %v4093
      %v6275 = vpop.f32.mrf.mxu0
      %v6276 = vadd.f32 0.0, %v6275
      %v6277 = vpop.f32.mrf.mxu0
      %v6278 = vadd.f32 0.0, %v6277
      %6279 = vmatmul.bf16.gmra.mxu0 %v4095
      %v6280 = vpop.f32.mrf.mxu0
      %v6281 = vadd.f32 0.0, %v6280
      %v6282 = vpop.f32.mrf.mxu0
      %v6283 = vadd.f32 0.0, %v6282
      %6284 = vmatmul.bf16.gmra.mxu0 %v4482
      %v6285 = vpop.f32.mrf.mxu0
      %v6286 = vadd.f32 0.0, %v6285
      %v6287 = vpop.f32.mrf.mxu0
      %v6288 = vadd.f32 0.0, %v6287
      %6289 = vmatmul.bf16.gmra.mxu0 %v4484
      %v6290 = vpop.f32.mrf.mxu0
      %v6291 = vadd.f32 0.0, %v6290
      %v6292 = vpop.f32.mrf.mxu0
      %v6293 = vadd.f32 0.0, %v6292
      %6294 = vmatmul.bf16.gmra.mxu0 %v5276
      %v6295 = vpop.f32.mrf.mxu0
      %v6296 = vadd.f32 0.0, %v6295
      %v6297 = vpop.f32.mrf.mxu0
      %v6298 = vadd.f32 0.0, %v6297
      %6299 = vmatmul.bf16.gmra.mxu0 %v5278
      %v6300 = vpop.f32.mrf.mxu0
      %v6301 = vadd.f32 0.0, %v6300
      %v6302 = vpop.f32.mrf.mxu0
      %v6303 = vadd.f32 0.0, %v6302
      %6304 = vdwg.mxu0
      %6305 = vmatpush.bf16.msra.mxu0 0
      %6306 = vmatpush.bf16.msra.mxu0 0
      %6307 = vmatpush.bf16.msra.mxu0 0
      %6308 = vmatpush.bf16.msra.mxu0 0
      %6309 = vmatpush.bf16.msra.mxu0 %v4979
      %6310 = vmatpush.bf16.msra.mxu0 %v4977
      %6311 = vmatpush.bf16.msra.mxu0 %v4975
      %6312 = vmatpush.bf16.msra.mxu0 %v4973
      %6313 = vmatmul.bf16.gmra.mxu0 %v4238
      %v6314 = vpop.f32.mrf.mxu0
      %v6315 = vadd.f32 %v6266, %v6314
      %v6316 = vpop.f32.mrf.mxu0
      %v6317 = vadd.f32 %v6268, %v6316
      %6318 = vmatmul.bf16.gmra.mxu0 %v4241
      %v6319 = vpop.f32.mrf.mxu0
      %v6320 = vadd.f32 %v6271, %v6319
      %v6321 = vpop.f32.mrf.mxu0
      %v6322 = vadd.f32 %v6273, %v6321
      %6323 = vmatmul.bf16.gmra.mxu0 %v4244
      %v6324 = vpop.f32.mrf.mxu0
      %v6325 = vadd.f32 %v6276, %v6324
      %v6326 = vpop.f32.mrf.mxu0
      %v6327 = vadd.f32 %v6278, %v6326
      %6328 = vmatmul.bf16.gmra.mxu0 %v4247
      %v6329 = vpop.f32.mrf.mxu0
      %v6330 = vadd.f32 %v6281, %v6329
      %v6331 = vpop.f32.mrf.mxu0
      %v6332 = vadd.f32 %v6283, %v6331
      %6333 = vmatmul.bf16.gmra.mxu0 %v4609
      %v6334 = vpop.f32.mrf.mxu0
      %v6335 = vadd.f32 %v6286, %v6334
      %v6336 = vpop.f32.mrf.mxu0
      %v6337 = vadd.f32 %v6288, %v6336
      %6338 = vmatmul.bf16.gmra.mxu0 %v4612
      %v6339 = vpop.f32.mrf.mxu0
      %v6340 = vadd.f32 %v6291, %v6339
      %v6341 = vpop.f32.mrf.mxu0
      %v6342 = vadd.f32 %v6293, %v6341
      %6343 = vmatmul.bf16.gmra.mxu0 %v5403
      %v6344 = vpop.f32.mrf.mxu0
      %v6345 = vadd.f32 %v6296, %v6344
      %v6346 = vpop.f32.mrf.mxu0
      %v6347 = vadd.f32 %v6298, %v6346
      %6348 = vmatmul.bf16.gmra.mxu0 %v5406
      %v6349 = vpop.f32.mrf.mxu0
      %v6350 = vadd.f32 %v6301, %v6349
      %v6351 = vpop.f32.mrf.mxu0
      %v6352 = vadd.f32 %v6303, %v6351
      %6353 = vdwg.mxu0
      %6354 = vmatpush.bf16.msra.mxu0 %v4972
      %6355 = vmatpush.bf16.msra.mxu0 %v4970
      %6356 = vmatpush.bf16.msra.mxu0 %v4968
      %6357 = vmatpush.bf16.msra.mxu0 %v4966
      %6358 = vmatpush.bf16.msra.mxu0 %v4964
      %6359 = vmatpush.bf16.msra.mxu0 %v4962
      %6360 = vmatpush.bf16.msra.mxu0 %v4960
      %6361 = vmatpush.bf16.msra.mxu0 %v4958
      %6362 = vmatmul.bf16.gmra.mxu0 %v4089
      %v6363 = vpop.f32.mrf.mxu0
      %v6364 = vadd.f32 0.0, %v6363
      %v6365 = vpop.f32.mrf.mxu0
      %v6366 = vadd.f32 0.0, %v6365
      %6367 = vmatmul.bf16.gmra.mxu0 %v4091
      %v6368 = vpop.f32.mrf.mxu0
      %v6369 = vadd.f32 0.0, %v6368
      %v6370 = vpop.f32.mrf.mxu0
      %v6371 = vadd.f32 0.0, %v6370
      %6372 = vmatmul.bf16.gmra.mxu0 %v4093
      %v6373 = vpop.f32.mrf.mxu0
      %v6374 = vadd.f32 0.0, %v6373
      %v6375 = vpop.f32.mrf.mxu0
      %v6376 = vadd.f32 0.0, %v6375
      %6377 = vmatmul.bf16.gmra.mxu0 %v4095
      %v6378 = vpop.f32.mrf.mxu0
      %v6379 = vadd.f32 0.0, %v6378
      %v6380 = vpop.f32.mrf.mxu0
      %v6381 = vadd.f32 0.0, %v6380
      %6382 = vmatmul.bf16.gmra.mxu0 %v4482
      %v6383 = vpop.f32.mrf.mxu0
      %v6384 = vadd.f32 0.0, %v6383
      %v6385 = vpop.f32.mrf.mxu0
      %v6386 = vadd.f32 0.0, %v6385
      %6387 = vmatmul.bf16.gmra.mxu0 %v4484
      %v6388 = vpop.f32.mrf.mxu0
      %v6389 = vadd.f32 0.0, %v6388
      %v6390 = vpop.f32.mrf.mxu0
      %v6391 = vadd.f32 0.0, %v6390
      %6392 = vmatmul.bf16.gmra.mxu0 %v5276
      %v6393 = vpop.f32.mrf.mxu0
      %v6394 = vadd.f32 0.0, %v6393
      %v6395 = vpop.f32.mrf.mxu0
      %v6396 = vadd.f32 0.0, %v6395
      %6397 = vmatmul.bf16.gmra.mxu0 %v5278
      %v6398 = vpop.f32.mrf.mxu0
      %v6399 = vadd.f32 0.0, %v6398
      %v6400 = vpop.f32.mrf.mxu0
      %v6401 = vadd.f32 0.0, %v6400
      %6402 = vdwg.mxu0
      %6403 = vmatpush.bf16.msra.mxu0 0
      %6404 = vmatpush.bf16.msra.mxu0 0
      %6405 = vmatpush.bf16.msra.mxu0 0
      %6406 = vmatpush.bf16.msra.mxu0 0
      %6407 = vmatpush.bf16.msra.mxu0 %v4980
      %6408 = vmatpush.bf16.msra.mxu0 %v4978
      %6409 = vmatpush.bf16.msra.mxu0 %v4976
      %6410 = vmatpush.bf16.msra.mxu0 %v4974
      %6411 = vmatmul.bf16.gmra.mxu0 %v4238
      %v6412 = vpop.f32.mrf.mxu0
      %v6413 = vadd.f32 %v6364, %v6412
      %v6414 = vpop.f32.mrf.mxu0
      %v6415 = vadd.f32 %v6366, %v6414
      %6416 = vmatmul.bf16.gmra.mxu0 %v4241
      %v6417 = vpop.f32.mrf.mxu0
      %v6418 = vadd.f32 %v6369, %v6417
      %v6419 = vpop.f32.mrf.mxu0
      %v6420 = vadd.f32 %v6371, %v6419
      %6421 = vmatmul.bf16.gmra.mxu0 %v4244
      %v6422 = vpop.f32.mrf.mxu0
      %v6423 = vadd.f32 %v6374, %v6422
      %v6424 = vpop.f32.mrf.mxu0
      %v6425 = vadd.f32 %v6376, %v6424
      %6426 = vmatmul.bf16.gmra.mxu0 %v4247
      %v6427 = vpop.f32.mrf.mxu0
      %v6428 = vadd.f32 %v6379, %v6427
      %v6429 = vpop.f32.mrf.mxu0
      %v6430 = vadd.f32 %v6381, %v6429
      %6431 = vmatmul.bf16.gmra.mxu0 %v4609
      %v6432 = vpop.f32.mrf.mxu0
      %v6433 = vadd.f32 %v6384, %v6432
      %v6434 = vpop.f32.mrf.mxu0
      %v6435 = vadd.f32 %v6386, %v6434
      %6436 = vmatmul.bf16.gmra.mxu0 %v4612
      %v6437 = vpop.f32.mrf.mxu0
      %v6438 = vadd.f32 %v6389, %v6437
      %v6439 = vpop.f32.mrf.mxu0
      %v6440 = vadd.f32 %v6391, %v6439
      %6441 = vmatmul.bf16.gmra.mxu0 %v5403
      %v6442 = vpop.f32.mrf.mxu0
      %v6443 = vadd.f32 %v6394, %v6442
      %v6444 = vpop.f32.mrf.mxu0
      %v6445 = vadd.f32 %v6396, %v6444
      %6446 = vmatmul.bf16.gmra.mxu0 %v5406
      %v6447 = vpop.f32.mrf.mxu0
      %v6448 = vadd.f32 %v6399, %v6447
      %v6449 = vpop.f32.mrf.mxu0
      %v6450 = vadd.f32 %v6401, %v6449
      %6451 = vdwg.mxu0
      %v6452 = vadd.f32 %v6224, %v6315
      %v6453 = vadd.f32 %v6225, %v6413
      %v6454 = vadd.f32 %v6226, %v6317
      %v6455 = vadd.f32 %v6227, %v6415
      %v6456 = vadd.f32 %v6228, %v6320
      %v6457 = vadd.f32 %v6229, %v6418
      %v6458 = vadd.f32 %v6230, %v6322
      %v6459 = vadd.f32 %v6231, %v6420
      %v6460 = vadd.f32 %v6232, %v6325
      %v6461 = vadd.f32 %v6233, %v6423
      %v6462 = vadd.f32 %v6234, %v6327
      %v6463 = vadd.f32 %v6235, %v6425
      %v6464 = vadd.f32 %v6236, %v6330
      %v6465 = vadd.f32 %v6237, %v6428
      %v6466 = vadd.f32 %v6238, %v6332
      %v6467 = vadd.f32 %v6239, %v6430
      %v6468 = vadd.f32 %v6240, %v6335
      %v6469 = vadd.f32 %v6241, %v6433
      %v6470 = vadd.f32 %v6242, %v6337
      %v6471 = vadd.f32 %v6243, %v6435
      %v6472 = vadd.f32 %v6244, %v6340
      %v6473 = vadd.f32 %v6245, %v6438
      %v6474 = vadd.f32 %v6246, %v6342
      %v6475 = vadd.f32 %v6247, %v6440
      %v6476 = vadd.f32 %v6248, %v6345
      %v6477 = vadd.f32 %v6249, %v6443
      %v6478 = vadd.f32 %v6250, %v6347
      %v6479 = vadd.f32 %v6251, %v6445
      %v6480 = vadd.f32 %v6252, %v6350
      %v6481 = vadd.f32 %v6253, %v6448
      %v6482 = vadd.f32 %v6254, %v6352
      %v6483 = vadd.f32 %v6255, %v6450
      %v6488 = vunpack.c.l.b16 %v3568
      %v6489 = vunpack.c.h.b16 %v3568
      %v6490 = vunpack.c.l.b16 %v3569
      %v6491 = vunpack.c.h.b16 %v3569
      %v6492 = vunpack.c.l.b16 %v3570
      %v6493 = vunpack.c.h.b16 %v3570
      %v6494 = vunpack.c.l.b16 %v3571
      %v6495 = vunpack.c.h.b16 %v3571
      %v6496 = vpack.c.b16 %v6490, %v6488
      %v6497 = vpack.c.b16 %v6491, %v6489
      %v6498 = vpack.c.b16 %v6494, %v6492
      %v6499 = vpack.c.b16 %v6495, %v6493
      %v6503 = vsel %vm3086, %v6497, 0
      %v6506 = vsel %vm3086, %v6499, 0
      %6508 = vmatpush.bf16.msra.mxu0 %v5368
      %6509 = vmatpush.bf16.msra.mxu0 %v5366
      %6510 = vmatpush.bf16.msra.mxu0 %v5364
      %6511 = vmatpush.bf16.msra.mxu0 %v5362
      %6512 = vmatpush.bf16.msra.mxu0 %v5360
      %6513 = vmatpush.bf16.msra.mxu0 %v5358
      %6514 = vmatpush.bf16.msra.mxu0 %v5356
      %6515 = vmatpush.bf16.msra.mxu0 %v5354
      %6516 = vmatmul.bf16.gmra.mxu0 %v3677
      %v6517 = vpop.f32.mrf.mxu0
      %v6518 = vadd.f32 0.0, %v6517
      %v6519 = vpop.f32.mrf.mxu0
      %v6520 = vadd.f32 0.0, %v6519
      %6521 = vmatmul.bf16.gmra.mxu0 %v3679
      %v6522 = vpop.f32.mrf.mxu0
      %v6523 = vadd.f32 0.0, %v6522
      %v6524 = vpop.f32.mrf.mxu0
      %v6525 = vadd.f32 0.0, %v6524
      %6526 = vmatmul.bf16.gmra.mxu0 %v3681
      %v6527 = vpop.f32.mrf.mxu0
      %v6528 = vadd.f32 0.0, %v6527
      %v6529 = vpop.f32.mrf.mxu0
      %v6530 = vadd.f32 0.0, %v6529
      %6531 = vmatmul.bf16.gmra.mxu0 %v3683
      %v6532 = vpop.f32.mrf.mxu0
      %v6533 = vadd.f32 0.0, %v6532
      %v6534 = vpop.f32.mrf.mxu0
      %v6535 = vadd.f32 0.0, %v6534
      %6536 = vmatmul.bf16.gmra.mxu0 %v4879
      %v6537 = vpop.f32.mrf.mxu0
      %v6538 = vadd.f32 0.0, %v6537
      %v6539 = vpop.f32.mrf.mxu0
      %v6540 = vadd.f32 0.0, %v6539
      %6541 = vmatmul.bf16.gmra.mxu0 %v4881
      %v6542 = vpop.f32.mrf.mxu0
      %v6543 = vadd.f32 0.0, %v6542
      %v6544 = vpop.f32.mrf.mxu0
      %v6545 = vadd.f32 0.0, %v6544
      %6546 = vmatmul.bf16.gmra.mxu0 %v6496
      %v6547 = vpop.f32.mrf.mxu0
      %v6548 = vadd.f32 0.0, %v6547
      %v6549 = vpop.f32.mrf.mxu0
      %v6550 = vadd.f32 0.0, %v6549
      %6551 = vmatmul.bf16.gmra.mxu0 %v6498
      %v6552 = vpop.f32.mrf.mxu0
      %v6553 = vadd.f32 0.0, %v6552
      %v6554 = vpop.f32.mrf.mxu0
      %v6555 = vadd.f32 0.0, %v6554
      %6556 = vdwg.mxu0
      %6557 = vmatpush.bf16.msra.mxu0 0
      %6558 = vmatpush.bf16.msra.mxu0 0
      %6559 = vmatpush.bf16.msra.mxu0 0
      %6560 = vmatpush.bf16.msra.mxu0 0
      %6561 = vmatpush.bf16.msra.mxu0 %v5376
      %6562 = vmatpush.bf16.msra.mxu0 %v5374
      %6563 = vmatpush.bf16.msra.mxu0 %v5372
      %6564 = vmatpush.bf16.msra.mxu0 %v5370
      %6565 = vmatmul.bf16.gmra.mxu0 %v3826
      %v6566 = vpop.f32.mrf.mxu0
      %v6567 = vadd.f32 %v6518, %v6566
      %v6568 = vpop.f32.mrf.mxu0
      %v6569 = vadd.f32 %v6520, %v6568
      %6570 = vmatmul.bf16.gmra.mxu0 %v3829
      %v6571 = vpop.f32.mrf.mxu0
      %v6572 = vadd.f32 %v6523, %v6571
      %v6573 = vpop.f32.mrf.mxu0
      %v6574 = vadd.f32 %v6525, %v6573
      %6575 = vmatmul.bf16.gmra.mxu0 %v3832
      %v6576 = vpop.f32.mrf.mxu0
      %v6577 = vadd.f32 %v6528, %v6576
      %v6578 = vpop.f32.mrf.mxu0
      %v6579 = vadd.f32 %v6530, %v6578
      %6580 = vmatmul.bf16.gmra.mxu0 %v3835
      %v6581 = vpop.f32.mrf.mxu0
      %v6582 = vadd.f32 %v6533, %v6581
      %v6583 = vpop.f32.mrf.mxu0
      %v6584 = vadd.f32 %v6535, %v6583
      %6585 = vmatmul.bf16.gmra.mxu0 %v5006
      %v6586 = vpop.f32.mrf.mxu0
      %v6587 = vadd.f32 %v6538, %v6586
      %v6588 = vpop.f32.mrf.mxu0
      %v6589 = vadd.f32 %v6540, %v6588
      %6590 = vmatmul.bf16.gmra.mxu0 %v5009
      %v6591 = vpop.f32.mrf.mxu0
      %v6592 = vadd.f32 %v6543, %v6591
      %v6593 = vpop.f32.mrf.mxu0
      %v6594 = vadd.f32 %v6545, %v6593
      %6595 = vmatmul.bf16.gmra.mxu0 %v6503
      %v6596 = vpop.f32.mrf.mxu0
      %v6597 = vadd.f32 %v6548, %v6596
      %v6598 = vpop.f32.mrf.mxu0
      %v6599 = vadd.f32 %v6550, %v6598
      %6600 = vmatmul.bf16.gmra.mxu0 %v6506
      %v6601 = vpop.f32.mrf.mxu0
      %v6602 = vadd.f32 %v6553, %v6601
      %v6603 = vpop.f32.mrf.mxu0
      %v6604 = vadd.f32 %v6555, %v6603
      %6605 = vdwg.mxu0
      %6606 = vmatpush.bf16.msra.mxu0 %v5369
      %6607 = vmatpush.bf16.msra.mxu0 %v5367
      %6608 = vmatpush.bf16.msra.mxu0 %v5365
      %6609 = vmatpush.bf16.msra.mxu0 %v5363
      %6610 = vmatpush.bf16.msra.mxu0 %v5361
      %6611 = vmatpush.bf16.msra.mxu0 %v5359
      %6612 = vmatpush.bf16.msra.mxu0 %v5357
      %6613 = vmatpush.bf16.msra.mxu0 %v5355
      %6614 = vmatmul.bf16.gmra.mxu0 %v3677
      %v6615 = vpop.f32.mrf.mxu0
      %v6616 = vadd.f32 0.0, %v6615
      %v6617 = vpop.f32.mrf.mxu0
      %v6618 = vadd.f32 0.0, %v6617
      %6619 = vmatmul.bf16.gmra.mxu0 %v3679
      %v6620 = vpop.f32.mrf.mxu0
      %v6621 = vadd.f32 0.0, %v6620
      %v6622 = vpop.f32.mrf.mxu0
      %v6623 = vadd.f32 0.0, %v6622
      %6624 = vmatmul.bf16.gmra.mxu0 %v3681
      %v6625 = vpop.f32.mrf.mxu0
      %v6626 = vadd.f32 0.0, %v6625
      %v6627 = vpop.f32.mrf.mxu0
      %v6628 = vadd.f32 0.0, %v6627
      %6629 = vmatmul.bf16.gmra.mxu0 %v3683
      %v6630 = vpop.f32.mrf.mxu0
      %v6631 = vadd.f32 0.0, %v6630
      %v6632 = vpop.f32.mrf.mxu0
      %v6633 = vadd.f32 0.0, %v6632
      %6634 = vmatmul.bf16.gmra.mxu0 %v4879
      %v6635 = vpop.f32.mrf.mxu0
      %v6636 = vadd.f32 0.0, %v6635
      %v6637 = vpop.f32.mrf.mxu0
      %v6638 = vadd.f32 0.0, %v6637
      %6639 = vmatmul.bf16.gmra.mxu0 %v4881
      %v6640 = vpop.f32.mrf.mxu0
      %v6641 = vadd.f32 0.0, %v6640
      %v6642 = vpop.f32.mrf.mxu0
      %v6643 = vadd.f32 0.0, %v6642
      %6644 = vmatmul.bf16.gmra.mxu0 %v6496
      %v6645 = vpop.f32.mrf.mxu0
      %v6646 = vadd.f32 0.0, %v6645
      %v6647 = vpop.f32.mrf.mxu0
      %v6648 = vadd.f32 0.0, %v6647
      %6649 = vmatmul.bf16.gmra.mxu0 %v6498
      %v6650 = vpop.f32.mrf.mxu0
      %v6651 = vadd.f32 0.0, %v6650
      %v6652 = vpop.f32.mrf.mxu0
      %v6653 = vadd.f32 0.0, %v6652
      %6654 = vdwg.mxu0
      %6655 = vmatpush.bf16.msra.mxu0 0
      %6656 = vmatpush.bf16.msra.mxu0 0
      %6657 = vmatpush.bf16.msra.mxu0 0
      %6658 = vmatpush.bf16.msra.mxu0 0
      %6659 = vmatpush.bf16.msra.mxu0 %v5377
      %6660 = vmatpush.bf16.msra.mxu0 %v5375
      %6661 = vmatpush.bf16.msra.mxu0 %v5373
      %6662 = vmatpush.bf16.msra.mxu0 %v5371
      %6663 = vmatmul.bf16.gmra.mxu0 %v3826
      %v6664 = vpop.f32.mrf.mxu0
      %v6665 = vadd.f32 %v6616, %v6664
      %v6666 = vpop.f32.mrf.mxu0
      %v6667 = vadd.f32 %v6618, %v6666
      %6668 = vmatmul.bf16.gmra.mxu0 %v3829
      %v6669 = vpop.f32.mrf.mxu0
      %v6670 = vadd.f32 %v6621, %v6669
      %v6671 = vpop.f32.mrf.mxu0
      %v6672 = vadd.f32 %v6623, %v6671
      %6673 = vmatmul.bf16.gmra.mxu0 %v3832
      %v6674 = vpop.f32.mrf.mxu0
      %v6675 = vadd.f32 %v6626, %v6674
      %v6676 = vpop.f32.mrf.mxu0
      %v6677 = vadd.f32 %v6628, %v6676
      %6678 = vmatmul.bf16.gmra.mxu0 %v3835
      %v6679 = vpop.f32.mrf.mxu0
      %v6680 = vadd.f32 %v6631, %v6679
      %v6681 = vpop.f32.mrf.mxu0
      %v6682 = vadd.f32 %v6633, %v6681
      %6683 = vmatmul.bf16.gmra.mxu0 %v5006
      %v6684 = vpop.f32.mrf.mxu0
      %v6685 = vadd.f32 %v6636, %v6684
      %v6686 = vpop.f32.mrf.mxu0
      %v6687 = vadd.f32 %v6638, %v6686
      %6688 = vmatmul.bf16.gmra.mxu0 %v5009
      %v6689 = vpop.f32.mrf.mxu0
      %v6690 = vadd.f32 %v6641, %v6689
      %v6691 = vpop.f32.mrf.mxu0
      %v6692 = vadd.f32 %v6643, %v6691
      %6693 = vmatmul.bf16.gmra.mxu0 %v6503
      %v6694 = vpop.f32.mrf.mxu0
      %v6695 = vadd.f32 %v6646, %v6694
      %v6696 = vpop.f32.mrf.mxu0
      %v6697 = vadd.f32 %v6648, %v6696
      %6698 = vmatmul.bf16.gmra.mxu0 %v6506
      %v6699 = vpop.f32.mrf.mxu0
      %v6700 = vadd.f32 %v6651, %v6699
      %v6701 = vpop.f32.mrf.mxu0
      %v6702 = vadd.f32 %v6653, %v6701
      %6703 = vdwg.mxu0
      %v6704 = vadd.f32 %v6452, %v6567
      %v6705 = vadd.f32 %v6453, %v6665
      %v6706 = vadd.f32 %v6454, %v6569
      %v6707 = vadd.f32 %v6455, %v6667
      %v6708 = vadd.f32 %v6456, %v6572
      %v6709 = vadd.f32 %v6457, %v6670
      %v6710 = vadd.f32 %v6458, %v6574
      %v6711 = vadd.f32 %v6459, %v6672
      %v6712 = vadd.f32 %v6460, %v6577
      %v6713 = vadd.f32 %v6461, %v6675
      %v6714 = vadd.f32 %v6462, %v6579
      %v6715 = vadd.f32 %v6463, %v6677
      %v6716 = vadd.f32 %v6464, %v6582
      %v6717 = vadd.f32 %v6465, %v6680
      %v6718 = vadd.f32 %v6466, %v6584
      %v6719 = vadd.f32 %v6467, %v6682
      %v6720 = vadd.f32 %v6468, %v6587
      %v6721 = vadd.f32 %v6469, %v6685
      %v6722 = vadd.f32 %v6470, %v6589
      %v6723 = vadd.f32 %v6471, %v6687
      %v6724 = vadd.f32 %v6472, %v6592
      %v6725 = vadd.f32 %v6473, %v6690
      %v6726 = vadd.f32 %v6474, %v6594
      %v6727 = vadd.f32 %v6475, %v6692
      %v6728 = vadd.f32 %v6476, %v6597
      %v6729 = vadd.f32 %v6477, %v6695
      %v6730 = vadd.f32 %v6478, %v6599
      %v6731 = vadd.f32 %v6479, %v6697
      %v6732 = vadd.f32 %v6480, %v6602
      %v6733 = vadd.f32 %v6481, %v6700
      %v6734 = vadd.f32 %v6482, %v6604
      %v6735 = vadd.f32 %v6483, %v6702
      %v6736 = vld [vmem:[%s4] sm:$0x1]
      %v6737 = vmax.f32 %v5604, %v6704
      %v6738 = vmax.f32 %v5605, %v6705
      %v6739 = vmax.f32 %v5606, %v6706
      %v6740 = vmax.f32 %v5607, %v6707
      %v6741 = vmax.f32 %v5608, %v6708
      %v6742 = vmax.f32 %v5609, %v6709
      %v6743 = vmax.f32 %v5610, %v6710
      %v6744 = vmax.f32 %v5611, %v6711
      %v6745 = vmax.f32 %v5612, %v6712
      %v6746 = vmax.f32 %v5613, %v6713
      %v6747 = vmax.f32 %v5614, %v6714
      %v6748 = vmax.f32 %v5615, %v6715
      %v6749 = vmax.f32 %v5616, %v6716
      %v6750 = vmax.f32 %v5617, %v6717
      %v6751 = vmax.f32 %v5618, %v6718
      %v6752 = vmax.f32 %v5619, %v6719
      %v6753 = vmax.f32 %v5620, %v6720
      %v6754 = vmax.f32 %v5621, %v6721
      %v6755 = vmax.f32 %v5622, %v6722
      %v6756 = vmax.f32 %v5623, %v6723
      %v6757 = vmax.f32 %v5624, %v6724
      %v6758 = vmax.f32 %v5625, %v6725
      %v6759 = vmax.f32 %v5626, %v6726
      %v6760 = vmax.f32 %v5627, %v6727
      %v6761 = vmax.f32 %v5628, %v6728
      %v6762 = vmax.f32 %v5629, %v6729
      %v6763 = vmax.f32 %v5630, %v6730
      %v6764 = vmax.f32 %v5631, %v6731
      %v6765 = vmax.f32 %v5632, %v6732
      %v6766 = vmax.f32 %v5633, %v6733
      %v6767 = vmax.f32 %v5634, %v6734
      %v6768 = vmax.f32 %v5635, %v6735
      %v6769 = vmax.f32 %v6737, %v6738
      %v6770 = vmax.f32 %v6739, %v6740
      %v6771 = vmax.f32 %v6741, %v6742
      %v6772 = vmax.f32 %v6743, %v6744
      %v6773 = vmax.f32 %v6745, %v6746
      %v6774 = vmax.f32 %v6747, %v6748
      %v6775 = vmax.f32 %v6749, %v6750
      %v6776 = vmax.f32 %v6751, %v6752
      %v6777 = vmax.f32 %v6753, %v6754
      %v6778 = vmax.f32 %v6755, %v6756
      %v6779 = vmax.f32 %v6757, %v6758
      %v6780 = vmax.f32 %v6759, %v6760
      %v6781 = vmax.f32 %v6761, %v6762
      %v6782 = vmax.f32 %v6763, %v6764
      %v6783 = vmax.f32 %v6765, %v6766
      %v6784 = vmax.f32 %v6767, %v6768
      %v6786 = vperm.slane %v6736, 0
      %v6788 = vadd.f32 %v6769, %v6786
      %v6789 = vadd.f32 %v6770, %v6786
      %v6790 = vadd.f32 %v6771, %v6786
      %v6791 = vadd.f32 %v6772, %v6786
      %v6792 = vadd.f32 %v6773, %v6786
      %v6793 = vadd.f32 %v6774, %v6786
      %v6794 = vadd.f32 %v6775, %v6786
      %v6795 = vadd.f32 %v6776, %v6786
      %v6796 = vadd.f32 %v6777, %v6786
      %v6797 = vadd.f32 %v6778, %v6786
      %v6798 = vadd.f32 %v6779, %v6786
      %v6799 = vadd.f32 %v6780, %v6786
      %v6800 = vadd.f32 %v6781, %v6786
      %v6801 = vadd.f32 %v6782, %v6786
      %v6802 = vadd.f32 %v6783, %v6786
      %v6803 = vadd.f32 %v6784, %v6786
      %v6804 = vmax.f32 %v6788, 0.0
      %v6805 = vmax.f32 %v6789, 0.0
      %v6806 = vmax.f32 %v6790, 0.0
      %v6807 = vmax.f32 %v6791, 0.0
      %v6808 = vmax.f32 %v6792, 0.0
      %v6809 = vmax.f32 %v6793, 0.0
      %v6810 = vmax.f32 %v6794, 0.0
      %v6811 = vmax.f32 %v6795, 0.0
      %v6812 = vmax.f32 %v6796, 0.0
      %v6813 = vmax.f32 %v6797, 0.0
      %v6814 = vmax.f32 %v6798, 0.0
      %v6815 = vmax.f32 %v6799, 0.0
      %v6816 = vmax.f32 %v6800, 0.0
      %v6817 = vmax.f32 %v6801, 0.0
      %v6818 = vmax.f32 %v6802, 0.0
      %v6819 = vmax.f32 %v6803, 0.0
      %v6820 = vpack.c.bf16 %v6804, %v6804
      %v6821 = vpack.c.bf16 %v6805, %v6805
      %v6822 = vpack.c.bf16 %v6806, %v6806
      %v6823 = vpack.c.bf16 %v6807, %v6807
      %v6824 = vpack.c.bf16 %v6808, %v6808
      %v6825 = vpack.c.bf16 %v6809, %v6809
      %v6826 = vpack.c.bf16 %v6810, %v6810
      %v6827 = vpack.c.bf16 %v6811, %v6811
      %v6828 = vpack.c.bf16 %v6812, %v6812
      %v6829 = vpack.c.bf16 %v6813, %v6813
      %v6830 = vpack.c.bf16 %v6814, %v6814
      %v6831 = vpack.c.bf16 %v6815, %v6815
      %v6832 = vpack.c.bf16 %v6816, %v6816
      %v6833 = vpack.c.bf16 %v6817, %v6817
      %v6834 = vpack.c.bf16 %v6818, %v6818
      %v6835 = vpack.c.bf16 %v6819, %v6819
      %v6836 = vld [vmem:[%s5] sm:$0xf]
      %v6837 = vld [vmem:[%s5 + $0x4] sm:$0xf]
      %v6838 = vld [vmem:[%s5 + $0x8] sm:$0xf]
      %v6839 = vld [vmem:[%s5 + $0xc] sm:$0xf]
      %v6840 = vld [vmem:[%s5 + $0x10] sm:$0xf]
      %v6841 = vld [vmem:[%s5 + $0x14] sm:$0xf]
      %v6842 = vld [vmem:[%s5 + $0x18] sm:$0xf]
      %v6843 = vld [vmem:[%s5 + $0x1c] sm:$0xf]
      %v6844 = vld [vmem:[%s5 + $0x20] sm:$0xf]
      %v6845 = vld [vmem:[%s5 + $0x24] sm:$0xf]
      %v6846 = vld [vmem:[%s5 + $0x28] sm:$0xf]
      %v6847 = vld [vmem:[%s5 + $0x2c] sm:$0xf]
      %v6848 = vld [vmem:[%s5 + $0x30] sm:$0xf]
      %v6849 = vld [vmem:[%s5 + $0x34] sm:$0xf]
      %v6850 = vld [vmem:[%s5 + $0x38] sm:$0xf]
      %v6851 = vld [vmem:[%s5 + $0x3c] sm:$0xf]
      %s6852 = scalar_lea.vmem %s5, 64
      %v6853 = vld [vmem:[%s6852] sm:$0xf]
      %v6854 = vld [vmem:[%s6852 + $0x4] sm:$0xf]
      %v6855 = vld [vmem:[%s6852 + $0x8] sm:$0xf]
      %v6856 = vld [vmem:[%s6852 + $0xc] sm:$0xf]
      %v6857 = vld [vmem:[%s6852 + $0x10] sm:$0xf]
      %v6858 = vld [vmem:[%s6852 + $0x14] sm:$0xf]
      %v6859 = vld [vmem:[%s6852 + $0x18] sm:$0xf]
      %v6860 = vld [vmem:[%s6852 + $0x1c] sm:$0xf]
      %v6861 = vld [vmem:[%s6852 + $0x20] sm:$0xf]
      %v6862 = vld [vmem:[%s6852 + $0x24] sm:$0xf]
      %v6863 = vld [vmem:[%s6852 + $0x28] sm:$0xf]
      %v6864 = vld [vmem:[%s6852 + $0x2c] sm:$0xf]
      %v6865 = vld [vmem:[%s6852 + $0x30] sm:$0xf]
      %v6866 = vld [vmem:[%s6852 + $0x34] sm:$0xf]
      %v6867 = vld [vmem:[%s6852 + $0x38] sm:$0xf]
      %v6868 = vld [vmem:[%s6852 + $0x3c] sm:$0xf]
      %v6873 = vunpack.c.l.b16 %v6824
      %v6874 = vunpack.c.l.b16 %v6825
      %v6875 = vunpack.c.l.b16 %v6826
      %v6876 = vunpack.c.l.b16 %v6827
      %v6877 = vpack.c.b16 %v6874, %v6873
      %v6878 = vpack.c.b16 %v6876, %v6875
      %v6897 = vunpack.c.l.b16 %v6853
      %v6898 = vunpack.c.l.b16 %v6854
      %v6899 = vunpack.c.l.b16 %v6855
      %v6900 = vunpack.c.l.b16 %v6856
      %v6901 = vunpack.c.l.b16 %v6857
      %v6902 = vunpack.c.l.b16 %v6858
      %v6903 = vunpack.c.l.b16 %v6859
      %v6904 = vunpack.c.l.b16 %v6860
      %v6905 = vunpack.c.l.b16 %v6861
      %v6906 = vunpack.c.l.b16 %v6862
      %v6907 = vunpack.c.l.b16 %v6863
      %v6908 = vunpack.c.l.b16 %v6864
      %v6909 = vunpack.c.l.b16 %v6865
      %v6910 = vunpack.c.l.b16 %v6866
      %v6911 = vunpack.c.l.b16 %v6867
      %v6912 = vunpack.c.l.b16 %v6868
      %v6913 = vpack.c.b16 %v6898, %v6897
      %v6914 = vpack.c.b16 %v6900, %v6899
      %v6915 = vpack.c.b16 %v6902, %v6901
      %v6916 = vpack.c.b16 %v6904, %v6903
      %v6917 = vpack.c.b16 %v6906, %v6905
      %v6918 = vpack.c.b16 %v6908, %v6907
      %v6919 = vpack.c.b16 %v6910, %v6909
      %v6920 = vpack.c.b16 %v6912, %v6911
      %6929 = vmatpush.bf16.msra.mxu0 %v6920
      %6930 = vmatpush.bf16.msra.mxu0 %v6919
      %6931 = vmatpush.bf16.msra.mxu0 %v6918
      %6932 = vmatpush.bf16.msra.mxu0 %v6917
      %6933 = vmatpush.bf16.msra.mxu0 %v6916
      %6934 = vmatpush.bf16.msra.mxu0 %v6915
      %6935 = vmatpush.bf16.msra.mxu0 %v6914
      %6936 = vmatpush.bf16.msra.mxu0 %v6913
      %6937 = vmatmul.bf16.gmra.mxu0 %v6877
      %v6938 = vpop.f32.mrf.mxu0
      %v6939 = vadd.f32 0.0, %v6938
      %v6940 = vpop.f32.mrf.mxu0
      %v6941 = vadd.f32 0.0, %v6940
      %6942 = vmatmul.bf16.gmra.mxu0 %v6878
      %v6943 = vpop.f32.mrf.mxu0
      %v6944 = vadd.f32 0.0, %v6943
      %v6945 = vpop.f32.mrf.mxu0
      %v6946 = vadd.f32 0.0, %v6945
      %6947 = vdwg.mxu0
      %v6952 = vunpack.c.l.b16 %v6820
      %v6953 = vunpack.c.l.b16 %v6821
      %v6954 = vunpack.c.l.b16 %v6822
      %v6955 = vunpack.c.l.b16 %v6823
      %v6956 = vpack.c.b16 %v6953, %v6952
      %v6957 = vpack.c.b16 %v6955, %v6954
      %v6976 = vunpack.c.l.b16 %v6836
      %v6977 = vunpack.c.l.b16 %v6837
      %v6978 = vunpack.c.l.b16 %v6838
      %v6979 = vunpack.c.l.b16 %v6839
      %v6980 = vunpack.c.l.b16 %v6840
      %v6981 = vunpack.c.l.b16 %v6841
      %v6982 = vunpack.c.l.b16 %v6842
      %v6983 = vunpack.c.l.b16 %v6843
      %v6984 = vunpack.c.l.b16 %v6844
      %v6985 = vunpack.c.l.b16 %v6845
      %v6986 = vunpack.c.l.b16 %v6846
      %v6987 = vunpack.c.l.b16 %v6847
      %v6988 = vunpack.c.l.b16 %v6848
      %v6989 = vunpack.c.l.b16 %v6849
      %v6990 = vunpack.c.l.b16 %v6850
      %v6991 = vunpack.c.l.b16 %v6851
      %v6992 = vpack.c.b16 %v6977, %v6976
      %v6993 = vpack.c.b16 %v6979, %v6978
      %v6994 = vpack.c.b16 %v6981, %v6980
      %v6995 = vpack.c.b16 %v6983, %v6982
      %v6996 = vpack.c.b16 %v6985, %v6984
      %v6997 = vpack.c.b16 %v6987, %v6986
      %v6998 = vpack.c.b16 %v6989, %v6988
      %v6999 = vpack.c.b16 %v6991, %v6990
      %7008 = vmatpush.bf16.msra.mxu0 %v6999
      %7009 = vmatpush.bf16.msra.mxu0 %v6998
      %7010 = vmatpush.bf16.msra.mxu0 %v6997
      %7011 = vmatpush.bf16.msra.mxu0 %v6996
      %7012 = vmatpush.bf16.msra.mxu0 %v6995
      %7013 = vmatpush.bf16.msra.mxu0 %v6994
      %7014 = vmatpush.bf16.msra.mxu0 %v6993
      %7015 = vmatpush.bf16.msra.mxu0 %v6992
      %7016 = vmatmul.bf16.gmra.mxu0 %v6956
      %v7017 = vpop.f32.mrf.mxu0
      %v7018 = vadd.f32 %v6939, %v7017
      %v7019 = vpop.f32.mrf.mxu0
      %v7020 = vadd.f32 %v6941, %v7019
      %7021 = vmatmul.bf16.gmra.mxu0 %v6957
      %v7022 = vpop.f32.mrf.mxu0
      %v7023 = vadd.f32 %v6944, %v7022
      %v7024 = vpop.f32.mrf.mxu0
      %v7025 = vadd.f32 %v6946, %v7024
      %7026 = vdwg.mxu0
      %s7027 = scalar_lea.vmem %s5, 128
      %v7028 = vld [vmem:[%s7027] sm:$0xf]
      %v7029 = vld [vmem:[%s7027 + $0x4] sm:$0xf]
      %v7030 = vld [vmem:[%s7027 + $0x8] sm:$0xf]
      %v7031 = vld [vmem:[%s7027 + $0xc] sm:$0xf]
      %v7032 = vld [vmem:[%s7027 + $0x10] sm:$0xf]
      %v7033 = vld [vmem:[%s7027 + $0x14] sm:$0xf]
      %v7034 = vld [vmem:[%s7027 + $0x18] sm:$0xf]
      %v7035 = vld [vmem:[%s7027 + $0x1c] sm:$0xf]
      %v7036 = vld [vmem:[%s7027 + $0x20] sm:$0xf]
      %v7037 = vld [vmem:[%s7027 + $0x24] sm:$0xf]
      %v7038 = vld [vmem:[%s7027 + $0x28] sm:$0xf]
      %v7039 = vld [vmem:[%s7027 + $0x2c] sm:$0xf]
      %v7040 = vld [vmem:[%s7027 + $0x30] sm:$0xf]
      %v7041 = vld [vmem:[%s7027 + $0x34] sm:$0xf]
      %v7042 = vld [vmem:[%s7027 + $0x38] sm:$0xf]
      %v7043 = vld [vmem:[%s7027 + $0x3c] sm:$0xf]
      %v7048 = vunpack.c.l.b16 %v6828
      %v7049 = vunpack.c.l.b16 %v6829
      %v7050 = vunpack.c.l.b16 %v6830
      %v7051 = vunpack.c.l.b16 %v6831
      %v7052 = vpack.c.b16 %v7049, %v7048
      %v7053 = vpack.c.b16 %v7051, %v7050
      %v7072 = vunpack.c.l.b16 %v7028
      %v7073 = vunpack.c.l.b16 %v7029
      %v7074 = vunpack.c.l.b16 %v7030
      %v7075 = vunpack.c.l.b16 %v7031
      %v7076 = vunpack.c.l.b16 %v7032
      %v7077 = vunpack.c.l.b16 %v7033
      %v7078 = vunpack.c.l.b16 %v7034
      %v7079 = vunpack.c.l.b16 %v7035
      %v7080 = vunpack.c.l.b16 %v7036
      %v7081 = vunpack.c.l.b16 %v7037
      %v7082 = vunpack.c.l.b16 %v7038
      %v7083 = vunpack.c.l.b16 %v7039
      %v7084 = vunpack.c.l.b16 %v7040
      %v7085 = vunpack.c.l.b16 %v7041
      %v7086 = vunpack.c.l.b16 %v7042
      %v7087 = vunpack.c.l.b16 %v7043
      %v7088 = vpack.c.b16 %v7073, %v7072
      %v7089 = vpack.c.b16 %v7075, %v7074
      %v7090 = vpack.c.b16 %v7077, %v7076
      %v7091 = vpack.c.b16 %v7079, %v7078
      %v7092 = vpack.c.b16 %v7081, %v7080
      %v7093 = vpack.c.b16 %v7083, %v7082
      %v7094 = vpack.c.b16 %v7085, %v7084
      %v7095 = vpack.c.b16 %v7087, %v7086
      %7104 = vmatpush.bf16.msra.mxu0 %v7095
      %7105 = vmatpush.bf16.msra.mxu0 %v7094
      %7106 = vmatpush.bf16.msra.mxu0 %v7093
      %7107 = vmatpush.bf16.msra.mxu0 %v7092
      %7108 = vmatpush.bf16.msra.mxu0 %v7091
      %7109 = vmatpush.bf16.msra.mxu0 %v7090
      %7110 = vmatpush.bf16.msra.mxu0 %v7089
      %7111 = vmatpush.bf16.msra.mxu0 %v7088
      %7112 = vmatmul.bf16.gmra.mxu0 %v7052
      %v7113 = vpop.f32.mrf.mxu0
      %v7114 = vadd.f32 0.0, %v7113
      %v7115 = vpop.f32.mrf.mxu0
      %v7116 = vadd.f32 0.0, %v7115
      %7117 = vmatmul.bf16.gmra.mxu0 %v7053
      %v7118 = vpop.f32.mrf.mxu0
      %v7119 = vadd.f32 0.0, %v7118
      %v7120 = vpop.f32.mrf.mxu0
      %v7121 = vadd.f32 0.0, %v7120
      %7122 = vdwg.mxu0
      %v7123 = vadd.f32 %v7018, %v7114
      %v7124 = vadd.f32 %v7020, %v7116
      %v7125 = vadd.f32 %v7023, %v7119
      %v7126 = vadd.f32 %v7025, %v7121
      %s7127 = scalar_lea.vmem %s5, 192
      %v7128 = vld [vmem:[%s7127] sm:$0xf]
      %v7129 = vld [vmem:[%s7127 + $0x4] sm:$0xf]
      %v7130 = vld [vmem:[%s7127 + $0x8] sm:$0xf]
      %v7131 = vld [vmem:[%s7127 + $0xc] sm:$0xf]
      %v7132 = vld [vmem:[%s7127 + $0x10] sm:$0xf]
      %v7133 = vld [vmem:[%s7127 + $0x14] sm:$0xf]
      %v7134 = vld [vmem:[%s7127 + $0x18] sm:$0xf]
      %v7135 = vld [vmem:[%s7127 + $0x1c] sm:$0xf]
      %v7136 = vld [vmem:[%s7127 + $0x20] sm:$0xf]
      %v7137 = vld [vmem:[%s7127 + $0x24] sm:$0xf]
      %v7138 = vld [vmem:[%s7127 + $0x28] sm:$0xf]
      %v7139 = vld [vmem:[%s7127 + $0x2c] sm:$0xf]
      %v7140 = vld [vmem:[%s7127 + $0x30] sm:$0xf]
      %v7141 = vld [vmem:[%s7127 + $0x34] sm:$0xf]
      %v7142 = vld [vmem:[%s7127 + $0x38] sm:$0xf]
      %v7143 = vld [vmem:[%s7127 + $0x3c] sm:$0xf]
      %v7148 = vunpack.c.l.b16 %v6832
      %v7149 = vunpack.c.l.b16 %v6833
      %v7150 = vunpack.c.l.b16 %v6834
      %v7151 = vunpack.c.l.b16 %v6835
      %v7152 = vpack.c.b16 %v7149, %v7148
      %v7153 = vpack.c.b16 %v7151, %v7150
      %v7172 = vunpack.c.l.b16 %v7128
      %v7173 = vunpack.c.l.b16 %v7129
      %v7174 = vunpack.c.l.b16 %v7130
      %v7175 = vunpack.c.l.b16 %v7131
      %v7176 = vunpack.c.l.b16 %v7132
      %v7177 = vunpack.c.l.b16 %v7133
      %v7178 = vunpack.c.l.b16 %v7134
      %v7179 = vunpack.c.l.b16 %v7135
      %v7180 = vunpack.c.l.b16 %v7136
      %v7181 = vunpack.c.l.b16 %v7137
      %v7182 = vunpack.c.l.b16 %v7138
      %v7183 = vunpack.c.l.b16 %v7139
      %v7184 = vunpack.c.l.b16 %v7140
      %v7185 = vunpack.c.l.b16 %v7141
      %v7186 = vunpack.c.l.b16 %v7142
      %v7187 = vunpack.c.l.b16 %v7143
      %v7188 = vpack.c.b16 %v7173, %v7172
      %v7189 = vpack.c.b16 %v7175, %v7174
      %v7190 = vpack.c.b16 %v7177, %v7176
      %v7191 = vpack.c.b16 %v7179, %v7178
      %v7192 = vpack.c.b16 %v7181, %v7180
      %v7193 = vpack.c.b16 %v7183, %v7182
      %v7194 = vpack.c.b16 %v7185, %v7184
      %v7195 = vpack.c.b16 %v7187, %v7186
      %7204 = vmatpush.bf16.msra.mxu0 %v7195
      %7205 = vmatpush.bf16.msra.mxu0 %v7194
      %7206 = vmatpush.bf16.msra.mxu0 %v7193
      %7207 = vmatpush.bf16.msra.mxu0 %v7192
      %7208 = vmatpush.bf16.msra.mxu0 %v7191
      %7209 = vmatpush.bf16.msra.mxu0 %v7190
      %7210 = vmatpush.bf16.msra.mxu0 %v7189
      %7211 = vmatpush.bf16.msra.mxu0 %v7188
      %7212 = vmatmul.bf16.gmra.mxu0 %v7152
      %v7213 = vpop.f32.mrf.mxu0
      %v7214 = vadd.f32 0.0, %v7213
      %v7215 = vpop.f32.mrf.mxu0
      %v7216 = vadd.f32 0.0, %v7215
      %7217 = vmatmul.bf16.gmra.mxu0 %v7153
      %v7218 = vpop.f32.mrf.mxu0
      %v7219 = vadd.f32 0.0, %v7218
      %v7220 = vpop.f32.mrf.mxu0
      %v7221 = vadd.f32 0.0, %v7220
      %7222 = vdwg.mxu0
      %v7223 = vadd.f32 %v7123, %v7214
      %v7224 = vadd.f32 %v7124, %v7216
      %v7225 = vadd.f32 %v7125, %v7219
      %v7226 = vadd.f32 %v7126, %v7221
      %v7227 = vld [vmem:[%s6] sm:$0x1]
      %v7229 = vperm.slane %v7227, 0
      %v7231 = vadd.f32 %v7223, %v7229
      %v7232 = vadd.f32 %v7224, %v7229
      %v7233 = vadd.f32 %v7225, %v7229
      %v7234 = vadd.f32 %v7226, %v7229
      %v7235 = vlaneseq
      %v7236 = vand.u32 %v7235, 127
      %vm7237 = vcmp.lt.s32.totalorder %v7236, 10
      %v7238 = vsel %vm7237, %v7231, -1e+30
      %v7239 = vsel %vm7237, %v7232, -1e+30
      %v7240 = vsel %vm7237, %v7233, -1e+30
      %v7241 = vsel %vm7237, %v7234, -1e+30
      %7242 = vmax.xlane.f32.xlu0 %v7238
      %v7243 = vpop.xlane.xlu0 %7242
      %7244 = vmax.xlane.f32.xlu0 %v7239
      %v7245 = vpop.xlane.xlu0 %7244
      %7246 = vmax.xlane.f32.xlu0 %v7240
      %v7247 = vpop.xlane.xlu0 %7246
      %7248 = vmax.xlane.f32.xlu0 %v7241
      %v7249 = vpop.xlane.xlu0 %7248
      %v7250 = vsub.f32 %v7238, %v7243
      %v7251 = vsub.f32 %v7239, %v7245
      %v7252 = vsub.f32 %v7240, %v7247
      %v7253 = vsub.f32 %v7241, %v7249
      %v7254 = vmul.f32 %v7250, 1.442695
      %v7255 = vpow.pop %v7254
      %v7256 = vmul.f32 %v7251, 1.442695
      %v7257 = vpow.pop %v7256
      %v7258 = vmul.f32 %v7252, 1.442695
      %v7259 = vpow.pop %v7258
      %v7260 = vmul.f32 %v7253, 1.442695
      %v7261 = vpow.pop %v7260
      %7262 = vadd.xlane.f32.xlu0 %v7255
      %v7263 = vpop.xlane.xlu0 %7262
      %7264 = vadd.xlane.f32.xlu0 %v7257
      %v7265 = vpop.xlane.xlu0 %7264
      %7266 = vadd.xlane.f32.xlu0 %v7259
      %v7267 = vpop.xlane.xlu0 %7266
      %7268 = vadd.xlane.f32.xlu0 %v7261
      %v7269 = vpop.xlane.xlu0 %7268
      %v7270 = vlog2.pop %v7263
      %v7271 = vmul.f32 %v7270, 0.6931472
      %v7272 = vlog2.pop %v7265
      %v7273 = vmul.f32 %v7272, 0.6931472
      %v7274 = vlog2.pop %v7267
      %v7275 = vmul.f32 %v7274, 0.6931472
      %v7276 = vlog2.pop %v7269
      %v7277 = vmul.f32 %v7276, 0.6931472
      %v7278 = vsub.f32 %v7250, %v7271
      %v7279 = vsub.f32 %v7251, %v7273
      %v7280 = vsub.f32 %v7252, %v7275
      %v7281 = vsub.f32 %v7253, %v7277
      %7282 = vst [vmem:[%s283] sm:$0xff] %v7278
      %7283 = vst [vmem:[%s283 + $0x8] sm:$0xff] %v7279
      %7284 = vst [vmem:[%s283 + $0x10] sm:$0xff] %v7280
      %7285 = vst [vmem:[%s283 + $0x18] sm:$0xff] %v7281
      %s7286 = smul.u32 4, %s18
      %p7287 = scmp.lt.s32.totalorder %s7286, 7
      %s7288 = scalar_select %p7287, %s7286, 7
      %s7289 = smul.addr %s7288, 8
      %s7290 = scalar_lea.vmem %s7, %s7289
      // Predicated region
      $region49: #{mnist_cnn_forward.1} parent=47 // pred_check
        %p7291 = pneg %p188
      $region50: #{mnist_cnn_forward.1} parent=47 // pred_check_branch
        %7293 = sbr.rel (%p7291) target = $region52
      $region51: #{mnist_cnn_forward.1} parent=47 // pred_region
        %s7294 = smul.u32 4, %s18
      $region52: #{mnist_cnn_forward.1} parent=47 // pred_fallthru
        _
    $region48: #{mnist_cnn_forward.1} parent=5 // pred_fallthru
      _
    %p7295 = scmp.le.s32.totalorder 2, %s13
    // Predicated region
    $region53: #{mnist_cnn_forward.1} parent=5 // pred_check
      %p7296 = pneg %p7295
    $region54: #{mnist_cnn_forward.1} parent=5 // pred_check_branch
      %7298 = sbr.rel (%p7296) target = $region56
    $region55: #{mnist_cnn_forward.1} parent=5 // pred_region
      %s7299 = ssub.s32 %s13, 2
      // Predicated region
      $region57: #{mnist_cnn_forward.1} parent=55 // pred_check
        %p7300 = pneg %p194
      $region58: #{mnist_cnn_forward.1} parent=55 // pred_check_branch
        %7302 = sbr.rel (%p7300) target = $region60
      $region59: #{mnist_cnn_forward.1} parent=55 // pred_region
        %s7303 = smul.u32 4, %s19
        %p7304 = scmp.lt.s32.totalorder %s7303, 7
        %s7305 = scalar_select %p7304, %s7303, 7
        %s7306 = smul.addr %s7305, 8
        %s7307 = scalar_lea.vmem %s7, %s7306
      $region60: #{mnist_cnn_forward.1} parent=55 // pred_fallthru
        _
    $region56: #{mnist_cnn_forward.1} parent=5 // pred_fallthru
      _
  $region6: #{mnist_cnn_forward.1} parent=0 // loop_footer
    %s17 = sadd.s32 1, %s13
  $region7: #{mnist_cnn_forward.1} parent=0 // loop_footer_branch
    %12 = sbr.rel target = $region3
  $region8: #{mnist_cnn_forward.1} parent=0 // loop_exit
    _

</llo_original>
